<compile_context>
chip_gen: v7x
topology: tpu7x:2x2x1
jax: 0.10.0
libtpu: 0.0.40
codegen_flags: <defaults>
</compile_context>

<pallas_src>
import numpy as np

import jax
import jax.numpy as jnp
from jax import lax
from jax.experimental import pallas as pl
from jax.experimental.pallas import tpu as pltpu


# --------------------------- in-kernel helpers ------------------------------ #

def _even_odd_rows(n_out, n_in):
    """(n_out, n_in) 0/1 selectors picking rows 2i / 2i+1 (left-multiplication)."""
    i = lax.broadcasted_iota(jnp.int32, (n_out, n_in), 0)
    j = lax.broadcasted_iota(jnp.int32, (n_out, n_in), 1)
    even = jnp.where(j == 2 * i, 1.0, 0.0).astype(jnp.float32)
    odd = jnp.where(j == 2 * i + 1, 1.0, 0.0).astype(jnp.float32)
    return even, odd


def _even_odd_cols(n_in, n_out):
    """(n_in, n_out) 0/1 selectors picking cols 2j / 2j+1 (right-multiplication)."""
    i = lax.broadcasted_iota(jnp.int32, (n_in, n_out), 0)
    j = lax.broadcasted_iota(jnp.int32, (n_in, n_out), 1)
    even = jnp.where(i == 2 * j, 1.0, 0.0).astype(jnp.float32)
    odd = jnp.where(i == 2 * j + 1, 1.0, 0.0).astype(jnp.float32)
    return even, odd


def _maxpool2x2_stacked(y, rows, cols):
    """2x2/stride-2 max pool of a channel-stacked (rows, cols) map -> (rows/2, cols/2)."""
    f32 = jnp.float32
    r_out, c_out = rows // 2, cols // 2
    re, ro = _even_odd_rows(r_out, rows)
    rowmax = jnp.maximum(jnp.dot(re, y, preferred_element_type=f32),
                         jnp.dot(ro, y, preferred_element_type=f32))        # (r_out, cols)
    ce, co = _even_odd_cols(cols, c_out)
    return jnp.maximum(jnp.dot(rowmax, ce, preferred_element_type=f32),
                       jnp.dot(rowmax, co, preferred_element_type=f32))      # (r_out, c_out)


# ------------------------------ fused kernel -------------------------------- #

def _fused_forward_kernel(x_ref, a1_ref, t1_ref, b1_ref,
                          a2_ref, t2_ref, b2_ref,
                          wf1_ref, bf1_ref, wf2_ref, bf2_ref, wf3_ref, bf3_ref,
                          o_ref):
    f32 = jnp.float32
    x = x_ref[0, 0].astype(f32)                                   # (28, 28)

    # conv1 (1->4, 5x5, pad 2) + bias + ReLU, channel-major stacked: (4*28, 28)
    y1 = jnp.zeros((4 * 28, 28), f32)
    for dj in range(5):
        shifted = jnp.dot(x, t1_ref[dj], preferred_element_type=f32)         # (28, 28)
        y1 = y1 + jnp.dot(a1_ref[dj], shifted, preferred_element_type=f32)   # (112, 28)
    y1 = jnp.maximum(y1 + b1_ref[...], 0.0)

    p1 = _maxpool2x2_stacked(y1, 4 * 28, 28)                      # (4*14, 14)

    # conv2 (4->16, 5x5, pad 2) + bias + ReLU: (16*14, 14)
    y2 = jnp.zeros((16 * 14, 14), f32)
    for dj in range(5):
        shifted = jnp.dot(p1, t2_ref[dj], preferred_element_type=f32)        # (56, 14)
        y2 = y2 + jnp.dot(a2_ref[dj], shifted, preferred_element_type=f32)   # (224, 14)
    y2 = jnp.maximum(y2 + b2_ref[...], 0.0)

    p2 = _maxpool2x2_stacked(y2, 16 * 14, 14)                     # (16*7, 7) channel-major

    # fc1 (784 -> 128): torch.flatten(x, 0) ordering is folded into the
    # pre-permuted weight wf1[w] (one (128, 112) slab per pooled column w).
    v = bf1_ref[...]                                              # (128, 1)
    for w in range(7):
        v = v + jnp.dot(wf1_ref[w], p2[:, w:w + 1], preferred_element_type=f32)
    v = jnp.maximum(v, 0.0)

    # fc2 (128 -> 64) + ReLU
    v = jnp.maximum(jnp.dot(wf2_ref[...], v, preferred_element_type=f32) + bf2_ref[...], 0.0)

    # fc3 (64 -> 10) + sigmoid
    v = jnp.dot(wf3_ref[...], v, preferred_element_type=f32) + bf3_ref[...]
    o_ref[...] = (1.0 / (1.0 + jnp.exp(-v))).astype(o_ref.dtype)


# --------------------- one-time parameter preprocessing --------------------- #

def _banded_conv_mats(w_oihw, h):
    """A[dj, co*h + r, ci*h + r'] = w[co, ci, r'-r+pad, dj] inside the band, else 0."""
    cout, cin, k, _ = w_oihw.shape
    pad = k // 2
    a = np.zeros((k, cout * h, cin * h), np.float32)
    w_np = np.asarray(w_oihw, np.float32)
    for dj in range(k):
        for co in range(cout):
            for ci in range(cin):
                for r in range(h):
                    for di in range(k):
                        rp = r + di - pad
                        if 0 <= rp < h:
                            a[dj, co * h + r, ci * h + rp] = w_np[co, ci, di, dj]
    return a


def _col_shift_mats(w, k):
    """T[dj, w', w] = 1 iff w' == w + dj - k//2 (zero-padded 'same' column shift)."""
    pad = k // 2
    t = np.zeros((k, w, w), np.float32)
    for dj in range(k):
        for c in range(w):
            cp = c + dj - pad
            if 0 <= cp < w:
                t[dj, cp, c] = 1.0
    return t


def prepare_params(p):
    """Precompute banded conv matrices, permuted fc1 weight, column biases (once)."""
    w1 = np.asarray(p["w1"], np.float32)          # (4, 1, 5, 5)   OIHW (PyTorch)
    w2 = np.asarray(p["w2"], np.float32)          # (16, 4, 5, 5)
    fc1 = np.asarray(p["fc1_w"], np.float32).reshape(128, 16, 7, 7)
    # wf1[w, k, c*7 + h] = fc1_w[k, c*49 + h*7 + w]  (matches stacked p2 columns)
    wf1 = np.transpose(fc1, (3, 0, 1, 2)).reshape(7, 128, 16 * 7)
    return dict(
        a1=jnp.asarray(_banded_conv_mats(w1, 28)),                               # (5, 112, 28)
        t1=jnp.asarray(_col_shift_mats(28, 5)),                                  # (5, 28, 28)
        b1=jnp.asarray(np.repeat(np.asarray(p["b1"], np.float32), 28)[:, None]),  # (112, 1)
        a2=jnp.asarray(_banded_conv_mats(w2, 14)),                               # (5, 224, 56)
        t2=jnp.asarray(_col_shift_mats(14, 5)),                                  # (5, 14, 14)
        b2=jnp.asarray(np.repeat(np.asarray(p["b2"], np.float32), 14)[:, None]),  # (224, 1)
        wf1=jnp.asarray(wf1),                                                     # (7, 128, 112)
        bf1=jnp.asarray(np.asarray(p["fc1_b"], np.float32)[:, None]),             # (128, 1)
        wf2=jnp.asarray(p["fc2_w"], dtype=jnp.float32),                           # (64, 128)
        bf2=jnp.asarray(np.asarray(p["fc2_b"], np.float32)[:, None]),             # (64, 1)
        wf3=jnp.asarray(p["fc3_w"], dtype=jnp.float32),                           # (10, 64)
        bf3=jnp.asarray(np.asarray(p["fc3_b"], np.float32)[:, None]),             # (10, 1)
    )


# ------------------------------- forward call -------------------------------- #

def _zero_index_map(ndim):
    def idx(i):
        return (0,) * ndim
    return idx


def conv_single_chan_forward(x_nchw, prep):
    x = x_nchw.astype(jnp.float32)                                # (1, 1, 28, 28)
    args = (x, prep["a1"], prep["t1"], prep["b1"],
            prep["a2"], prep["t2"], prep["b2"],
            prep["wf1"], prep["bf1"], prep["wf2"], prep["bf2"],
            prep["wf3"], prep["bf3"])
    out = pl.pallas_call(
        _fused_forward_kernel,
        out_shape=jax.ShapeDtypeStruct((10, 1), jnp.float32),
        grid=(1,),
        in_specs=[pl.BlockSpec(a.shape, _zero_index_map(a.ndim)) for a in args],
        out_specs=pl.BlockSpec((10, 1), lambda i: (0, 0)),
        compiler_params=pltpu.CompilerParams(dimension_semantics=("arbitrary",)),
    )(*args)
    return out[:, 0]                                              # (10,)


# ----------------------------- pure-JAX reference ---------------------------- #

def reference_forward(x_nchw, p):
    hp = lax.Precision.HIGHEST
    x = x_nchw.astype(jnp.float32)

    def conv(x, w, b):
        y = lax.conv_general_dilated(
            x, w, (1, 1), ((2, 2), (2, 2)),
            dimension_numbers=("NCHW", "OIHW", "NCHW"), precision=hp)
        return jnp.maximum(y + b[None, :, None, None], 0.0)

    def pool(x):
        n, c, h, w = x.shape
        return x.reshape(n, c, h // 2, 2, w // 2, 2).max(axis=(3, 5))

    h = pool(conv(x, p["w1"], p["b1"]))
    h = pool(conv(h, p["w2"], p["b2"]))
    v = h.reshape(-1)                                  # torch.flatten(x, 0), batch 1
    v = jnp.maximum(jnp.dot(p["fc1_w"], v, precision=hp) + p["fc1_b"], 0.0)
    v = jnp.maximum(jnp.dot(p["fc2_w"], v, precision=hp) + p["fc2_b"], 0.0)
    return jax.nn.sigmoid(jnp.dot(p["fc3_w"], v, precision=hp) + p["fc3_b"])


# ----------------------------------- params ---------------------------------- #

def init_params(key):
    ks = jax.random.split(key, 12)

    def u(k, shape, fan_in):
        bound = 1.0 / float(np.sqrt(fan_in))
        return jax.random.uniform(k, shape, jnp.float32, -bound, bound)

    return dict(
        # conv weights in PyTorch OIHW layout
        w1=u(ks[0], (4, 1, 5, 5), 25),     b1=u(ks[1], (4,), 25),
        w2=u(ks[2], (16, 4, 5, 5), 100),   b2=u(ks[3], (16,), 100),
        # conv3 exists in __init__ but is unused by forward(); kept for parity.
        w3=u(ks[4], (32, 16, 5, 5), 400),  b3=u(ks[5], (32,), 400),
        fc1_w=u(ks[6], (128, 784), 784),   fc1_b=u(ks[7], (128,), 784),
        fc2_w=u(ks[8], (64, 128), 128),    fc2_b=u(ks[9], (64,), 128),
        fc3_w=u(ks[10], (10, 64), 64),     fc3_b=u(ks[11], (10,), 64),
    )


if __name__ == "__main__":
    key = jax.random.PRNGKey(0)
    kp, kx = jax.random.split(key)
    params = init_params(kp)
    prep = prepare_params(params)          # one-time weight preprocessing

    # fc1 expects 784 = 16*7*7 features -> NCHW input (1, 1, 28, 28).
    x = jax.random.normal(kx, (1, 1, 28, 28), jnp.float32)

    fwd = jax.jit(conv_single_chan_forward)
    out = jax.block_until_ready(fwd(x, prep))
    ref = np.asarray(reference_forward(x, params))

    assert out.shape == (10,)
    np.testing.assert_allclose(np.asarray(out), ref, rtol=5e-3, atol=5e-3)
    print("KERNEL_OK")
</pallas_src>

<mosaic_0001>
module attributes {stable_mosaic.version = 11 : i64} {
  func.func @_fused_forward_kernel(%arg0: i32, %arg1: memref<1x1x28x28xf32, #tpu.memory_space<vmem>>, %arg2: memref<5x112x28xf32, #tpu.memory_space<vmem>>, %arg3: memref<5x28x28xf32, #tpu.memory_space<vmem>>, %arg4: memref<112x1xf32, #tpu.memory_space<vmem>>, %arg5: memref<5x224x56xf32, #tpu.memory_space<vmem>>, %arg6: memref<5x14x14xf32, #tpu.memory_space<vmem>>, %arg7: memref<224x1xf32, #tpu.memory_space<vmem>>, %arg8: memref<7x128x112xf32, #tpu.memory_space<vmem>>, %arg9: memref<128x1xf32, #tpu.memory_space<vmem>>, %arg10: memref<64x128xf32, #tpu.memory_space<vmem>>, %arg11: memref<64x1xf32, #tpu.memory_space<vmem>>, %arg12: memref<10x64xf32, #tpu.memory_space<vmem>>, %arg13: memref<10x1xf32, #tpu.memory_space<vmem>>, %arg14: memref<10x1xf32, #tpu.memory_space<vmem>>) attributes {dimension_semantics = [#tpu.dimension_semantics<arbitrary>], iteration_bounds = array<i64: 1>, scalar_prefetch = 0 : i64, scratch_operands = 0 : i64, tpu.core_type = #tpu.core_type<tc>, window_params = [{pipeline_mode = #tpu.pipeline_mode<synchronous>, transform_indices = @transform_0, window_bounds = array<i64: 1, 1, 28, 28>}, {pipeline_mode = #tpu.pipeline_mode<synchronous>, transform_indices = @transform_1, window_bounds = array<i64: 5, 112, 28>}, {pipeline_mode = #tpu.pipeline_mode<synchronous>, transform_indices = @transform_2, window_bounds = array<i64: 5, 28, 28>}, {pipeline_mode = #tpu.pipeline_mode<synchronous>, transform_indices = @transform_3, window_bounds = array<i64: 112, 1>}, {pipeline_mode = #tpu.pipeline_mode<synchronous>, transform_indices = @transform_4, window_bounds = array<i64: 5, 224, 56>}, {pipeline_mode = #tpu.pipeline_mode<synchronous>, transform_indices = @transform_5, window_bounds = array<i64: 5, 14, 14>}, {pipeline_mode = #tpu.pipeline_mode<synchronous>, transform_indices = @transform_6, window_bounds = array<i64: 224, 1>}, {pipeline_mode = #tpu.pipeline_mode<synchronous>, transform_indices = @transform_7, window_bounds = array<i64: 7, 128, 112>}, {pipeline_mode = #tpu.pipeline_mode<synchronous>, transform_indices = @transform_8, window_bounds = array<i64: 128, 1>}, {pipeline_mode = #tpu.pipeline_mode<synchronous>, transform_indices = @transform_9, window_bounds = array<i64: 64, 128>}, {pipeline_mode = #tpu.pipeline_mode<synchronous>, transform_indices = @transform_10, window_bounds = array<i64: 64, 1>}, {pipeline_mode = #tpu.pipeline_mode<synchronous>, transform_indices = @transform_11, window_bounds = array<i64: 10, 64>}, {pipeline_mode = #tpu.pipeline_mode<synchronous>, transform_indices = @transform_12, window_bounds = array<i64: 10, 1>}, {pipeline_mode = #tpu.pipeline_mode<synchronous>, transform_indices = @transform_13, window_bounds = array<i64: 10, 1>}]} {
    %c0 = arith.constant 0 : index
    %c0_0 = arith.constant 0 : index
    %c0_1 = arith.constant 0 : index
    %c0_2 = arith.constant 0 : index
    %0 = vector.load %arg1[%c0, %c0_0, %c0_1, %c0_2] : memref<1x1x28x28xf32, #tpu.memory_space<vmem>>, vector<1x1x28x28xf32>
    %1 = vector.shape_cast %0 : vector<1x1x28x28xf32> to vector<28x28xf32>
    %cst = arith.constant 0.000000e+00 : f32
    %2 = vector.broadcast %cst : f32 to vector<112x28xf32>
    %c0_3 = arith.constant 0 : index
    %c0_4 = arith.constant 0 : index
    %c0_5 = arith.constant 0 : index
    %3 = vector.load %arg3[%c0_3, %c0_4, %c0_5] : memref<5x28x28xf32, #tpu.memory_space<vmem>>, vector<1x28x28xf32>
    %4 = vector.shape_cast %3 : vector<1x28x28xf32> to vector<28x28xf32>
    %cst_6 = arith.constant dense<0.000000e+00> : vector<28x28xf32>
    %5 = tpu.matmul %1, %4, %cst_6 {dimension_numbers = #tpu.dot_dimension_numbers<[1], [0], [0], [1], [0, 0, 1, 1], [], []>} : vector<28x28xf32>, vector<28x28xf32>, vector<28x28xf32> -> vector<28x28xf32>
    %c0_7 = arith.constant 0 : index
    %c0_8 = arith.constant 0 : index
    %c0_9 = arith.constant 0 : index
    %6 = vector.load %arg2[%c0_7, %c0_8, %c0_9] : memref<5x112x28xf32, #tpu.memory_space<vmem>>, vector<1x112x28xf32>
    %7 = vector.shape_cast %6 : vector<1x112x28xf32> to vector<112x28xf32>
    %cst_10 = arith.constant dense<0.000000e+00> : vector<112x28xf32>
    %8 = tpu.matmul %7, %5, %cst_10 {dimension_numbers = #tpu.dot_dimension_numbers<[1], [0], [0], [1], [0, 0, 1, 1], [], []>} : vector<112x28xf32>, vector<28x28xf32>, vector<112x28xf32> -> vector<112x28xf32>
    %9 = arith.addf %2, %8 : vector<112x28xf32>
    %c1 = arith.constant 1 : index
    %c0_11 = arith.constant 0 : index
    %c0_12 = arith.constant 0 : index
    %10 = vector.load %arg3[%c1, %c0_11, %c0_12] : memref<5x28x28xf32, #tpu.memory_space<vmem>>, vector<1x28x28xf32>
    %11 = vector.shape_cast %10 : vector<1x28x28xf32> to vector<28x28xf32>
    %cst_13 = arith.constant dense<0.000000e+00> : vector<28x28xf32>
    %12 = tpu.matmul %1, %11, %cst_13 {dimension_numbers = #tpu.dot_dimension_numbers<[1], [0], [0], [1], [0, 0, 1, 1], [], []>} : vector<28x28xf32>, vector<28x28xf32>, vector<28x28xf32> -> vector<28x28xf32>
    %c1_14 = arith.constant 1 : index
    %c0_15 = arith.constant 0 : index
    %c0_16 = arith.constant 0 : index
    %13 = vector.load %arg2[%c1_14, %c0_15, %c0_16] : memref<5x112x28xf32, #tpu.memory_space<vmem>>, vector<1x112x28xf32>
    %14 = vector.shape_cast %13 : vector<1x112x28xf32> to vector<112x28xf32>
    %cst_17 = arith.constant dense<0.000000e+00> : vector<112x28xf32>
    %15 = tpu.matmul %14, %12, %cst_17 {dimension_numbers = #tpu.dot_dimension_numbers<[1], [0], [0], [1], [0, 0, 1, 1], [], []>} : vector<112x28xf32>, vector<28x28xf32>, vector<112x28xf32> -> vector<112x28xf32>
    %16 = arith.addf %9, %15 : vector<112x28xf32>
    %c2 = arith.constant 2 : index
    %c0_18 = arith.constant 0 : index
    %c0_19 = arith.constant 0 : index
    %17 = vector.load %arg3[%c2, %c0_18, %c0_19] : memref<5x28x28xf32, #tpu.memory_space<vmem>>, vector<1x28x28xf32>
    %18 = vector.shape_cast %17 : vector<1x28x28xf32> to vector<28x28xf32>
    %cst_20 = arith.constant dense<0.000000e+00> : vector<28x28xf32>
    %19 = tpu.matmul %1, %18, %cst_20 {dimension_numbers = #tpu.dot_dimension_numbers<[1], [0], [0], [1], [0, 0, 1, 1], [], []>} : vector<28x28xf32>, vector<28x28xf32>, vector<28x28xf32> -> vector<28x28xf32>
    %c2_21 = arith.constant 2 : index
    %c0_22 = arith.constant 0 : index
    %c0_23 = arith.constant 0 : index
    %20 = vector.load %arg2[%c2_21, %c0_22, %c0_23] : memref<5x112x28xf32, #tpu.memory_space<vmem>>, vector<1x112x28xf32>
    %21 = vector.shape_cast %20 : vector<1x112x28xf32> to vector<112x28xf32>
    %cst_24 = arith.constant dense<0.000000e+00> : vector<112x28xf32>
    %22 = tpu.matmul %21, %19, %cst_24 {dimension_numbers = #tpu.dot_dimension_numbers<[1], [0], [0], [1], [0, 0, 1, 1], [], []>} : vector<112x28xf32>, vector<28x28xf32>, vector<112x28xf32> -> vector<112x28xf32>
    %23 = arith.addf %16, %22 : vector<112x28xf32>
    %c3 = arith.constant 3 : index
    %c0_25 = arith.constant 0 : index
    %c0_26 = arith.constant 0 : index
    %24 = vector.load %arg3[%c3, %c0_25, %c0_26] : memref<5x28x28xf32, #tpu.memory_space<vmem>>, vector<1x28x28xf32>
    %25 = vector.shape_cast %24 : vector<1x28x28xf32> to vector<28x28xf32>
    %cst_27 = arith.constant dense<0.000000e+00> : vector<28x28xf32>
    %26 = tpu.matmul %1, %25, %cst_27 {dimension_numbers = #tpu.dot_dimension_numbers<[1], [0], [0], [1], [0, 0, 1, 1], [], []>} : vector<28x28xf32>, vector<28x28xf32>, vector<28x28xf32> -> vector<28x28xf32>
    %c3_28 = arith.constant 3 : index
    %c0_29 = arith.constant 0 : index
    %c0_30 = arith.constant 0 : index
    %27 = vector.load %arg2[%c3_28, %c0_29, %c0_30] : memref<5x112x28xf32, #tpu.memory_space<vmem>>, vector<1x112x28xf32>
    %28 = vector.shape_cast %27 : vector<1x112x28xf32> to vector<112x28xf32>
    %cst_31 = arith.constant dense<0.000000e+00> : vector<112x28xf32>
    %29 = tpu.matmul %28, %26, %cst_31 {dimension_numbers = #tpu.dot_dimension_numbers<[1], [0], [0], [1], [0, 0, 1, 1], [], []>} : vector<112x28xf32>, vector<28x28xf32>, vector<112x28xf32> -> vector<112x28xf32>
    %30 = arith.addf %23, %29 : vector<112x28xf32>
    %c4 = arith.constant 4 : index
    %c0_32 = arith.constant 0 : index
    %c0_33 = arith.constant 0 : index
    %31 = vector.load %arg3[%c4, %c0_32, %c0_33] : memref<5x28x28xf32, #tpu.memory_space<vmem>>, vector<1x28x28xf32>
    %32 = vector.shape_cast %31 : vector<1x28x28xf32> to vector<28x28xf32>
    %cst_34 = arith.constant dense<0.000000e+00> : vector<28x28xf32>
    %33 = tpu.matmul %1, %32, %cst_34 {dimension_numbers = #tpu.dot_dimension_numbers<[1], [0], [0], [1], [0, 0, 1, 1], [], []>} : vector<28x28xf32>, vector<28x28xf32>, vector<28x28xf32> -> vector<28x28xf32>
    %c4_35 = arith.constant 4 : index
    %c0_36 = arith.constant 0 : index
    %c0_37 = arith.constant 0 : index
    %34 = vector.load %arg2[%c4_35, %c0_36, %c0_37] : memref<5x112x28xf32, #tpu.memory_space<vmem>>, vector<1x112x28xf32>
    %35 = vector.shape_cast %34 : vector<1x112x28xf32> to vector<112x28xf32>
    %cst_38 = arith.constant dense<0.000000e+00> : vector<112x28xf32>
    %36 = tpu.matmul %35, %33, %cst_38 {dimension_numbers = #tpu.dot_dimension_numbers<[1], [0], [0], [1], [0, 0, 1, 1], [], []>} : vector<112x28xf32>, vector<28x28xf32>, vector<112x28xf32> -> vector<112x28xf32>
    %37 = arith.addf %30, %36 : vector<112x28xf32>
    %c0_39 = arith.constant 0 : index
    %c0_40 = arith.constant 0 : index
    %38 = vector.load %arg4[%c0_39, %c0_40] : memref<112x1xf32, #tpu.memory_space<vmem>>, vector<112x1xf32>
    %39 = vector.broadcast %38 : vector<112x1xf32> to vector<112x28xf32>
    %40 = arith.addf %37, %39 : vector<112x28xf32>
    %cst_41 = arith.constant 0.000000e+00 : f32
    %41 = vector.broadcast %cst_41 : f32 to vector<112x28xf32>
    %42 = arith.maximumf %40, %41 : vector<112x28xf32>
    %43 = tpu.iota {dimensions = array<i32: 0>} : vector<56x112xi32>
    %44 = tpu.iota {dimensions = array<i32: 1>} : vector<56x112xi32>
    %c2_i32 = arith.constant 2 : i32
    %45 = vector.broadcast %c2_i32 : i32 to vector<56x112xi32>
    %46 = arith.muli %45, %43 : vector<56x112xi32>
    %47 = arith.cmpi eq, %44, %46 : vector<56x112xi32>
    %cst_42 = arith.constant 1.000000e+00 : f32
    %cst_43 = arith.constant 0.000000e+00 : f32
    %48 = vector.broadcast %cst_42 : f32 to vector<56x112xf32>
    %49 = vector.broadcast %cst_43 : f32 to vector<56x112xf32>
    %50 = arith.select %47, %48, %49 : vector<56x112xi1>, vector<56x112xf32>
    %c2_i32_44 = arith.constant 2 : i32
    %51 = vector.broadcast %c2_i32_44 : i32 to vector<56x112xi32>
    %52 = arith.muli %51, %43 : vector<56x112xi32>
    %c1_i32 = arith.constant 1 : i32
    %53 = vector.broadcast %c1_i32 : i32 to vector<56x112xi32>
    %54 = arith.addi %52, %53 : vector<56x112xi32>
    %55 = arith.cmpi eq, %44, %54 : vector<56x112xi32>
    %cst_45 = arith.constant 1.000000e+00 : f32
    %cst_46 = arith.constant 0.000000e+00 : f32
    %56 = vector.broadcast %cst_45 : f32 to vector<56x112xf32>
    %57 = vector.broadcast %cst_46 : f32 to vector<56x112xf32>
    %58 = arith.select %55, %56, %57 : vector<56x112xi1>, vector<56x112xf32>
    %cst_47 = arith.constant dense<0.000000e+00> : vector<56x28xf32>
    %59 = tpu.matmul %50, %42, %cst_47 {dimension_numbers = #tpu.dot_dimension_numbers<[1], [0], [0], [1], [0, 0, 1, 1], [], []>} : vector<56x112xf32>, vector<112x28xf32>, vector<56x28xf32> -> vector<56x28xf32>
    %cst_48 = arith.constant dense<0.000000e+00> : vector<56x28xf32>
    %60 = tpu.matmul %58, %42, %cst_48 {dimension_numbers = #tpu.dot_dimension_numbers<[1], [0], [0], [1], [0, 0, 1, 1], [], []>} : vector<56x112xf32>, vector<112x28xf32>, vector<56x28xf32> -> vector<56x28xf32>
    %61 = arith.maximumf %59, %60 : vector<56x28xf32>
    %62 = tpu.iota {dimensions = array<i32: 0>} : vector<28x14xi32>
    %63 = tpu.iota {dimensions = array<i32: 1>} : vector<28x14xi32>
    %c2_i32_49 = arith.constant 2 : i32
    %64 = vector.broadcast %c2_i32_49 : i32 to vector<28x14xi32>
    %65 = arith.muli %64, %63 : vector<28x14xi32>
    %66 = arith.cmpi eq, %62, %65 : vector<28x14xi32>
    %cst_50 = arith.constant 1.000000e+00 : f32
    %cst_51 = arith.constant 0.000000e+00 : f32
    %67 = vector.broadcast %cst_50 : f32 to vector<28x14xf32>
    %68 = vector.broadcast %cst_51 : f32 to vector<28x14xf32>
    %69 = arith.select %66, %67, %68 : vector<28x14xi1>, vector<28x14xf32>
    %c2_i32_52 = arith.constant 2 : i32
    %70 = vector.broadcast %c2_i32_52 : i32 to vector<28x14xi32>
    %71 = arith.muli %70, %63 : vector<28x14xi32>
    %c1_i32_53 = arith.constant 1 : i32
    %72 = vector.broadcast %c1_i32_53 : i32 to vector<28x14xi32>
    %73 = arith.addi %71, %72 : vector<28x14xi32>
    %74 = arith.cmpi eq, %62, %73 : vector<28x14xi32>
    %cst_54 = arith.constant 1.000000e+00 : f32
    %cst_55 = arith.constant 0.000000e+00 : f32
    %75 = vector.broadcast %cst_54 : f32 to vector<28x14xf32>
    %76 = vector.broadcast %cst_55 : f32 to vector<28x14xf32>
    %77 = arith.select %74, %75, %76 : vector<28x14xi1>, vector<28x14xf32>
    %cst_56 = arith.constant dense<0.000000e+00> : vector<56x14xf32>
    %78 = tpu.matmul %61, %69, %cst_56 {dimension_numbers = #tpu.dot_dimension_numbers<[1], [0], [0], [1], [0, 0, 1, 1], [], []>} : vector<56x28xf32>, vector<28x14xf32>, vector<56x14xf32> -> vector<56x14xf32>
    %cst_57 = arith.constant dense<0.000000e+00> : vector<56x14xf32>
    %79 = tpu.matmul %61, %77, %cst_57 {dimension_numbers = #tpu.dot_dimension_numbers<[1], [0], [0], [1], [0, 0, 1, 1], [], []>} : vector<56x28xf32>, vector<28x14xf32>, vector<56x14xf32> -> vector<56x14xf32>
    %80 = arith.maximumf %78, %79 : vector<56x14xf32>
    %cst_58 = arith.constant 0.000000e+00 : f32
    %81 = vector.broadcast %cst_58 : f32 to vector<224x14xf32>
    %c0_59 = arith.constant 0 : index
    %c0_60 = arith.constant 0 : index
    %c0_61 = arith.constant 0 : index
    %82 = vector.load %arg6[%c0_59, %c0_60, %c0_61] : memref<5x14x14xf32, #tpu.memory_space<vmem>>, vector<1x14x14xf32>
    %83 = vector.shape_cast %82 : vector<1x14x14xf32> to vector<14x14xf32>
    %cst_62 = arith.constant dense<0.000000e+00> : vector<56x14xf32>
    %84 = tpu.matmul %80, %83, %cst_62 {dimension_numbers = #tpu.dot_dimension_numbers<[1], [0], [0], [1], [0, 0, 1, 1], [], []>} : vector<56x14xf32>, vector<14x14xf32>, vector<56x14xf32> -> vector<56x14xf32>
    %c0_63 = arith.constant 0 : index
    %c0_64 = arith.constant 0 : index
    %c0_65 = arith.constant 0 : index
    %85 = vector.load %arg5[%c0_63, %c0_64, %c0_65] : memref<5x224x56xf32, #tpu.memory_space<vmem>>, vector<1x224x56xf32>
    %86 = vector.shape_cast %85 : vector<1x224x56xf32> to vector<224x56xf32>
    %cst_66 = arith.constant dense<0.000000e+00> : vector<224x14xf32>
    %87 = tpu.matmul %86, %84, %cst_66 {dimension_numbers = #tpu.dot_dimension_numbers<[1], [0], [0], [1], [0, 0, 1, 1], [], []>} : vector<224x56xf32>, vector<56x14xf32>, vector<224x14xf32> -> vector<224x14xf32>
    %88 = arith.addf %81, %87 : vector<224x14xf32>
    %c1_67 = arith.constant 1 : index
    %c0_68 = arith.constant 0 : index
    %c0_69 = arith.constant 0 : index
    %89 = vector.load %arg6[%c1_67, %c0_68, %c0_69] : memref<5x14x14xf32, #tpu.memory_space<vmem>>, vector<1x14x14xf32>
    %90 = vector.shape_cast %89 : vector<1x14x14xf32> to vector<14x14xf32>
    %cst_70 = arith.constant dense<0.000000e+00> : vector<56x14xf32>
    %91 = tpu.matmul %80, %90, %cst_70 {dimension_numbers = #tpu.dot_dimension_numbers<[1], [0], [0], [1], [0, 0, 1, 1], [], []>} : vector<56x14xf32>, vector<14x14xf32>, vector<56x14xf32> -> vector<56x14xf32>
    %c1_71 = arith.constant 1 : index
    %c0_72 = arith.constant 0 : index
    %c0_73 = arith.constant 0 : index
    %92 = vector.load %arg5[%c1_71, %c0_72, %c0_73] : memref<5x224x56xf32, #tpu.memory_space<vmem>>, vector<1x224x56xf32>
    %93 = vector.shape_cast %92 : vector<1x224x56xf32> to vector<224x56xf32>
    %cst_74 = arith.constant dense<0.000000e+00> : vector<224x14xf32>
    %94 = tpu.matmul %93, %91, %cst_74 {dimension_numbers = #tpu.dot_dimension_numbers<[1], [0], [0], [1], [0, 0, 1, 1], [], []>} : vector<224x56xf32>, vector<56x14xf32>, vector<224x14xf32> -> vector<224x14xf32>
    %95 = arith.addf %88, %94 : vector<224x14xf32>
    %c2_75 = arith.constant 2 : index
    %c0_76 = arith.constant 0 : index
    %c0_77 = arith.constant 0 : index
    %96 = vector.load %arg6[%c2_75, %c0_76, %c0_77] : memref<5x14x14xf32, #tpu.memory_space<vmem>>, vector<1x14x14xf32>
    %97 = vector.shape_cast %96 : vector<1x14x14xf32> to vector<14x14xf32>
    %cst_78 = arith.constant dense<0.000000e+00> : vector<56x14xf32>
    %98 = tpu.matmul %80, %97, %cst_78 {dimension_numbers = #tpu.dot_dimension_numbers<[1], [0], [0], [1], [0, 0, 1, 1], [], []>} : vector<56x14xf32>, vector<14x14xf32>, vector<56x14xf32> -> vector<56x14xf32>
    %c2_79 = arith.constant 2 : index
    %c0_80 = arith.constant 0 : index
    %c0_81 = arith.constant 0 : index
    %99 = vector.load %arg5[%c2_79, %c0_80, %c0_81] : memref<5x224x56xf32, #tpu.memory_space<vmem>>, vector<1x224x56xf32>
    %100 = vector.shape_cast %99 : vector<1x224x56xf32> to vector<224x56xf32>
    %cst_82 = arith.constant dense<0.000000e+00> : vector<224x14xf32>
    %101 = tpu.matmul %100, %98, %cst_82 {dimension_numbers = #tpu.dot_dimension_numbers<[1], [0], [0], [1], [0, 0, 1, 1], [], []>} : vector<224x56xf32>, vector<56x14xf32>, vector<224x14xf32> -> vector<224x14xf32>
    %102 = arith.addf %95, %101 : vector<224x14xf32>
    %c3_83 = arith.constant 3 : index
    %c0_84 = arith.constant 0 : index
    %c0_85 = arith.constant 0 : index
    %103 = vector.load %arg6[%c3_83, %c0_84, %c0_85] : memref<5x14x14xf32, #tpu.memory_space<vmem>>, vector<1x14x14xf32>
    %104 = vector.shape_cast %103 : vector<1x14x14xf32> to vector<14x14xf32>
    %cst_86 = arith.constant dense<0.000000e+00> : vector<56x14xf32>
    %105 = tpu.matmul %80, %104, %cst_86 {dimension_numbers = #tpu.dot_dimension_numbers<[1], [0], [0], [1], [0, 0, 1, 1], [], []>} : vector<56x14xf32>, vector<14x14xf32>, vector<56x14xf32> -> vector<56x14xf32>
    %c3_87 = arith.constant 3 : index
    %c0_88 = arith.constant 0 : index
    %c0_89 = arith.constant 0 : index
    %106 = vector.load %arg5[%c3_87, %c0_88, %c0_89] : memref<5x224x56xf32, #tpu.memory_space<vmem>>, vector<1x224x56xf32>
    %107 = vector.shape_cast %106 : vector<1x224x56xf32> to vector<224x56xf32>
    %cst_90 = arith.constant dense<0.000000e+00> : vector<224x14xf32>
    %108 = tpu.matmul %107, %105, %cst_90 {dimension_numbers = #tpu.dot_dimension_numbers<[1], [0], [0], [1], [0, 0, 1, 1], [], []>} : vector<224x56xf32>, vector<56x14xf32>, vector<224x14xf32> -> vector<224x14xf32>
    %109 = arith.addf %102, %108 : vector<224x14xf32>
    %c4_91 = arith.constant 4 : index
    %c0_92 = arith.constant 0 : index
    %c0_93 = arith.constant 0 : index
    %110 = vector.load %arg6[%c4_91, %c0_92, %c0_93] : memref<5x14x14xf32, #tpu.memory_space<vmem>>, vector<1x14x14xf32>
    %111 = vector.shape_cast %110 : vector<1x14x14xf32> to vector<14x14xf32>
    %cst_94 = arith.constant dense<0.000000e+00> : vector<56x14xf32>
    %112 = tpu.matmul %80, %111, %cst_94 {dimension_numbers = #tpu.dot_dimension_numbers<[1], [0], [0], [1], [0, 0, 1, 1], [], []>} : vector<56x14xf32>, vector<14x14xf32>, vector<56x14xf32> -> vector<56x14xf32>
    %c4_95 = arith.constant 4 : index
    %c0_96 = arith.constant 0 : index
    %c0_97 = arith.constant 0 : index
    %113 = vector.load %arg5[%c4_95, %c0_96, %c0_97] : memref<5x224x56xf32, #tpu.memory_space<vmem>>, vector<1x224x56xf32>
    %114 = vector.shape_cast %113 : vector<1x224x56xf32> to vector<224x56xf32>
    %cst_98 = arith.constant dense<0.000000e+00> : vector<224x14xf32>
    %115 = tpu.matmul %114, %112, %cst_98 {dimension_numbers = #tpu.dot_dimension_numbers<[1], [0], [0], [1], [0, 0, 1, 1], [], []>} : vector<224x56xf32>, vector<56x14xf32>, vector<224x14xf32> -> vector<224x14xf32>
    %116 = arith.addf %109, %115 : vector<224x14xf32>
    %c0_99 = arith.constant 0 : index
    %c0_100 = arith.constant 0 : index
    %117 = vector.load %arg7[%c0_99, %c0_100] : memref<224x1xf32, #tpu.memory_space<vmem>>, vector<224x1xf32>
    %118 = vector.broadcast %117 : vector<224x1xf32> to vector<224x14xf32>
    %119 = arith.addf %116, %118 : vector<224x14xf32>
    %cst_101 = arith.constant 0.000000e+00 : f32
    %120 = vector.broadcast %cst_101 : f32 to vector<224x14xf32>
    %121 = arith.maximumf %119, %120 : vector<224x14xf32>
    %122 = tpu.iota {dimensions = array<i32: 0>} : vector<112x224xi32>
    %123 = tpu.iota {dimensions = array<i32: 1>} : vector<112x224xi32>
    %c2_i32_102 = arith.constant 2 : i32
    %124 = vector.broadcast %c2_i32_102 : i32 to vector<112x224xi32>
    %125 = arith.muli %124, %122 : vector<112x224xi32>
    %126 = arith.cmpi eq, %123, %125 : vector<112x224xi32>
    %cst_103 = arith.constant 1.000000e+00 : f32
    %cst_104 = arith.constant 0.000000e+00 : f32
    %127 = vector.broadcast %cst_103 : f32 to vector<112x224xf32>
    %128 = vector.broadcast %cst_104 : f32 to vector<112x224xf32>
    %129 = arith.select %126, %127, %128 : vector<112x224xi1>, vector<112x224xf32>
    %c2_i32_105 = arith.constant 2 : i32
    %130 = vector.broadcast %c2_i32_105 : i32 to vector<112x224xi32>
    %131 = arith.muli %130, %122 : vector<112x224xi32>
    %c1_i32_106 = arith.constant 1 : i32
    %132 = vector.broadcast %c1_i32_106 : i32 to vector<112x224xi32>
    %133 = arith.addi %131, %132 : vector<112x224xi32>
    %134 = arith.cmpi eq, %123, %133 : vector<112x224xi32>
    %cst_107 = arith.constant 1.000000e+00 : f32
    %cst_108 = arith.constant 0.000000e+00 : f32
    %135 = vector.broadcast %cst_107 : f32 to vector<112x224xf32>
    %136 = vector.broadcast %cst_108 : f32 to vector<112x224xf32>
    %137 = arith.select %134, %135, %136 : vector<112x224xi1>, vector<112x224xf32>
    %cst_109 = arith.constant dense<0.000000e+00> : vector<112x14xf32>
    %138 = tpu.matmul %129, %121, %cst_109 {dimension_numbers = #tpu.dot_dimension_numbers<[1], [0], [0], [1], [0, 0, 1, 1], [], []>} : vector<112x224xf32>, vector<224x14xf32>, vector<112x14xf32> -> vector<112x14xf32>
    %cst_110 = arith.constant dense<0.000000e+00> : vector<112x14xf32>
    %139 = tpu.matmul %137, %121, %cst_110 {dimension_numbers = #tpu.dot_dimension_numbers<[1], [0], [0], [1], [0, 0, 1, 1], [], []>} : vector<112x224xf32>, vector<224x14xf32>, vector<112x14xf32> -> vector<112x14xf32>
    %140 = arith.maximumf %138, %139 : vector<112x14xf32>
    %141 = tpu.iota {dimensions = array<i32: 0>} : vector<14x7xi32>
    %142 = tpu.iota {dimensions = array<i32: 1>} : vector<14x7xi32>
    %c2_i32_111 = arith.constant 2 : i32
    %143 = vector.broadcast %c2_i32_111 : i32 to vector<14x7xi32>
    %144 = arith.muli %143, %142 : vector<14x7xi32>
    %145 = arith.cmpi eq, %141, %144 : vector<14x7xi32>
    %cst_112 = arith.constant 1.000000e+00 : f32
    %cst_113 = arith.constant 0.000000e+00 : f32
    %146 = vector.broadcast %cst_112 : f32 to vector<14x7xf32>
    %147 = vector.broadcast %cst_113 : f32 to vector<14x7xf32>
    %148 = arith.select %145, %146, %147 : vector<14x7xi1>, vector<14x7xf32>
    %c2_i32_114 = arith.constant 2 : i32
    %149 = vector.broadcast %c2_i32_114 : i32 to vector<14x7xi32>
    %150 = arith.muli %149, %142 : vector<14x7xi32>
    %c1_i32_115 = arith.constant 1 : i32
    %151 = vector.broadcast %c1_i32_115 : i32 to vector<14x7xi32>
    %152 = arith.addi %150, %151 : vector<14x7xi32>
    %153 = arith.cmpi eq, %141, %152 : vector<14x7xi32>
    %cst_116 = arith.constant 1.000000e+00 : f32
    %cst_117 = arith.constant 0.000000e+00 : f32
    %154 = vector.broadcast %cst_116 : f32 to vector<14x7xf32>
    %155 = vector.broadcast %cst_117 : f32 to vector<14x7xf32>
    %156 = arith.select %153, %154, %155 : vector<14x7xi1>, vector<14x7xf32>
    %cst_118 = arith.constant dense<0.000000e+00> : vector<112x7xf32>
    %157 = tpu.matmul %140, %148, %cst_118 {dimension_numbers = #tpu.dot_dimension_numbers<[1], [0], [0], [1], [0, 0, 1, 1], [], []>} : vector<112x14xf32>, vector<14x7xf32>, vector<112x7xf32> -> vector<112x7xf32>
    %cst_119 = arith.constant dense<0.000000e+00> : vector<112x7xf32>
    %158 = tpu.matmul %140, %156, %cst_119 {dimension_numbers = #tpu.dot_dimension_numbers<[1], [0], [0], [1], [0, 0, 1, 1], [], []>} : vector<112x14xf32>, vector<14x7xf32>, vector<112x7xf32> -> vector<112x7xf32>
    %159 = arith.maximumf %157, %158 : vector<112x7xf32>
    %c0_120 = arith.constant 0 : index
    %c0_121 = arith.constant 0 : index
    %160 = vector.load %arg9[%c0_120, %c0_121] : memref<128x1xf32, #tpu.memory_space<vmem>>, vector<128x1xf32>
    %c0_122 = arith.constant 0 : index
    %c0_123 = arith.constant 0 : index
    %c0_124 = arith.constant 0 : index
    %161 = vector.load %arg8[%c0_122, %c0_123, %c0_124] : memref<7x128x112xf32, #tpu.memory_space<vmem>>, vector<1x128x112xf32>
    %162 = vector.shape_cast %161 : vector<1x128x112xf32> to vector<128x112xf32>
    %163 = vector.extract_strided_slice %159 {offsets = [0, 0], sizes = [112, 1], strides = [1, 1]} : vector<112x7xf32> to vector<112x1xf32>
    %cst_125 = arith.constant dense<0.000000e+00> : vector<128x1xf32>
    %164 = tpu.matmul %162, %163, %cst_125 {dimension_numbers = #tpu.dot_dimension_numbers<[1], [0], [0], [1], [0, 0, 1, 1], [], []>} : vector<128x112xf32>, vector<112x1xf32>, vector<128x1xf32> -> vector<128x1xf32>
    %165 = arith.addf %160, %164 : vector<128x1xf32>
    %c1_126 = arith.constant 1 : index
    %c0_127 = arith.constant 0 : index
    %c0_128 = arith.constant 0 : index
    %166 = vector.load %arg8[%c1_126, %c0_127, %c0_128] : memref<7x128x112xf32, #tpu.memory_space<vmem>>, vector<1x128x112xf32>
    %167 = vector.shape_cast %166 : vector<1x128x112xf32> to vector<128x112xf32>
    %168 = vector.extract_strided_slice %159 {offsets = [0, 1], sizes = [112, 1], strides = [1, 1]} : vector<112x7xf32> to vector<112x1xf32>
    %cst_129 = arith.constant dense<0.000000e+00> : vector<128x1xf32>
    %169 = tpu.matmul %167, %168, %cst_129 {dimension_numbers = #tpu.dot_dimension_numbers<[1], [0], [0], [1], [0, 0, 1, 1], [], []>} : vector<128x112xf32>, vector<112x1xf32>, vector<128x1xf32> -> vector<128x1xf32>
    %170 = arith.addf %165, %169 : vector<128x1xf32>
    %c2_130 = arith.constant 2 : index
    %c0_131 = arith.constant 0 : index
    %c0_132 = arith.constant 0 : index
    %171 = vector.load %arg8[%c2_130, %c0_131, %c0_132] : memref<7x128x112xf32, #tpu.memory_space<vmem>>, vector<1x128x112xf32>
    %172 = vector.shape_cast %171 : vector<1x128x112xf32> to vector<128x112xf32>
    %173 = vector.extract_strided_slice %159 {offsets = [0, 2], sizes = [112, 1], strides = [1, 1]} : vector<112x7xf32> to vector<112x1xf32>
    %cst_133 = arith.constant dense<0.000000e+00> : vector<128x1xf32>
    %174 = tpu.matmul %172, %173, %cst_133 {dimension_numbers = #tpu.dot_dimension_numbers<[1], [0], [0], [1], [0, 0, 1, 1], [], []>} : vector<128x112xf32>, vector<112x1xf32>, vector<128x1xf32> -> vector<128x1xf32>
    %175 = arith.addf %170, %174 : vector<128x1xf32>
    %c3_134 = arith.constant 3 : index
    %c0_135 = arith.constant 0 : index
    %c0_136 = arith.constant 0 : index
    %176 = vector.load %arg8[%c3_134, %c0_135, %c0_136] : memref<7x128x112xf32, #tpu.memory_space<vmem>>, vector<1x128x112xf32>
    %177 = vector.shape_cast %176 : vector<1x128x112xf32> to vector<128x112xf32>
    %178 = vector.extract_strided_slice %159 {offsets = [0, 3], sizes = [112, 1], strides = [1, 1]} : vector<112x7xf32> to vector<112x1xf32>
    %cst_137 = arith.constant dense<0.000000e+00> : vector<128x1xf32>
    %179 = tpu.matmul %177, %178, %cst_137 {dimension_numbers = #tpu.dot_dimension_numbers<[1], [0], [0], [1], [0, 0, 1, 1], [], []>} : vector<128x112xf32>, vector<112x1xf32>, vector<128x1xf32> -> vector<128x1xf32>
    %180 = arith.addf %175, %179 : vector<128x1xf32>
    %c4_138 = arith.constant 4 : index
    %c0_139 = arith.constant 0 : index
    %c0_140 = arith.constant 0 : index
    %181 = vector.load %arg8[%c4_138, %c0_139, %c0_140] : memref<7x128x112xf32, #tpu.memory_space<vmem>>, vector<1x128x112xf32>
    %182 = vector.shape_cast %181 : vector<1x128x112xf32> to vector<128x112xf32>
    %183 = vector.extract_strided_slice %159 {offsets = [0, 4], sizes = [112, 1], strides = [1, 1]} : vector<112x7xf32> to vector<112x1xf32>
    %cst_141 = arith.constant dense<0.000000e+00> : vector<128x1xf32>
    %184 = tpu.matmul %182, %183, %cst_141 {dimension_numbers = #tpu.dot_dimension_numbers<[1], [0], [0], [1], [0, 0, 1, 1], [], []>} : vector<128x112xf32>, vector<112x1xf32>, vector<128x1xf32> -> vector<128x1xf32>
    %185 = arith.addf %180, %184 : vector<128x1xf32>
    %c5 = arith.constant 5 : index
    %c0_142 = arith.constant 0 : index
    %c0_143 = arith.constant 0 : index
    %186 = vector.load %arg8[%c5, %c0_142, %c0_143] : memref<7x128x112xf32, #tpu.memory_space<vmem>>, vector<1x128x112xf32>
    %187 = vector.shape_cast %186 : vector<1x128x112xf32> to vector<128x112xf32>
    %188 = vector.extract_strided_slice %159 {offsets = [0, 5], sizes = [112, 1], strides = [1, 1]} : vector<112x7xf32> to vector<112x1xf32>
    %cst_144 = arith.constant dense<0.000000e+00> : vector<128x1xf32>
    %189 = tpu.matmul %187, %188, %cst_144 {dimension_numbers = #tpu.dot_dimension_numbers<[1], [0], [0], [1], [0, 0, 1, 1], [], []>} : vector<128x112xf32>, vector<112x1xf32>, vector<128x1xf32> -> vector<128x1xf32>
    %190 = arith.addf %185, %189 : vector<128x1xf32>
    %c6 = arith.constant 6 : index
    %c0_145 = arith.constant 0 : index
    %c0_146 = arith.constant 0 : index
    %191 = vector.load %arg8[%c6, %c0_145, %c0_146] : memref<7x128x112xf32, #tpu.memory_space<vmem>>, vector<1x128x112xf32>
    %192 = vector.shape_cast %191 : vector<1x128x112xf32> to vector<128x112xf32>
    %193 = vector.extract_strided_slice %159 {offsets = [0, 6], sizes = [112, 1], strides = [1, 1]} : vector<112x7xf32> to vector<112x1xf32>
    %cst_147 = arith.constant dense<0.000000e+00> : vector<128x1xf32>
    %194 = tpu.matmul %192, %193, %cst_147 {dimension_numbers = #tpu.dot_dimension_numbers<[1], [0], [0], [1], [0, 0, 1, 1], [], []>} : vector<128x112xf32>, vector<112x1xf32>, vector<128x1xf32> -> vector<128x1xf32>
    %195 = arith.addf %190, %194 : vector<128x1xf32>
    %cst_148 = arith.constant 0.000000e+00 : f32
    %196 = vector.broadcast %cst_148 : f32 to vector<128x1xf32>
    %197 = arith.maximumf %195, %196 : vector<128x1xf32>
    %c0_149 = arith.constant 0 : index
    %c0_150 = arith.constant 0 : index
    %198 = vector.load %arg10[%c0_149, %c0_150] : memref<64x128xf32, #tpu.memory_space<vmem>>, vector<64x128xf32>
    %cst_151 = arith.constant dense<0.000000e+00> : vector<64x1xf32>
    %199 = tpu.matmul %198, %197, %cst_151 {dimension_numbers = #tpu.dot_dimension_numbers<[1], [0], [0], [1], [0, 0, 1, 1], [], []>} : vector<64x128xf32>, vector<128x1xf32>, vector<64x1xf32> -> vector<64x1xf32>
    %c0_152 = arith.constant 0 : index
    %c0_153 = arith.constant 0 : index
    %200 = vector.load %arg11[%c0_152, %c0_153] : memref<64x1xf32, #tpu.memory_space<vmem>>, vector<64x1xf32>
    %201 = arith.addf %199, %200 : vector<64x1xf32>
    %cst_154 = arith.constant 0.000000e+00 : f32
    %202 = vector.broadcast %cst_154 : f32 to vector<64x1xf32>
    %203 = arith.maximumf %201, %202 : vector<64x1xf32>
    %c0_155 = arith.constant 0 : index
    %c0_156 = arith.constant 0 : index
    %204 = vector.load %arg12[%c0_155, %c0_156] : memref<10x64xf32, #tpu.memory_space<vmem>>, vector<10x64xf32>
    %cst_157 = arith.constant dense<0.000000e+00> : vector<10x1xf32>
    %205 = tpu.matmul %204, %203, %cst_157 {dimension_numbers = #tpu.dot_dimension_numbers<[1], [0], [0], [1], [0, 0, 1, 1], [], []>} : vector<10x64xf32>, vector<64x1xf32>, vector<10x1xf32> -> vector<10x1xf32>
    %c0_158 = arith.constant 0 : index
    %c0_159 = arith.constant 0 : index
    %206 = vector.load %arg13[%c0_158, %c0_159] : memref<10x1xf32, #tpu.memory_space<vmem>>, vector<10x1xf32>
    %207 = arith.addf %205, %206 : vector<10x1xf32>
    %cst_160 = arith.constant 0.000000e+00 : f32
    %208 = vector.broadcast %cst_160 : f32 to vector<10x1xf32>
    %209 = arith.subf %208, %207 : vector<10x1xf32>
    %210 = math.exp %209 : vector<10x1xf32>
    %cst_161 = arith.constant 1.000000e+00 : f32
    %211 = vector.broadcast %cst_161 : f32 to vector<10x1xf32>
    %212 = arith.addf %211, %210 : vector<10x1xf32>
    %cst_162 = arith.constant 1.000000e+00 : f32
    %213 = vector.broadcast %cst_162 : f32 to vector<10x1xf32>
    %214 = arith.divf %213, %212 : vector<10x1xf32>
    %c0_163 = arith.constant 0 : index
    %c0_164 = arith.constant 0 : index
    %215 = vector.load %arg14[%c0_163, %c0_164] : memref<10x1xf32, #tpu.memory_space<vmem>>, vector<10x1xf32>
    tpu.vector_store %arg14[%c0_163, %c0_164], %214 {strides = array<i32>} : memref<10x1xf32, #tpu.memory_space<vmem>>, vector<10x1xf32>,
    return
  }
  func.func @transform_0(%arg0: i32) -> (i32, i32, i32, i32) {
    %c0_i32 = arith.constant 0 : i32
    %c0_i32_0 = arith.constant 0 : i32
    %c0_i32_1 = arith.constant 0 : i32
    %c0_i32_2 = arith.constant 0 : i32
    %c0_i32_3 = arith.constant 0 : i32
    return %c0_i32, %c0_i32_0, %c0_i32_1, %c0_i32_2 : i32, i32, i32, i32
  }
  func.func @transform_1(%arg0: i32) -> (i32, i32, i32) {
    %c0_i32 = arith.constant 0 : i32
    %c0_i32_0 = arith.constant 0 : i32
    %c0_i32_1 = arith.constant 0 : i32
    %c0_i32_2 = arith.constant 0 : i32
    return %c0_i32, %c0_i32_0, %c0_i32_1 : i32, i32, i32
  }
  func.func @transform_2(%arg0: i32) -> (i32, i32, i32) {
    %c0_i32 = arith.constant 0 : i32
    %c0_i32_0 = arith.constant 0 : i32
    %c0_i32_1 = arith.constant 0 : i32
    %c0_i32_2 = arith.constant 0 : i32
    return %c0_i32, %c0_i32_0, %c0_i32_1 : i32, i32, i32
  }
  func.func @transform_3(%arg0: i32) -> (i32, i32) {
    %c0_i32 = arith.constant 0 : i32
    %c0_i32_0 = arith.constant 0 : i32
    %c0_i32_1 = arith.constant 0 : i32
    return %c0_i32, %c0_i32_0 : i32, i32
  }
  func.func @transform_4(%arg0: i32) -> (i32, i32, i32) {
    %c0_i32 = arith.constant 0 : i32
    %c0_i32_0 = arith.constant 0 : i32
    %c0_i32_1 = arith.constant 0 : i32
    %c0_i32_2 = arith.constant 0 : i32
    return %c0_i32, %c0_i32_0, %c0_i32_1 : i32, i32, i32
  }
  func.func @transform_5(%arg0: i32) -> (i32, i32, i32) {
    %c0_i32 = arith.constant 0 : i32
    %c0_i32_0 = arith.constant 0 : i32
    %c0_i32_1 = arith.constant 0 : i32
    %c0_i32_2 = arith.constant 0 : i32
    return %c0_i32, %c0_i32_0, %c0_i32_1 : i32, i32, i32
  }
  func.func @transform_6(%arg0: i32) -> (i32, i32) {
    %c0_i32 = arith.constant 0 : i32
    %c0_i32_0 = arith.constant 0 : i32
    %c0_i32_1 = arith.constant 0 : i32
    return %c0_i32, %c0_i32_0 : i32, i32
  }
  func.func @transform_7(%arg0: i32) -> (i32, i32, i32) {
    %c0_i32 = arith.constant 0 : i32
    %c0_i32_0 = arith.constant 0 : i32
    %c0_i32_1 = arith.constant 0 : i32
    %c0_i32_2 = arith.constant 0 : i32
    return %c0_i32, %c0_i32_0, %c0_i32_1 : i32, i32, i32
  }
  func.func @transform_8(%arg0: i32) -> (i32, i32) {
    %c0_i32 = arith.constant 0 : i32
    %c0_i32_0 = arith.constant 0 : i32
    %c0_i32_1 = arith.constant 0 : i32
    return %c0_i32, %c0_i32_0 : i32, i32
  }
  func.func @transform_9(%arg0: i32) -> (i32, i32) {
    %c0_i32 = arith.constant 0 : i32
    %c0_i32_0 = arith.constant 0 : i32
    %c0_i32_1 = arith.constant 0 : i32
    return %c0_i32, %c0_i32_0 : i32, i32
  }
  func.func @transform_10(%arg0: i32) -> (i32, i32) {
    %c0_i32 = arith.constant 0 : i32
    %c0_i32_0 = arith.constant 0 : i32
    %c0_i32_1 = arith.constant 0 : i32
    return %c0_i32, %c0_i32_0 : i32, i32
  }
  func.func @transform_11(%arg0: i32) -> (i32, i32) {
    %c0_i32 = arith.constant 0 : i32
    %c0_i32_0 = arith.constant 0 : i32
    %c0_i32_1 = arith.constant 0 : i32
    return %c0_i32, %c0_i32_0 : i32, i32
  }
  func.func @transform_12(%arg0: i32) -> (i32, i32) {
    %c0_i32 = arith.constant 0 : i32
    %c0_i32_0 = arith.constant 0 : i32
    %c0_i32_1 = arith.constant 0 : i32
    return %c0_i32, %c0_i32_0 : i32, i32
  }
  func.func @transform_13(%arg0: i32) -> (i32, i32) {
    %c0_i32 = arith.constant 0 : i32
    %c0_i32_0 = arith.constant 0 : i32
    %c0_i32_1 = arith.constant 0 : i32
    return %c0_i32, %c0_i32_0 : i32, i32
  }
}

</mosaic_0001>

<llo_original>
// kernel: conv_single_chan_forward.1
$region0: #{conv_single_chan_forward.1}
  #allocation0 [shape = 'u32[]', space=smem, size = 0x4, offset = 0x4, fixed_abs, tag = 'smem constant byte address 0x4 - core index']
  #allocation1 [shape = 'u32[144,128]{1,0:T(1,128)}', space=vmem, size = 0x12000, scoped, tag = 'internal scratch']
  %s0 = inlined_call_operand.vmem [shape: f32[1,1,28,28], index: 0, kind: input, shape index: {}]
  %s1 = inlined_call_operand.vmem [shape: f32[5,112,28], index: 1, kind: input, shape index: {}]
  %s2 = inlined_call_operand.vmem [shape: f32[5,28,28], index: 2, kind: input, shape index: {}]
  %s3 = inlined_call_operand.vmem [shape: f32[112,1], index: 3, kind: input, shape index: {}]
  %s4 = inlined_call_operand.vmem [shape: f32[5,224,56], index: 4, kind: input, shape index: {}]
  %s5 = inlined_call_operand.vmem [shape: f32[5,14,14], index: 5, kind: input, shape index: {}]
  %s6 = inlined_call_operand.vmem [shape: f32[224,1], index: 6, kind: input, shape index: {}]
  %s7 = inlined_call_operand.vmem [shape: f32[7,128,112], index: 7, kind: input, shape index: {}]
  %s8 = inlined_call_operand.vmem [shape: f32[128,1], index: 8, kind: input, shape index: {}]
  %s9 = inlined_call_operand.vmem [shape: f32[64,128], index: 9, kind: input, shape index: {}]
  %s10 = inlined_call_operand.vmem [shape: f32[64,1], index: 10, kind: input, shape index: {}]
  %s11 = inlined_call_operand.vmem [shape: f32[10,64], index: 11, kind: input, shape index: {}]
  %s12 = inlined_call_operand.vmem [shape: f32[10,1], index: 12, kind: input, shape index: {}]
  %s13 = inlined_call_operand.vmem [shape: f32[10,1], index: 13, kind: output, shape index: {}]
  %s14 = sld [smem:[#allocation0]]
  $region62: #{conv_single_chan_forward.1} parent=0
    _
  %s16 = ssub.s32 1, %s14
  %s17 = scalar_select 0, %s16, %s14
  // Predicated region
  $region2: #{conv_single_chan_forward.1} parent=0 // pred_check
    _
  $region3: #{conv_single_chan_forward.1} parent=0 // pred_check_branch
    %19 = sbr.rel (0) target = $region5
  $region4: #{conv_single_chan_forward.1} parent=0 // pred_region
    _
  $region5: #{conv_single_chan_forward.1} parent=0 // pred_fallthru
    _
  // Predicated region
  $region6: #{conv_single_chan_forward.1} parent=0 // pred_check
    _
  $region7: #{conv_single_chan_forward.1} parent=0 // pred_check_branch
    %21 = sbr.rel (0) target = $region9
  $region8: #{conv_single_chan_forward.1} parent=0 // pred_region
    _
  $region9: #{conv_single_chan_forward.1} parent=0 // pred_fallthru
    _
  // Predicated region
  $region10: #{conv_single_chan_forward.1} parent=0 // pred_check
    _
  $region11: #{conv_single_chan_forward.1} parent=0 // pred_check_branch
    %23 = sbr.rel (0) target = $region13
  $region12: #{conv_single_chan_forward.1} parent=0 // pred_region
    _
  $region13: #{conv_single_chan_forward.1} parent=0 // pred_fallthru
    _
  // Predicated region
  $region14: #{conv_single_chan_forward.1} parent=0 // pred_check
    _
  $region15: #{conv_single_chan_forward.1} parent=0 // pred_check_branch
    %25 = sbr.rel (0) target = $region17
  $region16: #{conv_single_chan_forward.1} parent=0 // pred_region
    _
  $region17: #{conv_single_chan_forward.1} parent=0 // pred_fallthru
    _
  // Predicated region
  $region18: #{conv_single_chan_forward.1} parent=0 // pred_check
    _
  $region19: #{conv_single_chan_forward.1} parent=0 // pred_check_branch
    %27 = sbr.rel (0) target = $region21
  $region20: #{conv_single_chan_forward.1} parent=0 // pred_region
    _
  $region21: #{conv_single_chan_forward.1} parent=0 // pred_fallthru
    _
  // Predicated region
  $region22: #{conv_single_chan_forward.1} parent=0 // pred_check
    _
  $region23: #{conv_single_chan_forward.1} parent=0 // pred_check_branch
    %29 = sbr.rel (0) target = $region25
  $region24: #{conv_single_chan_forward.1} parent=0 // pred_region
    _
  $region25: #{conv_single_chan_forward.1} parent=0 // pred_fallthru
    _
  // Predicated region
  $region26: #{conv_single_chan_forward.1} parent=0 // pred_check
    _
  $region27: #{conv_single_chan_forward.1} parent=0 // pred_check_branch
    %31 = sbr.rel (0) target = $region29
  $region28: #{conv_single_chan_forward.1} parent=0 // pred_region
    _
  $region29: #{conv_single_chan_forward.1} parent=0 // pred_fallthru
    _
  // Predicated region
  $region30: #{conv_single_chan_forward.1} parent=0 // pred_check
    _
  $region31: #{conv_single_chan_forward.1} parent=0 // pred_check_branch
    %33 = sbr.rel (0) target = $region33
  $region32: #{conv_single_chan_forward.1} parent=0 // pred_region
    _
  $region33: #{conv_single_chan_forward.1} parent=0 // pred_fallthru
    _
  // Predicated region
  $region34: #{conv_single_chan_forward.1} parent=0 // pred_check
    _
  $region35: #{conv_single_chan_forward.1} parent=0 // pred_check_branch
    %35 = sbr.rel (0) target = $region37
  $region36: #{conv_single_chan_forward.1} parent=0 // pred_region
    _
  $region37: #{conv_single_chan_forward.1} parent=0 // pred_fallthru
    _
  // Predicated region
  $region38: #{conv_single_chan_forward.1} parent=0 // pred_check
    _
  $region39: #{conv_single_chan_forward.1} parent=0 // pred_check_branch
    %37 = sbr.rel (0) target = $region41
  $region40: #{conv_single_chan_forward.1} parent=0 // pred_region
    _
  $region41: #{conv_single_chan_forward.1} parent=0 // pred_fallthru
    _
  // Predicated region
  $region42: #{conv_single_chan_forward.1} parent=0 // pred_check
    _
  $region43: #{conv_single_chan_forward.1} parent=0 // pred_check_branch
    %39 = sbr.rel (0) target = $region45
  $region44: #{conv_single_chan_forward.1} parent=0 // pred_region
    _
  $region45: #{conv_single_chan_forward.1} parent=0 // pred_fallthru
    _
  // Predicated region
  $region46: #{conv_single_chan_forward.1} parent=0 // pred_check
    _
  $region47: #{conv_single_chan_forward.1} parent=0 // pred_check_branch
    %41 = sbr.rel (0) target = $region49
  $region48: #{conv_single_chan_forward.1} parent=0 // pred_region
    _
  $region49: #{conv_single_chan_forward.1} parent=0 // pred_fallthru
    _
  // Predicated region
  $region50: #{conv_single_chan_forward.1} parent=0 // pred_check
    _
  $region51: #{conv_single_chan_forward.1} parent=0 // pred_check_branch
    %43 = sbr.rel (0) target = $region53
  $region52: #{conv_single_chan_forward.1} parent=0 // pred_region
    _
  $region53: #{conv_single_chan_forward.1} parent=0 // pred_fallthru
    _
  %v44 = vld [vmem:[%s0] sm:$0xff]
  %v45 = vld [vmem:[%s0 + $0x8] sm:$0xff]
  %v46 = vld [vmem:[%s0 + $0x10] sm:$0xff]
  %v47 = vld [vmem:[%s0 + $0x18] sm:$0xf]
  %v48 = vld [vmem:[%s2] sm:$0xff]
  %v49 = vld [vmem:[%s2 + $0x8] sm:$0xff]
  %v50 = vld [vmem:[%s2 + $0x10] sm:$0xff]
  %v51 = vld [vmem:[%s2 + $0x18] sm:$0xf]
  %vm52 = vcmask 228352
  %v54 = vsel %vm52, %v44, 0
  %v57 = vsel %vm52, %v45, 0
  %v60 = vsel %vm52, %v46, 0
  %v63 = vsel %vm52, %v47, 0
  %vm65 = vcmask 1043456
  %v67 = vsel %vm65, %v51, 0
  %69 = vmatprep.subr.mxu0 0.0
  %70 = vmatpush1.msra.mxu0 %v48
  %71 = vmatprep.subr.mxu0 0.0
  %72 = vmatpush1.msra.mxu0 %v49
  %73 = vmatprep.subr.mxu0 0.0
  %74 = vmatpush1.msra.mxu0 %v50
  %75 = vmatprep.subr.mxu0 0.0
  %76 = vmatpush1.msra.mxu0 %v67
  %77 = vmatprep.subr.mxu0 0.0
  %78 = vmatpush1.msra.mxu0 0.0
  %79 = vmatprep.subr.mxu0 0.0
  %80 = vmatpush1.msra.mxu0 0.0
  %81 = vmatprep.subr.mxu0 0.0
  %82 = vmatpush1.msra.mxu0 0.0
  %83 = vmatprep.subr.mxu0 0.0
  %84 = vmatpush1.msra.mxu0 0.0
  %85 = vmatprep.subr.mxu0 0.0
  %86 = vmatpush1.msra.mxu0 0.0
  %87 = vmatprep.subr.mxu0 0.0
  %88 = vmatpush1.msra.mxu0 0.0
  %89 = vmatprep.subr.mxu0 0.0
  %90 = vmatpush1.msra.mxu0 0.0
  %91 = vmatprep.subr.mxu0 0.0
  %92 = vmatpush1.msra.mxu0 0.0
  %93 = vmatprep.subr.mxu0 0.0
  %94 = vmatpush1.msra.mxu0 0.0
  %95 = vmatprep.subr.mxu0 0.0
  %96 = vmatpush1.msra.mxu0 0.0
  %97 = vmatprep.subr.mxu0 0.0
  %98 = vmatpush1.msra.mxu0 0.0
  %99 = vmatprep.subr.mxu0 0.0
  %100 = vmatpush1.msra.mxu0 0.0
  %101 = vmatprep.subr.mxu0 0.0
  %102 = vmatpush1.msra.mxu0 0.0
  %103 = vmatprep.subr.mxu0 0.0
  %104 = vmatpush1.msra.mxu0 0.0
  %105 = vmatprep.subr.mxu0 0.0
  %106 = vmatpush1.msra.mxu0 0.0
  %107 = vmatprep.subr.mxu0 0.0
  %108 = vmatpush1.msra.mxu0 0.0
  %109 = vmatprep.subr.mxu0 0.0
  %110 = vmatpush1.msra.mxu0 0.0
  %111 = vmatprep.subr.mxu0 0.0
  %112 = vmatpush1.msra.mxu0 0.0
  %113 = vmatprep.subr.mxu0 0.0
  %114 = vmatpush1.msra.mxu0 0.0
  %115 = vmatprep.subr.mxu0 0.0
  %116 = vmatpush1.msra.mxu0 0.0
  %117 = vmatprep.subr.mxu0 0.0
  %118 = vmatpush1.msra.mxu0 0.0
  %119 = vmatprep.subr.mxu0 0.0
  %120 = vmatpush1.msra.mxu0 0.0
  %121 = vmatprep.subr.mxu0 0.0
  %122 = vmatpush1.msra.mxu0 0.0
  %123 = vmatprep.subr.mxu0 0.0
  %124 = vmatpush1.msra.mxu0 0.0
  %125 = vmatprep.subr.mxu0 0.0
  %126 = vmatpush1.msra.mxu0 0.0
  %127 = vmatprep.subr.mxu0 0.0
  %128 = vmatpush1.msra.mxu0 0.0
  %129 = vmatprep.subr.mxu0 0.0
  %130 = vmatpush1.msra.mxu0 0.0
  %131 = vmatprep.subr.mxu0 0.0
  %132 = vmatpush1.msra.mxu0 0.0
  %133 = vmatprep.mubr.f32.mxu0 0.0
  %134 = vmatmul.mubr.f32.gmra.mrb[0].mxu0 %v54
  %v135 = vpop.f32.mrb[0].mxu0
  %v136 = vadd.f32 0.0, %v135
  %v137 = vpop.f32.mrb[0].mxu0
  %138 = vmatprep.mubr.f32.mxu0 0.0
  %139 = vmatmul.mubr.f32.gmra.mrb[0].mxu0 %v57
  %v140 = vpop.f32.mrb[0].mxu0
  %v141 = vadd.f32 0.0, %v140
  %v142 = vpop.f32.mrb[0].mxu0
  %143 = vmatprep.mubr.f32.mxu0 0.0
  %144 = vmatmul.mubr.f32.gmra.mrb[0].mxu0 %v60
  %v145 = vpop.f32.mrb[0].mxu0
  %v146 = vadd.f32 0.0, %v145
  %v147 = vpop.f32.mrb[0].mxu0
  %148 = vmatprep.mubr.f32.mxu0 0.0
  %149 = vmatmul.mubr.f32.gmra.mrb[0].mxu0 %v63
  %v150 = vpop.f32.mrb[0].mxu0
  %v151 = vadd.f32 0.0, %v150
  %v152 = vpop.f32.mrb[0].mxu0
  %153 = vdwg.mxu0
  %v154 = vld [vmem:[%s1] sm:$0xff]
  %v155 = vld [vmem:[%s1 + $0x8] sm:$0xff]
  %v156 = vld [vmem:[%s1 + $0x10] sm:$0xff]
  %v157 = vld [vmem:[%s1 + $0x18] sm:$0xff]
  %v158 = vld [vmem:[%s1 + $0x20] sm:$0xff]
  %v159 = vld [vmem:[%s1 + $0x28] sm:$0xff]
  %v160 = vld [vmem:[%s1 + $0x30] sm:$0xff]
  %v161 = vld [vmem:[%s1 + $0x38] sm:$0xff]
  %v162 = vld [vmem:[%s1 + $0x40] sm:$0xff]
  %v163 = vld [vmem:[%s1 + $0x48] sm:$0xff]
  %v164 = vld [vmem:[%s1 + $0x50] sm:$0xff]
  %v165 = vld [vmem:[%s1 + $0x58] sm:$0xff]
  %v166 = vld [vmem:[%s1 + $0x60] sm:$0xff]
  %v167 = vld [vmem:[%s1 + $0x68] sm:$0xff]
  %s168 = scalar_lea.vmem %s2, 32
  %v169 = vld [vmem:[%s168] sm:$0xff]
  %v170 = vld [vmem:[%s168 + $0x8] sm:$0xff]
  %v171 = vld [vmem:[%s168 + $0x10] sm:$0xff]
  %v172 = vld [vmem:[%s168 + $0x18] sm:$0xf]
  %v174 = vsel %vm65, %v172, 0
  %176 = vmatprep.subr.mxu0 0.0
  %177 = vmatpush1.msra.mxu0 %v169
  %178 = vmatprep.subr.mxu0 0.0
  %179 = vmatpush1.msra.mxu0 %v170
  %180 = vmatprep.subr.mxu0 0.0
  %181 = vmatpush1.msra.mxu0 %v171
  %182 = vmatprep.subr.mxu0 0.0
  %183 = vmatpush1.msra.mxu0 %v174
  %184 = vmatprep.subr.mxu0 0.0
  %185 = vmatpush1.msra.mxu0 0.0
  %186 = vmatprep.subr.mxu0 0.0
  %187 = vmatpush1.msra.mxu0 0.0
  %188 = vmatprep.subr.mxu0 0.0
  %189 = vmatpush1.msra.mxu0 0.0
  %190 = vmatprep.subr.mxu0 0.0
  %191 = vmatpush1.msra.mxu0 0.0
  %192 = vmatprep.subr.mxu0 0.0
  %193 = vmatpush1.msra.mxu0 0.0
  %194 = vmatprep.subr.mxu0 0.0
  %195 = vmatpush1.msra.mxu0 0.0
  %196 = vmatprep.subr.mxu0 0.0
  %197 = vmatpush1.msra.mxu0 0.0
  %198 = vmatprep.subr.mxu0 0.0
  %199 = vmatpush1.msra.mxu0 0.0
  %200 = vmatprep.subr.mxu0 0.0
  %201 = vmatpush1.msra.mxu0 0.0
  %202 = vmatprep.subr.mxu0 0.0
  %203 = vmatpush1.msra.mxu0 0.0
  %204 = vmatprep.subr.mxu0 0.0
  %205 = vmatpush1.msra.mxu0 0.0
  %206 = vmatprep.subr.mxu0 0.0
  %207 = vmatpush1.msra.mxu0 0.0
  %208 = vmatprep.subr.mxu0 0.0
  %209 = vmatpush1.msra.mxu0 0.0
  %210 = vmatprep.subr.mxu0 0.0
  %211 = vmatpush1.msra.mxu0 0.0
  %212 = vmatprep.subr.mxu0 0.0
  %213 = vmatpush1.msra.mxu0 0.0
  %214 = vmatprep.subr.mxu0 0.0
  %215 = vmatpush1.msra.mxu0 0.0
  %216 = vmatprep.subr.mxu0 0.0
  %217 = vmatpush1.msra.mxu0 0.0
  %218 = vmatprep.subr.mxu0 0.0
  %219 = vmatpush1.msra.mxu0 0.0
  %220 = vmatprep.subr.mxu0 0.0
  %221 = vmatpush1.msra.mxu0 0.0
  %222 = vmatprep.subr.mxu0 0.0
  %223 = vmatpush1.msra.mxu0 0.0
  %224 = vmatprep.subr.mxu0 0.0
  %225 = vmatpush1.msra.mxu0 0.0
  %226 = vmatprep.subr.mxu0 0.0
  %227 = vmatpush1.msra.mxu0 0.0
  %228 = vmatprep.subr.mxu0 0.0
  %229 = vmatpush1.msra.mxu0 0.0
  %230 = vmatprep.subr.mxu0 0.0
  %231 = vmatpush1.msra.mxu0 0.0
  %232 = vmatprep.subr.mxu0 0.0
  %233 = vmatpush1.msra.mxu0 0.0
  %234 = vmatprep.subr.mxu0 0.0
  %235 = vmatpush1.msra.mxu0 0.0
  %236 = vmatprep.subr.mxu0 0.0
  %237 = vmatpush1.msra.mxu0 0.0
  %238 = vmatprep.subr.mxu0 0.0
  %239 = vmatpush1.msra.mxu0 0.0
  %240 = vmatprep.mubr.f32.mxu0 0.0
  %241 = vmatmul.mubr.f32.gmra.mrb[0].mxu0 %v54
  %v242 = vpop.f32.mrb[0].mxu0
  %v243 = vadd.f32 0.0, %v242
  %v244 = vpop.f32.mrb[0].mxu0
  %245 = vmatprep.mubr.f32.mxu0 0.0
  %246 = vmatmul.mubr.f32.gmra.mrb[0].mxu0 %v57
  %v247 = vpop.f32.mrb[0].mxu0
  %v248 = vadd.f32 0.0, %v247
  %v249 = vpop.f32.mrb[0].mxu0
  %250 = vmatprep.mubr.f32.mxu0 0.0
  %251 = vmatmul.mubr.f32.gmra.mrb[0].mxu0 %v60
  %v252 = vpop.f32.mrb[0].mxu0
  %v253 = vadd.f32 0.0, %v252
  %v254 = vpop.f32.mrb[0].mxu0
  %255 = vmatprep.mubr.f32.mxu0 0.0
  %256 = vmatmul.mubr.f32.gmra.mrb[0].mxu0 %v63
  %v257 = vpop.f32.mrb[0].mxu0
  %v258 = vadd.f32 0.0, %v257
  %v259 = vpop.f32.mrb[0].mxu0
  %260 = vdwg.mxu0
  %s261 = scalar_lea.vmem %s1, 112
  %v262 = vld [vmem:[%s261] sm:$0xff]
  %v263 = vld [vmem:[%s261 + $0x8] sm:$0xff]
  %v264 = vld [vmem:[%s261 + $0x10] sm:$0xff]
  %v265 = vld [vmem:[%s261 + $0x18] sm:$0xff]
  %v266 = vld [vmem:[%s261 + $0x20] sm:$0xff]
  %v267 = vld [vmem:[%s261 + $0x28] sm:$0xff]
  %v268 = vld [vmem:[%s261 + $0x30] sm:$0xff]
  %v269 = vld [vmem:[%s261 + $0x38] sm:$0xff]
  %v270 = vld [vmem:[%s261 + $0x40] sm:$0xff]
  %v271 = vld [vmem:[%s261 + $0x48] sm:$0xff]
  %v272 = vld [vmem:[%s261 + $0x50] sm:$0xff]
  %v273 = vld [vmem:[%s261 + $0x58] sm:$0xff]
  %v274 = vld [vmem:[%s261 + $0x60] sm:$0xff]
  %v275 = vld [vmem:[%s261 + $0x68] sm:$0xff]
  %v277 = vsel %vm52, %v262, 0
  %v280 = vsel %vm52, %v263, 0
  %v283 = vsel %vm52, %v264, 0
  %v286 = vsel %vm52, %v265, 0
  %v289 = vsel %vm52, %v266, 0
  %v292 = vsel %vm52, %v267, 0
  %v295 = vsel %vm52, %v268, 0
  %v298 = vsel %vm52, %v269, 0
  %v301 = vsel %vm52, %v270, 0
  %v304 = vsel %vm52, %v271, 0
  %v307 = vsel %vm52, %v272, 0
  %v310 = vsel %vm52, %v273, 0
  %v313 = vsel %vm52, %v274, 0
  %v316 = vsel %vm52, %v275, 0
  %v319 = vsel %vm65, %v258, 0
  %321 = vmatprep.subr.mxu0 0.0
  %322 = vmatpush1.msra.mxu0 %v243
  %323 = vmatprep.subr.mxu0 0.0
  %324 = vmatpush1.msra.mxu0 %v248
  %325 = vmatprep.subr.mxu0 0.0
  %326 = vmatpush1.msra.mxu0 %v253
  %327 = vmatprep.subr.mxu0 0.0
  %328 = vmatpush1.msra.mxu0 %v319
  %329 = vmatprep.subr.mxu0 0.0
  %330 = vmatpush1.msra.mxu0 0.0
  %331 = vmatprep.subr.mxu0 0.0
  %332 = vmatpush1.msra.mxu0 0.0
  %333 = vmatprep.subr.mxu0 0.0
  %334 = vmatpush1.msra.mxu0 0.0
  %335 = vmatprep.subr.mxu0 0.0
  %336 = vmatpush1.msra.mxu0 0.0
  %337 = vmatprep.subr.mxu0 0.0
  %338 = vmatpush1.msra.mxu0 0.0
  %339 = vmatprep.subr.mxu0 0.0
  %340 = vmatpush1.msra.mxu0 0.0
  %341 = vmatprep.subr.mxu0 0.0
  %342 = vmatpush1.msra.mxu0 0.0
  %343 = vmatprep.subr.mxu0 0.0
  %344 = vmatpush1.msra.mxu0 0.0
  %345 = vmatprep.subr.mxu0 0.0
  %346 = vmatpush1.msra.mxu0 0.0
  %347 = vmatprep.subr.mxu0 0.0
  %348 = vmatpush1.msra.mxu0 0.0
  %349 = vmatprep.subr.mxu0 0.0
  %350 = vmatpush1.msra.mxu0 0.0
  %351 = vmatprep.subr.mxu0 0.0
  %352 = vmatpush1.msra.mxu0 0.0
  %353 = vmatprep.subr.mxu0 0.0
  %354 = vmatpush1.msra.mxu0 0.0
  %355 = vmatprep.subr.mxu0 0.0
  %356 = vmatpush1.msra.mxu0 0.0
  %357 = vmatprep.subr.mxu0 0.0
  %358 = vmatpush1.msra.mxu0 0.0
  %359 = vmatprep.subr.mxu0 0.0
  %360 = vmatpush1.msra.mxu0 0.0
  %361 = vmatprep.subr.mxu0 0.0
  %362 = vmatpush1.msra.mxu0 0.0
  %363 = vmatprep.subr.mxu0 0.0
  %364 = vmatpush1.msra.mxu0 0.0
  %365 = vmatprep.subr.mxu0 0.0
  %366 = vmatpush1.msra.mxu0 0.0
  %367 = vmatprep.subr.mxu0 0.0
  %368 = vmatpush1.msra.mxu0 0.0
  %369 = vmatprep.subr.mxu0 0.0
  %370 = vmatpush1.msra.mxu0 0.0
  %371 = vmatprep.subr.mxu0 0.0
  %372 = vmatpush1.msra.mxu0 0.0
  %373 = vmatprep.subr.mxu0 0.0
  %374 = vmatpush1.msra.mxu0 0.0
  %375 = vmatprep.subr.mxu0 0.0
  %376 = vmatpush1.msra.mxu0 0.0
  %377 = vmatprep.subr.mxu0 0.0
  %378 = vmatpush1.msra.mxu0 0.0
  %379 = vmatprep.subr.mxu0 0.0
  %380 = vmatpush1.msra.mxu0 0.0
  %381 = vmatprep.subr.mxu0 0.0
  %382 = vmatpush1.msra.mxu0 0.0
  %383 = vmatprep.subr.mxu0 0.0
  %384 = vmatpush1.msra.mxu0 0.0
  %385 = vmatprep.mubr.f32.mxu0 0.0
  %386 = vmatmul.mubr.f32.gmra.mrb[0].mxu0 %v277
  %v387 = vpop.f32.mrb[0].mxu0
  %v388 = vadd.f32 0.0, %v387
  %v389 = vpop.f32.mrb[0].mxu0
  %390 = vmatprep.mubr.f32.mxu0 0.0
  %391 = vmatmul.mubr.f32.gmra.mrb[0].mxu0 %v280
  %v392 = vpop.f32.mrb[0].mxu0
  %v393 = vadd.f32 0.0, %v392
  %v394 = vpop.f32.mrb[0].mxu0
  %395 = vmatprep.mubr.f32.mxu0 0.0
  %396 = vmatmul.mubr.f32.gmra.mrb[0].mxu0 %v283
  %v397 = vpop.f32.mrb[0].mxu0
  %v398 = vadd.f32 0.0, %v397
  %v399 = vpop.f32.mrb[0].mxu0
  %400 = vmatprep.mubr.f32.mxu0 0.0
  %401 = vmatmul.mubr.f32.gmra.mrb[0].mxu0 %v286
  %v402 = vpop.f32.mrb[0].mxu0
  %v403 = vadd.f32 0.0, %v402
  %v404 = vpop.f32.mrb[0].mxu0
  %405 = vmatprep.mubr.f32.mxu0 0.0
  %406 = vmatmul.mubr.f32.gmra.mrb[0].mxu0 %v289
  %v407 = vpop.f32.mrb[0].mxu0
  %v408 = vadd.f32 0.0, %v407
  %v409 = vpop.f32.mrb[0].mxu0
  %410 = vmatprep.mubr.f32.mxu0 0.0
  %411 = vmatmul.mubr.f32.gmra.mrb[0].mxu0 %v292
  %v412 = vpop.f32.mrb[0].mxu0
  %v413 = vadd.f32 0.0, %v412
  %v414 = vpop.f32.mrb[0].mxu0
  %415 = vmatprep.mubr.f32.mxu0 0.0
  %416 = vmatmul.mubr.f32.gmra.mrb[0].mxu0 %v295
  %v417 = vpop.f32.mrb[0].mxu0
  %v418 = vadd.f32 0.0, %v417
  %v419 = vpop.f32.mrb[0].mxu0
  %420 = vmatprep.mubr.f32.mxu0 0.0
  %421 = vmatmul.mubr.f32.gmra.mrb[0].mxu0 %v298
  %v422 = vpop.f32.mrb[0].mxu0
  %v423 = vadd.f32 0.0, %v422
  %v424 = vpop.f32.mrb[0].mxu0
  %425 = vmatprep.mubr.f32.mxu0 0.0
  %426 = vmatmul.mubr.f32.gmra.mrb[0].mxu0 %v301
  %v427 = vpop.f32.mrb[0].mxu0
  %v428 = vadd.f32 0.0, %v427
  %v429 = vpop.f32.mrb[0].mxu0
  %430 = vmatprep.mubr.f32.mxu0 0.0
  %431 = vmatmul.mubr.f32.gmra.mrb[0].mxu0 %v304
  %v432 = vpop.f32.mrb[0].mxu0
  %v433 = vadd.f32 0.0, %v432
  %v434 = vpop.f32.mrb[0].mxu0
  %435 = vmatprep.mubr.f32.mxu0 0.0
  %436 = vmatmul.mubr.f32.gmra.mrb[0].mxu0 %v307
  %v437 = vpop.f32.mrb[0].mxu0
  %v438 = vadd.f32 0.0, %v437
  %v439 = vpop.f32.mrb[0].mxu0
  %440 = vmatprep.mubr.f32.mxu0 0.0
  %441 = vmatmul.mubr.f32.gmra.mrb[0].mxu0 %v310
  %v442 = vpop.f32.mrb[0].mxu0
  %v443 = vadd.f32 0.0, %v442
  %v444 = vpop.f32.mrb[0].mxu0
  %445 = vmatprep.mubr.f32.mxu0 0.0
  %446 = vmatmul.mubr.f32.gmra.mrb[0].mxu0 %v313
  %v447 = vpop.f32.mrb[0].mxu0
  %v448 = vadd.f32 0.0, %v447
  %v449 = vpop.f32.mrb[0].mxu0
  %450 = vmatprep.mubr.f32.mxu0 0.0
  %451 = vmatmul.mubr.f32.gmra.mrb[0].mxu0 %v316
  %v452 = vpop.f32.mrb[0].mxu0
  %v453 = vadd.f32 0.0, %v452
  %v454 = vpop.f32.mrb[0].mxu0
  %455 = vdwg.mxu0
  %v457 = vsel %vm52, %v154, 0
  %v460 = vsel %vm52, %v155, 0
  %v463 = vsel %vm52, %v156, 0
  %v466 = vsel %vm52, %v157, 0
  %v469 = vsel %vm52, %v158, 0
  %v472 = vsel %vm52, %v159, 0
  %v475 = vsel %vm52, %v160, 0
  %v478 = vsel %vm52, %v161, 0
  %v481 = vsel %vm52, %v162, 0
  %v484 = vsel %vm52, %v163, 0
  %v487 = vsel %vm52, %v164, 0
  %v490 = vsel %vm52, %v165, 0
  %v493 = vsel %vm52, %v166, 0
  %v496 = vsel %vm52, %v167, 0
  %v499 = vsel %vm65, %v151, 0
  %501 = vmatprep.subr.mxu0 0.0
  %502 = vmatpush1.msra.mxu0 %v136
  %503 = vmatprep.subr.mxu0 0.0
  %504 = vmatpush1.msra.mxu0 %v141
  %505 = vmatprep.subr.mxu0 0.0
  %506 = vmatpush1.msra.mxu0 %v146
  %507 = vmatprep.subr.mxu0 0.0
  %508 = vmatpush1.msra.mxu0 %v499
  %509 = vmatprep.subr.mxu0 0.0
  %510 = vmatpush1.msra.mxu0 0.0
  %511 = vmatprep.subr.mxu0 0.0
  %512 = vmatpush1.msra.mxu0 0.0
  %513 = vmatprep.subr.mxu0 0.0
  %514 = vmatpush1.msra.mxu0 0.0
  %515 = vmatprep.subr.mxu0 0.0
  %516 = vmatpush1.msra.mxu0 0.0
  %517 = vmatprep.subr.mxu0 0.0
  %518 = vmatpush1.msra.mxu0 0.0
  %519 = vmatprep.subr.mxu0 0.0
  %520 = vmatpush1.msra.mxu0 0.0
  %521 = vmatprep.subr.mxu0 0.0
  %522 = vmatpush1.msra.mxu0 0.0
  %523 = vmatprep.subr.mxu0 0.0
  %524 = vmatpush1.msra.mxu0 0.0
  %525 = vmatprep.subr.mxu0 0.0
  %526 = vmatpush1.msra.mxu0 0.0
  %527 = vmatprep.subr.mxu0 0.0
  %528 = vmatpush1.msra.mxu0 0.0
  %529 = vmatprep.subr.mxu0 0.0
  %530 = vmatpush1.msra.mxu0 0.0
  %531 = vmatprep.subr.mxu0 0.0
  %532 = vmatpush1.msra.mxu0 0.0
  %533 = vmatprep.subr.mxu0 0.0
  %534 = vmatpush1.msra.mxu0 0.0
  %535 = vmatprep.subr.mxu0 0.0
  %536 = vmatpush1.msra.mxu0 0.0
  %537 = vmatprep.subr.mxu0 0.0
  %538 = vmatpush1.msra.mxu0 0.0
  %539 = vmatprep.subr.mxu0 0.0
  %540 = vmatpush1.msra.mxu0 0.0
  %541 = vmatprep.subr.mxu0 0.0
  %542 = vmatpush1.msra.mxu0 0.0
  %543 = vmatprep.subr.mxu0 0.0
  %544 = vmatpush1.msra.mxu0 0.0
  %545 = vmatprep.subr.mxu0 0.0
  %546 = vmatpush1.msra.mxu0 0.0
  %547 = vmatprep.subr.mxu0 0.0
  %548 = vmatpush1.msra.mxu0 0.0
  %549 = vmatprep.subr.mxu0 0.0
  %550 = vmatpush1.msra.mxu0 0.0
  %551 = vmatprep.subr.mxu0 0.0
  %552 = vmatpush1.msra.mxu0 0.0
  %553 = vmatprep.subr.mxu0 0.0
  %554 = vmatpush1.msra.mxu0 0.0
  %555 = vmatprep.subr.mxu0 0.0
  %556 = vmatpush1.msra.mxu0 0.0
  %557 = vmatprep.subr.mxu0 0.0
  %558 = vmatpush1.msra.mxu0 0.0
  %559 = vmatprep.subr.mxu0 0.0
  %560 = vmatpush1.msra.mxu0 0.0
  %561 = vmatprep.subr.mxu0 0.0
  %562 = vmatpush1.msra.mxu0 0.0
  %563 = vmatprep.subr.mxu0 0.0
  %564 = vmatpush1.msra.mxu0 0.0
  %565 = vmatprep.mubr.f32.mxu0 0.0
  %566 = vmatmul.mubr.f32.gmra.mrb[0].mxu0 %v457
  %v567 = vpop.f32.mrb[0].mxu0
  %v568 = vadd.f32 %v388, %v567
  %v569 = vpop.f32.mrb[0].mxu0
  %570 = vmatprep.mubr.f32.mxu0 0.0
  %571 = vmatmul.mubr.f32.gmra.mrb[0].mxu0 %v460
  %v572 = vpop.f32.mrb[0].mxu0
  %v573 = vadd.f32 %v393, %v572
  %v574 = vpop.f32.mrb[0].mxu0
  %575 = vmatprep.mubr.f32.mxu0 0.0
  %576 = vmatmul.mubr.f32.gmra.mrb[0].mxu0 %v463
  %v577 = vpop.f32.mrb[0].mxu0
  %v578 = vadd.f32 %v398, %v577
  %v579 = vpop.f32.mrb[0].mxu0
  %580 = vmatprep.mubr.f32.mxu0 0.0
  %581 = vmatmul.mubr.f32.gmra.mrb[0].mxu0 %v466
  %v582 = vpop.f32.mrb[0].mxu0
  %v583 = vadd.f32 %v403, %v582
  %v584 = vpop.f32.mrb[0].mxu0
  %585 = vmatprep.mubr.f32.mxu0 0.0
  %586 = vmatmul.mubr.f32.gmra.mrb[0].mxu0 %v469
  %v587 = vpop.f32.mrb[0].mxu0
  %v588 = vadd.f32 %v408, %v587
  %v589 = vpop.f32.mrb[0].mxu0
  %590 = vmatprep.mubr.f32.mxu0 0.0
  %591 = vmatmul.mubr.f32.gmra.mrb[0].mxu0 %v472
  %v592 = vpop.f32.mrb[0].mxu0
  %v593 = vadd.f32 %v413, %v592
  %v594 = vpop.f32.mrb[0].mxu0
  %595 = vmatprep.mubr.f32.mxu0 0.0
  %596 = vmatmul.mubr.f32.gmra.mrb[0].mxu0 %v475
  %v597 = vpop.f32.mrb[0].mxu0
  %v598 = vadd.f32 %v418, %v597
  %v599 = vpop.f32.mrb[0].mxu0
  %600 = vmatprep.mubr.f32.mxu0 0.0
  %601 = vmatmul.mubr.f32.gmra.mrb[0].mxu0 %v478
  %v602 = vpop.f32.mrb[0].mxu0
  %v603 = vadd.f32 %v423, %v602
  %v604 = vpop.f32.mrb[0].mxu0
  %605 = vmatprep.mubr.f32.mxu0 0.0
  %606 = vmatmul.mubr.f32.gmra.mrb[0].mxu0 %v481
  %v607 = vpop.f32.mrb[0].mxu0
  %v608 = vadd.f32 %v428, %v607
  %v609 = vpop.f32.mrb[0].mxu0
  %610 = vmatprep.mubr.f32.mxu0 0.0
  %611 = vmatmul.mubr.f32.gmra.mrb[0].mxu0 %v484
  %v612 = vpop.f32.mrb[0].mxu0
  %v613 = vadd.f32 %v433, %v612
  %v614 = vpop.f32.mrb[0].mxu0
  %615 = vmatprep.mubr.f32.mxu0 0.0
  %616 = vmatmul.mubr.f32.gmra.mrb[0].mxu0 %v487
  %v617 = vpop.f32.mrb[0].mxu0
  %v618 = vadd.f32 %v438, %v617
  %v619 = vpop.f32.mrb[0].mxu0
  %620 = vmatprep.mubr.f32.mxu0 0.0
  %621 = vmatmul.mubr.f32.gmra.mrb[0].mxu0 %v490
  %v622 = vpop.f32.mrb[0].mxu0
  %v623 = vadd.f32 %v443, %v622
  %v624 = vpop.f32.mrb[0].mxu0
  %625 = vmatprep.mubr.f32.mxu0 0.0
  %626 = vmatmul.mubr.f32.gmra.mrb[0].mxu0 %v493
  %v627 = vpop.f32.mrb[0].mxu0
  %v628 = vadd.f32 %v448, %v627
  %v629 = vpop.f32.mrb[0].mxu0
  %630 = vmatprep.mubr.f32.mxu0 0.0
  %631 = vmatmul.mubr.f32.gmra.mrb[0].mxu0 %v496
  %v632 = vpop.f32.mrb[0].mxu0
  %v633 = vadd.f32 %v453, %v632
  %v634 = vpop.f32.mrb[0].mxu0
  %635 = vdwg.mxu0
  %s636 = scalar_lea.vmem %s2, 64
  %v637 = vld [vmem:[%s636] sm:$0xff]
  %v638 = vld [vmem:[%s636 + $0x8] sm:$0xff]
  %v639 = vld [vmem:[%s636 + $0x10] sm:$0xff]
  %v640 = vld [vmem:[%s636 + $0x18] sm:$0xf]
  %v642 = vsel %vm65, %v640, 0
  %644 = vmatprep.subr.mxu0 0.0
  %645 = vmatpush1.msra.mxu0 %v637
  %646 = vmatprep.subr.mxu0 0.0
  %647 = vmatpush1.msra.mxu0 %v638
  %648 = vmatprep.subr.mxu0 0.0
  %649 = vmatpush1.msra.mxu0 %v639
  %650 = vmatprep.subr.mxu0 0.0
  %651 = vmatpush1.msra.mxu0 %v642
  %652 = vmatprep.subr.mxu0 0.0
  %653 = vmatpush1.msra.mxu0 0.0
  %654 = vmatprep.subr.mxu0 0.0
  %655 = vmatpush1.msra.mxu0 0.0
  %656 = vmatprep.subr.mxu0 0.0
  %657 = vmatpush1.msra.mxu0 0.0
  %658 = vmatprep.subr.mxu0 0.0
  %659 = vmatpush1.msra.mxu0 0.0
  %660 = vmatprep.subr.mxu0 0.0
  %661 = vmatpush1.msra.mxu0 0.0
  %662 = vmatprep.subr.mxu0 0.0
  %663 = vmatpush1.msra.mxu0 0.0
  %664 = vmatprep.subr.mxu0 0.0
  %665 = vmatpush1.msra.mxu0 0.0
  %666 = vmatprep.subr.mxu0 0.0
  %667 = vmatpush1.msra.mxu0 0.0
  %668 = vmatprep.subr.mxu0 0.0
  %669 = vmatpush1.msra.mxu0 0.0
  %670 = vmatprep.subr.mxu0 0.0
  %671 = vmatpush1.msra.mxu0 0.0
  %672 = vmatprep.subr.mxu0 0.0
  %673 = vmatpush1.msra.mxu0 0.0
  %674 = vmatprep.subr.mxu0 0.0
  %675 = vmatpush1.msra.mxu0 0.0
  %676 = vmatprep.subr.mxu0 0.0
  %677 = vmatpush1.msra.mxu0 0.0
  %678 = vmatprep.subr.mxu0 0.0
  %679 = vmatpush1.msra.mxu0 0.0
  %680 = vmatprep.subr.mxu0 0.0
  %681 = vmatpush1.msra.mxu0 0.0
  %682 = vmatprep.subr.mxu0 0.0
  %683 = vmatpush1.msra.mxu0 0.0
  %684 = vmatprep.subr.mxu0 0.0
  %685 = vmatpush1.msra.mxu0 0.0
  %686 = vmatprep.subr.mxu0 0.0
  %687 = vmatpush1.msra.mxu0 0.0
  %688 = vmatprep.subr.mxu0 0.0
  %689 = vmatpush1.msra.mxu0 0.0
  %690 = vmatprep.subr.mxu0 0.0
  %691 = vmatpush1.msra.mxu0 0.0
  %692 = vmatprep.subr.mxu0 0.0
  %693 = vmatpush1.msra.mxu0 0.0
  %694 = vmatprep.subr.mxu0 0.0
  %695 = vmatpush1.msra.mxu0 0.0
  %696 = vmatprep.subr.mxu0 0.0
  %697 = vmatpush1.msra.mxu0 0.0
  %698 = vmatprep.subr.mxu0 0.0
  %699 = vmatpush1.msra.mxu0 0.0
  %700 = vmatprep.subr.mxu0 0.0
  %701 = vmatpush1.msra.mxu0 0.0
  %702 = vmatprep.subr.mxu0 0.0
  %703 = vmatpush1.msra.mxu0 0.0
  %704 = vmatprep.subr.mxu0 0.0
  %705 = vmatpush1.msra.mxu0 0.0
  %706 = vmatprep.subr.mxu0 0.0
  %707 = vmatpush1.msra.mxu0 0.0
  %708 = vmatprep.mubr.f32.mxu0 0.0
  %709 = vmatmul.mubr.f32.gmra.mrb[0].mxu0 %v54
  %v710 = vpop.f32.mrb[0].mxu0
  %v711 = vadd.f32 0.0, %v710
  %v712 = vpop.f32.mrb[0].mxu0
  %713 = vmatprep.mubr.f32.mxu0 0.0
  %714 = vmatmul.mubr.f32.gmra.mrb[0].mxu0 %v57
  %v715 = vpop.f32.mrb[0].mxu0
  %v716 = vadd.f32 0.0, %v715
  %v717 = vpop.f32.mrb[0].mxu0
  %718 = vmatprep.mubr.f32.mxu0 0.0
  %719 = vmatmul.mubr.f32.gmra.mrb[0].mxu0 %v60
  %v720 = vpop.f32.mrb[0].mxu0
  %v721 = vadd.f32 0.0, %v720
  %v722 = vpop.f32.mrb[0].mxu0
  %723 = vmatprep.mubr.f32.mxu0 0.0
  %724 = vmatmul.mubr.f32.gmra.mrb[0].mxu0 %v63
  %v725 = vpop.f32.mrb[0].mxu0
  %v726 = vadd.f32 0.0, %v725
  %v727 = vpop.f32.mrb[0].mxu0
  %728 = vdwg.mxu0
  %s729 = scalar_lea.vmem %s1, 224
  %v730 = vld [vmem:[%s729] sm:$0xff]
  %v731 = vld [vmem:[%s729 + $0x8] sm:$0xff]
  %v732 = vld [vmem:[%s729 + $0x10] sm:$0xff]
  %v733 = vld [vmem:[%s729 + $0x18] sm:$0xff]
  %v734 = vld [vmem:[%s729 + $0x20] sm:$0xff]
  %v735 = vld [vmem:[%s729 + $0x28] sm:$0xff]
  %v736 = vld [vmem:[%s729 + $0x30] sm:$0xff]
  %v737 = vld [vmem:[%s729 + $0x38] sm:$0xff]
  %v738 = vld [vmem:[%s729 + $0x40] sm:$0xff]
  %v739 = vld [vmem:[%s729 + $0x48] sm:$0xff]
  %v740 = vld [vmem:[%s729 + $0x50] sm:$0xff]
  %v741 = vld [vmem:[%s729 + $0x58] sm:$0xff]
  %v742 = vld [vmem:[%s729 + $0x60] sm:$0xff]
  %v743 = vld [vmem:[%s729 + $0x68] sm:$0xff]
  %v745 = vsel %vm52, %v730, 0
  %v748 = vsel %vm52, %v731, 0
  %v751 = vsel %vm52, %v732, 0
  %v754 = vsel %vm52, %v733, 0
  %v757 = vsel %vm52, %v734, 0
  %v760 = vsel %vm52, %v735, 0
  %v763 = vsel %vm52, %v736, 0
  %v766 = vsel %vm52, %v737, 0
  %v769 = vsel %vm52, %v738, 0
  %v772 = vsel %vm52, %v739, 0
  %v775 = vsel %vm52, %v740, 0
  %v778 = vsel %vm52, %v741, 0
  %v781 = vsel %vm52, %v742, 0
  %v784 = vsel %vm52, %v743, 0
  %v787 = vsel %vm65, %v726, 0
  %789 = vmatprep.subr.mxu0 0.0
  %790 = vmatpush1.msra.mxu0 %v711
  %791 = vmatprep.subr.mxu0 0.0
  %792 = vmatpush1.msra.mxu0 %v716
  %793 = vmatprep.subr.mxu0 0.0
  %794 = vmatpush1.msra.mxu0 %v721
  %795 = vmatprep.subr.mxu0 0.0
  %796 = vmatpush1.msra.mxu0 %v787
  %797 = vmatprep.subr.mxu0 0.0
  %798 = vmatpush1.msra.mxu0 0.0
  %799 = vmatprep.subr.mxu0 0.0
  %800 = vmatpush1.msra.mxu0 0.0
  %801 = vmatprep.subr.mxu0 0.0
  %802 = vmatpush1.msra.mxu0 0.0
  %803 = vmatprep.subr.mxu0 0.0
  %804 = vmatpush1.msra.mxu0 0.0
  %805 = vmatprep.subr.mxu0 0.0
  %806 = vmatpush1.msra.mxu0 0.0
  %807 = vmatprep.subr.mxu0 0.0
  %808 = vmatpush1.msra.mxu0 0.0
  %809 = vmatprep.subr.mxu0 0.0
  %810 = vmatpush1.msra.mxu0 0.0
  %811 = vmatprep.subr.mxu0 0.0
  %812 = vmatpush1.msra.mxu0 0.0
  %813 = vmatprep.subr.mxu0 0.0
  %814 = vmatpush1.msra.mxu0 0.0
  %815 = vmatprep.subr.mxu0 0.0
  %816 = vmatpush1.msra.mxu0 0.0
  %817 = vmatprep.subr.mxu0 0.0
  %818 = vmatpush1.msra.mxu0 0.0
  %819 = vmatprep.subr.mxu0 0.0
  %820 = vmatpush1.msra.mxu0 0.0
  %821 = vmatprep.subr.mxu0 0.0
  %822 = vmatpush1.msra.mxu0 0.0
  %823 = vmatprep.subr.mxu0 0.0
  %824 = vmatpush1.msra.mxu0 0.0
  %825 = vmatprep.subr.mxu0 0.0
  %826 = vmatpush1.msra.mxu0 0.0
  %827 = vmatprep.subr.mxu0 0.0
  %828 = vmatpush1.msra.mxu0 0.0
  %829 = vmatprep.subr.mxu0 0.0
  %830 = vmatpush1.msra.mxu0 0.0
  %831 = vmatprep.subr.mxu0 0.0
  %832 = vmatpush1.msra.mxu0 0.0
  %833 = vmatprep.subr.mxu0 0.0
  %834 = vmatpush1.msra.mxu0 0.0
  %835 = vmatprep.subr.mxu0 0.0
  %836 = vmatpush1.msra.mxu0 0.0
  %837 = vmatprep.subr.mxu0 0.0
  %838 = vmatpush1.msra.mxu0 0.0
  %839 = vmatprep.subr.mxu0 0.0
  %840 = vmatpush1.msra.mxu0 0.0
  %841 = vmatprep.subr.mxu0 0.0
  %842 = vmatpush1.msra.mxu0 0.0
  %843 = vmatprep.subr.mxu0 0.0
  %844 = vmatpush1.msra.mxu0 0.0
  %845 = vmatprep.subr.mxu0 0.0
  %846 = vmatpush1.msra.mxu0 0.0
  %847 = vmatprep.subr.mxu0 0.0
  %848 = vmatpush1.msra.mxu0 0.0
  %849 = vmatprep.subr.mxu0 0.0
  %850 = vmatpush1.msra.mxu0 0.0
  %851 = vmatprep.subr.mxu0 0.0
  %852 = vmatpush1.msra.mxu0 0.0
  %853 = vmatprep.mubr.f32.mxu0 0.0
  %854 = vmatmul.mubr.f32.gmra.mrb[0].mxu0 %v745
  %v855 = vpop.f32.mrb[0].mxu0
  %v856 = vadd.f32 0.0, %v855
  %v857 = vpop.f32.mrb[0].mxu0
  %858 = vmatprep.mubr.f32.mxu0 0.0
  %859 = vmatmul.mubr.f32.gmra.mrb[0].mxu0 %v748
  %v860 = vpop.f32.mrb[0].mxu0
  %v861 = vadd.f32 0.0, %v860
  %v862 = vpop.f32.mrb[0].mxu0
  %863 = vmatprep.mubr.f32.mxu0 0.0
  %864 = vmatmul.mubr.f32.gmra.mrb[0].mxu0 %v751
  %v865 = vpop.f32.mrb[0].mxu0
  %v866 = vadd.f32 0.0, %v865
  %v867 = vpop.f32.mrb[0].mxu0
  %868 = vmatprep.mubr.f32.mxu0 0.0
  %869 = vmatmul.mubr.f32.gmra.mrb[0].mxu0 %v754
  %v870 = vpop.f32.mrb[0].mxu0
  %v871 = vadd.f32 0.0, %v870
  %v872 = vpop.f32.mrb[0].mxu0
  %873 = vmatprep.mubr.f32.mxu0 0.0
  %874 = vmatmul.mubr.f32.gmra.mrb[0].mxu0 %v757
  %v875 = vpop.f32.mrb[0].mxu0
  %v876 = vadd.f32 0.0, %v875
  %v877 = vpop.f32.mrb[0].mxu0
  %878 = vmatprep.mubr.f32.mxu0 0.0
  %879 = vmatmul.mubr.f32.gmra.mrb[0].mxu0 %v760
  %v880 = vpop.f32.mrb[0].mxu0
  %v881 = vadd.f32 0.0, %v880
  %v882 = vpop.f32.mrb[0].mxu0
  %883 = vmatprep.mubr.f32.mxu0 0.0
  %884 = vmatmul.mubr.f32.gmra.mrb[0].mxu0 %v763
  %v885 = vpop.f32.mrb[0].mxu0
  %v886 = vadd.f32 0.0, %v885
  %v887 = vpop.f32.mrb[0].mxu0
  %888 = vmatprep.mubr.f32.mxu0 0.0
  %889 = vmatmul.mubr.f32.gmra.mrb[0].mxu0 %v766
  %v890 = vpop.f32.mrb[0].mxu0
  %v891 = vadd.f32 0.0, %v890
  %v892 = vpop.f32.mrb[0].mxu0
  %893 = vmatprep.mubr.f32.mxu0 0.0
  %894 = vmatmul.mubr.f32.gmra.mrb[0].mxu0 %v769
  %v895 = vpop.f32.mrb[0].mxu0
  %v896 = vadd.f32 0.0, %v895
  %v897 = vpop.f32.mrb[0].mxu0
  %898 = vmatprep.mubr.f32.mxu0 0.0
  %899 = vmatmul.mubr.f32.gmra.mrb[0].mxu0 %v772
  %v900 = vpop.f32.mrb[0].mxu0
  %v901 = vadd.f32 0.0, %v900
  %v902 = vpop.f32.mrb[0].mxu0
  %903 = vmatprep.mubr.f32.mxu0 0.0
  %904 = vmatmul.mubr.f32.gmra.mrb[0].mxu0 %v775
  %v905 = vpop.f32.mrb[0].mxu0
  %v906 = vadd.f32 0.0, %v905
  %v907 = vpop.f32.mrb[0].mxu0
  %908 = vmatprep.mubr.f32.mxu0 0.0
  %909 = vmatmul.mubr.f32.gmra.mrb[0].mxu0 %v778
  %v910 = vpop.f32.mrb[0].mxu0
  %v911 = vadd.f32 0.0, %v910
  %v912 = vpop.f32.mrb[0].mxu0
  %913 = vmatprep.mubr.f32.mxu0 0.0
  %914 = vmatmul.mubr.f32.gmra.mrb[0].mxu0 %v781
  %v915 = vpop.f32.mrb[0].mxu0
  %v916 = vadd.f32 0.0, %v915
  %v917 = vpop.f32.mrb[0].mxu0
  %918 = vmatprep.mubr.f32.mxu0 0.0
  %919 = vmatmul.mubr.f32.gmra.mrb[0].mxu0 %v784
  %v920 = vpop.f32.mrb[0].mxu0
  %v921 = vadd.f32 0.0, %v920
  %v922 = vpop.f32.mrb[0].mxu0
  %923 = vdwg.mxu0
  %v924 = vadd.f32 %v568, %v856
  %v925 = vadd.f32 %v573, %v861
  %v926 = vadd.f32 %v578, %v866
  %v927 = vadd.f32 %v583, %v871
  %v928 = vadd.f32 %v588, %v876
  %v929 = vadd.f32 %v593, %v881
  %v930 = vadd.f32 %v598, %v886
  %v931 = vadd.f32 %v603, %v891
  %v932 = vadd.f32 %v608, %v896
  %v933 = vadd.f32 %v613, %v901
  %v934 = vadd.f32 %v618, %v906
  %v935 = vadd.f32 %v623, %v911
  %v936 = vadd.f32 %v628, %v916
  %v937 = vadd.f32 %v633, %v921
  %s938 = scalar_lea.vmem %s2, 96
  %v939 = vld [vmem:[%s938] sm:$0xff]
  %v940 = vld [vmem:[%s938 + $0x8] sm:$0xff]
  %v941 = vld [vmem:[%s938 + $0x10] sm:$0xff]
  %v942 = vld [vmem:[%s938 + $0x18] sm:$0xf]
  %v944 = vsel %vm65, %v942, 0
  %946 = vmatprep.subr.mxu0 0.0
  %947 = vmatpush1.msra.mxu0 %v939
  %948 = vmatprep.subr.mxu0 0.0
  %949 = vmatpush1.msra.mxu0 %v940
  %950 = vmatprep.subr.mxu0 0.0
  %951 = vmatpush1.msra.mxu0 %v941
  %952 = vmatprep.subr.mxu0 0.0
  %953 = vmatpush1.msra.mxu0 %v944
  %954 = vmatprep.subr.mxu0 0.0
  %955 = vmatpush1.msra.mxu0 0.0
  %956 = vmatprep.subr.mxu0 0.0
  %957 = vmatpush1.msra.mxu0 0.0
  %958 = vmatprep.subr.mxu0 0.0
  %959 = vmatpush1.msra.mxu0 0.0
  %960 = vmatprep.subr.mxu0 0.0
  %961 = vmatpush1.msra.mxu0 0.0
  %962 = vmatprep.subr.mxu0 0.0
  %963 = vmatpush1.msra.mxu0 0.0
  %964 = vmatprep.subr.mxu0 0.0
  %965 = vmatpush1.msra.mxu0 0.0
  %966 = vmatprep.subr.mxu0 0.0
  %967 = vmatpush1.msra.mxu0 0.0
  %968 = vmatprep.subr.mxu0 0.0
  %969 = vmatpush1.msra.mxu0 0.0
  %970 = vmatprep.subr.mxu0 0.0
  %971 = vmatpush1.msra.mxu0 0.0
  %972 = vmatprep.subr.mxu0 0.0
  %973 = vmatpush1.msra.mxu0 0.0
  %974 = vmatprep.subr.mxu0 0.0
  %975 = vmatpush1.msra.mxu0 0.0
  %976 = vmatprep.subr.mxu0 0.0
  %977 = vmatpush1.msra.mxu0 0.0
  %978 = vmatprep.subr.mxu0 0.0
  %979 = vmatpush1.msra.mxu0 0.0
  %980 = vmatprep.subr.mxu0 0.0
  %981 = vmatpush1.msra.mxu0 0.0
  %982 = vmatprep.subr.mxu0 0.0
  %983 = vmatpush1.msra.mxu0 0.0
  %984 = vmatprep.subr.mxu0 0.0
  %985 = vmatpush1.msra.mxu0 0.0
  %986 = vmatprep.subr.mxu0 0.0
  %987 = vmatpush1.msra.mxu0 0.0
  %988 = vmatprep.subr.mxu0 0.0
  %989 = vmatpush1.msra.mxu0 0.0
  %990 = vmatprep.subr.mxu0 0.0
  %991 = vmatpush1.msra.mxu0 0.0
  %992 = vmatprep.subr.mxu0 0.0
  %993 = vmatpush1.msra.mxu0 0.0
  %994 = vmatprep.subr.mxu0 0.0
  %995 = vmatpush1.msra.mxu0 0.0
  %996 = vmatprep.subr.mxu0 0.0
  %997 = vmatpush1.msra.mxu0 0.0
  %998 = vmatprep.subr.mxu0 0.0
  %999 = vmatpush1.msra.mxu0 0.0
  %1000 = vmatprep.subr.mxu0 0.0
  %1001 = vmatpush1.msra.mxu0 0.0
  %1002 = vmatprep.subr.mxu0 0.0
  %1003 = vmatpush1.msra.mxu0 0.0
  %1004 = vmatprep.subr.mxu0 0.0
  %1005 = vmatpush1.msra.mxu0 0.0
  %1006 = vmatprep.subr.mxu0 0.0
  %1007 = vmatpush1.msra.mxu0 0.0
  %1008 = vmatprep.subr.mxu0 0.0
  %1009 = vmatpush1.msra.mxu0 0.0
  %1010 = vmatprep.mubr.f32.mxu0 0.0
  %1011 = vmatmul.mubr.f32.gmra.mrb[0].mxu0 %v54
  %v1012 = vpop.f32.mrb[0].mxu0
  %v1013 = vadd.f32 0.0, %v1012
  %v1014 = vpop.f32.mrb[0].mxu0
  %1015 = vmatprep.mubr.f32.mxu0 0.0
  %1016 = vmatmul.mubr.f32.gmra.mrb[0].mxu0 %v57
  %v1017 = vpop.f32.mrb[0].mxu0
  %v1018 = vadd.f32 0.0, %v1017
  %v1019 = vpop.f32.mrb[0].mxu0
  %1020 = vmatprep.mubr.f32.mxu0 0.0
  %1021 = vmatmul.mubr.f32.gmra.mrb[0].mxu0 %v60
  %v1022 = vpop.f32.mrb[0].mxu0
  %v1023 = vadd.f32 0.0, %v1022
  %v1024 = vpop.f32.mrb[0].mxu0
  %1025 = vmatprep.mubr.f32.mxu0 0.0
  %1026 = vmatmul.mubr.f32.gmra.mrb[0].mxu0 %v63
  %v1027 = vpop.f32.mrb[0].mxu0
  %v1028 = vadd.f32 0.0, %v1027
  %v1029 = vpop.f32.mrb[0].mxu0
  %1030 = vdwg.mxu0
  %s1031 = scalar_lea.vmem %s1, 336
  %v1032 = vld [vmem:[%s1031] sm:$0xff]
  %v1033 = vld [vmem:[%s1031 + $0x8] sm:$0xff]
  %v1034 = vld [vmem:[%s1031 + $0x10] sm:$0xff]
  %v1035 = vld [vmem:[%s1031 + $0x18] sm:$0xff]
  %v1036 = vld [vmem:[%s1031 + $0x20] sm:$0xff]
  %v1037 = vld [vmem:[%s1031 + $0x28] sm:$0xff]
  %v1038 = vld [vmem:[%s1031 + $0x30] sm:$0xff]
  %v1039 = vld [vmem:[%s1031 + $0x38] sm:$0xff]
  %v1040 = vld [vmem:[%s1031 + $0x40] sm:$0xff]
  %v1041 = vld [vmem:[%s1031 + $0x48] sm:$0xff]
  %v1042 = vld [vmem:[%s1031 + $0x50] sm:$0xff]
  %v1043 = vld [vmem:[%s1031 + $0x58] sm:$0xff]
  %v1044 = vld [vmem:[%s1031 + $0x60] sm:$0xff]
  %v1045 = vld [vmem:[%s1031 + $0x68] sm:$0xff]
  %v1047 = vsel %vm52, %v1032, 0
  %v1050 = vsel %vm52, %v1033, 0
  %v1053 = vsel %vm52, %v1034, 0
  %v1056 = vsel %vm52, %v1035, 0
  %v1059 = vsel %vm52, %v1036, 0
  %v1062 = vsel %vm52, %v1037, 0
  %v1065 = vsel %vm52, %v1038, 0
  %v1068 = vsel %vm52, %v1039, 0
  %v1071 = vsel %vm52, %v1040, 0
  %v1074 = vsel %vm52, %v1041, 0
  %v1077 = vsel %vm52, %v1042, 0
  %v1080 = vsel %vm52, %v1043, 0
  %v1083 = vsel %vm52, %v1044, 0
  %v1086 = vsel %vm52, %v1045, 0
  %v1089 = vsel %vm65, %v1028, 0
  %1091 = vmatprep.subr.mxu0 0.0
  %1092 = vmatpush1.msra.mxu0 %v1013
  %1093 = vmatprep.subr.mxu0 0.0
  %1094 = vmatpush1.msra.mxu0 %v1018
  %1095 = vmatprep.subr.mxu0 0.0
  %1096 = vmatpush1.msra.mxu0 %v1023
  %1097 = vmatprep.subr.mxu0 0.0
  %1098 = vmatpush1.msra.mxu0 %v1089
  %1099 = vmatprep.subr.mxu0 0.0
  %1100 = vmatpush1.msra.mxu0 0.0
  %1101 = vmatprep.subr.mxu0 0.0
  %1102 = vmatpush1.msra.mxu0 0.0
  %1103 = vmatprep.subr.mxu0 0.0
  %1104 = vmatpush1.msra.mxu0 0.0
  %1105 = vmatprep.subr.mxu0 0.0
  %1106 = vmatpush1.msra.mxu0 0.0
  %1107 = vmatprep.subr.mxu0 0.0
  %1108 = vmatpush1.msra.mxu0 0.0
  %1109 = vmatprep.subr.mxu0 0.0
  %1110 = vmatpush1.msra.mxu0 0.0
  %1111 = vmatprep.subr.mxu0 0.0
  %1112 = vmatpush1.msra.mxu0 0.0
  %1113 = vmatprep.subr.mxu0 0.0
  %1114 = vmatpush1.msra.mxu0 0.0
  %1115 = vmatprep.subr.mxu0 0.0
  %1116 = vmatpush1.msra.mxu0 0.0
  %1117 = vmatprep.subr.mxu0 0.0
  %1118 = vmatpush1.msra.mxu0 0.0
  %1119 = vmatprep.subr.mxu0 0.0
  %1120 = vmatpush1.msra.mxu0 0.0
  %1121 = vmatprep.subr.mxu0 0.0
  %1122 = vmatpush1.msra.mxu0 0.0
  %1123 = vmatprep.subr.mxu0 0.0
  %1124 = vmatpush1.msra.mxu0 0.0
  %1125 = vmatprep.subr.mxu0 0.0
  %1126 = vmatpush1.msra.mxu0 0.0
  %1127 = vmatprep.subr.mxu0 0.0
  %1128 = vmatpush1.msra.mxu0 0.0
  %1129 = vmatprep.subr.mxu0 0.0
  %1130 = vmatpush1.msra.mxu0 0.0
  %1131 = vmatprep.subr.mxu0 0.0
  %1132 = vmatpush1.msra.mxu0 0.0
  %1133 = vmatprep.subr.mxu0 0.0
  %1134 = vmatpush1.msra.mxu0 0.0
  %1135 = vmatprep.subr.mxu0 0.0
  %1136 = vmatpush1.msra.mxu0 0.0
  %1137 = vmatprep.subr.mxu0 0.0
  %1138 = vmatpush1.msra.mxu0 0.0
  %1139 = vmatprep.subr.mxu0 0.0
  %1140 = vmatpush1.msra.mxu0 0.0
  %1141 = vmatprep.subr.mxu0 0.0
  %1142 = vmatpush1.msra.mxu0 0.0
  %1143 = vmatprep.subr.mxu0 0.0
  %1144 = vmatpush1.msra.mxu0 0.0
  %1145 = vmatprep.subr.mxu0 0.0
  %1146 = vmatpush1.msra.mxu0 0.0
  %1147 = vmatprep.subr.mxu0 0.0
  %1148 = vmatpush1.msra.mxu0 0.0
  %1149 = vmatprep.subr.mxu0 0.0
  %1150 = vmatpush1.msra.mxu0 0.0
  %1151 = vmatprep.subr.mxu0 0.0
  %1152 = vmatpush1.msra.mxu0 0.0
  %1153 = vmatprep.subr.mxu0 0.0
  %1154 = vmatpush1.msra.mxu0 0.0
  %1155 = vmatprep.mubr.f32.mxu0 0.0
  %1156 = vmatmul.mubr.f32.gmra.mrb[0].mxu0 %v1047
  %v1157 = vpop.f32.mrb[0].mxu0
  %v1158 = vadd.f32 0.0, %v1157
  %v1159 = vpop.f32.mrb[0].mxu0
  %1160 = vmatprep.mubr.f32.mxu0 0.0
  %1161 = vmatmul.mubr.f32.gmra.mrb[0].mxu0 %v1050
  %v1162 = vpop.f32.mrb[0].mxu0
  %v1163 = vadd.f32 0.0, %v1162
  %v1164 = vpop.f32.mrb[0].mxu0
  %1165 = vmatprep.mubr.f32.mxu0 0.0
  %1166 = vmatmul.mubr.f32.gmra.mrb[0].mxu0 %v1053
  %v1167 = vpop.f32.mrb[0].mxu0
  %v1168 = vadd.f32 0.0, %v1167
  %v1169 = vpop.f32.mrb[0].mxu0
  %1170 = vmatprep.mubr.f32.mxu0 0.0
  %1171 = vmatmul.mubr.f32.gmra.mrb[0].mxu0 %v1056
  %v1172 = vpop.f32.mrb[0].mxu0
  %v1173 = vadd.f32 0.0, %v1172
  %v1174 = vpop.f32.mrb[0].mxu0
  %1175 = vmatprep.mubr.f32.mxu0 0.0
  %1176 = vmatmul.mubr.f32.gmra.mrb[0].mxu0 %v1059
  %v1177 = vpop.f32.mrb[0].mxu0
  %v1178 = vadd.f32 0.0, %v1177
  %v1179 = vpop.f32.mrb[0].mxu0
  %1180 = vmatprep.mubr.f32.mxu0 0.0
  %1181 = vmatmul.mubr.f32.gmra.mrb[0].mxu0 %v1062
  %v1182 = vpop.f32.mrb[0].mxu0
  %v1183 = vadd.f32 0.0, %v1182
  %v1184 = vpop.f32.mrb[0].mxu0
  %1185 = vmatprep.mubr.f32.mxu0 0.0
  %1186 = vmatmul.mubr.f32.gmra.mrb[0].mxu0 %v1065
  %v1187 = vpop.f32.mrb[0].mxu0
  %v1188 = vadd.f32 0.0, %v1187
  %v1189 = vpop.f32.mrb[0].mxu0
  %1190 = vmatprep.mubr.f32.mxu0 0.0
  %1191 = vmatmul.mubr.f32.gmra.mrb[0].mxu0 %v1068
  %v1192 = vpop.f32.mrb[0].mxu0
  %v1193 = vadd.f32 0.0, %v1192
  %v1194 = vpop.f32.mrb[0].mxu0
  %1195 = vmatprep.mubr.f32.mxu0 0.0
  %1196 = vmatmul.mubr.f32.gmra.mrb[0].mxu0 %v1071
  %v1197 = vpop.f32.mrb[0].mxu0
  %v1198 = vadd.f32 0.0, %v1197
  %v1199 = vpop.f32.mrb[0].mxu0
  %1200 = vmatprep.mubr.f32.mxu0 0.0
  %1201 = vmatmul.mubr.f32.gmra.mrb[0].mxu0 %v1074
  %v1202 = vpop.f32.mrb[0].mxu0
  %v1203 = vadd.f32 0.0, %v1202
  %v1204 = vpop.f32.mrb[0].mxu0
  %1205 = vmatprep.mubr.f32.mxu0 0.0
  %1206 = vmatmul.mubr.f32.gmra.mrb[0].mxu0 %v1077
  %v1207 = vpop.f32.mrb[0].mxu0
  %v1208 = vadd.f32 0.0, %v1207
  %v1209 = vpop.f32.mrb[0].mxu0
  %1210 = vmatprep.mubr.f32.mxu0 0.0
  %1211 = vmatmul.mubr.f32.gmra.mrb[0].mxu0 %v1080
  %v1212 = vpop.f32.mrb[0].mxu0
  %v1213 = vadd.f32 0.0, %v1212
  %v1214 = vpop.f32.mrb[0].mxu0
  %1215 = vmatprep.mubr.f32.mxu0 0.0
  %1216 = vmatmul.mubr.f32.gmra.mrb[0].mxu0 %v1083
  %v1217 = vpop.f32.mrb[0].mxu0
  %v1218 = vadd.f32 0.0, %v1217
  %v1219 = vpop.f32.mrb[0].mxu0
  %1220 = vmatprep.mubr.f32.mxu0 0.0
  %1221 = vmatmul.mubr.f32.gmra.mrb[0].mxu0 %v1086
  %v1222 = vpop.f32.mrb[0].mxu0
  %v1223 = vadd.f32 0.0, %v1222
  %v1224 = vpop.f32.mrb[0].mxu0
  %1225 = vdwg.mxu0
  %v1226 = vadd.f32 %v924, %v1158
  %v1227 = vadd.f32 %v925, %v1163
  %v1228 = vadd.f32 %v926, %v1168
  %v1229 = vadd.f32 %v927, %v1173
  %v1230 = vadd.f32 %v928, %v1178
  %v1231 = vadd.f32 %v929, %v1183
  %v1232 = vadd.f32 %v930, %v1188
  %v1233 = vadd.f32 %v931, %v1193
  %v1234 = vadd.f32 %v932, %v1198
  %v1235 = vadd.f32 %v933, %v1203
  %v1236 = vadd.f32 %v934, %v1208
  %v1237 = vadd.f32 %v935, %v1213
  %v1238 = vadd.f32 %v936, %v1218
  %v1239 = vadd.f32 %v937, %v1223
  %s1240 = scalar_lea.vmem %s2, 128
  %v1241 = vld [vmem:[%s1240] sm:$0xff]
  %v1242 = vld [vmem:[%s1240 + $0x8] sm:$0xff]
  %v1243 = vld [vmem:[%s1240 + $0x10] sm:$0xff]
  %v1244 = vld [vmem:[%s1240 + $0x18] sm:$0xf]
  %v1246 = vsel %vm65, %v1244, 0
  %1248 = vmatprep.subr.mxu0 0.0
  %1249 = vmatpush1.msra.mxu0 %v1241
  %1250 = vmatprep.subr.mxu0 0.0
  %1251 = vmatpush1.msra.mxu0 %v1242
  %1252 = vmatprep.subr.mxu0 0.0
  %1253 = vmatpush1.msra.mxu0 %v1243
  %1254 = vmatprep.subr.mxu0 0.0
  %1255 = vmatpush1.msra.mxu0 %v1246
  %1256 = vmatprep.subr.mxu0 0.0
  %1257 = vmatpush1.msra.mxu0 0.0
  %1258 = vmatprep.subr.mxu0 0.0
  %1259 = vmatpush1.msra.mxu0 0.0
  %1260 = vmatprep.subr.mxu0 0.0
  %1261 = vmatpush1.msra.mxu0 0.0
  %1262 = vmatprep.subr.mxu0 0.0
  %1263 = vmatpush1.msra.mxu0 0.0
  %1264 = vmatprep.subr.mxu0 0.0
  %1265 = vmatpush1.msra.mxu0 0.0
  %1266 = vmatprep.subr.mxu0 0.0
  %1267 = vmatpush1.msra.mxu0 0.0
  %1268 = vmatprep.subr.mxu0 0.0
  %1269 = vmatpush1.msra.mxu0 0.0
  %1270 = vmatprep.subr.mxu0 0.0
  %1271 = vmatpush1.msra.mxu0 0.0
  %1272 = vmatprep.subr.mxu0 0.0
  %1273 = vmatpush1.msra.mxu0 0.0
  %1274 = vmatprep.subr.mxu0 0.0
  %1275 = vmatpush1.msra.mxu0 0.0
  %1276 = vmatprep.subr.mxu0 0.0
  %1277 = vmatpush1.msra.mxu0 0.0
  %1278 = vmatprep.subr.mxu0 0.0
  %1279 = vmatpush1.msra.mxu0 0.0
  %1280 = vmatprep.subr.mxu0 0.0
  %1281 = vmatpush1.msra.mxu0 0.0
  %1282 = vmatprep.subr.mxu0 0.0
  %1283 = vmatpush1.msra.mxu0 0.0
  %1284 = vmatprep.subr.mxu0 0.0
  %1285 = vmatpush1.msra.mxu0 0.0
  %1286 = vmatprep.subr.mxu0 0.0
  %1287 = vmatpush1.msra.mxu0 0.0
  %1288 = vmatprep.subr.mxu0 0.0
  %1289 = vmatpush1.msra.mxu0 0.0
  %1290 = vmatprep.subr.mxu0 0.0
  %1291 = vmatpush1.msra.mxu0 0.0
  %1292 = vmatprep.subr.mxu0 0.0
  %1293 = vmatpush1.msra.mxu0 0.0
  %1294 = vmatprep.subr.mxu0 0.0
  %1295 = vmatpush1.msra.mxu0 0.0
  %1296 = vmatprep.subr.mxu0 0.0
  %1297 = vmatpush1.msra.mxu0 0.0
  %1298 = vmatprep.subr.mxu0 0.0
  %1299 = vmatpush1.msra.mxu0 0.0
  %1300 = vmatprep.subr.mxu0 0.0
  %1301 = vmatpush1.msra.mxu0 0.0
  %1302 = vmatprep.subr.mxu0 0.0
  %1303 = vmatpush1.msra.mxu0 0.0
  %1304 = vmatprep.subr.mxu0 0.0
  %1305 = vmatpush1.msra.mxu0 0.0
  %1306 = vmatprep.subr.mxu0 0.0
  %1307 = vmatpush1.msra.mxu0 0.0
  %1308 = vmatprep.subr.mxu0 0.0
  %1309 = vmatpush1.msra.mxu0 0.0
  %1310 = vmatprep.subr.mxu0 0.0
  %1311 = vmatpush1.msra.mxu0 0.0
  %1312 = vmatprep.mubr.f32.mxu0 0.0
  %1313 = vmatmul.mubr.f32.gmra.mrb[0].mxu0 %v54
  %v1314 = vpop.f32.mrb[0].mxu0
  %v1315 = vadd.f32 0.0, %v1314
  %v1316 = vpop.f32.mrb[0].mxu0
  %1317 = vmatprep.mubr.f32.mxu0 0.0
  %1318 = vmatmul.mubr.f32.gmra.mrb[0].mxu0 %v57
  %v1319 = vpop.f32.mrb[0].mxu0
  %v1320 = vadd.f32 0.0, %v1319
  %v1321 = vpop.f32.mrb[0].mxu0
  %1322 = vmatprep.mubr.f32.mxu0 0.0
  %1323 = vmatmul.mubr.f32.gmra.mrb[0].mxu0 %v60
  %v1324 = vpop.f32.mrb[0].mxu0
  %v1325 = vadd.f32 0.0, %v1324
  %v1326 = vpop.f32.mrb[0].mxu0
  %1327 = vmatprep.mubr.f32.mxu0 0.0
  %1328 = vmatmul.mubr.f32.gmra.mrb[0].mxu0 %v63
  %v1329 = vpop.f32.mrb[0].mxu0
  %v1330 = vadd.f32 0.0, %v1329
  %v1331 = vpop.f32.mrb[0].mxu0
  %1332 = vdwg.mxu0
  %s1333 = scalar_lea.vmem %s1, 448
  %v1334 = vld [vmem:[%s1333] sm:$0xff]
  %v1335 = vld [vmem:[%s1333 + $0x8] sm:$0xff]
  %v1336 = vld [vmem:[%s1333 + $0x10] sm:$0xff]
  %v1337 = vld [vmem:[%s1333 + $0x18] sm:$0xff]
  %v1338 = vld [vmem:[%s1333 + $0x20] sm:$0xff]
  %v1339 = vld [vmem:[%s1333 + $0x28] sm:$0xff]
  %v1340 = vld [vmem:[%s1333 + $0x30] sm:$0xff]
  %v1341 = vld [vmem:[%s1333 + $0x38] sm:$0xff]
  %v1342 = vld [vmem:[%s1333 + $0x40] sm:$0xff]
  %v1343 = vld [vmem:[%s1333 + $0x48] sm:$0xff]
  %v1344 = vld [vmem:[%s1333 + $0x50] sm:$0xff]
  %v1345 = vld [vmem:[%s1333 + $0x58] sm:$0xff]
  %v1346 = vld [vmem:[%s1333 + $0x60] sm:$0xff]
  %v1347 = vld [vmem:[%s1333 + $0x68] sm:$0xff]
  %v1349 = vsel %vm52, %v1334, 0
  %v1352 = vsel %vm52, %v1335, 0
  %v1355 = vsel %vm52, %v1336, 0
  %v1358 = vsel %vm52, %v1337, 0
  %v1361 = vsel %vm52, %v1338, 0
  %v1364 = vsel %vm52, %v1339, 0
  %v1367 = vsel %vm52, %v1340, 0
  %v1370 = vsel %vm52, %v1341, 0
  %v1373 = vsel %vm52, %v1342, 0
  %v1376 = vsel %vm52, %v1343, 0
  %v1379 = vsel %vm52, %v1344, 0
  %v1382 = vsel %vm52, %v1345, 0
  %v1385 = vsel %vm52, %v1346, 0
  %v1388 = vsel %vm52, %v1347, 0
  %v1391 = vsel %vm65, %v1330, 0
  %1393 = vmatprep.subr.mxu0 0.0
  %1394 = vmatpush1.msra.mxu0 %v1315
  %1395 = vmatprep.subr.mxu0 0.0
  %1396 = vmatpush1.msra.mxu0 %v1320
  %1397 = vmatprep.subr.mxu0 0.0
  %1398 = vmatpush1.msra.mxu0 %v1325
  %1399 = vmatprep.subr.mxu0 0.0
  %1400 = vmatpush1.msra.mxu0 %v1391
  %1401 = vmatprep.subr.mxu0 0.0
  %1402 = vmatpush1.msra.mxu0 0.0
  %1403 = vmatprep.subr.mxu0 0.0
  %1404 = vmatpush1.msra.mxu0 0.0
  %1405 = vmatprep.subr.mxu0 0.0
  %1406 = vmatpush1.msra.mxu0 0.0
  %1407 = vmatprep.subr.mxu0 0.0
  %1408 = vmatpush1.msra.mxu0 0.0
  %1409 = vmatprep.subr.mxu0 0.0
  %1410 = vmatpush1.msra.mxu0 0.0
  %1411 = vmatprep.subr.mxu0 0.0
  %1412 = vmatpush1.msra.mxu0 0.0
  %1413 = vmatprep.subr.mxu0 0.0
  %1414 = vmatpush1.msra.mxu0 0.0
  %1415 = vmatprep.subr.mxu0 0.0
  %1416 = vmatpush1.msra.mxu0 0.0
  %1417 = vmatprep.subr.mxu0 0.0
  %1418 = vmatpush1.msra.mxu0 0.0
  %1419 = vmatprep.subr.mxu0 0.0
  %1420 = vmatpush1.msra.mxu0 0.0
  %1421 = vmatprep.subr.mxu0 0.0
  %1422 = vmatpush1.msra.mxu0 0.0
  %1423 = vmatprep.subr.mxu0 0.0
  %1424 = vmatpush1.msra.mxu0 0.0
  %1425 = vmatprep.subr.mxu0 0.0
  %1426 = vmatpush1.msra.mxu0 0.0
  %1427 = vmatprep.subr.mxu0 0.0
  %1428 = vmatpush1.msra.mxu0 0.0
  %1429 = vmatprep.subr.mxu0 0.0
  %1430 = vmatpush1.msra.mxu0 0.0
  %1431 = vmatprep.subr.mxu0 0.0
  %1432 = vmatpush1.msra.mxu0 0.0
  %1433 = vmatprep.subr.mxu0 0.0
  %1434 = vmatpush1.msra.mxu0 0.0
  %1435 = vmatprep.subr.mxu0 0.0
  %1436 = vmatpush1.msra.mxu0 0.0
  %1437 = vmatprep.subr.mxu0 0.0
  %1438 = vmatpush1.msra.mxu0 0.0
  %1439 = vmatprep.subr.mxu0 0.0
  %1440 = vmatpush1.msra.mxu0 0.0
  %1441 = vmatprep.subr.mxu0 0.0
  %1442 = vmatpush1.msra.mxu0 0.0
  %1443 = vmatprep.subr.mxu0 0.0
  %1444 = vmatpush1.msra.mxu0 0.0
  %1445 = vmatprep.subr.mxu0 0.0
  %1446 = vmatpush1.msra.mxu0 0.0
  %1447 = vmatprep.subr.mxu0 0.0
  %1448 = vmatpush1.msra.mxu0 0.0
  %1449 = vmatprep.subr.mxu0 0.0
  %1450 = vmatpush1.msra.mxu0 0.0
  %1451 = vmatprep.subr.mxu0 0.0
  %1452 = vmatpush1.msra.mxu0 0.0
  %1453 = vmatprep.subr.mxu0 0.0
  %1454 = vmatpush1.msra.mxu0 0.0
  %1455 = vmatprep.subr.mxu0 0.0
  %1456 = vmatpush1.msra.mxu0 0.0
  %1457 = vmatprep.mubr.f32.mxu0 0.0
  %1458 = vmatmul.mubr.f32.gmra.mrb[0].mxu0 %v1349
  %v1459 = vpop.f32.mrb[0].mxu0
  %v1460 = vadd.f32 0.0, %v1459
  %v1461 = vpop.f32.mrb[0].mxu0
  %1462 = vmatprep.mubr.f32.mxu0 0.0
  %1463 = vmatmul.mubr.f32.gmra.mrb[0].mxu0 %v1352
  %v1464 = vpop.f32.mrb[0].mxu0
  %v1465 = vadd.f32 0.0, %v1464
  %v1466 = vpop.f32.mrb[0].mxu0
  %1467 = vmatprep.mubr.f32.mxu0 0.0
  %1468 = vmatmul.mubr.f32.gmra.mrb[0].mxu0 %v1355
  %v1469 = vpop.f32.mrb[0].mxu0
  %v1470 = vadd.f32 0.0, %v1469
  %v1471 = vpop.f32.mrb[0].mxu0
  %1472 = vmatprep.mubr.f32.mxu0 0.0
  %1473 = vmatmul.mubr.f32.gmra.mrb[0].mxu0 %v1358
  %v1474 = vpop.f32.mrb[0].mxu0
  %v1475 = vadd.f32 0.0, %v1474
  %v1476 = vpop.f32.mrb[0].mxu0
  %1477 = vmatprep.mubr.f32.mxu0 0.0
  %1478 = vmatmul.mubr.f32.gmra.mrb[0].mxu0 %v1361
  %v1479 = vpop.f32.mrb[0].mxu0
  %v1480 = vadd.f32 0.0, %v1479
  %v1481 = vpop.f32.mrb[0].mxu0
  %1482 = vmatprep.mubr.f32.mxu0 0.0
  %1483 = vmatmul.mubr.f32.gmra.mrb[0].mxu0 %v1364
  %v1484 = vpop.f32.mrb[0].mxu0
  %v1485 = vadd.f32 0.0, %v1484
  %v1486 = vpop.f32.mrb[0].mxu0
  %1487 = vmatprep.mubr.f32.mxu0 0.0
  %1488 = vmatmul.mubr.f32.gmra.mrb[0].mxu0 %v1367
  %v1489 = vpop.f32.mrb[0].mxu0
  %v1490 = vadd.f32 0.0, %v1489
  %v1491 = vpop.f32.mrb[0].mxu0
  %1492 = vmatprep.mubr.f32.mxu0 0.0
  %1493 = vmatmul.mubr.f32.gmra.mrb[0].mxu0 %v1370
  %v1494 = vpop.f32.mrb[0].mxu0
  %v1495 = vadd.f32 0.0, %v1494
  %v1496 = vpop.f32.mrb[0].mxu0
  %1497 = vmatprep.mubr.f32.mxu0 0.0
  %1498 = vmatmul.mubr.f32.gmra.mrb[0].mxu0 %v1373
  %v1499 = vpop.f32.mrb[0].mxu0
  %v1500 = vadd.f32 0.0, %v1499
  %v1501 = vpop.f32.mrb[0].mxu0
  %1502 = vmatprep.mubr.f32.mxu0 0.0
  %1503 = vmatmul.mubr.f32.gmra.mrb[0].mxu0 %v1376
  %v1504 = vpop.f32.mrb[0].mxu0
  %v1505 = vadd.f32 0.0, %v1504
  %v1506 = vpop.f32.mrb[0].mxu0
  %1507 = vmatprep.mubr.f32.mxu0 0.0
  %1508 = vmatmul.mubr.f32.gmra.mrb[0].mxu0 %v1379
  %v1509 = vpop.f32.mrb[0].mxu0
  %v1510 = vadd.f32 0.0, %v1509
  %v1511 = vpop.f32.mrb[0].mxu0
  %1512 = vmatprep.mubr.f32.mxu0 0.0
  %1513 = vmatmul.mubr.f32.gmra.mrb[0].mxu0 %v1382
  %v1514 = vpop.f32.mrb[0].mxu0
  %v1515 = vadd.f32 0.0, %v1514
  %v1516 = vpop.f32.mrb[0].mxu0
  %1517 = vmatprep.mubr.f32.mxu0 0.0
  %1518 = vmatmul.mubr.f32.gmra.mrb[0].mxu0 %v1385
  %v1519 = vpop.f32.mrb[0].mxu0
  %v1520 = vadd.f32 0.0, %v1519
  %v1521 = vpop.f32.mrb[0].mxu0
  %1522 = vmatprep.mubr.f32.mxu0 0.0
  %1523 = vmatmul.mubr.f32.gmra.mrb[0].mxu0 %v1388
  %v1524 = vpop.f32.mrb[0].mxu0
  %v1525 = vadd.f32 0.0, %v1524
  %v1526 = vpop.f32.mrb[0].mxu0
  %1527 = vdwg.mxu0
  %v1528 = vadd.f32 %v1226, %v1460
  %v1529 = vadd.f32 %v1227, %v1465
  %v1530 = vadd.f32 %v1228, %v1470
  %v1531 = vadd.f32 %v1229, %v1475
  %v1532 = vadd.f32 %v1230, %v1480
  %v1533 = vadd.f32 %v1231, %v1485
  %v1534 = vadd.f32 %v1232, %v1490
  %v1535 = vadd.f32 %v1233, %v1495
  %v1536 = vadd.f32 %v1234, %v1500
  %v1537 = vadd.f32 %v1235, %v1505
  %v1538 = vadd.f32 %v1236, %v1510
  %v1539 = vadd.f32 %v1237, %v1515
  %v1540 = vadd.f32 %v1238, %v1520
  %v1541 = vadd.f32 %v1239, %v1525
  %v1542 = vld [vmem:[%s3] sm:$0xff]
  %v1543 = vld [vmem:[%s3 + $0x8] sm:$0xff]
  %v1544 = vld [vmem:[%s3 + $0x10] sm:$0xff]
  %v1545 = vld [vmem:[%s3 + $0x18] sm:$0xff]
  %v1546 = vld [vmem:[%s3 + $0x20] sm:$0xff]
  %v1547 = vld [vmem:[%s3 + $0x28] sm:$0xff]
  %v1548 = vld [vmem:[%s3 + $0x30] sm:$0xff]
  %v1549 = vld [vmem:[%s3 + $0x38] sm:$0xff]
  %v1550 = vld [vmem:[%s3 + $0x40] sm:$0xff]
  %v1551 = vld [vmem:[%s3 + $0x48] sm:$0xff]
  %v1552 = vld [vmem:[%s3 + $0x50] sm:$0xff]
  %v1553 = vld [vmem:[%s3 + $0x58] sm:$0xff]
  %v1554 = vld [vmem:[%s3 + $0x60] sm:$0xff]
  %v1555 = vld [vmem:[%s3 + $0x68] sm:$0xff]
  %1557 = vset.pattern.permute.xlu0 0
  %1558 = vperm.xlu0 %1557, %v1542
  %v1559 = vpop.permute.xlu0 %1558
  %1562 = vset.pattern.permute.xlu0 0
  %1563 = vperm.xlu0 %1562, %v1543
  %v1564 = vpop.permute.xlu0 %1563
  %1567 = vset.pattern.permute.xlu0 0
  %1568 = vperm.xlu0 %1567, %v1544
  %v1569 = vpop.permute.xlu0 %1568
  %1572 = vset.pattern.permute.xlu0 0
  %1573 = vperm.xlu0 %1572, %v1545
  %v1574 = vpop.permute.xlu0 %1573
  %1577 = vset.pattern.permute.xlu0 0
  %1578 = vperm.xlu0 %1577, %v1546
  %v1579 = vpop.permute.xlu0 %1578
  %1582 = vset.pattern.permute.xlu0 0
  %1583 = vperm.xlu0 %1582, %v1547
  %v1584 = vpop.permute.xlu0 %1583
  %1587 = vset.pattern.permute.xlu0 0
  %1588 = vperm.xlu0 %1587, %v1548
  %v1589 = vpop.permute.xlu0 %1588
  %1592 = vset.pattern.permute.xlu0 0
  %1593 = vperm.xlu0 %1592, %v1549
  %v1594 = vpop.permute.xlu0 %1593
  %1597 = vset.pattern.permute.xlu0 0
  %1598 = vperm.xlu0 %1597, %v1550
  %v1599 = vpop.permute.xlu0 %1598
  %1602 = vset.pattern.permute.xlu0 0
  %1603 = vperm.xlu0 %1602, %v1551
  %v1604 = vpop.permute.xlu0 %1603
  %1607 = vset.pattern.permute.xlu0 0
  %1608 = vperm.xlu0 %1607, %v1552
  %v1609 = vpop.permute.xlu0 %1608
  %1612 = vset.pattern.permute.xlu0 0
  %1613 = vperm.xlu0 %1612, %v1553
  %v1614 = vpop.permute.xlu0 %1613
  %1617 = vset.pattern.permute.xlu0 0
  %1618 = vperm.xlu0 %1617, %v1554
  %v1619 = vpop.permute.xlu0 %1618
  %1622 = vset.pattern.permute.xlu0 0
  %1623 = vperm.xlu0 %1622, %v1555
  %v1624 = vpop.permute.xlu0 %1623
  %v1626 = vadd.f32 %v1528, %v1559
  %v1627 = vadd.f32 %v1529, %v1564
  %v1628 = vadd.f32 %v1530, %v1569
  %v1629 = vadd.f32 %v1531, %v1574
  %v1630 = vadd.f32 %v1532, %v1579
  %v1631 = vadd.f32 %v1533, %v1584
  %v1632 = vadd.f32 %v1534, %v1589
  %v1633 = vadd.f32 %v1535, %v1594
  %v1634 = vadd.f32 %v1536, %v1599
  %v1635 = vadd.f32 %v1537, %v1604
  %v1636 = vadd.f32 %v1538, %v1609
  %v1637 = vadd.f32 %v1539, %v1614
  %v1638 = vadd.f32 %v1540, %v1619
  %v1639 = vadd.f32 %v1541, %v1624
  %v1640 = vmax.f32 %v1626, 0.0
  %v1641 = vmax.f32 %v1627, 0.0
  %v1642 = vmax.f32 %v1628, 0.0
  %v1643 = vmax.f32 %v1629, 0.0
  %v1644 = vmax.f32 %v1630, 0.0
  %v1645 = vmax.f32 %v1631, 0.0
  %v1646 = vmax.f32 %v1632, 0.0
  %v1647 = vmax.f32 %v1633, 0.0
  %v1648 = vmax.f32 %v1634, 0.0
  %v1649 = vmax.f32 %v1635, 0.0
  %v1650 = vmax.f32 %v1636, 0.0
  %v1651 = vmax.f32 %v1637, 0.0
  %v1652 = vmax.f32 %v1638, 0.0
  %v1653 = vmax.f32 %v1639, 0.0
  %v1654 = vlaneseq
  %v1655 = vshrl.u32 %v1654, 7
  %v1656 = vadd.s32 %v1655, 8
  %v1657 = vadd.s32 %v1655, 16
  %v1658 = vadd.s32 %v1655, 24
  %v1659 = vadd.s32 %v1655, 32
  %v1660 = vadd.s32 %v1655, 40
  %v1661 = vadd.s32 %v1655, 48
  %v1662 = vlaneseq
  %v1663 = vand.u32 %v1662, 127
  %v1664 = vmul.u32 %v1655, 2
  %v1665 = vmul.u32 %v1656, 2
  %v1666 = vmul.u32 %v1657, 2
  %v1667 = vmul.u32 %v1658, 2
  %v1668 = vmul.u32 %v1659, 2
  %v1669 = vmul.u32 %v1660, 2
  %v1670 = vmul.u32 %v1661, 2
  %vm1671 = vcmp.eq.s32.totalorder %v1663, %v1664
  %vm1672 = vcmp.eq.s32.totalorder %v1663, %v1665
  %vm1673 = vcmp.eq.s32.totalorder %v1663, %v1666
  %vm1674 = vcmp.eq.s32.totalorder %v1663, %v1667
  %vm1675 = vcmp.eq.s32.totalorder %v1663, %v1668
  %vm1676 = vcmp.eq.s32.totalorder %v1663, %v1669
  %vm1677 = vcmp.eq.s32.totalorder %v1663, %v1670
  %v1678 = vsel %vm1671, 1.0, 0.0
  %v1679 = vsel %vm1672, 1.0, 0.0
  %v1680 = vsel %vm1673, 1.0, 0.0
  %v1681 = vsel %vm1674, 1.0, 0.0
  %v1682 = vsel %vm1675, 1.0, 0.0
  %v1683 = vsel %vm1676, 1.0, 0.0
  %v1684 = vsel %vm1677, 1.0, 0.0
  %v1685 = vadd.s32 %v1664, 1
  %v1686 = vadd.s32 %v1665, 1
  %v1687 = vadd.s32 %v1666, 1
  %v1688 = vadd.s32 %v1667, 1
  %v1689 = vadd.s32 %v1668, 1
  %v1690 = vadd.s32 %v1669, 1
  %v1691 = vadd.s32 %v1670, 1
  %vm1692 = vcmp.eq.s32.totalorder %v1663, %v1685
  %vm1693 = vcmp.eq.s32.totalorder %v1663, %v1686
  %vm1694 = vcmp.eq.s32.totalorder %v1663, %v1687
  %vm1695 = vcmp.eq.s32.totalorder %v1663, %v1688
  %vm1696 = vcmp.eq.s32.totalorder %v1663, %v1689
  %vm1697 = vcmp.eq.s32.totalorder %v1663, %v1690
  %vm1698 = vcmp.eq.s32.totalorder %v1663, %v1691
  %v1699 = vsel %vm1692, 1.0, 0.0
  %v1700 = vsel %vm1693, 1.0, 0.0
  %v1701 = vsel %vm1694, 1.0, 0.0
  %v1702 = vsel %vm1695, 1.0, 0.0
  %v1703 = vsel %vm1696, 1.0, 0.0
  %v1704 = vsel %vm1697, 1.0, 0.0
  %v1705 = vsel %vm1698, 1.0, 0.0
  %vm1706 = vcmask 916480
  %v1708 = vsel %vm1706, %v1678, 0
  %v1711 = vsel %vm1706, %v1679, 0
  %v1714 = vsel %vm1706, %v1680, 0
  %v1717 = vsel %vm1706, %v1681, 0
  %v1720 = vsel %vm1706, %v1682, 0
  %v1723 = vsel %vm1706, %v1683, 0
  %v1726 = vsel %vm1706, %v1684, 0
  %1728 = vmatprep.subr.mxu0 0.0
  %1729 = vmatpush1.msra.mxu0 %v1640
  %1730 = vmatprep.subr.mxu0 0.0
  %1731 = vmatpush1.msra.mxu0 %v1641
  %1732 = vmatprep.subr.mxu0 0.0
  %1733 = vmatpush1.msra.mxu0 %v1642
  %1734 = vmatprep.subr.mxu0 0.0
  %1735 = vmatpush1.msra.mxu0 %v1643
  %1736 = vmatprep.subr.mxu0 0.0
  %1737 = vmatpush1.msra.mxu0 %v1644
  %1738 = vmatprep.subr.mxu0 0.0
  %1739 = vmatpush1.msra.mxu0 %v1645
  %1740 = vmatprep.subr.mxu0 0.0
  %1741 = vmatpush1.msra.mxu0 %v1646
  %1742 = vmatprep.subr.mxu0 0.0
  %1743 = vmatpush1.msra.mxu0 %v1647
  %1744 = vmatprep.subr.mxu0 0.0
  %1745 = vmatpush1.msra.mxu0 %v1648
  %1746 = vmatprep.subr.mxu0 0.0
  %1747 = vmatpush1.msra.mxu0 %v1649
  %1748 = vmatprep.subr.mxu0 0.0
  %1749 = vmatpush1.msra.mxu0 %v1650
  %1750 = vmatprep.subr.mxu0 0.0
  %1751 = vmatpush1.msra.mxu0 %v1651
  %1752 = vmatprep.subr.mxu0 0.0
  %1753 = vmatpush1.msra.mxu0 %v1652
  %1754 = vmatprep.subr.mxu0 0.0
  %1755 = vmatpush1.msra.mxu0 %v1653
  %1756 = vmatprep.subr.mxu0 0.0
  %1757 = vmatpush1.msra.mxu0 0.0
  %1758 = vmatprep.subr.mxu0 0.0
  %1759 = vmatpush1.msra.mxu0 0.0
  %1760 = vmatprep.subr.mxu0 0.0
  %1761 = vmatpush1.msra.mxu0 0.0
  %1762 = vmatprep.subr.mxu0 0.0
  %1763 = vmatpush1.msra.mxu0 0.0
  %1764 = vmatprep.subr.mxu0 0.0
  %1765 = vmatpush1.msra.mxu0 0.0
  %1766 = vmatprep.subr.mxu0 0.0
  %1767 = vmatpush1.msra.mxu0 0.0
  %1768 = vmatprep.subr.mxu0 0.0
  %1769 = vmatpush1.msra.mxu0 0.0
  %1770 = vmatprep.subr.mxu0 0.0
  %1771 = vmatpush1.msra.mxu0 0.0
  %1772 = vmatprep.subr.mxu0 0.0
  %1773 = vmatpush1.msra.mxu0 0.0
  %1774 = vmatprep.subr.mxu0 0.0
  %1775 = vmatpush1.msra.mxu0 0.0
  %1776 = vmatprep.subr.mxu0 0.0
  %1777 = vmatpush1.msra.mxu0 0.0
  %1778 = vmatprep.subr.mxu0 0.0
  %1779 = vmatpush1.msra.mxu0 0.0
  %1780 = vmatprep.subr.mxu0 0.0
  %1781 = vmatpush1.msra.mxu0 0.0
  %1782 = vmatprep.subr.mxu0 0.0
  %1783 = vmatpush1.msra.mxu0 0.0
  %1784 = vmatprep.subr.mxu0 0.0
  %1785 = vmatpush1.msra.mxu0 0.0
  %1786 = vmatprep.subr.mxu0 0.0
  %1787 = vmatpush1.msra.mxu0 0.0
  %1788 = vmatprep.subr.mxu0 0.0
  %1789 = vmatpush1.msra.mxu0 0.0
  %1790 = vmatprep.subr.mxu0 0.0
  %1791 = vmatpush1.msra.mxu0 0.0
  %1792 = vmatprep.mubr.f32.mxu0 0.0
  %1793 = vmatmul.mubr.f32.gmra.mrb[0].mxu0 %v1708
  %v1794 = vpop.f32.mrb[0].mxu0
  %v1795 = vadd.f32 0.0, %v1794
  %v1796 = vpop.f32.mrb[0].mxu0
  %1797 = vmatprep.mubr.f32.mxu0 0.0
  %1798 = vmatmul.mubr.f32.gmra.mrb[0].mxu0 %v1711
  %v1799 = vpop.f32.mrb[0].mxu0
  %v1800 = vadd.f32 0.0, %v1799
  %v1801 = vpop.f32.mrb[0].mxu0
  %1802 = vmatprep.mubr.f32.mxu0 0.0
  %1803 = vmatmul.mubr.f32.gmra.mrb[0].mxu0 %v1714
  %v1804 = vpop.f32.mrb[0].mxu0
  %v1805 = vadd.f32 0.0, %v1804
  %v1806 = vpop.f32.mrb[0].mxu0
  %1807 = vmatprep.mubr.f32.mxu0 0.0
  %1808 = vmatmul.mubr.f32.gmra.mrb[0].mxu0 %v1717
  %v1809 = vpop.f32.mrb[0].mxu0
  %v1810 = vadd.f32 0.0, %v1809
  %v1811 = vpop.f32.mrb[0].mxu0
  %1812 = vmatprep.mubr.f32.mxu0 0.0
  %1813 = vmatmul.mubr.f32.gmra.mrb[0].mxu0 %v1720
  %v1814 = vpop.f32.mrb[0].mxu0
  %v1815 = vadd.f32 0.0, %v1814
  %v1816 = vpop.f32.mrb[0].mxu0
  %1817 = vmatprep.mubr.f32.mxu0 0.0
  %1818 = vmatmul.mubr.f32.gmra.mrb[0].mxu0 %v1723
  %v1819 = vpop.f32.mrb[0].mxu0
  %v1820 = vadd.f32 0.0, %v1819
  %v1821 = vpop.f32.mrb[0].mxu0
  %1822 = vmatprep.mubr.f32.mxu0 0.0
  %1823 = vmatmul.mubr.f32.gmra.mrb[0].mxu0 %v1726
  %v1824 = vpop.f32.mrb[0].mxu0
  %v1825 = vadd.f32 0.0, %v1824
  %v1826 = vpop.f32.mrb[0].mxu0
  %1827 = vdwg.mxu0
  %v1829 = vsel %vm1706, %v1699, 0
  %v1832 = vsel %vm1706, %v1700, 0
  %v1835 = vsel %vm1706, %v1701, 0
  %v1838 = vsel %vm1706, %v1702, 0
  %v1841 = vsel %vm1706, %v1703, 0
  %v1844 = vsel %vm1706, %v1704, 0
  %v1847 = vsel %vm1706, %v1705, 0
  %1849 = vmatprep.subr.mxu0 0.0
  %1850 = vmatpush1.msra.mxu0 %v1640
  %1851 = vmatprep.subr.mxu0 0.0
  %1852 = vmatpush1.msra.mxu0 %v1641
  %1853 = vmatprep.subr.mxu0 0.0
  %1854 = vmatpush1.msra.mxu0 %v1642
  %1855 = vmatprep.subr.mxu0 0.0
  %1856 = vmatpush1.msra.mxu0 %v1643
  %1857 = vmatprep.subr.mxu0 0.0
  %1858 = vmatpush1.msra.mxu0 %v1644
  %1859 = vmatprep.subr.mxu0 0.0
  %1860 = vmatpush1.msra.mxu0 %v1645
  %1861 = vmatprep.subr.mxu0 0.0
  %1862 = vmatpush1.msra.mxu0 %v1646
  %1863 = vmatprep.subr.mxu0 0.0
  %1864 = vmatpush1.msra.mxu0 %v1647
  %1865 = vmatprep.subr.mxu0 0.0
  %1866 = vmatpush1.msra.mxu0 %v1648
  %1867 = vmatprep.subr.mxu0 0.0
  %1868 = vmatpush1.msra.mxu0 %v1649
  %1869 = vmatprep.subr.mxu0 0.0
  %1870 = vmatpush1.msra.mxu0 %v1650
  %1871 = vmatprep.subr.mxu0 0.0
  %1872 = vmatpush1.msra.mxu0 %v1651
  %1873 = vmatprep.subr.mxu0 0.0
  %1874 = vmatpush1.msra.mxu0 %v1652
  %1875 = vmatprep.subr.mxu0 0.0
  %1876 = vmatpush1.msra.mxu0 %v1653
  %1877 = vmatprep.subr.mxu0 0.0
  %1878 = vmatpush1.msra.mxu0 0.0
  %1879 = vmatprep.subr.mxu0 0.0
  %1880 = vmatpush1.msra.mxu0 0.0
  %1881 = vmatprep.subr.mxu0 0.0
  %1882 = vmatpush1.msra.mxu0 0.0
  %1883 = vmatprep.subr.mxu0 0.0
  %1884 = vmatpush1.msra.mxu0 0.0
  %1885 = vmatprep.subr.mxu0 0.0
  %1886 = vmatpush1.msra.mxu0 0.0
  %1887 = vmatprep.subr.mxu0 0.0
  %1888 = vmatpush1.msra.mxu0 0.0
  %1889 = vmatprep.subr.mxu0 0.0
  %1890 = vmatpush1.msra.mxu0 0.0
  %1891 = vmatprep.subr.mxu0 0.0
  %1892 = vmatpush1.msra.mxu0 0.0
  %1893 = vmatprep.subr.mxu0 0.0
  %1894 = vmatpush1.msra.mxu0 0.0
  %1895 = vmatprep.subr.mxu0 0.0
  %1896 = vmatpush1.msra.mxu0 0.0
  %1897 = vmatprep.subr.mxu0 0.0
  %1898 = vmatpush1.msra.mxu0 0.0
  %1899 = vmatprep.subr.mxu0 0.0
  %1900 = vmatpush1.msra.mxu0 0.0
  %1901 = vmatprep.subr.mxu0 0.0
  %1902 = vmatpush1.msra.mxu0 0.0
  %1903 = vmatprep.subr.mxu0 0.0
  %1904 = vmatpush1.msra.mxu0 0.0
  %1905 = vmatprep.subr.mxu0 0.0
  %1906 = vmatpush1.msra.mxu0 0.0
  %1907 = vmatprep.subr.mxu0 0.0
  %1908 = vmatpush1.msra.mxu0 0.0
  %1909 = vmatprep.subr.mxu0 0.0
  %1910 = vmatpush1.msra.mxu0 0.0
  %1911 = vmatprep.subr.mxu0 0.0
  %1912 = vmatpush1.msra.mxu0 0.0
  %1913 = vmatprep.mubr.f32.mxu0 0.0
  %1914 = vmatmul.mubr.f32.gmra.mrb[0].mxu0 %v1829
  %v1915 = vpop.f32.mrb[0].mxu0
  %v1916 = vadd.f32 0.0, %v1915
  %v1917 = vpop.f32.mrb[0].mxu0
  %1918 = vmatprep.mubr.f32.mxu0 0.0
  %1919 = vmatmul.mubr.f32.gmra.mrb[0].mxu0 %v1832
  %v1920 = vpop.f32.mrb[0].mxu0
  %v1921 = vadd.f32 0.0, %v1920
  %v1922 = vpop.f32.mrb[0].mxu0
  %1923 = vmatprep.mubr.f32.mxu0 0.0
  %1924 = vmatmul.mubr.f32.gmra.mrb[0].mxu0 %v1835
  %v1925 = vpop.f32.mrb[0].mxu0
  %v1926 = vadd.f32 0.0, %v1925
  %v1927 = vpop.f32.mrb[0].mxu0
  %1928 = vmatprep.mubr.f32.mxu0 0.0
  %1929 = vmatmul.mubr.f32.gmra.mrb[0].mxu0 %v1838
  %v1930 = vpop.f32.mrb[0].mxu0
  %v1931 = vadd.f32 0.0, %v1930
  %v1932 = vpop.f32.mrb[0].mxu0
  %1933 = vmatprep.mubr.f32.mxu0 0.0
  %1934 = vmatmul.mubr.f32.gmra.mrb[0].mxu0 %v1841
  %v1935 = vpop.f32.mrb[0].mxu0
  %v1936 = vadd.f32 0.0, %v1935
  %v1937 = vpop.f32.mrb[0].mxu0
  %1938 = vmatprep.mubr.f32.mxu0 0.0
  %1939 = vmatmul.mubr.f32.gmra.mrb[0].mxu0 %v1844
  %v1940 = vpop.f32.mrb[0].mxu0
  %v1941 = vadd.f32 0.0, %v1940
  %v1942 = vpop.f32.mrb[0].mxu0
  %1943 = vmatprep.mubr.f32.mxu0 0.0
  %1944 = vmatmul.mubr.f32.gmra.mrb[0].mxu0 %v1847
  %v1945 = vpop.f32.mrb[0].mxu0
  %v1946 = vadd.f32 0.0, %v1945
  %v1947 = vpop.f32.mrb[0].mxu0
  %1948 = vdwg.mxu0
  %v1949 = vmax.f32 %v1795, %v1916
  %v1950 = vmax.f32 %v1800, %v1921
  %v1951 = vmax.f32 %v1805, %v1926
  %v1952 = vmax.f32 %v1810, %v1931
  %v1953 = vmax.f32 %v1815, %v1936
  %v1954 = vmax.f32 %v1820, %v1941
  %v1955 = vmax.f32 %v1825, %v1946
  %v1956 = vmul.u32 %v1663, 2
  %vm1957 = vcmp.eq.s32.totalorder %v1655, %v1956
  %vm1958 = vcmp.eq.s32.totalorder %v1656, %v1956
  %vm1959 = vcmp.eq.s32.totalorder %v1657, %v1956
  %vm1960 = vcmp.eq.s32.totalorder %v1658, %v1956
  %v1961 = vsel %vm1957, 1.0, 0.0
  %v1962 = vsel %vm1958, 1.0, 0.0
  %v1963 = vsel %vm1959, 1.0, 0.0
  %v1964 = vsel %vm1960, 1.0, 0.0
  %v1965 = vadd.s32 %v1956, 1
  %vm1966 = vcmp.eq.s32.totalorder %v1655, %v1965
  %vm1967 = vcmp.eq.s32.totalorder %v1656, %v1965
  %vm1968 = vcmp.eq.s32.totalorder %v1657, %v1965
  %vm1969 = vcmp.eq.s32.totalorder %v1658, %v1965
  %v1970 = vsel %vm1966, 1.0, 0.0
  %v1971 = vsel %vm1967, 1.0, 0.0
  %v1972 = vsel %vm1968, 1.0, 0.0
  %v1973 = vsel %vm1969, 1.0, 0.0
  %v1975 = vsel %vm52, %v1949, 0
  %v1978 = vsel %vm52, %v1950, 0
  %v1981 = vsel %vm52, %v1951, 0
  %v1984 = vsel %vm52, %v1952, 0
  %v1987 = vsel %vm52, %v1953, 0
  %v1990 = vsel %vm52, %v1954, 0
  %v1993 = vsel %vm52, %v1955, 0
  %v1996 = vsel %vm65, %v1964, 0
  %1998 = vmatprep.subr.mxu0 0.0
  %1999 = vmatpush1.msra.mxu0 %v1961
  %2000 = vmatprep.subr.mxu0 0.0
  %2001 = vmatpush1.msra.mxu0 %v1962
  %2002 = vmatprep.subr.mxu0 0.0
  %2003 = vmatpush1.msra.mxu0 %v1963
  %2004 = vmatprep.subr.mxu0 0.0
  %2005 = vmatpush1.msra.mxu0 %v1996
  %2006 = vmatprep.subr.mxu0 0.0
  %2007 = vmatpush1.msra.mxu0 0.0
  %2008 = vmatprep.subr.mxu0 0.0
  %2009 = vmatpush1.msra.mxu0 0.0
  %2010 = vmatprep.subr.mxu0 0.0
  %2011 = vmatpush1.msra.mxu0 0.0
  %2012 = vmatprep.subr.mxu0 0.0
  %2013 = vmatpush1.msra.mxu0 0.0
  %2014 = vmatprep.subr.mxu0 0.0
  %2015 = vmatpush1.msra.mxu0 0.0
  %2016 = vmatprep.subr.mxu0 0.0
  %2017 = vmatpush1.msra.mxu0 0.0
  %2018 = vmatprep.subr.mxu0 0.0
  %2019 = vmatpush1.msra.mxu0 0.0
  %2020 = vmatprep.subr.mxu0 0.0
  %2021 = vmatpush1.msra.mxu0 0.0
  %2022 = vmatprep.subr.mxu0 0.0
  %2023 = vmatpush1.msra.mxu0 0.0
  %2024 = vmatprep.subr.mxu0 0.0
  %2025 = vmatpush1.msra.mxu0 0.0
  %2026 = vmatprep.subr.mxu0 0.0
  %2027 = vmatpush1.msra.mxu0 0.0
  %2028 = vmatprep.subr.mxu0 0.0
  %2029 = vmatpush1.msra.mxu0 0.0
  %2030 = vmatprep.subr.mxu0 0.0
  %2031 = vmatpush1.msra.mxu0 0.0
  %2032 = vmatprep.subr.mxu0 0.0
  %2033 = vmatpush1.msra.mxu0 0.0
  %2034 = vmatprep.subr.mxu0 0.0
  %2035 = vmatpush1.msra.mxu0 0.0
  %2036 = vmatprep.subr.mxu0 0.0
  %2037 = vmatpush1.msra.mxu0 0.0
  %2038 = vmatprep.subr.mxu0 0.0
  %2039 = vmatpush1.msra.mxu0 0.0
  %2040 = vmatprep.subr.mxu0 0.0
  %2041 = vmatpush1.msra.mxu0 0.0
  %2042 = vmatprep.subr.mxu0 0.0
  %2043 = vmatpush1.msra.mxu0 0.0
  %2044 = vmatprep.subr.mxu0 0.0
  %2045 = vmatpush1.msra.mxu0 0.0
  %2046 = vmatprep.subr.mxu0 0.0
  %2047 = vmatpush1.msra.mxu0 0.0
  %2048 = vmatprep.subr.mxu0 0.0
  %2049 = vmatpush1.msra.mxu0 0.0
  %2050 = vmatprep.subr.mxu0 0.0
  %2051 = vmatpush1.msra.mxu0 0.0
  %2052 = vmatprep.subr.mxu0 0.0
  %2053 = vmatpush1.msra.mxu0 0.0
  %2054 = vmatprep.subr.mxu0 0.0
  %2055 = vmatpush1.msra.mxu0 0.0
  %2056 = vmatprep.subr.mxu0 0.0
  %2057 = vmatpush1.msra.mxu0 0.0
  %2058 = vmatprep.subr.mxu0 0.0
  %2059 = vmatpush1.msra.mxu0 0.0
  %2060 = vmatprep.subr.mxu0 0.0
  %2061 = vmatpush1.msra.mxu0 0.0
  %2062 = vmatprep.mubr.f32.mxu0 0.0
  %2063 = vmatmul.mubr.f32.gmra.mrb[0].mxu0 %v1975
  %v2064 = vpop.f32.mrb[0].mxu0
  %v2065 = vadd.f32 0.0, %v2064
  %v2066 = vpop.f32.mrb[0].mxu0
  %2067 = vmatprep.mubr.f32.mxu0 0.0
  %2068 = vmatmul.mubr.f32.gmra.mrb[0].mxu0 %v1978
  %v2069 = vpop.f32.mrb[0].mxu0
  %v2070 = vadd.f32 0.0, %v2069
  %v2071 = vpop.f32.mrb[0].mxu0
  %2072 = vmatprep.mubr.f32.mxu0 0.0
  %2073 = vmatmul.mubr.f32.gmra.mrb[0].mxu0 %v1981
  %v2074 = vpop.f32.mrb[0].mxu0
  %v2075 = vadd.f32 0.0, %v2074
  %v2076 = vpop.f32.mrb[0].mxu0
  %2077 = vmatprep.mubr.f32.mxu0 0.0
  %2078 = vmatmul.mubr.f32.gmra.mrb[0].mxu0 %v1984
  %v2079 = vpop.f32.mrb[0].mxu0
  %v2080 = vadd.f32 0.0, %v2079
  %v2081 = vpop.f32.mrb[0].mxu0
  %2082 = vmatprep.mubr.f32.mxu0 0.0
  %2083 = vmatmul.mubr.f32.gmra.mrb[0].mxu0 %v1987
  %v2084 = vpop.f32.mrb[0].mxu0
  %v2085 = vadd.f32 0.0, %v2084
  %v2086 = vpop.f32.mrb[0].mxu0
  %2087 = vmatprep.mubr.f32.mxu0 0.0
  %2088 = vmatmul.mubr.f32.gmra.mrb[0].mxu0 %v1990
  %v2089 = vpop.f32.mrb[0].mxu0
  %v2090 = vadd.f32 0.0, %v2089
  %v2091 = vpop.f32.mrb[0].mxu0
  %2092 = vmatprep.mubr.f32.mxu0 0.0
  %2093 = vmatmul.mubr.f32.gmra.mrb[0].mxu0 %v1993
  %v2094 = vpop.f32.mrb[0].mxu0
  %v2095 = vadd.f32 0.0, %v2094
  %v2096 = vpop.f32.mrb[0].mxu0
  %2097 = vdwg.mxu0
  %v2099 = vsel %vm65, %v1973, 0
  %2101 = vmatprep.subr.mxu0 0.0
  %2102 = vmatpush1.msra.mxu0 %v1970
  %2103 = vmatprep.subr.mxu0 0.0
  %2104 = vmatpush1.msra.mxu0 %v1971
  %2105 = vmatprep.subr.mxu0 0.0
  %2106 = vmatpush1.msra.mxu0 %v1972
  %2107 = vmatprep.subr.mxu0 0.0
  %2108 = vmatpush1.msra.mxu0 %v2099
  %2109 = vmatprep.subr.mxu0 0.0
  %2110 = vmatpush1.msra.mxu0 0.0
  %2111 = vmatprep.subr.mxu0 0.0
  %2112 = vmatpush1.msra.mxu0 0.0
  %2113 = vmatprep.subr.mxu0 0.0
  %2114 = vmatpush1.msra.mxu0 0.0
  %2115 = vmatprep.subr.mxu0 0.0
  %2116 = vmatpush1.msra.mxu0 0.0
  %2117 = vmatprep.subr.mxu0 0.0
  %2118 = vmatpush1.msra.mxu0 0.0
  %2119 = vmatprep.subr.mxu0 0.0
  %2120 = vmatpush1.msra.mxu0 0.0
  %2121 = vmatprep.subr.mxu0 0.0
  %2122 = vmatpush1.msra.mxu0 0.0
  %2123 = vmatprep.subr.mxu0 0.0
  %2124 = vmatpush1.msra.mxu0 0.0
  %2125 = vmatprep.subr.mxu0 0.0
  %2126 = vmatpush1.msra.mxu0 0.0
  %2127 = vmatprep.subr.mxu0 0.0
  %2128 = vmatpush1.msra.mxu0 0.0
  %2129 = vmatprep.subr.mxu0 0.0
  %2130 = vmatpush1.msra.mxu0 0.0
  %2131 = vmatprep.subr.mxu0 0.0
  %2132 = vmatpush1.msra.mxu0 0.0
  %2133 = vmatprep.subr.mxu0 0.0
  %2134 = vmatpush1.msra.mxu0 0.0
  %2135 = vmatprep.subr.mxu0 0.0
  %2136 = vmatpush1.msra.mxu0 0.0
  %2137 = vmatprep.subr.mxu0 0.0
  %2138 = vmatpush1.msra.mxu0 0.0
  %2139 = vmatprep.subr.mxu0 0.0
  %2140 = vmatpush1.msra.mxu0 0.0
  %2141 = vmatprep.subr.mxu0 0.0
  %2142 = vmatpush1.msra.mxu0 0.0
  %2143 = vmatprep.subr.mxu0 0.0
  %2144 = vmatpush1.msra.mxu0 0.0
  %2145 = vmatprep.subr.mxu0 0.0
  %2146 = vmatpush1.msra.mxu0 0.0
  %2147 = vmatprep.subr.mxu0 0.0
  %2148 = vmatpush1.msra.mxu0 0.0
  %2149 = vmatprep.subr.mxu0 0.0
  %2150 = vmatpush1.msra.mxu0 0.0
  %2151 = vmatprep.subr.mxu0 0.0
  %2152 = vmatpush1.msra.mxu0 0.0
  %2153 = vmatprep.subr.mxu0 0.0
  %2154 = vmatpush1.msra.mxu0 0.0
  %2155 = vmatprep.subr.mxu0 0.0
  %2156 = vmatpush1.msra.mxu0 0.0
  %2157 = vmatprep.subr.mxu0 0.0
  %2158 = vmatpush1.msra.mxu0 0.0
  %2159 = vmatprep.subr.mxu0 0.0
  %2160 = vmatpush1.msra.mxu0 0.0
  %2161 = vmatprep.subr.mxu0 0.0
  %2162 = vmatpush1.msra.mxu0 0.0
  %2163 = vmatprep.subr.mxu0 0.0
  %2164 = vmatpush1.msra.mxu0 0.0
  %2165 = vmatprep.mubr.f32.mxu0 0.0
  %2166 = vmatmul.mubr.f32.gmra.mrb[0].mxu0 %v1975
  %v2167 = vpop.f32.mrb[0].mxu0
  %v2168 = vadd.f32 0.0, %v2167
  %v2169 = vpop.f32.mrb[0].mxu0
  %2170 = vmatprep.mubr.f32.mxu0 0.0
  %2171 = vmatmul.mubr.f32.gmra.mrb[0].mxu0 %v1978
  %v2172 = vpop.f32.mrb[0].mxu0
  %v2173 = vadd.f32 0.0, %v2172
  %v2174 = vpop.f32.mrb[0].mxu0
  %2175 = vmatprep.mubr.f32.mxu0 0.0
  %2176 = vmatmul.mubr.f32.gmra.mrb[0].mxu0 %v1981
  %v2177 = vpop.f32.mrb[0].mxu0
  %v2178 = vadd.f32 0.0, %v2177
  %v2179 = vpop.f32.mrb[0].mxu0
  %2180 = vmatprep.mubr.f32.mxu0 0.0
  %2181 = vmatmul.mubr.f32.gmra.mrb[0].mxu0 %v1984
  %v2182 = vpop.f32.mrb[0].mxu0
  %v2183 = vadd.f32 0.0, %v2182
  %v2184 = vpop.f32.mrb[0].mxu0
  %2185 = vmatprep.mubr.f32.mxu0 0.0
  %2186 = vmatmul.mubr.f32.gmra.mrb[0].mxu0 %v1987
  %v2187 = vpop.f32.mrb[0].mxu0
  %v2188 = vadd.f32 0.0, %v2187
  %v2189 = vpop.f32.mrb[0].mxu0
  %2190 = vmatprep.mubr.f32.mxu0 0.0
  %2191 = vmatmul.mubr.f32.gmra.mrb[0].mxu0 %v1990
  %v2192 = vpop.f32.mrb[0].mxu0
  %v2193 = vadd.f32 0.0, %v2192
  %v2194 = vpop.f32.mrb[0].mxu0
  %2195 = vmatprep.mubr.f32.mxu0 0.0
  %2196 = vmatmul.mubr.f32.gmra.mrb[0].mxu0 %v1993
  %v2197 = vpop.f32.mrb[0].mxu0
  %v2198 = vadd.f32 0.0, %v2197
  %v2199 = vpop.f32.mrb[0].mxu0
  %2200 = vdwg.mxu0
  %v2201 = vmax.f32 %v2065, %v2168
  %v2202 = vmax.f32 %v2070, %v2173
  %v2203 = vmax.f32 %v2075, %v2178
  %v2204 = vmax.f32 %v2080, %v2183
  %v2205 = vmax.f32 %v2085, %v2188
  %v2206 = vmax.f32 %v2090, %v2193
  %v2207 = vmax.f32 %v2095, %v2198
  %v2208 = vld [vmem:[%s5] sm:$0xff]
  %v2209 = vld [vmem:[%s5 + $0x8] sm:$0x3f]
  %vm2210 = vcmask 113664
  %v2212 = vsel %vm2210, %v2201, 0
  %v2215 = vsel %vm2210, %v2202, 0
  %v2218 = vsel %vm2210, %v2203, 0
  %v2221 = vsel %vm2210, %v2204, 0
  %v2224 = vsel %vm2210, %v2205, 0
  %v2227 = vsel %vm2210, %v2206, 0
  %v2230 = vsel %vm2210, %v2207, 0
  %vm2232 = vcmask 1045504
  %v2234 = vsel %vm2232, %v2209, 0
  %2236 = vmatprep.subr.mxu0 0.0
  %2237 = vmatpush1.msra.mxu0 %v2208
  %2238 = vmatprep.subr.mxu0 0.0
  %2239 = vmatpush1.msra.mxu0 %v2234
  %2240 = vmatprep.subr.mxu0 0.0
  %2241 = vmatpush1.msra.mxu0 0.0
  %2242 = vmatprep.subr.mxu0 0.0
  %2243 = vmatpush1.msra.mxu0 0.0
  %2244 = vmatprep.subr.mxu0 0.0
  %2245 = vmatpush1.msra.mxu0 0.0
  %2246 = vmatprep.subr.mxu0 0.0
  %2247 = vmatpush1.msra.mxu0 0.0
  %2248 = vmatprep.subr.mxu0 0.0
  %2249 = vmatpush1.msra.mxu0 0.0
  %2250 = vmatprep.subr.mxu0 0.0
  %2251 = vmatpush1.msra.mxu0 0.0
  %2252 = vmatprep.subr.mxu0 0.0
  %2253 = vmatpush1.msra.mxu0 0.0
  %2254 = vmatprep.subr.mxu0 0.0
  %2255 = vmatpush1.msra.mxu0 0.0
  %2256 = vmatprep.subr.mxu0 0.0
  %2257 = vmatpush1.msra.mxu0 0.0
  %2258 = vmatprep.subr.mxu0 0.0
  %2259 = vmatpush1.msra.mxu0 0.0
  %2260 = vmatprep.subr.mxu0 0.0
  %2261 = vmatpush1.msra.mxu0 0.0
  %2262 = vmatprep.subr.mxu0 0.0
  %2263 = vmatpush1.msra.mxu0 0.0
  %2264 = vmatprep.subr.mxu0 0.0
  %2265 = vmatpush1.msra.mxu0 0.0
  %2266 = vmatprep.subr.mxu0 0.0
  %2267 = vmatpush1.msra.mxu0 0.0
  %2268 = vmatprep.subr.mxu0 0.0
  %2269 = vmatpush1.msra.mxu0 0.0
  %2270 = vmatprep.subr.mxu0 0.0
  %2271 = vmatpush1.msra.mxu0 0.0
  %2272 = vmatprep.subr.mxu0 0.0
  %2273 = vmatpush1.msra.mxu0 0.0
  %2274 = vmatprep.subr.mxu0 0.0
  %2275 = vmatpush1.msra.mxu0 0.0
  %2276 = vmatprep.subr.mxu0 0.0
  %2277 = vmatpush1.msra.mxu0 0.0
  %2278 = vmatprep.subr.mxu0 0.0
  %2279 = vmatpush1.msra.mxu0 0.0
  %2280 = vmatprep.subr.mxu0 0.0
  %2281 = vmatpush1.msra.mxu0 0.0
  %2282 = vmatprep.subr.mxu0 0.0
  %2283 = vmatpush1.msra.mxu0 0.0
  %2284 = vmatprep.subr.mxu0 0.0
  %2285 = vmatpush1.msra.mxu0 0.0
  %2286 = vmatprep.subr.mxu0 0.0
  %2287 = vmatpush1.msra.mxu0 0.0
  %2288 = vmatprep.subr.mxu0 0.0
  %2289 = vmatpush1.msra.mxu0 0.0
  %2290 = vmatprep.subr.mxu0 0.0
  %2291 = vmatpush1.msra.mxu0 0.0
  %2292 = vmatprep.subr.mxu0 0.0
  %2293 = vmatpush1.msra.mxu0 0.0
  %2294 = vmatprep.subr.mxu0 0.0
  %2295 = vmatpush1.msra.mxu0 0.0
  %2296 = vmatprep.subr.mxu0 0.0
  %2297 = vmatpush1.msra.mxu0 0.0
  %2298 = vmatprep.subr.mxu0 0.0
  %2299 = vmatpush1.msra.mxu0 0.0
  %2300 = vmatprep.mubr.f32.mxu0 0.0
  %2301 = vmatmul.mubr.f32.gmra.mrb[0].mxu0 %v2212
  %v2302 = vpop.f32.mrb[0].mxu0
  %v2303 = vadd.f32 0.0, %v2302
  %v2304 = vpop.f32.mrb[0].mxu0
  %2305 = vmatprep.mubr.f32.mxu0 0.0
  %2306 = vmatmul.mubr.f32.gmra.mrb[0].mxu0 %v2215
  %v2307 = vpop.f32.mrb[0].mxu0
  %v2308 = vadd.f32 0.0, %v2307
  %v2309 = vpop.f32.mrb[0].mxu0
  %2310 = vmatprep.mubr.f32.mxu0 0.0
  %2311 = vmatmul.mubr.f32.gmra.mrb[0].mxu0 %v2218
  %v2312 = vpop.f32.mrb[0].mxu0
  %v2313 = vadd.f32 0.0, %v2312
  %v2314 = vpop.f32.mrb[0].mxu0
  %2315 = vmatprep.mubr.f32.mxu0 0.0
  %2316 = vmatmul.mubr.f32.gmra.mrb[0].mxu0 %v2221
  %v2317 = vpop.f32.mrb[0].mxu0
  %v2318 = vadd.f32 0.0, %v2317
  %v2319 = vpop.f32.mrb[0].mxu0
  %2320 = vmatprep.mubr.f32.mxu0 0.0
  %2321 = vmatmul.mubr.f32.gmra.mrb[0].mxu0 %v2224
  %v2322 = vpop.f32.mrb[0].mxu0
  %v2323 = vadd.f32 0.0, %v2322
  %v2324 = vpop.f32.mrb[0].mxu0
  %2325 = vmatprep.mubr.f32.mxu0 0.0
  %2326 = vmatmul.mubr.f32.gmra.mrb[0].mxu0 %v2227
  %v2327 = vpop.f32.mrb[0].mxu0
  %v2328 = vadd.f32 0.0, %v2327
  %v2329 = vpop.f32.mrb[0].mxu0
  %2330 = vmatprep.mubr.f32.mxu0 0.0
  %2331 = vmatmul.mubr.f32.gmra.mrb[0].mxu0 %v2230
  %v2332 = vpop.f32.mrb[0].mxu0
  %v2333 = vadd.f32 0.0, %v2332
  %v2334 = vpop.f32.mrb[0].mxu0
  %2335 = vdwg.mxu0
  %v2336 = vld [vmem:[%s4] sm:$0xff]
  %v2337 = vld [vmem:[%s4 + $0x8] sm:$0xff]
  %v2338 = vld [vmem:[%s4 + $0x10] sm:$0xff]
  %v2339 = vld [vmem:[%s4 + $0x18] sm:$0xff]
  %v2340 = vld [vmem:[%s4 + $0x20] sm:$0xff]
  %v2341 = vld [vmem:[%s4 + $0x28] sm:$0xff]
  %v2342 = vld [vmem:[%s4 + $0x30] sm:$0xff]
  %v2343 = vld [vmem:[%s4 + $0x38] sm:$0xff]
  %v2344 = vld [vmem:[%s4 + $0x40] sm:$0xff]
  %v2345 = vld [vmem:[%s4 + $0x48] sm:$0xff]
  %v2346 = vld [vmem:[%s4 + $0x50] sm:$0xff]
  %v2347 = vld [vmem:[%s4 + $0x58] sm:$0xff]
  %v2348 = vld [vmem:[%s4 + $0x60] sm:$0xff]
  %v2349 = vld [vmem:[%s4 + $0x68] sm:$0xff]
  %v2350 = vld [vmem:[%s4 + $0x70] sm:$0xff]
  %v2351 = vld [vmem:[%s4 + $0x78] sm:$0xff]
  %v2352 = vld [vmem:[%s4 + $0x80] sm:$0xff]
  %v2353 = vld [vmem:[%s4 + $0x88] sm:$0xff]
  %v2354 = vld [vmem:[%s4 + $0x90] sm:$0xff]
  %v2355 = vld [vmem:[%s4 + $0x98] sm:$0xff]
  %v2356 = vld [vmem:[%s4 + $0xa0] sm:$0xff]
  %v2357 = vld [vmem:[%s4 + $0xa8] sm:$0xff]
  %v2358 = vld [vmem:[%s4 + $0xb0] sm:$0xff]
  %v2359 = vld [vmem:[%s4 + $0xb8] sm:$0xff]
  %v2360 = vld [vmem:[%s4 + $0xc0] sm:$0xff]
  %v2361 = vld [vmem:[%s4 + $0xc8] sm:$0xff]
  %v2362 = vld [vmem:[%s4 + $0xd0] sm:$0xff]
  %v2363 = vld [vmem:[%s4 + $0xd8] sm:$0xff]
  %s2364 = scalar_lea.vmem %s5, 16
  %v2365 = vld [vmem:[%s2364] sm:$0xff]
  %v2366 = vld [vmem:[%s2364 + $0x8] sm:$0x3f]
  %v2368 = vsel %vm2232, %v2366, 0
  %2370 = vmatprep.subr.mxu0 0.0
  %2371 = vmatpush1.msra.mxu0 %v2365
  %2372 = vmatprep.subr.mxu0 0.0
  %2373 = vmatpush1.msra.mxu0 %v2368
  %2374 = vmatprep.subr.mxu0 0.0
  %2375 = vmatpush1.msra.mxu0 0.0
  %2376 = vmatprep.subr.mxu0 0.0
  %2377 = vmatpush1.msra.mxu0 0.0
  %2378 = vmatprep.subr.mxu0 0.0
  %2379 = vmatpush1.msra.mxu0 0.0
  %2380 = vmatprep.subr.mxu0 0.0
  %2381 = vmatpush1.msra.mxu0 0.0
  %2382 = vmatprep.subr.mxu0 0.0
  %2383 = vmatpush1.msra.mxu0 0.0
  %2384 = vmatprep.subr.mxu0 0.0
  %2385 = vmatpush1.msra.mxu0 0.0
  %2386 = vmatprep.subr.mxu0 0.0
  %2387 = vmatpush1.msra.mxu0 0.0
  %2388 = vmatprep.subr.mxu0 0.0
  %2389 = vmatpush1.msra.mxu0 0.0
  %2390 = vmatprep.subr.mxu0 0.0
  %2391 = vmatpush1.msra.mxu0 0.0
  %2392 = vmatprep.subr.mxu0 0.0
  %2393 = vmatpush1.msra.mxu0 0.0
  %2394 = vmatprep.subr.mxu0 0.0
  %2395 = vmatpush1.msra.mxu0 0.0
  %2396 = vmatprep.subr.mxu0 0.0
  %2397 = vmatpush1.msra.mxu0 0.0
  %2398 = vmatprep.subr.mxu0 0.0
  %2399 = vmatpush1.msra.mxu0 0.0
  %2400 = vmatprep.subr.mxu0 0.0
  %2401 = vmatpush1.msra.mxu0 0.0
  %2402 = vmatprep.subr.mxu0 0.0
  %2403 = vmatpush1.msra.mxu0 0.0
  %2404 = vmatprep.subr.mxu0 0.0
  %2405 = vmatpush1.msra.mxu0 0.0
  %2406 = vmatprep.subr.mxu0 0.0
  %2407 = vmatpush1.msra.mxu0 0.0
  %2408 = vmatprep.subr.mxu0 0.0
  %2409 = vmatpush1.msra.mxu0 0.0
  %2410 = vmatprep.subr.mxu0 0.0
  %2411 = vmatpush1.msra.mxu0 0.0
  %2412 = vmatprep.subr.mxu0 0.0
  %2413 = vmatpush1.msra.mxu0 0.0
  %2414 = vmatprep.subr.mxu0 0.0
  %2415 = vmatpush1.msra.mxu0 0.0
  %2416 = vmatprep.subr.mxu0 0.0
  %2417 = vmatpush1.msra.mxu0 0.0
  %2418 = vmatprep.subr.mxu0 0.0
  %2419 = vmatpush1.msra.mxu0 0.0
  %2420 = vmatprep.subr.mxu0 0.0
  %2421 = vmatpush1.msra.mxu0 0.0
  %2422 = vmatprep.subr.mxu0 0.0
  %2423 = vmatpush1.msra.mxu0 0.0
  %2424 = vmatprep.subr.mxu0 0.0
  %2425 = vmatpush1.msra.mxu0 0.0
  %2426 = vmatprep.subr.mxu0 0.0
  %2427 = vmatpush1.msra.mxu0 0.0
  %2428 = vmatprep.subr.mxu0 0.0
  %2429 = vmatpush1.msra.mxu0 0.0
  %2430 = vmatprep.subr.mxu0 0.0
  %2431 = vmatpush1.msra.mxu0 0.0
  %2432 = vmatprep.subr.mxu0 0.0
  %2433 = vmatpush1.msra.mxu0 0.0
  %2434 = vmatprep.mubr.f32.mxu0 0.0
  %2435 = vmatmul.mubr.f32.gmra.mrb[0].mxu0 %v2212
  %v2436 = vpop.f32.mrb[0].mxu0
  %v2437 = vadd.f32 0.0, %v2436
  %v2438 = vpop.f32.mrb[0].mxu0
  %2439 = vmatprep.mubr.f32.mxu0 0.0
  %2440 = vmatmul.mubr.f32.gmra.mrb[0].mxu0 %v2215
  %v2441 = vpop.f32.mrb[0].mxu0
  %v2442 = vadd.f32 0.0, %v2441
  %v2443 = vpop.f32.mrb[0].mxu0
  %2444 = vmatprep.mubr.f32.mxu0 0.0
  %2445 = vmatmul.mubr.f32.gmra.mrb[0].mxu0 %v2218
  %v2446 = vpop.f32.mrb[0].mxu0
  %v2447 = vadd.f32 0.0, %v2446
  %v2448 = vpop.f32.mrb[0].mxu0
  %2449 = vmatprep.mubr.f32.mxu0 0.0
  %2450 = vmatmul.mubr.f32.gmra.mrb[0].mxu0 %v2221
  %v2451 = vpop.f32.mrb[0].mxu0
  %v2452 = vadd.f32 0.0, %v2451
  %v2453 = vpop.f32.mrb[0].mxu0
  %2454 = vmatprep.mubr.f32.mxu0 0.0
  %2455 = vmatmul.mubr.f32.gmra.mrb[0].mxu0 %v2224
  %v2456 = vpop.f32.mrb[0].mxu0
  %v2457 = vadd.f32 0.0, %v2456
  %v2458 = vpop.f32.mrb[0].mxu0
  %2459 = vmatprep.mubr.f32.mxu0 0.0
  %2460 = vmatmul.mubr.f32.gmra.mrb[0].mxu0 %v2227
  %v2461 = vpop.f32.mrb[0].mxu0
  %v2462 = vadd.f32 0.0, %v2461
  %v2463 = vpop.f32.mrb[0].mxu0
  %2464 = vmatprep.mubr.f32.mxu0 0.0
  %2465 = vmatmul.mubr.f32.gmra.mrb[0].mxu0 %v2230
  %v2466 = vpop.f32.mrb[0].mxu0
  %v2467 = vadd.f32 0.0, %v2466
  %v2468 = vpop.f32.mrb[0].mxu0
  %2469 = vdwg.mxu0
  %s2470 = scalar_lea.vmem %s4, 224
  %v2471 = vld [vmem:[%s2470] sm:$0xff]
  %v2472 = vld [vmem:[%s2470 + $0x8] sm:$0xff]
  %v2473 = vld [vmem:[%s2470 + $0x10] sm:$0xff]
  %v2474 = vld [vmem:[%s2470 + $0x18] sm:$0xff]
  %v2475 = vld [vmem:[%s2470 + $0x20] sm:$0xff]
  %v2476 = vld [vmem:[%s2470 + $0x28] sm:$0xff]
  %v2477 = vld [vmem:[%s2470 + $0x30] sm:$0xff]
  %v2478 = vld [vmem:[%s2470 + $0x38] sm:$0xff]
  %v2479 = vld [vmem:[%s2470 + $0x40] sm:$0xff]
  %v2480 = vld [vmem:[%s2470 + $0x48] sm:$0xff]
  %v2481 = vld [vmem:[%s2470 + $0x50] sm:$0xff]
  %v2482 = vld [vmem:[%s2470 + $0x58] sm:$0xff]
  %v2483 = vld [vmem:[%s2470 + $0x60] sm:$0xff]
  %v2484 = vld [vmem:[%s2470 + $0x68] sm:$0xff]
  %v2485 = vld [vmem:[%s2470 + $0x70] sm:$0xff]
  %v2486 = vld [vmem:[%s2470 + $0x78] sm:$0xff]
  %v2487 = vld [vmem:[%s2470 + $0x80] sm:$0xff]
  %v2488 = vld [vmem:[%s2470 + $0x88] sm:$0xff]
  %v2489 = vld [vmem:[%s2470 + $0x90] sm:$0xff]
  %v2490 = vld [vmem:[%s2470 + $0x98] sm:$0xff]
  %v2491 = vld [vmem:[%s2470 + $0xa0] sm:$0xff]
  %v2492 = vld [vmem:[%s2470 + $0xa8] sm:$0xff]
  %v2493 = vld [vmem:[%s2470 + $0xb0] sm:$0xff]
  %v2494 = vld [vmem:[%s2470 + $0xb8] sm:$0xff]
  %v2495 = vld [vmem:[%s2470 + $0xc0] sm:$0xff]
  %v2496 = vld [vmem:[%s2470 + $0xc8] sm:$0xff]
  %v2497 = vld [vmem:[%s2470 + $0xd0] sm:$0xff]
  %v2498 = vld [vmem:[%s2470 + $0xd8] sm:$0xff]
  %vm2499 = vcmask 457728
  %v2501 = vsel %vm2499, %v2471, 0
  %v2504 = vsel %vm2499, %v2472, 0
  %v2507 = vsel %vm2499, %v2473, 0
  %v2510 = vsel %vm2499, %v2474, 0
  %v2513 = vsel %vm2499, %v2475, 0
  %v2516 = vsel %vm2499, %v2476, 0
  %v2519 = vsel %vm2499, %v2477, 0
  %v2522 = vsel %vm2499, %v2478, 0
  %v2525 = vsel %vm2499, %v2479, 0
  %v2528 = vsel %vm2499, %v2480, 0
  %v2531 = vsel %vm2499, %v2481, 0
  %v2534 = vsel %vm2499, %v2482, 0
  %v2537 = vsel %vm2499, %v2483, 0
  %v2540 = vsel %vm2499, %v2484, 0
  %v2543 = vsel %vm2499, %v2485, 0
  %v2546 = vsel %vm2499, %v2486, 0
  %v2549 = vsel %vm2499, %v2487, 0
  %v2552 = vsel %vm2499, %v2488, 0
  %v2555 = vsel %vm2499, %v2489, 0
  %v2558 = vsel %vm2499, %v2490, 0
  %v2561 = vsel %vm2499, %v2491, 0
  %v2564 = vsel %vm2499, %v2492, 0
  %v2567 = vsel %vm2499, %v2493, 0
  %v2570 = vsel %vm2499, %v2494, 0
  %v2573 = vsel %vm2499, %v2495, 0
  %v2576 = vsel %vm2499, %v2496, 0
  %v2579 = vsel %vm2499, %v2497, 0
  %v2582 = vsel %vm2499, %v2498, 0
  %2584 = vmatprep.subr.mxu0 0.0
  %2585 = vmatpush1.msra.mxu0 %v2437
  %2586 = vmatprep.subr.mxu0 0.0
  %2587 = vmatpush1.msra.mxu0 %v2442
  %2588 = vmatprep.subr.mxu0 0.0
  %2589 = vmatpush1.msra.mxu0 %v2447
  %2590 = vmatprep.subr.mxu0 0.0
  %2591 = vmatpush1.msra.mxu0 %v2452
  %2592 = vmatprep.subr.mxu0 0.0
  %2593 = vmatpush1.msra.mxu0 %v2457
  %2594 = vmatprep.subr.mxu0 0.0
  %2595 = vmatpush1.msra.mxu0 %v2462
  %2596 = vmatprep.subr.mxu0 0.0
  %2597 = vmatpush1.msra.mxu0 %v2467
  %2598 = vmatprep.subr.mxu0 0.0
  %2599 = vmatpush1.msra.mxu0 0.0
  %2600 = vmatprep.subr.mxu0 0.0
  %2601 = vmatpush1.msra.mxu0 0.0
  %2602 = vmatprep.subr.mxu0 0.0
  %2603 = vmatpush1.msra.mxu0 0.0
  %2604 = vmatprep.subr.mxu0 0.0
  %2605 = vmatpush1.msra.mxu0 0.0
  %2606 = vmatprep.subr.mxu0 0.0
  %2607 = vmatpush1.msra.mxu0 0.0
  %2608 = vmatprep.subr.mxu0 0.0
  %2609 = vmatpush1.msra.mxu0 0.0
  %2610 = vmatprep.subr.mxu0 0.0
  %2611 = vmatpush1.msra.mxu0 0.0
  %2612 = vmatprep.subr.mxu0 0.0
  %2613 = vmatpush1.msra.mxu0 0.0
  %2614 = vmatprep.subr.mxu0 0.0
  %2615 = vmatpush1.msra.mxu0 0.0
  %2616 = vmatprep.subr.mxu0 0.0
  %2617 = vmatpush1.msra.mxu0 0.0
  %2618 = vmatprep.subr.mxu0 0.0
  %2619 = vmatpush1.msra.mxu0 0.0
  %2620 = vmatprep.subr.mxu0 0.0
  %2621 = vmatpush1.msra.mxu0 0.0
  %2622 = vmatprep.subr.mxu0 0.0
  %2623 = vmatpush1.msra.mxu0 0.0
  %2624 = vmatprep.subr.mxu0 0.0
  %2625 = vmatpush1.msra.mxu0 0.0
  %2626 = vmatprep.subr.mxu0 0.0
  %2627 = vmatpush1.msra.mxu0 0.0
  %2628 = vmatprep.subr.mxu0 0.0
  %2629 = vmatpush1.msra.mxu0 0.0
  %2630 = vmatprep.subr.mxu0 0.0
  %2631 = vmatpush1.msra.mxu0 0.0
  %2632 = vmatprep.subr.mxu0 0.0
  %2633 = vmatpush1.msra.mxu0 0.0
  %2634 = vmatprep.subr.mxu0 0.0
  %2635 = vmatpush1.msra.mxu0 0.0
  %2636 = vmatprep.subr.mxu0 0.0
  %2637 = vmatpush1.msra.mxu0 0.0
  %2638 = vmatprep.subr.mxu0 0.0
  %2639 = vmatpush1.msra.mxu0 0.0
  %2640 = vmatprep.subr.mxu0 0.0
  %2641 = vmatpush1.msra.mxu0 0.0
  %2642 = vmatprep.subr.mxu0 0.0
  %2643 = vmatpush1.msra.mxu0 0.0
  %2644 = vmatprep.subr.mxu0 0.0
  %2645 = vmatpush1.msra.mxu0 0.0
  %2646 = vmatprep.subr.mxu0 0.0
  %2647 = vmatpush1.msra.mxu0 0.0
  %2648 = vmatprep.mubr.f32.mxu0 0.0
  %2649 = vmatmul.mubr.f32.gmra.mrb[0].mxu0 %v2501
  %v2650 = vpop.f32.mrb[0].mxu0
  %v2651 = vadd.f32 0.0, %v2650
  %v2652 = vpop.f32.mrb[0].mxu0
  %2653 = vmatprep.mubr.f32.mxu0 0.0
  %2654 = vmatmul.mubr.f32.gmra.mrb[0].mxu0 %v2504
  %v2655 = vpop.f32.mrb[0].mxu0
  %v2656 = vadd.f32 0.0, %v2655
  %v2657 = vpop.f32.mrb[0].mxu0
  %2658 = vmatprep.mubr.f32.mxu0 0.0
  %2659 = vmatmul.mubr.f32.gmra.mrb[0].mxu0 %v2507
  %v2660 = vpop.f32.mrb[0].mxu0
  %v2661 = vadd.f32 0.0, %v2660
  %v2662 = vpop.f32.mrb[0].mxu0
  %2663 = vmatprep.mubr.f32.mxu0 0.0
  %2664 = vmatmul.mubr.f32.gmra.mrb[0].mxu0 %v2510
  %v2665 = vpop.f32.mrb[0].mxu0
  %v2666 = vadd.f32 0.0, %v2665
  %v2667 = vpop.f32.mrb[0].mxu0
  %2668 = vmatprep.mubr.f32.mxu0 0.0
  %2669 = vmatmul.mubr.f32.gmra.mrb[0].mxu0 %v2513
  %v2670 = vpop.f32.mrb[0].mxu0
  %v2671 = vadd.f32 0.0, %v2670
  %v2672 = vpop.f32.mrb[0].mxu0
  %2673 = vmatprep.mubr.f32.mxu0 0.0
  %2674 = vmatmul.mubr.f32.gmra.mrb[0].mxu0 %v2516
  %v2675 = vpop.f32.mrb[0].mxu0
  %v2676 = vadd.f32 0.0, %v2675
  %v2677 = vpop.f32.mrb[0].mxu0
  %2678 = vmatprep.mubr.f32.mxu0 0.0
  %2679 = vmatmul.mubr.f32.gmra.mrb[0].mxu0 %v2519
  %v2680 = vpop.f32.mrb[0].mxu0
  %v2681 = vadd.f32 0.0, %v2680
  %v2682 = vpop.f32.mrb[0].mxu0
  %2683 = vmatprep.mubr.f32.mxu0 0.0
  %2684 = vmatmul.mubr.f32.gmra.mrb[0].mxu0 %v2522
  %v2685 = vpop.f32.mrb[0].mxu0
  %v2686 = vadd.f32 0.0, %v2685
  %v2687 = vpop.f32.mrb[0].mxu0
  %2688 = vmatprep.mubr.f32.mxu0 0.0
  %2689 = vmatmul.mubr.f32.gmra.mrb[0].mxu0 %v2525
  %v2690 = vpop.f32.mrb[0].mxu0
  %v2691 = vadd.f32 0.0, %v2690
  %v2692 = vpop.f32.mrb[0].mxu0
  %2693 = vmatprep.mubr.f32.mxu0 0.0
  %2694 = vmatmul.mubr.f32.gmra.mrb[0].mxu0 %v2528
  %v2695 = vpop.f32.mrb[0].mxu0
  %v2696 = vadd.f32 0.0, %v2695
  %v2697 = vpop.f32.mrb[0].mxu0
  %2698 = vmatprep.mubr.f32.mxu0 0.0
  %2699 = vmatmul.mubr.f32.gmra.mrb[0].mxu0 %v2531
  %v2700 = vpop.f32.mrb[0].mxu0
  %v2701 = vadd.f32 0.0, %v2700
  %v2702 = vpop.f32.mrb[0].mxu0
  %2703 = vmatprep.mubr.f32.mxu0 0.0
  %2704 = vmatmul.mubr.f32.gmra.mrb[0].mxu0 %v2534
  %v2705 = vpop.f32.mrb[0].mxu0
  %v2706 = vadd.f32 0.0, %v2705
  %v2707 = vpop.f32.mrb[0].mxu0
  %2708 = vmatprep.mubr.f32.mxu0 0.0
  %2709 = vmatmul.mubr.f32.gmra.mrb[0].mxu0 %v2537
  %v2710 = vpop.f32.mrb[0].mxu0
  %v2711 = vadd.f32 0.0, %v2710
  %v2712 = vpop.f32.mrb[0].mxu0
  %2713 = vmatprep.mubr.f32.mxu0 0.0
  %2714 = vmatmul.mubr.f32.gmra.mrb[0].mxu0 %v2540
  %v2715 = vpop.f32.mrb[0].mxu0
  %v2716 = vadd.f32 0.0, %v2715
  %v2717 = vpop.f32.mrb[0].mxu0
  %2718 = vmatprep.mubr.f32.mxu0 0.0
  %2719 = vmatmul.mubr.f32.gmra.mrb[0].mxu0 %v2543
  %v2720 = vpop.f32.mrb[0].mxu0
  %v2721 = vadd.f32 0.0, %v2720
  %v2722 = vpop.f32.mrb[0].mxu0
  %2723 = vmatprep.mubr.f32.mxu0 0.0
  %2724 = vmatmul.mubr.f32.gmra.mrb[0].mxu0 %v2546
  %v2725 = vpop.f32.mrb[0].mxu0
  %v2726 = vadd.f32 0.0, %v2725
  %v2727 = vpop.f32.mrb[0].mxu0
  %2728 = vmatprep.mubr.f32.mxu0 0.0
  %2729 = vmatmul.mubr.f32.gmra.mrb[0].mxu0 %v2549
  %v2730 = vpop.f32.mrb[0].mxu0
  %v2731 = vadd.f32 0.0, %v2730
  %v2732 = vpop.f32.mrb[0].mxu0
  %2733 = vmatprep.mubr.f32.mxu0 0.0
  %2734 = vmatmul.mubr.f32.gmra.mrb[0].mxu0 %v2552
  %v2735 = vpop.f32.mrb[0].mxu0
  %v2736 = vadd.f32 0.0, %v2735
  %v2737 = vpop.f32.mrb[0].mxu0
  %2738 = vmatprep.mubr.f32.mxu0 0.0
  %2739 = vmatmul.mubr.f32.gmra.mrb[0].mxu0 %v2555
  %v2740 = vpop.f32.mrb[0].mxu0
  %v2741 = vadd.f32 0.0, %v2740
  %v2742 = vpop.f32.mrb[0].mxu0
  %2743 = vmatprep.mubr.f32.mxu0 0.0
  %2744 = vmatmul.mubr.f32.gmra.mrb[0].mxu0 %v2558
  %v2745 = vpop.f32.mrb[0].mxu0
  %v2746 = vadd.f32 0.0, %v2745
  %v2747 = vpop.f32.mrb[0].mxu0
  %2748 = vmatprep.mubr.f32.mxu0 0.0
  %2749 = vmatmul.mubr.f32.gmra.mrb[0].mxu0 %v2561
  %v2750 = vpop.f32.mrb[0].mxu0
  %v2751 = vadd.f32 0.0, %v2750
  %v2752 = vpop.f32.mrb[0].mxu0
  %2753 = vmatprep.mubr.f32.mxu0 0.0
  %2754 = vmatmul.mubr.f32.gmra.mrb[0].mxu0 %v2564
  %v2755 = vpop.f32.mrb[0].mxu0
  %v2756 = vadd.f32 0.0, %v2755
  %v2757 = vpop.f32.mrb[0].mxu0
  %2758 = vmatprep.mubr.f32.mxu0 0.0
  %2759 = vmatmul.mubr.f32.gmra.mrb[0].mxu0 %v2567
  %v2760 = vpop.f32.mrb[0].mxu0
  %v2761 = vadd.f32 0.0, %v2760
  %v2762 = vpop.f32.mrb[0].mxu0
  %2763 = vmatprep.mubr.f32.mxu0 0.0
  %2764 = vmatmul.mubr.f32.gmra.mrb[0].mxu0 %v2570
  %v2765 = vpop.f32.mrb[0].mxu0
  %v2766 = vadd.f32 0.0, %v2765
  %v2767 = vpop.f32.mrb[0].mxu0
  %2768 = vmatprep.mubr.f32.mxu0 0.0
  %2769 = vmatmul.mubr.f32.gmra.mrb[0].mxu0 %v2573
  %v2770 = vpop.f32.mrb[0].mxu0
  %v2771 = vadd.f32 0.0, %v2770
  %v2772 = vpop.f32.mrb[0].mxu0
  %2773 = vmatprep.mubr.f32.mxu0 0.0
  %2774 = vmatmul.mubr.f32.gmra.mrb[0].mxu0 %v2576
  %v2775 = vpop.f32.mrb[0].mxu0
  %v2776 = vadd.f32 0.0, %v2775
  %v2777 = vpop.f32.mrb[0].mxu0
  %2778 = vmatprep.mubr.f32.mxu0 0.0
  %2779 = vmatmul.mubr.f32.gmra.mrb[0].mxu0 %v2579
  %v2780 = vpop.f32.mrb[0].mxu0
  %v2781 = vadd.f32 0.0, %v2780
  %v2782 = vpop.f32.mrb[0].mxu0
  %2783 = vmatprep.mubr.f32.mxu0 0.0
  %2784 = vmatmul.mubr.f32.gmra.mrb[0].mxu0 %v2582
  %v2785 = vpop.f32.mrb[0].mxu0
  %v2786 = vadd.f32 0.0, %v2785
  %v2787 = vpop.f32.mrb[0].mxu0
  %2788 = vdwg.mxu0
  %v2790 = vsel %vm2499, %v2336, 0
  %v2793 = vsel %vm2499, %v2337, 0
  %v2796 = vsel %vm2499, %v2338, 0
  %v2799 = vsel %vm2499, %v2339, 0
  %v2802 = vsel %vm2499, %v2340, 0
  %v2805 = vsel %vm2499, %v2341, 0
  %v2808 = vsel %vm2499, %v2342, 0
  %v2811 = vsel %vm2499, %v2343, 0
  %v2814 = vsel %vm2499, %v2344, 0
  %v2817 = vsel %vm2499, %v2345, 0
  %v2820 = vsel %vm2499, %v2346, 0
  %v2823 = vsel %vm2499, %v2347, 0
  %v2826 = vsel %vm2499, %v2348, 0
  %v2829 = vsel %vm2499, %v2349, 0
  %v2832 = vsel %vm2499, %v2350, 0
  %v2835 = vsel %vm2499, %v2351, 0
  %v2838 = vsel %vm2499, %v2352, 0
  %v2841 = vsel %vm2499, %v2353, 0
  %v2844 = vsel %vm2499, %v2354, 0
  %v2847 = vsel %vm2499, %v2355, 0
  %v2850 = vsel %vm2499, %v2356, 0
  %v2853 = vsel %vm2499, %v2357, 0
  %v2856 = vsel %vm2499, %v2358, 0
  %v2859 = vsel %vm2499, %v2359, 0
  %v2862 = vsel %vm2499, %v2360, 0
  %v2865 = vsel %vm2499, %v2361, 0
  %v2868 = vsel %vm2499, %v2362, 0
  %v2871 = vsel %vm2499, %v2363, 0
  %2873 = vmatprep.subr.mxu0 0.0
  %2874 = vmatpush1.msra.mxu0 %v2303
  %2875 = vmatprep.subr.mxu0 0.0
  %2876 = vmatpush1.msra.mxu0 %v2308
  %2877 = vmatprep.subr.mxu0 0.0
  %2878 = vmatpush1.msra.mxu0 %v2313
  %2879 = vmatprep.subr.mxu0 0.0
  %2880 = vmatpush1.msra.mxu0 %v2318
  %2881 = vmatprep.subr.mxu0 0.0
  %2882 = vmatpush1.msra.mxu0 %v2323
  %2883 = vmatprep.subr.mxu0 0.0
  %2884 = vmatpush1.msra.mxu0 %v2328
  %2885 = vmatprep.subr.mxu0 0.0
  %2886 = vmatpush1.msra.mxu0 %v2333
  %2887 = vmatprep.subr.mxu0 0.0
  %2888 = vmatpush1.msra.mxu0 0.0
  %2889 = vmatprep.subr.mxu0 0.0
  %2890 = vmatpush1.msra.mxu0 0.0
  %2891 = vmatprep.subr.mxu0 0.0
  %2892 = vmatpush1.msra.mxu0 0.0
  %2893 = vmatprep.subr.mxu0 0.0
  %2894 = vmatpush1.msra.mxu0 0.0
  %2895 = vmatprep.subr.mxu0 0.0
  %2896 = vmatpush1.msra.mxu0 0.0
  %2897 = vmatprep.subr.mxu0 0.0
  %2898 = vmatpush1.msra.mxu0 0.0
  %2899 = vmatprep.subr.mxu0 0.0
  %2900 = vmatpush1.msra.mxu0 0.0
  %2901 = vmatprep.subr.mxu0 0.0
  %2902 = vmatpush1.msra.mxu0 0.0
  %2903 = vmatprep.subr.mxu0 0.0
  %2904 = vmatpush1.msra.mxu0 0.0
  %2905 = vmatprep.subr.mxu0 0.0
  %2906 = vmatpush1.msra.mxu0 0.0
  %2907 = vmatprep.subr.mxu0 0.0
  %2908 = vmatpush1.msra.mxu0 0.0
  %2909 = vmatprep.subr.mxu0 0.0
  %2910 = vmatpush1.msra.mxu0 0.0
  %2911 = vmatprep.subr.mxu0 0.0
  %2912 = vmatpush1.msra.mxu0 0.0
  %2913 = vmatprep.subr.mxu0 0.0
  %2914 = vmatpush1.msra.mxu0 0.0
  %2915 = vmatprep.subr.mxu0 0.0
  %2916 = vmatpush1.msra.mxu0 0.0
  %2917 = vmatprep.subr.mxu0 0.0
  %2918 = vmatpush1.msra.mxu0 0.0
  %2919 = vmatprep.subr.mxu0 0.0
  %2920 = vmatpush1.msra.mxu0 0.0
  %2921 = vmatprep.subr.mxu0 0.0
  %2922 = vmatpush1.msra.mxu0 0.0
  %2923 = vmatprep.subr.mxu0 0.0
  %2924 = vmatpush1.msra.mxu0 0.0
  %2925 = vmatprep.subr.mxu0 0.0
  %2926 = vmatpush1.msra.mxu0 0.0
  %2927 = vmatprep.subr.mxu0 0.0
  %2928 = vmatpush1.msra.mxu0 0.0
  %2929 = vmatprep.subr.mxu0 0.0
  %2930 = vmatpush1.msra.mxu0 0.0
  %2931 = vmatprep.subr.mxu0 0.0
  %2932 = vmatpush1.msra.mxu0 0.0
  %2933 = vmatprep.subr.mxu0 0.0
  %2934 = vmatpush1.msra.mxu0 0.0
  %2935 = vmatprep.subr.mxu0 0.0
  %2936 = vmatpush1.msra.mxu0 0.0
  %2937 = vmatprep.mubr.f32.mxu0 0.0
  %2938 = vmatmul.mubr.f32.gmra.mrb[0].mxu0 %v2790
  %v2939 = vpop.f32.mrb[0].mxu0
  %v2940 = vadd.f32 %v2651, %v2939
  %v2941 = vpop.f32.mrb[0].mxu0
  %2942 = vmatprep.mubr.f32.mxu0 0.0
  %2943 = vmatmul.mubr.f32.gmra.mrb[0].mxu0 %v2793
  %v2944 = vpop.f32.mrb[0].mxu0
  %v2945 = vadd.f32 %v2656, %v2944
  %v2946 = vpop.f32.mrb[0].mxu0
  %2947 = vmatprep.mubr.f32.mxu0 0.0
  %2948 = vmatmul.mubr.f32.gmra.mrb[0].mxu0 %v2796
  %v2949 = vpop.f32.mrb[0].mxu0
  %v2950 = vadd.f32 %v2661, %v2949
  %v2951 = vpop.f32.mrb[0].mxu0
  %2952 = vmatprep.mubr.f32.mxu0 0.0
  %2953 = vmatmul.mubr.f32.gmra.mrb[0].mxu0 %v2799
  %v2954 = vpop.f32.mrb[0].mxu0
  %v2955 = vadd.f32 %v2666, %v2954
  %v2956 = vpop.f32.mrb[0].mxu0
  %2957 = vmatprep.mubr.f32.mxu0 0.0
  %2958 = vmatmul.mubr.f32.gmra.mrb[0].mxu0 %v2802
  %v2959 = vpop.f32.mrb[0].mxu0
  %v2960 = vadd.f32 %v2671, %v2959
  %v2961 = vpop.f32.mrb[0].mxu0
  %2962 = vmatprep.mubr.f32.mxu0 0.0
  %2963 = vmatmul.mubr.f32.gmra.mrb[0].mxu0 %v2805
  %v2964 = vpop.f32.mrb[0].mxu0
  %v2965 = vadd.f32 %v2676, %v2964
  %v2966 = vpop.f32.mrb[0].mxu0
  %2967 = vmatprep.mubr.f32.mxu0 0.0
  %2968 = vmatmul.mubr.f32.gmra.mrb[0].mxu0 %v2808
  %v2969 = vpop.f32.mrb[0].mxu0
  %v2970 = vadd.f32 %v2681, %v2969
  %v2971 = vpop.f32.mrb[0].mxu0
  %2972 = vmatprep.mubr.f32.mxu0 0.0
  %2973 = vmatmul.mubr.f32.gmra.mrb[0].mxu0 %v2811
  %v2974 = vpop.f32.mrb[0].mxu0
  %v2975 = vadd.f32 %v2686, %v2974
  %v2976 = vpop.f32.mrb[0].mxu0
  %2977 = vmatprep.mubr.f32.mxu0 0.0
  %2978 = vmatmul.mubr.f32.gmra.mrb[0].mxu0 %v2814
  %v2979 = vpop.f32.mrb[0].mxu0
  %v2980 = vadd.f32 %v2691, %v2979
  %v2981 = vpop.f32.mrb[0].mxu0
  %2982 = vmatprep.mubr.f32.mxu0 0.0
  %2983 = vmatmul.mubr.f32.gmra.mrb[0].mxu0 %v2817
  %v2984 = vpop.f32.mrb[0].mxu0
  %v2985 = vadd.f32 %v2696, %v2984
  %v2986 = vpop.f32.mrb[0].mxu0
  %2987 = vmatprep.mubr.f32.mxu0 0.0
  %2988 = vmatmul.mubr.f32.gmra.mrb[0].mxu0 %v2820
  %v2989 = vpop.f32.mrb[0].mxu0
  %v2990 = vadd.f32 %v2701, %v2989
  %v2991 = vpop.f32.mrb[0].mxu0
  %2992 = vmatprep.mubr.f32.mxu0 0.0
  %2993 = vmatmul.mubr.f32.gmra.mrb[0].mxu0 %v2823
  %v2994 = vpop.f32.mrb[0].mxu0
  %v2995 = vadd.f32 %v2706, %v2994
  %v2996 = vpop.f32.mrb[0].mxu0
  %2997 = vmatprep.mubr.f32.mxu0 0.0
  %2998 = vmatmul.mubr.f32.gmra.mrb[0].mxu0 %v2826
  %v2999 = vpop.f32.mrb[0].mxu0
  %v3000 = vadd.f32 %v2711, %v2999
  %v3001 = vpop.f32.mrb[0].mxu0
  %3002 = vmatprep.mubr.f32.mxu0 0.0
  %3003 = vmatmul.mubr.f32.gmra.mrb[0].mxu0 %v2829
  %v3004 = vpop.f32.mrb[0].mxu0
  %v3005 = vadd.f32 %v2716, %v3004
  %v3006 = vpop.f32.mrb[0].mxu0
  %3007 = vmatprep.mubr.f32.mxu0 0.0
  %3008 = vmatmul.mubr.f32.gmra.mrb[0].mxu0 %v2832
  %v3009 = vpop.f32.mrb[0].mxu0
  %v3010 = vadd.f32 %v2721, %v3009
  %v3011 = vpop.f32.mrb[0].mxu0
  %3012 = vmatprep.mubr.f32.mxu0 0.0
  %3013 = vmatmul.mubr.f32.gmra.mrb[0].mxu0 %v2835
  %v3014 = vpop.f32.mrb[0].mxu0
  %v3015 = vadd.f32 %v2726, %v3014
  %v3016 = vpop.f32.mrb[0].mxu0
  %3017 = vmatprep.mubr.f32.mxu0 0.0
  %3018 = vmatmul.mubr.f32.gmra.mrb[0].mxu0 %v2838
  %v3019 = vpop.f32.mrb[0].mxu0
  %v3020 = vadd.f32 %v2731, %v3019
  %v3021 = vpop.f32.mrb[0].mxu0
  %3022 = vmatprep.mubr.f32.mxu0 0.0
  %3023 = vmatmul.mubr.f32.gmra.mrb[0].mxu0 %v2841
  %v3024 = vpop.f32.mrb[0].mxu0
  %v3025 = vadd.f32 %v2736, %v3024
  %v3026 = vpop.f32.mrb[0].mxu0
  %3027 = vmatprep.mubr.f32.mxu0 0.0
  %3028 = vmatmul.mubr.f32.gmra.mrb[0].mxu0 %v2844
  %v3029 = vpop.f32.mrb[0].mxu0
  %v3030 = vadd.f32 %v2741, %v3029
  %v3031 = vpop.f32.mrb[0].mxu0
  %3032 = vmatprep.mubr.f32.mxu0 0.0
  %3033 = vmatmul.mubr.f32.gmra.mrb[0].mxu0 %v2847
  %v3034 = vpop.f32.mrb[0].mxu0
  %v3035 = vadd.f32 %v2746, %v3034
  %v3036 = vpop.f32.mrb[0].mxu0
  %3037 = vmatprep.mubr.f32.mxu0 0.0
  %3038 = vmatmul.mubr.f32.gmra.mrb[0].mxu0 %v2850
  %v3039 = vpop.f32.mrb[0].mxu0
  %v3040 = vadd.f32 %v2751, %v3039
  %v3041 = vpop.f32.mrb[0].mxu0
  %3042 = vmatprep.mubr.f32.mxu0 0.0
  %3043 = vmatmul.mubr.f32.gmra.mrb[0].mxu0 %v2853
  %v3044 = vpop.f32.mrb[0].mxu0
  %v3045 = vadd.f32 %v2756, %v3044
  %v3046 = vpop.f32.mrb[0].mxu0
  %3047 = vmatprep.mubr.f32.mxu0 0.0
  %3048 = vmatmul.mubr.f32.gmra.mrb[0].mxu0 %v2856
  %v3049 = vpop.f32.mrb[0].mxu0
  %v3050 = vadd.f32 %v2761, %v3049
  %v3051 = vpop.f32.mrb[0].mxu0
  %3052 = vmatprep.mubr.f32.mxu0 0.0
  %3053 = vmatmul.mubr.f32.gmra.mrb[0].mxu0 %v2859
  %v3054 = vpop.f32.mrb[0].mxu0
  %v3055 = vadd.f32 %v2766, %v3054
  %v3056 = vpop.f32.mrb[0].mxu0
  %3057 = vmatprep.mubr.f32.mxu0 0.0
  %3058 = vmatmul.mubr.f32.gmra.mrb[0].mxu0 %v2862
  %v3059 = vpop.f32.mrb[0].mxu0
  %v3060 = vadd.f32 %v2771, %v3059
  %v3061 = vpop.f32.mrb[0].mxu0
  %3062 = vmatprep.mubr.f32.mxu0 0.0
  %3063 = vmatmul.mubr.f32.gmra.mrb[0].mxu0 %v2865
  %v3064 = vpop.f32.mrb[0].mxu0
  %v3065 = vadd.f32 %v2776, %v3064
  %v3066 = vpop.f32.mrb[0].mxu0
  %3067 = vmatprep.mubr.f32.mxu0 0.0
  %3068 = vmatmul.mubr.f32.gmra.mrb[0].mxu0 %v2868
  %v3069 = vpop.f32.mrb[0].mxu0
  %v3070 = vadd.f32 %v2781, %v3069
  %v3071 = vpop.f32.mrb[0].mxu0
  %3072 = vmatprep.mubr.f32.mxu0 0.0
  %3073 = vmatmul.mubr.f32.gmra.mrb[0].mxu0 %v2871
  %v3074 = vpop.f32.mrb[0].mxu0
  %v3075 = vadd.f32 %v2786, %v3074
  %v3076 = vpop.f32.mrb[0].mxu0
  %3077 = vdwg.mxu0
  %s3078 = scalar_lea.vmem %s5, 32
  %v3079 = vld [vmem:[%s3078] sm:$0xff]
  %v3080 = vld [vmem:[%s3078 + $0x8] sm:$0x3f]
  %v3082 = vsel %vm2232, %v3080, 0
  %3084 = vmatprep.subr.mxu0 0.0
  %3085 = vmatpush1.msra.mxu0 %v3079
  %3086 = vmatprep.subr.mxu0 0.0
  %3087 = vmatpush1.msra.mxu0 %v3082
  %3088 = vmatprep.subr.mxu0 0.0
  %3089 = vmatpush1.msra.mxu0 0.0
  %3090 = vmatprep.subr.mxu0 0.0
  %3091 = vmatpush1.msra.mxu0 0.0
  %3092 = vmatprep.subr.mxu0 0.0
  %3093 = vmatpush1.msra.mxu0 0.0
  %3094 = vmatprep.subr.mxu0 0.0
  %3095 = vmatpush1.msra.mxu0 0.0
  %3096 = vmatprep.subr.mxu0 0.0
  %3097 = vmatpush1.msra.mxu0 0.0
  %3098 = vmatprep.subr.mxu0 0.0
  %3099 = vmatpush1.msra.mxu0 0.0
  %3100 = vmatprep.subr.mxu0 0.0
  %3101 = vmatpush1.msra.mxu0 0.0
  %3102 = vmatprep.subr.mxu0 0.0
  %3103 = vmatpush1.msra.mxu0 0.0
  %3104 = vmatprep.subr.mxu0 0.0
  %3105 = vmatpush1.msra.mxu0 0.0
  %3106 = vmatprep.subr.mxu0 0.0
  %3107 = vmatpush1.msra.mxu0 0.0
  %3108 = vmatprep.subr.mxu0 0.0
  %3109 = vmatpush1.msra.mxu0 0.0
  %3110 = vmatprep.subr.mxu0 0.0
  %3111 = vmatpush1.msra.mxu0 0.0
  %3112 = vmatprep.subr.mxu0 0.0
  %3113 = vmatpush1.msra.mxu0 0.0
  %3114 = vmatprep.subr.mxu0 0.0
  %3115 = vmatpush1.msra.mxu0 0.0
  %3116 = vmatprep.subr.mxu0 0.0
  %3117 = vmatpush1.msra.mxu0 0.0
  %3118 = vmatprep.subr.mxu0 0.0
  %3119 = vmatpush1.msra.mxu0 0.0
  %3120 = vmatprep.subr.mxu0 0.0
  %3121 = vmatpush1.msra.mxu0 0.0
  %3122 = vmatprep.subr.mxu0 0.0
  %3123 = vmatpush1.msra.mxu0 0.0
  %3124 = vmatprep.subr.mxu0 0.0
  %3125 = vmatpush1.msra.mxu0 0.0
  %3126 = vmatprep.subr.mxu0 0.0
  %3127 = vmatpush1.msra.mxu0 0.0
  %3128 = vmatprep.subr.mxu0 0.0
  %3129 = vmatpush1.msra.mxu0 0.0
  %3130 = vmatprep.subr.mxu0 0.0
  %3131 = vmatpush1.msra.mxu0 0.0
  %3132 = vmatprep.subr.mxu0 0.0
  %3133 = vmatpush1.msra.mxu0 0.0
  %3134 = vmatprep.subr.mxu0 0.0
  %3135 = vmatpush1.msra.mxu0 0.0
  %3136 = vmatprep.subr.mxu0 0.0
  %3137 = vmatpush1.msra.mxu0 0.0
  %3138 = vmatprep.subr.mxu0 0.0
  %3139 = vmatpush1.msra.mxu0 0.0
  %3140 = vmatprep.subr.mxu0 0.0
  %3141 = vmatpush1.msra.mxu0 0.0
  %3142 = vmatprep.subr.mxu0 0.0
  %3143 = vmatpush1.msra.mxu0 0.0
  %3144 = vmatprep.subr.mxu0 0.0
  %3145 = vmatpush1.msra.mxu0 0.0
  %3146 = vmatprep.subr.mxu0 0.0
  %3147 = vmatpush1.msra.mxu0 0.0
  %3148 = vmatprep.mubr.f32.mxu0 0.0
  %3149 = vmatmul.mubr.f32.gmra.mrb[0].mxu0 %v2212
  %v3150 = vpop.f32.mrb[0].mxu0
  %v3151 = vadd.f32 0.0, %v3150
  %v3152 = vpop.f32.mrb[0].mxu0
  %3153 = vmatprep.mubr.f32.mxu0 0.0
  %3154 = vmatmul.mubr.f32.gmra.mrb[0].mxu0 %v2215
  %v3155 = vpop.f32.mrb[0].mxu0
  %v3156 = vadd.f32 0.0, %v3155
  %v3157 = vpop.f32.mrb[0].mxu0
  %3158 = vmatprep.mubr.f32.mxu0 0.0
  %3159 = vmatmul.mubr.f32.gmra.mrb[0].mxu0 %v2218
  %v3160 = vpop.f32.mrb[0].mxu0
  %v3161 = vadd.f32 0.0, %v3160
  %v3162 = vpop.f32.mrb[0].mxu0
  %3163 = vmatprep.mubr.f32.mxu0 0.0
  %3164 = vmatmul.mubr.f32.gmra.mrb[0].mxu0 %v2221
  %v3165 = vpop.f32.mrb[0].mxu0
  %v3166 = vadd.f32 0.0, %v3165
  %v3167 = vpop.f32.mrb[0].mxu0
  %3168 = vmatprep.mubr.f32.mxu0 0.0
  %3169 = vmatmul.mubr.f32.gmra.mrb[0].mxu0 %v2224
  %v3170 = vpop.f32.mrb[0].mxu0
  %v3171 = vadd.f32 0.0, %v3170
  %v3172 = vpop.f32.mrb[0].mxu0
  %3173 = vmatprep.mubr.f32.mxu0 0.0
  %3174 = vmatmul.mubr.f32.gmra.mrb[0].mxu0 %v2227
  %v3175 = vpop.f32.mrb[0].mxu0
  %v3176 = vadd.f32 0.0, %v3175
  %v3177 = vpop.f32.mrb[0].mxu0
  %3178 = vmatprep.mubr.f32.mxu0 0.0
  %3179 = vmatmul.mubr.f32.gmra.mrb[0].mxu0 %v2230
  %v3180 = vpop.f32.mrb[0].mxu0
  %v3181 = vadd.f32 0.0, %v3180
  %v3182 = vpop.f32.mrb[0].mxu0
  %3183 = vdwg.mxu0
  %s3184 = scalar_lea.vmem %s4, 448
  %v3185 = vld [vmem:[%s3184] sm:$0xff]
  %v3186 = vld [vmem:[%s3184 + $0x8] sm:$0xff]
  %v3187 = vld [vmem:[%s3184 + $0x10] sm:$0xff]
  %v3188 = vld [vmem:[%s3184 + $0x18] sm:$0xff]
  %v3189 = vld [vmem:[%s3184 + $0x20] sm:$0xff]
  %v3190 = vld [vmem:[%s3184 + $0x28] sm:$0xff]
  %v3191 = vld [vmem:[%s3184 + $0x30] sm:$0xff]
  %v3192 = vld [vmem:[%s3184 + $0x38] sm:$0xff]
  %v3193 = vld [vmem:[%s3184 + $0x40] sm:$0xff]
  %v3194 = vld [vmem:[%s3184 + $0x48] sm:$0xff]
  %v3195 = vld [vmem:[%s3184 + $0x50] sm:$0xff]
  %v3196 = vld [vmem:[%s3184 + $0x58] sm:$0xff]
  %v3197 = vld [vmem:[%s3184 + $0x60] sm:$0xff]
  %v3198 = vld [vmem:[%s3184 + $0x68] sm:$0xff]
  %v3199 = vld [vmem:[%s3184 + $0x70] sm:$0xff]
  %v3200 = vld [vmem:[%s3184 + $0x78] sm:$0xff]
  %v3201 = vld [vmem:[%s3184 + $0x80] sm:$0xff]
  %v3202 = vld [vmem:[%s3184 + $0x88] sm:$0xff]
  %v3203 = vld [vmem:[%s3184 + $0x90] sm:$0xff]
  %v3204 = vld [vmem:[%s3184 + $0x98] sm:$0xff]
  %v3205 = vld [vmem:[%s3184 + $0xa0] sm:$0xff]
  %v3206 = vld [vmem:[%s3184 + $0xa8] sm:$0xff]
  %v3207 = vld [vmem:[%s3184 + $0xb0] sm:$0xff]
  %v3208 = vld [vmem:[%s3184 + $0xb8] sm:$0xff]
  %v3209 = vld [vmem:[%s3184 + $0xc0] sm:$0xff]
  %v3210 = vld [vmem:[%s3184 + $0xc8] sm:$0xff]
  %v3211 = vld [vmem:[%s3184 + $0xd0] sm:$0xff]
  %v3212 = vld [vmem:[%s3184 + $0xd8] sm:$0xff]
  %v3214 = vsel %vm2499, %v3185, 0
  %v3217 = vsel %vm2499, %v3186, 0
  %v3220 = vsel %vm2499, %v3187, 0
  %v3223 = vsel %vm2499, %v3188, 0
  %v3226 = vsel %vm2499, %v3189, 0
  %v3229 = vsel %vm2499, %v3190, 0
  %v3232 = vsel %vm2499, %v3191, 0
  %v3235 = vsel %vm2499, %v3192, 0
  %v3238 = vsel %vm2499, %v3193, 0
  %v3241 = vsel %vm2499, %v3194, 0
  %v3244 = vsel %vm2499, %v3195, 0
  %v3247 = vsel %vm2499, %v3196, 0
  %v3250 = vsel %vm2499, %v3197, 0
  %v3253 = vsel %vm2499, %v3198, 0
  %v3256 = vsel %vm2499, %v3199, 0
  %v3259 = vsel %vm2499, %v3200, 0
  %v3262 = vsel %vm2499, %v3201, 0
  %v3265 = vsel %vm2499, %v3202, 0
  %v3268 = vsel %vm2499, %v3203, 0
  %v3271 = vsel %vm2499, %v3204, 0
  %v3274 = vsel %vm2499, %v3205, 0
  %v3277 = vsel %vm2499, %v3206, 0
  %v3280 = vsel %vm2499, %v3207, 0
  %v3283 = vsel %vm2499, %v3208, 0
  %v3286 = vsel %vm2499, %v3209, 0
  %v3289 = vsel %vm2499, %v3210, 0
  %v3292 = vsel %vm2499, %v3211, 0
  %v3295 = vsel %vm2499, %v3212, 0
  %3297 = vmatprep.subr.mxu0 0.0
  %3298 = vmatpush1.msra.mxu0 %v3151
  %3299 = vmatprep.subr.mxu0 0.0
  %3300 = vmatpush1.msra.mxu0 %v3156
  %3301 = vmatprep.subr.mxu0 0.0
  %3302 = vmatpush1.msra.mxu0 %v3161
  %3303 = vmatprep.subr.mxu0 0.0
  %3304 = vmatpush1.msra.mxu0 %v3166
  %3305 = vmatprep.subr.mxu0 0.0
  %3306 = vmatpush1.msra.mxu0 %v3171
  %3307 = vmatprep.subr.mxu0 0.0
  %3308 = vmatpush1.msra.mxu0 %v3176
  %3309 = vmatprep.subr.mxu0 0.0
  %3310 = vmatpush1.msra.mxu0 %v3181
  %3311 = vmatprep.subr.mxu0 0.0
  %3312 = vmatpush1.msra.mxu0 0.0
  %3313 = vmatprep.subr.mxu0 0.0
  %3314 = vmatpush1.msra.mxu0 0.0
  %3315 = vmatprep.subr.mxu0 0.0
  %3316 = vmatpush1.msra.mxu0 0.0
  %3317 = vmatprep.subr.mxu0 0.0
  %3318 = vmatpush1.msra.mxu0 0.0
  %3319 = vmatprep.subr.mxu0 0.0
  %3320 = vmatpush1.msra.mxu0 0.0
  %3321 = vmatprep.subr.mxu0 0.0
  %3322 = vmatpush1.msra.mxu0 0.0
  %3323 = vmatprep.subr.mxu0 0.0
  %3324 = vmatpush1.msra.mxu0 0.0
  %3325 = vmatprep.subr.mxu0 0.0
  %3326 = vmatpush1.msra.mxu0 0.0
  %3327 = vmatprep.subr.mxu0 0.0
  %3328 = vmatpush1.msra.mxu0 0.0
  %3329 = vmatprep.subr.mxu0 0.0
  %3330 = vmatpush1.msra.mxu0 0.0
  %3331 = vmatprep.subr.mxu0 0.0
  %3332 = vmatpush1.msra.mxu0 0.0
  %3333 = vmatprep.subr.mxu0 0.0
  %3334 = vmatpush1.msra.mxu0 0.0
  %3335 = vmatprep.subr.mxu0 0.0
  %3336 = vmatpush1.msra.mxu0 0.0
  %3337 = vmatprep.subr.mxu0 0.0
  %3338 = vmatpush1.msra.mxu0 0.0
  %3339 = vmatprep.subr.mxu0 0.0
  %3340 = vmatpush1.msra.mxu0 0.0
  %3341 = vmatprep.subr.mxu0 0.0
  %3342 = vmatpush1.msra.mxu0 0.0
  %3343 = vmatprep.subr.mxu0 0.0
  %3344 = vmatpush1.msra.mxu0 0.0
  %3345 = vmatprep.subr.mxu0 0.0
  %3346 = vmatpush1.msra.mxu0 0.0
  %3347 = vmatprep.subr.mxu0 0.0
  %3348 = vmatpush1.msra.mxu0 0.0
  %3349 = vmatprep.subr.mxu0 0.0
  %3350 = vmatpush1.msra.mxu0 0.0
  %3351 = vmatprep.subr.mxu0 0.0
  %3352 = vmatpush1.msra.mxu0 0.0
  %3353 = vmatprep.subr.mxu0 0.0
  %3354 = vmatpush1.msra.mxu0 0.0
  %3355 = vmatprep.subr.mxu0 0.0
  %3356 = vmatpush1.msra.mxu0 0.0
  %3357 = vmatprep.subr.mxu0 0.0
  %3358 = vmatpush1.msra.mxu0 0.0
  %3359 = vmatprep.subr.mxu0 0.0
  %3360 = vmatpush1.msra.mxu0 0.0
  %3361 = vmatprep.mubr.f32.mxu0 0.0
  %3362 = vmatmul.mubr.f32.gmra.mrb[0].mxu0 %v3214
  %v3363 = vpop.f32.mrb[0].mxu0
  %v3364 = vadd.f32 0.0, %v3363
  %v3365 = vpop.f32.mrb[0].mxu0
  %3366 = vmatprep.mubr.f32.mxu0 0.0
  %3367 = vmatmul.mubr.f32.gmra.mrb[0].mxu0 %v3217
  %v3368 = vpop.f32.mrb[0].mxu0
  %v3369 = vadd.f32 0.0, %v3368
  %v3370 = vpop.f32.mrb[0].mxu0
  %3371 = vmatprep.mubr.f32.mxu0 0.0
  %3372 = vmatmul.mubr.f32.gmra.mrb[0].mxu0 %v3220
  %v3373 = vpop.f32.mrb[0].mxu0
  %v3374 = vadd.f32 0.0, %v3373
  %v3375 = vpop.f32.mrb[0].mxu0
  %3376 = vmatprep.mubr.f32.mxu0 0.0
  %3377 = vmatmul.mubr.f32.gmra.mrb[0].mxu0 %v3223
  %v3378 = vpop.f32.mrb[0].mxu0
  %v3379 = vadd.f32 0.0, %v3378
  %v3380 = vpop.f32.mrb[0].mxu0
  %3381 = vmatprep.mubr.f32.mxu0 0.0
  %3382 = vmatmul.mubr.f32.gmra.mrb[0].mxu0 %v3226
  %v3383 = vpop.f32.mrb[0].mxu0
  %v3384 = vadd.f32 0.0, %v3383
  %v3385 = vpop.f32.mrb[0].mxu0
  %3386 = vmatprep.mubr.f32.mxu0 0.0
  %3387 = vmatmul.mubr.f32.gmra.mrb[0].mxu0 %v3229
  %v3388 = vpop.f32.mrb[0].mxu0
  %v3389 = vadd.f32 0.0, %v3388
  %v3390 = vpop.f32.mrb[0].mxu0
  %3391 = vmatprep.mubr.f32.mxu0 0.0
  %3392 = vmatmul.mubr.f32.gmra.mrb[0].mxu0 %v3232
  %v3393 = vpop.f32.mrb[0].mxu0
  %v3394 = vadd.f32 0.0, %v3393
  %v3395 = vpop.f32.mrb[0].mxu0
  %3396 = vmatprep.mubr.f32.mxu0 0.0
  %3397 = vmatmul.mubr.f32.gmra.mrb[0].mxu0 %v3235
  %v3398 = vpop.f32.mrb[0].mxu0
  %v3399 = vadd.f32 0.0, %v3398
  %v3400 = vpop.f32.mrb[0].mxu0
  %3401 = vmatprep.mubr.f32.mxu0 0.0
  %3402 = vmatmul.mubr.f32.gmra.mrb[0].mxu0 %v3238
  %v3403 = vpop.f32.mrb[0].mxu0
  %v3404 = vadd.f32 0.0, %v3403
  %v3405 = vpop.f32.mrb[0].mxu0
  %3406 = vmatprep.mubr.f32.mxu0 0.0
  %3407 = vmatmul.mubr.f32.gmra.mrb[0].mxu0 %v3241
  %v3408 = vpop.f32.mrb[0].mxu0
  %v3409 = vadd.f32 0.0, %v3408
  %v3410 = vpop.f32.mrb[0].mxu0
  %3411 = vmatprep.mubr.f32.mxu0 0.0
  %3412 = vmatmul.mubr.f32.gmra.mrb[0].mxu0 %v3244
  %v3413 = vpop.f32.mrb[0].mxu0
  %v3414 = vadd.f32 0.0, %v3413
  %v3415 = vpop.f32.mrb[0].mxu0
  %3416 = vmatprep.mubr.f32.mxu0 0.0
  %3417 = vmatmul.mubr.f32.gmra.mrb[0].mxu0 %v3247
  %v3418 = vpop.f32.mrb[0].mxu0
  %v3419 = vadd.f32 0.0, %v3418
  %v3420 = vpop.f32.mrb[0].mxu0
  %3421 = vmatprep.mubr.f32.mxu0 0.0
  %3422 = vmatmul.mubr.f32.gmra.mrb[0].mxu0 %v3250
  %v3423 = vpop.f32.mrb[0].mxu0
  %v3424 = vadd.f32 0.0, %v3423
  %v3425 = vpop.f32.mrb[0].mxu0
  %3426 = vmatprep.mubr.f32.mxu0 0.0
  %3427 = vmatmul.mubr.f32.gmra.mrb[0].mxu0 %v3253
  %v3428 = vpop.f32.mrb[0].mxu0
  %v3429 = vadd.f32 0.0, %v3428
  %v3430 = vpop.f32.mrb[0].mxu0
  %3431 = vmatprep.mubr.f32.mxu0 0.0
  %3432 = vmatmul.mubr.f32.gmra.mrb[0].mxu0 %v3256
  %v3433 = vpop.f32.mrb[0].mxu0
  %v3434 = vadd.f32 0.0, %v3433
  %v3435 = vpop.f32.mrb[0].mxu0
  %3436 = vmatprep.mubr.f32.mxu0 0.0
  %3437 = vmatmul.mubr.f32.gmra.mrb[0].mxu0 %v3259
  %v3438 = vpop.f32.mrb[0].mxu0
  %v3439 = vadd.f32 0.0, %v3438
  %v3440 = vpop.f32.mrb[0].mxu0
  %3441 = vmatprep.mubr.f32.mxu0 0.0
  %3442 = vmatmul.mubr.f32.gmra.mrb[0].mxu0 %v3262
  %v3443 = vpop.f32.mrb[0].mxu0
  %v3444 = vadd.f32 0.0, %v3443
  %v3445 = vpop.f32.mrb[0].mxu0
  %3446 = vmatprep.mubr.f32.mxu0 0.0
  %3447 = vmatmul.mubr.f32.gmra.mrb[0].mxu0 %v3265
  %v3448 = vpop.f32.mrb[0].mxu0
  %v3449 = vadd.f32 0.0, %v3448
  %v3450 = vpop.f32.mrb[0].mxu0
  %3451 = vmatprep.mubr.f32.mxu0 0.0
  %3452 = vmatmul.mubr.f32.gmra.mrb[0].mxu0 %v3268
  %v3453 = vpop.f32.mrb[0].mxu0
  %v3454 = vadd.f32 0.0, %v3453
  %v3455 = vpop.f32.mrb[0].mxu0
  %3456 = vmatprep.mubr.f32.mxu0 0.0
  %3457 = vmatmul.mubr.f32.gmra.mrb[0].mxu0 %v3271
  %v3458 = vpop.f32.mrb[0].mxu0
  %v3459 = vadd.f32 0.0, %v3458
  %v3460 = vpop.f32.mrb[0].mxu0
  %3461 = vmatprep.mubr.f32.mxu0 0.0
  %3462 = vmatmul.mubr.f32.gmra.mrb[0].mxu0 %v3274
  %v3463 = vpop.f32.mrb[0].mxu0
  %v3464 = vadd.f32 0.0, %v3463
  %v3465 = vpop.f32.mrb[0].mxu0
  %3466 = vmatprep.mubr.f32.mxu0 0.0
  %3467 = vmatmul.mubr.f32.gmra.mrb[0].mxu0 %v3277
  %v3468 = vpop.f32.mrb[0].mxu0
  %v3469 = vadd.f32 0.0, %v3468
  %v3470 = vpop.f32.mrb[0].mxu0
  %3471 = vmatprep.mubr.f32.mxu0 0.0
  %3472 = vmatmul.mubr.f32.gmra.mrb[0].mxu0 %v3280
  %v3473 = vpop.f32.mrb[0].mxu0
  %v3474 = vadd.f32 0.0, %v3473
  %v3475 = vpop.f32.mrb[0].mxu0
  %3476 = vmatprep.mubr.f32.mxu0 0.0
  %3477 = vmatmul.mubr.f32.gmra.mrb[0].mxu0 %v3283
  %v3478 = vpop.f32.mrb[0].mxu0
  %v3479 = vadd.f32 0.0, %v3478
  %v3480 = vpop.f32.mrb[0].mxu0
  %3481 = vmatprep.mubr.f32.mxu0 0.0
  %3482 = vmatmul.mubr.f32.gmra.mrb[0].mxu0 %v3286
  %v3483 = vpop.f32.mrb[0].mxu0
  %v3484 = vadd.f32 0.0, %v3483
  %v3485 = vpop.f32.mrb[0].mxu0
  %3486 = vmatprep.mubr.f32.mxu0 0.0
  %3487 = vmatmul.mubr.f32.gmra.mrb[0].mxu0 %v3289
  %v3488 = vpop.f32.mrb[0].mxu0
  %v3489 = vadd.f32 0.0, %v3488
  %v3490 = vpop.f32.mrb[0].mxu0
  %3491 = vmatprep.mubr.f32.mxu0 0.0
  %3492 = vmatmul.mubr.f32.gmra.mrb[0].mxu0 %v3292
  %v3493 = vpop.f32.mrb[0].mxu0
  %v3494 = vadd.f32 0.0, %v3493
  %v3495 = vpop.f32.mrb[0].mxu0
  %3496 = vmatprep.mubr.f32.mxu0 0.0
  %3497 = vmatmul.mubr.f32.gmra.mrb[0].mxu0 %v3295
  %v3498 = vpop.f32.mrb[0].mxu0
  %v3499 = vadd.f32 0.0, %v3498
  %v3500 = vpop.f32.mrb[0].mxu0
  %3501 = vdwg.mxu0
  %v3502 = vadd.f32 %v2940, %v3364
  %v3503 = vadd.f32 %v2945, %v3369
  %v3504 = vadd.f32 %v2950, %v3374
  %v3505 = vadd.f32 %v2955, %v3379
  %v3506 = vadd.f32 %v2960, %v3384
  %v3507 = vadd.f32 %v2965, %v3389
  %v3508 = vadd.f32 %v2970, %v3394
  %v3509 = vadd.f32 %v2975, %v3399
  %v3510 = vadd.f32 %v2980, %v3404
  %v3511 = vadd.f32 %v2985, %v3409
  %v3512 = vadd.f32 %v2990, %v3414
  %v3513 = vadd.f32 %v2995, %v3419
  %v3514 = vadd.f32 %v3000, %v3424
  %v3515 = vadd.f32 %v3005, %v3429
  %v3516 = vadd.f32 %v3010, %v3434
  %v3517 = vadd.f32 %v3015, %v3439
  %v3518 = vadd.f32 %v3020, %v3444
  %v3519 = vadd.f32 %v3025, %v3449
  %v3520 = vadd.f32 %v3030, %v3454
  %v3521 = vadd.f32 %v3035, %v3459
  %v3522 = vadd.f32 %v3040, %v3464
  %v3523 = vadd.f32 %v3045, %v3469
  %v3524 = vadd.f32 %v3050, %v3474
  %v3525 = vadd.f32 %v3055, %v3479
  %v3526 = vadd.f32 %v3060, %v3484
  %v3527 = vadd.f32 %v3065, %v3489
  %v3528 = vadd.f32 %v3070, %v3494
  %v3529 = vadd.f32 %v3075, %v3499
  %s3530 = scalar_lea.vmem %s5, 48
  %v3531 = vld [vmem:[%s3530] sm:$0xff]
  %v3532 = vld [vmem:[%s3530 + $0x8] sm:$0x3f]
  %v3534 = vsel %vm2232, %v3532, 0
  %3536 = vmatprep.subr.mxu0 0.0
  %3537 = vmatpush1.msra.mxu0 %v3531
  %3538 = vmatprep.subr.mxu0 0.0
  %3539 = vmatpush1.msra.mxu0 %v3534
  %3540 = vmatprep.subr.mxu0 0.0
  %3541 = vmatpush1.msra.mxu0 0.0
  %3542 = vmatprep.subr.mxu0 0.0
  %3543 = vmatpush1.msra.mxu0 0.0
  %3544 = vmatprep.subr.mxu0 0.0
  %3545 = vmatpush1.msra.mxu0 0.0
  %3546 = vmatprep.subr.mxu0 0.0
  %3547 = vmatpush1.msra.mxu0 0.0
  %3548 = vmatprep.subr.mxu0 0.0
  %3549 = vmatpush1.msra.mxu0 0.0
  %3550 = vmatprep.subr.mxu0 0.0
  %3551 = vmatpush1.msra.mxu0 0.0
  %3552 = vmatprep.subr.mxu0 0.0
  %3553 = vmatpush1.msra.mxu0 0.0
  %3554 = vmatprep.subr.mxu0 0.0
  %3555 = vmatpush1.msra.mxu0 0.0
  %3556 = vmatprep.subr.mxu0 0.0
  %3557 = vmatpush1.msra.mxu0 0.0
  %3558 = vmatprep.subr.mxu0 0.0
  %3559 = vmatpush1.msra.mxu0 0.0
  %3560 = vmatprep.subr.mxu0 0.0
  %3561 = vmatpush1.msra.mxu0 0.0
  %3562 = vmatprep.subr.mxu0 0.0
  %3563 = vmatpush1.msra.mxu0 0.0
  %3564 = vmatprep.subr.mxu0 0.0
  %3565 = vmatpush1.msra.mxu0 0.0
  %3566 = vmatprep.subr.mxu0 0.0
  %3567 = vmatpush1.msra.mxu0 0.0
  %3568 = vmatprep.subr.mxu0 0.0
  %3569 = vmatpush1.msra.mxu0 0.0
  %3570 = vmatprep.subr.mxu0 0.0
  %3571 = vmatpush1.msra.mxu0 0.0
  %3572 = vmatprep.subr.mxu0 0.0
  %3573 = vmatpush1.msra.mxu0 0.0
  %3574 = vmatprep.subr.mxu0 0.0
  %3575 = vmatpush1.msra.mxu0 0.0
  %3576 = vmatprep.subr.mxu0 0.0
  %3577 = vmatpush1.msra.mxu0 0.0
  %3578 = vmatprep.subr.mxu0 0.0
  %3579 = vmatpush1.msra.mxu0 0.0
  %3580 = vmatprep.subr.mxu0 0.0
  %3581 = vmatpush1.msra.mxu0 0.0
  %3582 = vmatprep.subr.mxu0 0.0
  %3583 = vmatpush1.msra.mxu0 0.0
  %3584 = vmatprep.subr.mxu0 0.0
  %3585 = vmatpush1.msra.mxu0 0.0
  %3586 = vmatprep.subr.mxu0 0.0
  %3587 = vmatpush1.msra.mxu0 0.0
  %3588 = vmatprep.subr.mxu0 0.0
  %3589 = vmatpush1.msra.mxu0 0.0
  %3590 = vmatprep.subr.mxu0 0.0
  %3591 = vmatpush1.msra.mxu0 0.0
  %3592 = vmatprep.subr.mxu0 0.0
  %3593 = vmatpush1.msra.mxu0 0.0
  %3594 = vmatprep.subr.mxu0 0.0
  %3595 = vmatpush1.msra.mxu0 0.0
  %3596 = vmatprep.subr.mxu0 0.0
  %3597 = vmatpush1.msra.mxu0 0.0
  %3598 = vmatprep.subr.mxu0 0.0
  %3599 = vmatpush1.msra.mxu0 0.0
  %3600 = vmatprep.mubr.f32.mxu0 0.0
  %3601 = vmatmul.mubr.f32.gmra.mrb[0].mxu0 %v2212
  %v3602 = vpop.f32.mrb[0].mxu0
  %v3603 = vadd.f32 0.0, %v3602
  %v3604 = vpop.f32.mrb[0].mxu0
  %3605 = vmatprep.mubr.f32.mxu0 0.0
  %3606 = vmatmul.mubr.f32.gmra.mrb[0].mxu0 %v2215
  %v3607 = vpop.f32.mrb[0].mxu0
  %v3608 = vadd.f32 0.0, %v3607
  %v3609 = vpop.f32.mrb[0].mxu0
  %3610 = vmatprep.mubr.f32.mxu0 0.0
  %3611 = vmatmul.mubr.f32.gmra.mrb[0].mxu0 %v2218
  %v3612 = vpop.f32.mrb[0].mxu0
  %v3613 = vadd.f32 0.0, %v3612
  %v3614 = vpop.f32.mrb[0].mxu0
  %3615 = vmatprep.mubr.f32.mxu0 0.0
  %3616 = vmatmul.mubr.f32.gmra.mrb[0].mxu0 %v2221
  %v3617 = vpop.f32.mrb[0].mxu0
  %v3618 = vadd.f32 0.0, %v3617
  %v3619 = vpop.f32.mrb[0].mxu0
  %3620 = vmatprep.mubr.f32.mxu0 0.0
  %3621 = vmatmul.mubr.f32.gmra.mrb[0].mxu0 %v2224
  %v3622 = vpop.f32.mrb[0].mxu0
  %v3623 = vadd.f32 0.0, %v3622
  %v3624 = vpop.f32.mrb[0].mxu0
  %3625 = vmatprep.mubr.f32.mxu0 0.0
  %3626 = vmatmul.mubr.f32.gmra.mrb[0].mxu0 %v2227
  %v3627 = vpop.f32.mrb[0].mxu0
  %v3628 = vadd.f32 0.0, %v3627
  %v3629 = vpop.f32.mrb[0].mxu0
  %3630 = vmatprep.mubr.f32.mxu0 0.0
  %3631 = vmatmul.mubr.f32.gmra.mrb[0].mxu0 %v2230
  %v3632 = vpop.f32.mrb[0].mxu0
  %v3633 = vadd.f32 0.0, %v3632
  %v3634 = vpop.f32.mrb[0].mxu0
  %3635 = vdwg.mxu0
  %s3636 = scalar_lea.vmem %s4, 672
  %v3637 = vld [vmem:[%s3636] sm:$0xff]
  %v3638 = vld [vmem:[%s3636 + $0x8] sm:$0xff]
  %v3639 = vld [vmem:[%s3636 + $0x10] sm:$0xff]
  %v3640 = vld [vmem:[%s3636 + $0x18] sm:$0xff]
  %v3641 = vld [vmem:[%s3636 + $0x20] sm:$0xff]
  %v3642 = vld [vmem:[%s3636 + $0x28] sm:$0xff]
  %v3643 = vld [vmem:[%s3636 + $0x30] sm:$0xff]
  %v3644 = vld [vmem:[%s3636 + $0x38] sm:$0xff]
  %v3645 = vld [vmem:[%s3636 + $0x40] sm:$0xff]
  %v3646 = vld [vmem:[%s3636 + $0x48] sm:$0xff]
  %v3647 = vld [vmem:[%s3636 + $0x50] sm:$0xff]
  %v3648 = vld [vmem:[%s3636 + $0x58] sm:$0xff]
  %v3649 = vld [vmem:[%s3636 + $0x60] sm:$0xff]
  %v3650 = vld [vmem:[%s3636 + $0x68] sm:$0xff]
  %v3651 = vld [vmem:[%s3636 + $0x70] sm:$0xff]
  %v3652 = vld [vmem:[%s3636 + $0x78] sm:$0xff]
  %v3653 = vld [vmem:[%s3636 + $0x80] sm:$0xff]
  %v3654 = vld [vmem:[%s3636 + $0x88] sm:$0xff]
  %v3655 = vld [vmem:[%s3636 + $0x90] sm:$0xff]
  %v3656 = vld [vmem:[%s3636 + $0x98] sm:$0xff]
  %v3657 = vld [vmem:[%s3636 + $0xa0] sm:$0xff]
  %v3658 = vld [vmem:[%s3636 + $0xa8] sm:$0xff]
  %v3659 = vld [vmem:[%s3636 + $0xb0] sm:$0xff]
  %v3660 = vld [vmem:[%s3636 + $0xb8] sm:$0xff]
  %v3661 = vld [vmem:[%s3636 + $0xc0] sm:$0xff]
  %v3662 = vld [vmem:[%s3636 + $0xc8] sm:$0xff]
  %v3663 = vld [vmem:[%s3636 + $0xd0] sm:$0xff]
  %v3664 = vld [vmem:[%s3636 + $0xd8] sm:$0xff]
  %v3666 = vsel %vm2499, %v3637, 0
  %v3669 = vsel %vm2499, %v3638, 0
  %v3672 = vsel %vm2499, %v3639, 0
  %v3675 = vsel %vm2499, %v3640, 0
  %v3678 = vsel %vm2499, %v3641, 0
  %v3681 = vsel %vm2499, %v3642, 0
  %v3684 = vsel %vm2499, %v3643, 0
  %v3687 = vsel %vm2499, %v3644, 0
  %v3690 = vsel %vm2499, %v3645, 0
  %v3693 = vsel %vm2499, %v3646, 0
  %v3696 = vsel %vm2499, %v3647, 0
  %v3699 = vsel %vm2499, %v3648, 0
  %v3702 = vsel %vm2499, %v3649, 0
  %v3705 = vsel %vm2499, %v3650, 0
  %v3708 = vsel %vm2499, %v3651, 0
  %v3711 = vsel %vm2499, %v3652, 0
  %v3714 = vsel %vm2499, %v3653, 0
  %v3717 = vsel %vm2499, %v3654, 0
  %v3720 = vsel %vm2499, %v3655, 0
  %v3723 = vsel %vm2499, %v3656, 0
  %v3726 = vsel %vm2499, %v3657, 0
  %v3729 = vsel %vm2499, %v3658, 0
  %v3732 = vsel %vm2499, %v3659, 0
  %v3735 = vsel %vm2499, %v3660, 0
  %v3738 = vsel %vm2499, %v3661, 0
  %v3741 = vsel %vm2499, %v3662, 0
  %v3744 = vsel %vm2499, %v3663, 0
  %v3747 = vsel %vm2499, %v3664, 0
  %3749 = vmatprep.subr.mxu0 0.0
  %3750 = vmatpush1.msra.mxu0 %v3603
  %3751 = vmatprep.subr.mxu0 0.0
  %3752 = vmatpush1.msra.mxu0 %v3608
  %3753 = vmatprep.subr.mxu0 0.0
  %3754 = vmatpush1.msra.mxu0 %v3613
  %3755 = vmatprep.subr.mxu0 0.0
  %3756 = vmatpush1.msra.mxu0 %v3618
  %3757 = vmatprep.subr.mxu0 0.0
  %3758 = vmatpush1.msra.mxu0 %v3623
  %3759 = vmatprep.subr.mxu0 0.0
  %3760 = vmatpush1.msra.mxu0 %v3628
  %3761 = vmatprep.subr.mxu0 0.0
  %3762 = vmatpush1.msra.mxu0 %v3633
  %3763 = vmatprep.subr.mxu0 0.0
  %3764 = vmatpush1.msra.mxu0 0.0
  %3765 = vmatprep.subr.mxu0 0.0
  %3766 = vmatpush1.msra.mxu0 0.0
  %3767 = vmatprep.subr.mxu0 0.0
  %3768 = vmatpush1.msra.mxu0 0.0
  %3769 = vmatprep.subr.mxu0 0.0
  %3770 = vmatpush1.msra.mxu0 0.0
  %3771 = vmatprep.subr.mxu0 0.0
  %3772 = vmatpush1.msra.mxu0 0.0
  %3773 = vmatprep.subr.mxu0 0.0
  %3774 = vmatpush1.msra.mxu0 0.0
  %3775 = vmatprep.subr.mxu0 0.0
  %3776 = vmatpush1.msra.mxu0 0.0
  %3777 = vmatprep.subr.mxu0 0.0
  %3778 = vmatpush1.msra.mxu0 0.0
  %3779 = vmatprep.subr.mxu0 0.0
  %3780 = vmatpush1.msra.mxu0 0.0
  %3781 = vmatprep.subr.mxu0 0.0
  %3782 = vmatpush1.msra.mxu0 0.0
  %3783 = vmatprep.subr.mxu0 0.0
  %3784 = vmatpush1.msra.mxu0 0.0
  %3785 = vmatprep.subr.mxu0 0.0
  %3786 = vmatpush1.msra.mxu0 0.0
  %3787 = vmatprep.subr.mxu0 0.0
  %3788 = vmatpush1.msra.mxu0 0.0
  %3789 = vmatprep.subr.mxu0 0.0
  %3790 = vmatpush1.msra.mxu0 0.0
  %3791 = vmatprep.subr.mxu0 0.0
  %3792 = vmatpush1.msra.mxu0 0.0
  %3793 = vmatprep.subr.mxu0 0.0
  %3794 = vmatpush1.msra.mxu0 0.0
  %3795 = vmatprep.subr.mxu0 0.0
  %3796 = vmatpush1.msra.mxu0 0.0
  %3797 = vmatprep.subr.mxu0 0.0
  %3798 = vmatpush1.msra.mxu0 0.0
  %3799 = vmatprep.subr.mxu0 0.0
  %3800 = vmatpush1.msra.mxu0 0.0
  %3801 = vmatprep.subr.mxu0 0.0
  %3802 = vmatpush1.msra.mxu0 0.0
  %3803 = vmatprep.subr.mxu0 0.0
  %3804 = vmatpush1.msra.mxu0 0.0
  %3805 = vmatprep.subr.mxu0 0.0
  %3806 = vmatpush1.msra.mxu0 0.0
  %3807 = vmatprep.subr.mxu0 0.0
  %3808 = vmatpush1.msra.mxu0 0.0
  %3809 = vmatprep.subr.mxu0 0.0
  %3810 = vmatpush1.msra.mxu0 0.0
  %3811 = vmatprep.subr.mxu0 0.0
  %3812 = vmatpush1.msra.mxu0 0.0
  %3813 = vmatprep.mubr.f32.mxu0 0.0
  %3814 = vmatmul.mubr.f32.gmra.mrb[0].mxu0 %v3666
  %v3815 = vpop.f32.mrb[0].mxu0
  %v3816 = vadd.f32 0.0, %v3815
  %v3817 = vpop.f32.mrb[0].mxu0
  %3818 = vmatprep.mubr.f32.mxu0 0.0
  %3819 = vmatmul.mubr.f32.gmra.mrb[0].mxu0 %v3669
  %v3820 = vpop.f32.mrb[0].mxu0
  %v3821 = vadd.f32 0.0, %v3820
  %v3822 = vpop.f32.mrb[0].mxu0
  %3823 = vmatprep.mubr.f32.mxu0 0.0
  %3824 = vmatmul.mubr.f32.gmra.mrb[0].mxu0 %v3672
  %v3825 = vpop.f32.mrb[0].mxu0
  %v3826 = vadd.f32 0.0, %v3825
  %v3827 = vpop.f32.mrb[0].mxu0
  %3828 = vmatprep.mubr.f32.mxu0 0.0
  %3829 = vmatmul.mubr.f32.gmra.mrb[0].mxu0 %v3675
  %v3830 = vpop.f32.mrb[0].mxu0
  %v3831 = vadd.f32 0.0, %v3830
  %v3832 = vpop.f32.mrb[0].mxu0
  %3833 = vmatprep.mubr.f32.mxu0 0.0
  %3834 = vmatmul.mubr.f32.gmra.mrb[0].mxu0 %v3678
  %v3835 = vpop.f32.mrb[0].mxu0
  %v3836 = vadd.f32 0.0, %v3835
  %v3837 = vpop.f32.mrb[0].mxu0
  %3838 = vmatprep.mubr.f32.mxu0 0.0
  %3839 = vmatmul.mubr.f32.gmra.mrb[0].mxu0 %v3681
  %v3840 = vpop.f32.mrb[0].mxu0
  %v3841 = vadd.f32 0.0, %v3840
  %v3842 = vpop.f32.mrb[0].mxu0
  %3843 = vmatprep.mubr.f32.mxu0 0.0
  %3844 = vmatmul.mubr.f32.gmra.mrb[0].mxu0 %v3684
  %v3845 = vpop.f32.mrb[0].mxu0
  %v3846 = vadd.f32 0.0, %v3845
  %v3847 = vpop.f32.mrb[0].mxu0
  %3848 = vmatprep.mubr.f32.mxu0 0.0
  %3849 = vmatmul.mubr.f32.gmra.mrb[0].mxu0 %v3687
  %v3850 = vpop.f32.mrb[0].mxu0
  %v3851 = vadd.f32 0.0, %v3850
  %v3852 = vpop.f32.mrb[0].mxu0
  %3853 = vmatprep.mubr.f32.mxu0 0.0
  %3854 = vmatmul.mubr.f32.gmra.mrb[0].mxu0 %v3690
  %v3855 = vpop.f32.mrb[0].mxu0
  %v3856 = vadd.f32 0.0, %v3855
  %v3857 = vpop.f32.mrb[0].mxu0
  %3858 = vmatprep.mubr.f32.mxu0 0.0
  %3859 = vmatmul.mubr.f32.gmra.mrb[0].mxu0 %v3693
  %v3860 = vpop.f32.mrb[0].mxu0
  %v3861 = vadd.f32 0.0, %v3860
  %v3862 = vpop.f32.mrb[0].mxu0
  %3863 = vmatprep.mubr.f32.mxu0 0.0
  %3864 = vmatmul.mubr.f32.gmra.mrb[0].mxu0 %v3696
  %v3865 = vpop.f32.mrb[0].mxu0
  %v3866 = vadd.f32 0.0, %v3865
  %v3867 = vpop.f32.mrb[0].mxu0
  %3868 = vmatprep.mubr.f32.mxu0 0.0
  %3869 = vmatmul.mubr.f32.gmra.mrb[0].mxu0 %v3699
  %v3870 = vpop.f32.mrb[0].mxu0
  %v3871 = vadd.f32 0.0, %v3870
  %v3872 = vpop.f32.mrb[0].mxu0
  %3873 = vmatprep.mubr.f32.mxu0 0.0
  %3874 = vmatmul.mubr.f32.gmra.mrb[0].mxu0 %v3702
  %v3875 = vpop.f32.mrb[0].mxu0
  %v3876 = vadd.f32 0.0, %v3875
  %v3877 = vpop.f32.mrb[0].mxu0
  %3878 = vmatprep.mubr.f32.mxu0 0.0
  %3879 = vmatmul.mubr.f32.gmra.mrb[0].mxu0 %v3705
  %v3880 = vpop.f32.mrb[0].mxu0
  %v3881 = vadd.f32 0.0, %v3880
  %v3882 = vpop.f32.mrb[0].mxu0
  %3883 = vmatprep.mubr.f32.mxu0 0.0
  %3884 = vmatmul.mubr.f32.gmra.mrb[0].mxu0 %v3708
  %v3885 = vpop.f32.mrb[0].mxu0
  %v3886 = vadd.f32 0.0, %v3885
  %v3887 = vpop.f32.mrb[0].mxu0
  %3888 = vmatprep.mubr.f32.mxu0 0.0
  %3889 = vmatmul.mubr.f32.gmra.mrb[0].mxu0 %v3711
  %v3890 = vpop.f32.mrb[0].mxu0
  %v3891 = vadd.f32 0.0, %v3890
  %v3892 = vpop.f32.mrb[0].mxu0
  %3893 = vmatprep.mubr.f32.mxu0 0.0
  %3894 = vmatmul.mubr.f32.gmra.mrb[0].mxu0 %v3714
  %v3895 = vpop.f32.mrb[0].mxu0
  %v3896 = vadd.f32 0.0, %v3895
  %v3897 = vpop.f32.mrb[0].mxu0
  %3898 = vmatprep.mubr.f32.mxu0 0.0
  %3899 = vmatmul.mubr.f32.gmra.mrb[0].mxu0 %v3717
  %v3900 = vpop.f32.mrb[0].mxu0
  %v3901 = vadd.f32 0.0, %v3900
  %v3902 = vpop.f32.mrb[0].mxu0
  %3903 = vmatprep.mubr.f32.mxu0 0.0
  %3904 = vmatmul.mubr.f32.gmra.mrb[0].mxu0 %v3720
  %v3905 = vpop.f32.mrb[0].mxu0
  %v3906 = vadd.f32 0.0, %v3905
  %v3907 = vpop.f32.mrb[0].mxu0
  %3908 = vmatprep.mubr.f32.mxu0 0.0
  %3909 = vmatmul.mubr.f32.gmra.mrb[0].mxu0 %v3723
  %v3910 = vpop.f32.mrb[0].mxu0
  %v3911 = vadd.f32 0.0, %v3910
  %v3912 = vpop.f32.mrb[0].mxu0
  %3913 = vmatprep.mubr.f32.mxu0 0.0
  %3914 = vmatmul.mubr.f32.gmra.mrb[0].mxu0 %v3726
  %v3915 = vpop.f32.mrb[0].mxu0
  %v3916 = vadd.f32 0.0, %v3915
  %v3917 = vpop.f32.mrb[0].mxu0
  %3918 = vmatprep.mubr.f32.mxu0 0.0
  %3919 = vmatmul.mubr.f32.gmra.mrb[0].mxu0 %v3729
  %v3920 = vpop.f32.mrb[0].mxu0
  %v3921 = vadd.f32 0.0, %v3920
  %v3922 = vpop.f32.mrb[0].mxu0
  %3923 = vmatprep.mubr.f32.mxu0 0.0
  %3924 = vmatmul.mubr.f32.gmra.mrb[0].mxu0 %v3732
  %v3925 = vpop.f32.mrb[0].mxu0
  %v3926 = vadd.f32 0.0, %v3925
  %v3927 = vpop.f32.mrb[0].mxu0
  %3928 = vmatprep.mubr.f32.mxu0 0.0
  %3929 = vmatmul.mubr.f32.gmra.mrb[0].mxu0 %v3735
  %v3930 = vpop.f32.mrb[0].mxu0
  %v3931 = vadd.f32 0.0, %v3930
  %v3932 = vpop.f32.mrb[0].mxu0
  %3933 = vmatprep.mubr.f32.mxu0 0.0
  %3934 = vmatmul.mubr.f32.gmra.mrb[0].mxu0 %v3738
  %v3935 = vpop.f32.mrb[0].mxu0
  %v3936 = vadd.f32 0.0, %v3935
  %v3937 = vpop.f32.mrb[0].mxu0
  %3938 = vmatprep.mubr.f32.mxu0 0.0
  %3939 = vmatmul.mubr.f32.gmra.mrb[0].mxu0 %v3741
  %v3940 = vpop.f32.mrb[0].mxu0
  %v3941 = vadd.f32 0.0, %v3940
  %v3942 = vpop.f32.mrb[0].mxu0
  %3943 = vmatprep.mubr.f32.mxu0 0.0
  %3944 = vmatmul.mubr.f32.gmra.mrb[0].mxu0 %v3744
  %v3945 = vpop.f32.mrb[0].mxu0
  %v3946 = vadd.f32 0.0, %v3945
  %v3947 = vpop.f32.mrb[0].mxu0
  %3948 = vmatprep.mubr.f32.mxu0 0.0
  %3949 = vmatmul.mubr.f32.gmra.mrb[0].mxu0 %v3747
  %v3950 = vpop.f32.mrb[0].mxu0
  %v3951 = vadd.f32 0.0, %v3950
  %v3952 = vpop.f32.mrb[0].mxu0
  %3953 = vdwg.mxu0
  %v3954 = vadd.f32 %v3502, %v3816
  %v3955 = vadd.f32 %v3503, %v3821
  %v3956 = vadd.f32 %v3504, %v3826
  %v3957 = vadd.f32 %v3505, %v3831
  %v3958 = vadd.f32 %v3506, %v3836
  %v3959 = vadd.f32 %v3507, %v3841
  %v3960 = vadd.f32 %v3508, %v3846
  %v3961 = vadd.f32 %v3509, %v3851
  %v3962 = vadd.f32 %v3510, %v3856
  %v3963 = vadd.f32 %v3511, %v3861
  %v3964 = vadd.f32 %v3512, %v3866
  %v3965 = vadd.f32 %v3513, %v3871
  %v3966 = vadd.f32 %v3514, %v3876
  %v3967 = vadd.f32 %v3515, %v3881
  %v3968 = vadd.f32 %v3516, %v3886
  %v3969 = vadd.f32 %v3517, %v3891
  %v3970 = vadd.f32 %v3518, %v3896
  %v3971 = vadd.f32 %v3519, %v3901
  %v3972 = vadd.f32 %v3520, %v3906
  %v3973 = vadd.f32 %v3521, %v3911
  %v3974 = vadd.f32 %v3522, %v3916
  %v3975 = vadd.f32 %v3523, %v3921
  %v3976 = vadd.f32 %v3524, %v3926
  %v3977 = vadd.f32 %v3525, %v3931
  %v3978 = vadd.f32 %v3526, %v3936
  %v3979 = vadd.f32 %v3527, %v3941
  %v3980 = vadd.f32 %v3528, %v3946
  %v3981 = vadd.f32 %v3529, %v3951
  %s3982 = scalar_lea.vmem %s5, 64
  %v3983 = vld [vmem:[%s3982] sm:$0xff]
  %v3984 = vld [vmem:[%s3982 + $0x8] sm:$0x3f]
  %v3986 = vsel %vm2232, %v3984, 0
  %3988 = vmatprep.subr.mxu0 0.0
  %3989 = vmatpush1.msra.mxu0 %v3983
  %3990 = vmatprep.subr.mxu0 0.0
  %3991 = vmatpush1.msra.mxu0 %v3986
  %3992 = vmatprep.subr.mxu0 0.0
  %3993 = vmatpush1.msra.mxu0 0.0
  %3994 = vmatprep.subr.mxu0 0.0
  %3995 = vmatpush1.msra.mxu0 0.0
  %3996 = vmatprep.subr.mxu0 0.0
  %3997 = vmatpush1.msra.mxu0 0.0
  %3998 = vmatprep.subr.mxu0 0.0
  %3999 = vmatpush1.msra.mxu0 0.0
  %4000 = vmatprep.subr.mxu0 0.0
  %4001 = vmatpush1.msra.mxu0 0.0
  %4002 = vmatprep.subr.mxu0 0.0
  %4003 = vmatpush1.msra.mxu0 0.0
  %4004 = vmatprep.subr.mxu0 0.0
  %4005 = vmatpush1.msra.mxu0 0.0
  %4006 = vmatprep.subr.mxu0 0.0
  %4007 = vmatpush1.msra.mxu0 0.0
  %4008 = vmatprep.subr.mxu0 0.0
  %4009 = vmatpush1.msra.mxu0 0.0
  %4010 = vmatprep.subr.mxu0 0.0
  %4011 = vmatpush1.msra.mxu0 0.0
  %4012 = vmatprep.subr.mxu0 0.0
  %4013 = vmatpush1.msra.mxu0 0.0
  %4014 = vmatprep.subr.mxu0 0.0
  %4015 = vmatpush1.msra.mxu0 0.0
  %4016 = vmatprep.subr.mxu0 0.0
  %4017 = vmatpush1.msra.mxu0 0.0
  %4018 = vmatprep.subr.mxu0 0.0
  %4019 = vmatpush1.msra.mxu0 0.0
  %4020 = vmatprep.subr.mxu0 0.0
  %4021 = vmatpush1.msra.mxu0 0.0
  %4022 = vmatprep.subr.mxu0 0.0
  %4023 = vmatpush1.msra.mxu0 0.0
  %4024 = vmatprep.subr.mxu0 0.0
  %4025 = vmatpush1.msra.mxu0 0.0
  %4026 = vmatprep.subr.mxu0 0.0
  %4027 = vmatpush1.msra.mxu0 0.0
  %4028 = vmatprep.subr.mxu0 0.0
  %4029 = vmatpush1.msra.mxu0 0.0
  %4030 = vmatprep.subr.mxu0 0.0
  %4031 = vmatpush1.msra.mxu0 0.0
  %4032 = vmatprep.subr.mxu0 0.0
  %4033 = vmatpush1.msra.mxu0 0.0
  %4034 = vmatprep.subr.mxu0 0.0
  %4035 = vmatpush1.msra.mxu0 0.0
  %4036 = vmatprep.subr.mxu0 0.0
  %4037 = vmatpush1.msra.mxu0 0.0
  %4038 = vmatprep.subr.mxu0 0.0
  %4039 = vmatpush1.msra.mxu0 0.0
  %4040 = vmatprep.subr.mxu0 0.0
  %4041 = vmatpush1.msra.mxu0 0.0
  %4042 = vmatprep.subr.mxu0 0.0
  %4043 = vmatpush1.msra.mxu0 0.0
  %4044 = vmatprep.subr.mxu0 0.0
  %4045 = vmatpush1.msra.mxu0 0.0
  %4046 = vmatprep.subr.mxu0 0.0
  %4047 = vmatpush1.msra.mxu0 0.0
  %4048 = vmatprep.subr.mxu0 0.0
  %4049 = vmatpush1.msra.mxu0 0.0
  %4050 = vmatprep.subr.mxu0 0.0
  %4051 = vmatpush1.msra.mxu0 0.0
  %4052 = vmatprep.mubr.f32.mxu0 0.0
  %4053 = vmatmul.mubr.f32.gmra.mrb[0].mxu0 %v2212
  %v4054 = vpop.f32.mrb[0].mxu0
  %v4055 = vadd.f32 0.0, %v4054
  %v4056 = vpop.f32.mrb[0].mxu0
  %4057 = vmatprep.mubr.f32.mxu0 0.0
  %4058 = vmatmul.mubr.f32.gmra.mrb[0].mxu0 %v2215
  %v4059 = vpop.f32.mrb[0].mxu0
  %v4060 = vadd.f32 0.0, %v4059
  %v4061 = vpop.f32.mrb[0].mxu0
  %4062 = vmatprep.mubr.f32.mxu0 0.0
  %4063 = vmatmul.mubr.f32.gmra.mrb[0].mxu0 %v2218
  %v4064 = vpop.f32.mrb[0].mxu0
  %v4065 = vadd.f32 0.0, %v4064
  %v4066 = vpop.f32.mrb[0].mxu0
  %4067 = vmatprep.mubr.f32.mxu0 0.0
  %4068 = vmatmul.mubr.f32.gmra.mrb[0].mxu0 %v2221
  %v4069 = vpop.f32.mrb[0].mxu0
  %v4070 = vadd.f32 0.0, %v4069
  %v4071 = vpop.f32.mrb[0].mxu0
  %4072 = vmatprep.mubr.f32.mxu0 0.0
  %4073 = vmatmul.mubr.f32.gmra.mrb[0].mxu0 %v2224
  %v4074 = vpop.f32.mrb[0].mxu0
  %v4075 = vadd.f32 0.0, %v4074
  %v4076 = vpop.f32.mrb[0].mxu0
  %4077 = vmatprep.mubr.f32.mxu0 0.0
  %4078 = vmatmul.mubr.f32.gmra.mrb[0].mxu0 %v2227
  %v4079 = vpop.f32.mrb[0].mxu0
  %v4080 = vadd.f32 0.0, %v4079
  %v4081 = vpop.f32.mrb[0].mxu0
  %4082 = vmatprep.mubr.f32.mxu0 0.0
  %4083 = vmatmul.mubr.f32.gmra.mrb[0].mxu0 %v2230
  %v4084 = vpop.f32.mrb[0].mxu0
  %v4085 = vadd.f32 0.0, %v4084
  %v4086 = vpop.f32.mrb[0].mxu0
  %4087 = vdwg.mxu0
  %s4088 = scalar_lea.vmem %s4, 896
  %v4089 = vld [vmem:[%s4088] sm:$0xff]
  %v4090 = vld [vmem:[%s4088 + $0x8] sm:$0xff]
  %v4091 = vld [vmem:[%s4088 + $0x10] sm:$0xff]
  %v4092 = vld [vmem:[%s4088 + $0x18] sm:$0xff]
  %v4093 = vld [vmem:[%s4088 + $0x20] sm:$0xff]
  %v4094 = vld [vmem:[%s4088 + $0x28] sm:$0xff]
  %v4095 = vld [vmem:[%s4088 + $0x30] sm:$0xff]
  %v4096 = vld [vmem:[%s4088 + $0x38] sm:$0xff]
  %v4097 = vld [vmem:[%s4088 + $0x40] sm:$0xff]
  %v4098 = vld [vmem:[%s4088 + $0x48] sm:$0xff]
  %v4099 = vld [vmem:[%s4088 + $0x50] sm:$0xff]
  %v4100 = vld [vmem:[%s4088 + $0x58] sm:$0xff]
  %v4101 = vld [vmem:[%s4088 + $0x60] sm:$0xff]
  %v4102 = vld [vmem:[%s4088 + $0x68] sm:$0xff]
  %v4103 = vld [vmem:[%s4088 + $0x70] sm:$0xff]
  %v4104 = vld [vmem:[%s4088 + $0x78] sm:$0xff]
  %v4105 = vld [vmem:[%s4088 + $0x80] sm:$0xff]
  %v4106 = vld [vmem:[%s4088 + $0x88] sm:$0xff]
  %v4107 = vld [vmem:[%s4088 + $0x90] sm:$0xff]
  %v4108 = vld [vmem:[%s4088 + $0x98] sm:$0xff]
  %v4109 = vld [vmem:[%s4088 + $0xa0] sm:$0xff]
  %v4110 = vld [vmem:[%s4088 + $0xa8] sm:$0xff]
  %v4111 = vld [vmem:[%s4088 + $0xb0] sm:$0xff]
  %v4112 = vld [vmem:[%s4088 + $0xb8] sm:$0xff]
  %v4113 = vld [vmem:[%s4088 + $0xc0] sm:$0xff]
  %v4114 = vld [vmem:[%s4088 + $0xc8] sm:$0xff]
  %v4115 = vld [vmem:[%s4088 + $0xd0] sm:$0xff]
  %v4116 = vld [vmem:[%s4088 + $0xd8] sm:$0xff]
  %v4118 = vsel %vm2499, %v4089, 0
  %v4121 = vsel %vm2499, %v4090, 0
  %v4124 = vsel %vm2499, %v4091, 0
  %v4127 = vsel %vm2499, %v4092, 0
  %v4130 = vsel %vm2499, %v4093, 0
  %v4133 = vsel %vm2499, %v4094, 0
  %v4136 = vsel %vm2499, %v4095, 0
  %v4139 = vsel %vm2499, %v4096, 0
  %v4142 = vsel %vm2499, %v4097, 0
  %v4145 = vsel %vm2499, %v4098, 0
  %v4148 = vsel %vm2499, %v4099, 0
  %v4151 = vsel %vm2499, %v4100, 0
  %v4154 = vsel %vm2499, %v4101, 0
  %v4157 = vsel %vm2499, %v4102, 0
  %v4160 = vsel %vm2499, %v4103, 0
  %v4163 = vsel %vm2499, %v4104, 0
  %v4166 = vsel %vm2499, %v4105, 0
  %v4169 = vsel %vm2499, %v4106, 0
  %v4172 = vsel %vm2499, %v4107, 0
  %v4175 = vsel %vm2499, %v4108, 0
  %v4178 = vsel %vm2499, %v4109, 0
  %v4181 = vsel %vm2499, %v4110, 0
  %v4184 = vsel %vm2499, %v4111, 0
  %v4187 = vsel %vm2499, %v4112, 0
  %v4190 = vsel %vm2499, %v4113, 0
  %v4193 = vsel %vm2499, %v4114, 0
  %v4196 = vsel %vm2499, %v4115, 0
  %v4199 = vsel %vm2499, %v4116, 0
  %4201 = vmatprep.subr.mxu0 0.0
  %4202 = vmatpush1.msra.mxu0 %v4055
  %4203 = vmatprep.subr.mxu0 0.0
  %4204 = vmatpush1.msra.mxu0 %v4060
  %4205 = vmatprep.subr.mxu0 0.0
  %4206 = vmatpush1.msra.mxu0 %v4065
  %4207 = vmatprep.subr.mxu0 0.0
  %4208 = vmatpush1.msra.mxu0 %v4070
  %4209 = vmatprep.subr.mxu0 0.0
  %4210 = vmatpush1.msra.mxu0 %v4075
  %4211 = vmatprep.subr.mxu0 0.0
  %4212 = vmatpush1.msra.mxu0 %v4080
  %4213 = vmatprep.subr.mxu0 0.0
  %4214 = vmatpush1.msra.mxu0 %v4085
  %4215 = vmatprep.subr.mxu0 0.0
  %4216 = vmatpush1.msra.mxu0 0.0
  %4217 = vmatprep.subr.mxu0 0.0
  %4218 = vmatpush1.msra.mxu0 0.0
  %4219 = vmatprep.subr.mxu0 0.0
  %4220 = vmatpush1.msra.mxu0 0.0
  %4221 = vmatprep.subr.mxu0 0.0
  %4222 = vmatpush1.msra.mxu0 0.0
  %4223 = vmatprep.subr.mxu0 0.0
  %4224 = vmatpush1.msra.mxu0 0.0
  %4225 = vmatprep.subr.mxu0 0.0
  %4226 = vmatpush1.msra.mxu0 0.0
  %4227 = vmatprep.subr.mxu0 0.0
  %4228 = vmatpush1.msra.mxu0 0.0
  %4229 = vmatprep.subr.mxu0 0.0
  %4230 = vmatpush1.msra.mxu0 0.0
  %4231 = vmatprep.subr.mxu0 0.0
  %4232 = vmatpush1.msra.mxu0 0.0
  %4233 = vmatprep.subr.mxu0 0.0
  %4234 = vmatpush1.msra.mxu0 0.0
  %4235 = vmatprep.subr.mxu0 0.0
  %4236 = vmatpush1.msra.mxu0 0.0
  %4237 = vmatprep.subr.mxu0 0.0
  %4238 = vmatpush1.msra.mxu0 0.0
  %4239 = vmatprep.subr.mxu0 0.0
  %4240 = vmatpush1.msra.mxu0 0.0
  %4241 = vmatprep.subr.mxu0 0.0
  %4242 = vmatpush1.msra.mxu0 0.0
  %4243 = vmatprep.subr.mxu0 0.0
  %4244 = vmatpush1.msra.mxu0 0.0
  %4245 = vmatprep.subr.mxu0 0.0
  %4246 = vmatpush1.msra.mxu0 0.0
  %4247 = vmatprep.subr.mxu0 0.0
  %4248 = vmatpush1.msra.mxu0 0.0
  %4249 = vmatprep.subr.mxu0 0.0
  %4250 = vmatpush1.msra.mxu0 0.0
  %4251 = vmatprep.subr.mxu0 0.0
  %4252 = vmatpush1.msra.mxu0 0.0
  %4253 = vmatprep.subr.mxu0 0.0
  %4254 = vmatpush1.msra.mxu0 0.0
  %4255 = vmatprep.subr.mxu0 0.0
  %4256 = vmatpush1.msra.mxu0 0.0
  %4257 = vmatprep.subr.mxu0 0.0
  %4258 = vmatpush1.msra.mxu0 0.0
  %4259 = vmatprep.subr.mxu0 0.0
  %4260 = vmatpush1.msra.mxu0 0.0
  %4261 = vmatprep.subr.mxu0 0.0
  %4262 = vmatpush1.msra.mxu0 0.0
  %4263 = vmatprep.subr.mxu0 0.0
  %4264 = vmatpush1.msra.mxu0 0.0
  %4265 = vmatprep.mubr.f32.mxu0 0.0
  %4266 = vmatmul.mubr.f32.gmra.mrb[0].mxu0 %v4118
  %v4267 = vpop.f32.mrb[0].mxu0
  %v4268 = vadd.f32 0.0, %v4267
  %v4269 = vpop.f32.mrb[0].mxu0
  %4270 = vmatprep.mubr.f32.mxu0 0.0
  %4271 = vmatmul.mubr.f32.gmra.mrb[0].mxu0 %v4121
  %v4272 = vpop.f32.mrb[0].mxu0
  %v4273 = vadd.f32 0.0, %v4272
  %v4274 = vpop.f32.mrb[0].mxu0
  %4275 = vmatprep.mubr.f32.mxu0 0.0
  %4276 = vmatmul.mubr.f32.gmra.mrb[0].mxu0 %v4124
  %v4277 = vpop.f32.mrb[0].mxu0
  %v4278 = vadd.f32 0.0, %v4277
  %v4279 = vpop.f32.mrb[0].mxu0
  %4280 = vmatprep.mubr.f32.mxu0 0.0
  %4281 = vmatmul.mubr.f32.gmra.mrb[0].mxu0 %v4127
  %v4282 = vpop.f32.mrb[0].mxu0
  %v4283 = vadd.f32 0.0, %v4282
  %v4284 = vpop.f32.mrb[0].mxu0
  %4285 = vmatprep.mubr.f32.mxu0 0.0
  %4286 = vmatmul.mubr.f32.gmra.mrb[0].mxu0 %v4130
  %v4287 = vpop.f32.mrb[0].mxu0
  %v4288 = vadd.f32 0.0, %v4287
  %v4289 = vpop.f32.mrb[0].mxu0
  %4290 = vmatprep.mubr.f32.mxu0 0.0
  %4291 = vmatmul.mubr.f32.gmra.mrb[0].mxu0 %v4133
  %v4292 = vpop.f32.mrb[0].mxu0
  %v4293 = vadd.f32 0.0, %v4292
  %v4294 = vpop.f32.mrb[0].mxu0
  %4295 = vmatprep.mubr.f32.mxu0 0.0
  %4296 = vmatmul.mubr.f32.gmra.mrb[0].mxu0 %v4136
  %v4297 = vpop.f32.mrb[0].mxu0
  %v4298 = vadd.f32 0.0, %v4297
  %v4299 = vpop.f32.mrb[0].mxu0
  %4300 = vmatprep.mubr.f32.mxu0 0.0
  %4301 = vmatmul.mubr.f32.gmra.mrb[0].mxu0 %v4139
  %v4302 = vpop.f32.mrb[0].mxu0
  %v4303 = vadd.f32 0.0, %v4302
  %v4304 = vpop.f32.mrb[0].mxu0
  %4305 = vmatprep.mubr.f32.mxu0 0.0
  %4306 = vmatmul.mubr.f32.gmra.mrb[0].mxu0 %v4142
  %v4307 = vpop.f32.mrb[0].mxu0
  %v4308 = vadd.f32 0.0, %v4307
  %v4309 = vpop.f32.mrb[0].mxu0
  %4310 = vmatprep.mubr.f32.mxu0 0.0
  %4311 = vmatmul.mubr.f32.gmra.mrb[0].mxu0 %v4145
  %v4312 = vpop.f32.mrb[0].mxu0
  %v4313 = vadd.f32 0.0, %v4312
  %v4314 = vpop.f32.mrb[0].mxu0
  %4315 = vmatprep.mubr.f32.mxu0 0.0
  %4316 = vmatmul.mubr.f32.gmra.mrb[0].mxu0 %v4148
  %v4317 = vpop.f32.mrb[0].mxu0
  %v4318 = vadd.f32 0.0, %v4317
  %v4319 = vpop.f32.mrb[0].mxu0
  %4320 = vmatprep.mubr.f32.mxu0 0.0
  %4321 = vmatmul.mubr.f32.gmra.mrb[0].mxu0 %v4151
  %v4322 = vpop.f32.mrb[0].mxu0
  %v4323 = vadd.f32 0.0, %v4322
  %v4324 = vpop.f32.mrb[0].mxu0
  %4325 = vmatprep.mubr.f32.mxu0 0.0
  %4326 = vmatmul.mubr.f32.gmra.mrb[0].mxu0 %v4154
  %v4327 = vpop.f32.mrb[0].mxu0
  %v4328 = vadd.f32 0.0, %v4327
  %v4329 = vpop.f32.mrb[0].mxu0
  %4330 = vmatprep.mubr.f32.mxu0 0.0
  %4331 = vmatmul.mubr.f32.gmra.mrb[0].mxu0 %v4157
  %v4332 = vpop.f32.mrb[0].mxu0
  %v4333 = vadd.f32 0.0, %v4332
  %v4334 = vpop.f32.mrb[0].mxu0
  %4335 = vmatprep.mubr.f32.mxu0 0.0
  %4336 = vmatmul.mubr.f32.gmra.mrb[0].mxu0 %v4160
  %v4337 = vpop.f32.mrb[0].mxu0
  %v4338 = vadd.f32 0.0, %v4337
  %v4339 = vpop.f32.mrb[0].mxu0
  %4340 = vmatprep.mubr.f32.mxu0 0.0
  %4341 = vmatmul.mubr.f32.gmra.mrb[0].mxu0 %v4163
  %v4342 = vpop.f32.mrb[0].mxu0
  %v4343 = vadd.f32 0.0, %v4342
  %v4344 = vpop.f32.mrb[0].mxu0
  %4345 = vmatprep.mubr.f32.mxu0 0.0
  %4346 = vmatmul.mubr.f32.gmra.mrb[0].mxu0 %v4166
  %v4347 = vpop.f32.mrb[0].mxu0
  %v4348 = vadd.f32 0.0, %v4347
  %v4349 = vpop.f32.mrb[0].mxu0
  %4350 = vmatprep.mubr.f32.mxu0 0.0
  %4351 = vmatmul.mubr.f32.gmra.mrb[0].mxu0 %v4169
  %v4352 = vpop.f32.mrb[0].mxu0
  %v4353 = vadd.f32 0.0, %v4352
  %v4354 = vpop.f32.mrb[0].mxu0
  %4355 = vmatprep.mubr.f32.mxu0 0.0
  %4356 = vmatmul.mubr.f32.gmra.mrb[0].mxu0 %v4172
  %v4357 = vpop.f32.mrb[0].mxu0
  %v4358 = vadd.f32 0.0, %v4357
  %v4359 = vpop.f32.mrb[0].mxu0
  %4360 = vmatprep.mubr.f32.mxu0 0.0
  %4361 = vmatmul.mubr.f32.gmra.mrb[0].mxu0 %v4175
  %v4362 = vpop.f32.mrb[0].mxu0
  %v4363 = vadd.f32 0.0, %v4362
  %v4364 = vpop.f32.mrb[0].mxu0
  %4365 = vmatprep.mubr.f32.mxu0 0.0
  %4366 = vmatmul.mubr.f32.gmra.mrb[0].mxu0 %v4178
  %v4367 = vpop.f32.mrb[0].mxu0
  %v4368 = vadd.f32 0.0, %v4367
  %v4369 = vpop.f32.mrb[0].mxu0
  %4370 = vmatprep.mubr.f32.mxu0 0.0
  %4371 = vmatmul.mubr.f32.gmra.mrb[0].mxu0 %v4181
  %v4372 = vpop.f32.mrb[0].mxu0
  %v4373 = vadd.f32 0.0, %v4372
  %v4374 = vpop.f32.mrb[0].mxu0
  %4375 = vmatprep.mubr.f32.mxu0 0.0
  %4376 = vmatmul.mubr.f32.gmra.mrb[0].mxu0 %v4184
  %v4377 = vpop.f32.mrb[0].mxu0
  %v4378 = vadd.f32 0.0, %v4377
  %v4379 = vpop.f32.mrb[0].mxu0
  %4380 = vmatprep.mubr.f32.mxu0 0.0
  %4381 = vmatmul.mubr.f32.gmra.mrb[0].mxu0 %v4187
  %v4382 = vpop.f32.mrb[0].mxu0
  %v4383 = vadd.f32 0.0, %v4382
  %v4384 = vpop.f32.mrb[0].mxu0
  %4385 = vmatprep.mubr.f32.mxu0 0.0
  %4386 = vmatmul.mubr.f32.gmra.mrb[0].mxu0 %v4190
  %v4387 = vpop.f32.mrb[0].mxu0
  %v4388 = vadd.f32 0.0, %v4387
  %v4389 = vpop.f32.mrb[0].mxu0
  %4390 = vmatprep.mubr.f32.mxu0 0.0
  %4391 = vmatmul.mubr.f32.gmra.mrb[0].mxu0 %v4193
  %v4392 = vpop.f32.mrb[0].mxu0
  %v4393 = vadd.f32 0.0, %v4392
  %v4394 = vpop.f32.mrb[0].mxu0
  %4395 = vmatprep.mubr.f32.mxu0 0.0
  %4396 = vmatmul.mubr.f32.gmra.mrb[0].mxu0 %v4196
  %v4397 = vpop.f32.mrb[0].mxu0
  %v4398 = vadd.f32 0.0, %v4397
  %v4399 = vpop.f32.mrb[0].mxu0
  %4400 = vmatprep.mubr.f32.mxu0 0.0
  %4401 = vmatmul.mubr.f32.gmra.mrb[0].mxu0 %v4199
  %v4402 = vpop.f32.mrb[0].mxu0
  %v4403 = vadd.f32 0.0, %v4402
  %v4404 = vpop.f32.mrb[0].mxu0
  %4405 = vdwg.mxu0
  %v4406 = vadd.f32 %v3954, %v4268
  %v4407 = vadd.f32 %v3955, %v4273
  %v4408 = vadd.f32 %v3956, %v4278
  %v4409 = vadd.f32 %v3957, %v4283
  %v4410 = vadd.f32 %v3958, %v4288
  %v4411 = vadd.f32 %v3959, %v4293
  %v4412 = vadd.f32 %v3960, %v4298
  %v4413 = vadd.f32 %v3961, %v4303
  %v4414 = vadd.f32 %v3962, %v4308
  %v4415 = vadd.f32 %v3963, %v4313
  %v4416 = vadd.f32 %v3964, %v4318
  %v4417 = vadd.f32 %v3965, %v4323
  %v4418 = vadd.f32 %v3966, %v4328
  %v4419 = vadd.f32 %v3967, %v4333
  %v4420 = vadd.f32 %v3968, %v4338
  %v4421 = vadd.f32 %v3969, %v4343
  %v4422 = vadd.f32 %v3970, %v4348
  %v4423 = vadd.f32 %v3971, %v4353
  %v4424 = vadd.f32 %v3972, %v4358
  %v4425 = vadd.f32 %v3973, %v4363
  %v4426 = vadd.f32 %v3974, %v4368
  %v4427 = vadd.f32 %v3975, %v4373
  %v4428 = vadd.f32 %v3976, %v4378
  %v4429 = vadd.f32 %v3977, %v4383
  %v4430 = vadd.f32 %v3978, %v4388
  %v4431 = vadd.f32 %v3979, %v4393
  %v4432 = vadd.f32 %v3980, %v4398
  %v4433 = vadd.f32 %v3981, %v4403
  %v4434 = vld [vmem:[%s6] sm:$0xff]
  %v4435 = vld [vmem:[%s6 + $0x8] sm:$0xff]
  %v4436 = vld [vmem:[%s6 + $0x10] sm:$0xff]
  %v4437 = vld [vmem:[%s6 + $0x18] sm:$0xff]
  %v4438 = vld [vmem:[%s6 + $0x20] sm:$0xff]
  %v4439 = vld [vmem:[%s6 + $0x28] sm:$0xff]
  %v4440 = vld [vmem:[%s6 + $0x30] sm:$0xff]
  %v4441 = vld [vmem:[%s6 + $0x38] sm:$0xff]
  %v4442 = vld [vmem:[%s6 + $0x40] sm:$0xff]
  %v4443 = vld [vmem:[%s6 + $0x48] sm:$0xff]
  %v4444 = vld [vmem:[%s6 + $0x50] sm:$0xff]
  %v4445 = vld [vmem:[%s6 + $0x58] sm:$0xff]
  %v4446 = vld [vmem:[%s6 + $0x60] sm:$0xff]
  %v4447 = vld [vmem:[%s6 + $0x68] sm:$0xff]
  %v4448 = vld [vmem:[%s6 + $0x70] sm:$0xff]
  %v4449 = vld [vmem:[%s6 + $0x78] sm:$0xff]
  %v4450 = vld [vmem:[%s6 + $0x80] sm:$0xff]
  %v4451 = vld [vmem:[%s6 + $0x88] sm:$0xff]
  %v4452 = vld [vmem:[%s6 + $0x90] sm:$0xff]
  %v4453 = vld [vmem:[%s6 + $0x98] sm:$0xff]
  %v4454 = vld [vmem:[%s6 + $0xa0] sm:$0xff]
  %v4455 = vld [vmem:[%s6 + $0xa8] sm:$0xff]
  %v4456 = vld [vmem:[%s6 + $0xb0] sm:$0xff]
  %v4457 = vld [vmem:[%s6 + $0xb8] sm:$0xff]
  %v4458 = vld [vmem:[%s6 + $0xc0] sm:$0xff]
  %v4459 = vld [vmem:[%s6 + $0xc8] sm:$0xff]
  %v4460 = vld [vmem:[%s6 + $0xd0] sm:$0xff]
  %v4461 = vld [vmem:[%s6 + $0xd8] sm:$0xff]
  %4463 = vset.pattern.permute.xlu0 0
  %4464 = vperm.xlu0 %4463, %v4434
  %v4465 = vpop.permute.xlu0 %4464
  %4468 = vset.pattern.permute.xlu0 0
  %4469 = vperm.xlu0 %4468, %v4435
  %v4470 = vpop.permute.xlu0 %4469
  %4473 = vset.pattern.permute.xlu0 0
  %4474 = vperm.xlu0 %4473, %v4436
  %v4475 = vpop.permute.xlu0 %4474
  %4478 = vset.pattern.permute.xlu0 0
  %4479 = vperm.xlu0 %4478, %v4437
  %v4480 = vpop.permute.xlu0 %4479
  %4483 = vset.pattern.permute.xlu0 0
  %4484 = vperm.xlu0 %4483, %v4438
  %v4485 = vpop.permute.xlu0 %4484
  %4488 = vset.pattern.permute.xlu0 0
  %4489 = vperm.xlu0 %4488, %v4439
  %v4490 = vpop.permute.xlu0 %4489
  %4493 = vset.pattern.permute.xlu0 0
  %4494 = vperm.xlu0 %4493, %v4440
  %v4495 = vpop.permute.xlu0 %4494
  %4498 = vset.pattern.permute.xlu0 0
  %4499 = vperm.xlu0 %4498, %v4441
  %v4500 = vpop.permute.xlu0 %4499
  %4503 = vset.pattern.permute.xlu0 0
  %4504 = vperm.xlu0 %4503, %v4442
  %v4505 = vpop.permute.xlu0 %4504
  %4508 = vset.pattern.permute.xlu0 0
  %4509 = vperm.xlu0 %4508, %v4443
  %v4510 = vpop.permute.xlu0 %4509
  %4513 = vset.pattern.permute.xlu0 0
  %4514 = vperm.xlu0 %4513, %v4444
  %v4515 = vpop.permute.xlu0 %4514
  %4518 = vset.pattern.permute.xlu0 0
  %4519 = vperm.xlu0 %4518, %v4445
  %v4520 = vpop.permute.xlu0 %4519
  %4523 = vset.pattern.permute.xlu0 0
  %4524 = vperm.xlu0 %4523, %v4446
  %v4525 = vpop.permute.xlu0 %4524
  %4528 = vset.pattern.permute.xlu0 0
  %4529 = vperm.xlu0 %4528, %v4447
  %v4530 = vpop.permute.xlu0 %4529
  %4533 = vset.pattern.permute.xlu0 0
  %4534 = vperm.xlu0 %4533, %v4448
  %v4535 = vpop.permute.xlu0 %4534
  %4538 = vset.pattern.permute.xlu0 0
  %4539 = vperm.xlu0 %4538, %v4449
  %v4540 = vpop.permute.xlu0 %4539
  %4543 = vset.pattern.permute.xlu0 0
  %4544 = vperm.xlu0 %4543, %v4450
  %v4545 = vpop.permute.xlu0 %4544
  %4548 = vset.pattern.permute.xlu0 0
  %4549 = vperm.xlu0 %4548, %v4451
  %v4550 = vpop.permute.xlu0 %4549
  %4553 = vset.pattern.permute.xlu0 0
  %4554 = vperm.xlu0 %4553, %v4452
  %v4555 = vpop.permute.xlu0 %4554
  %4558 = vset.pattern.permute.xlu0 0
  %4559 = vperm.xlu0 %4558, %v4453
  %v4560 = vpop.permute.xlu0 %4559
  %4563 = vset.pattern.permute.xlu0 0
  %4564 = vperm.xlu0 %4563, %v4454
  %v4565 = vpop.permute.xlu0 %4564
  %4568 = vset.pattern.permute.xlu0 0
  %4569 = vperm.xlu0 %4568, %v4455
  %v4570 = vpop.permute.xlu0 %4569
  %4573 = vset.pattern.permute.xlu0 0
  %4574 = vperm.xlu0 %4573, %v4456
  %v4575 = vpop.permute.xlu0 %4574
  %4578 = vset.pattern.permute.xlu0 0
  %4579 = vperm.xlu0 %4578, %v4457
  %v4580 = vpop.permute.xlu0 %4579
  %4583 = vset.pattern.permute.xlu0 0
  %4584 = vperm.xlu0 %4583, %v4458
  %v4585 = vpop.permute.xlu0 %4584
  %4588 = vset.pattern.permute.xlu0 0
  %4589 = vperm.xlu0 %4588, %v4459
  %v4590 = vpop.permute.xlu0 %4589
  %4593 = vset.pattern.permute.xlu0 0
  %4594 = vperm.xlu0 %4593, %v4460
  %v4595 = vpop.permute.xlu0 %4594
  %4598 = vset.pattern.permute.xlu0 0
  %4599 = vperm.xlu0 %4598, %v4461
  %v4600 = vpop.permute.xlu0 %4599
  %v4602 = vadd.f32 %v4406, %v4465
  %v4603 = vadd.f32 %v4407, %v4470
  %v4604 = vadd.f32 %v4408, %v4475
  %v4605 = vadd.f32 %v4409, %v4480
  %v4606 = vadd.f32 %v4410, %v4485
  %v4607 = vadd.f32 %v4411, %v4490
  %v4608 = vadd.f32 %v4412, %v4495
  %v4609 = vadd.f32 %v4413, %v4500
  %v4610 = vadd.f32 %v4414, %v4505
  %v4611 = vadd.f32 %v4415, %v4510
  %v4612 = vadd.f32 %v4416, %v4515
  %v4613 = vadd.f32 %v4417, %v4520
  %v4614 = vadd.f32 %v4418, %v4525
  %v4615 = vadd.f32 %v4419, %v4530
  %v4616 = vadd.f32 %v4420, %v4535
  %v4617 = vadd.f32 %v4421, %v4540
  %v4618 = vadd.f32 %v4422, %v4545
  %v4619 = vadd.f32 %v4423, %v4550
  %v4620 = vadd.f32 %v4424, %v4555
  %v4621 = vadd.f32 %v4425, %v4560
  %v4622 = vadd.f32 %v4426, %v4565
  %v4623 = vadd.f32 %v4427, %v4570
  %v4624 = vadd.f32 %v4428, %v4575
  %v4625 = vadd.f32 %v4429, %v4580
  %v4626 = vadd.f32 %v4430, %v4585
  %v4627 = vadd.f32 %v4431, %v4590
  %v4628 = vadd.f32 %v4432, %v4595
  %v4629 = vadd.f32 %v4433, %v4600
  %v4630 = vmax.f32 %v4602, 0.0
  %v4631 = vmax.f32 %v4603, 0.0
  %v4632 = vmax.f32 %v4604, 0.0
  %v4633 = vmax.f32 %v4605, 0.0
  %v4634 = vmax.f32 %v4606, 0.0
  %v4635 = vmax.f32 %v4607, 0.0
  %v4636 = vmax.f32 %v4608, 0.0
  %v4637 = vmax.f32 %v4609, 0.0
  %v4638 = vmax.f32 %v4610, 0.0
  %v4639 = vmax.f32 %v4611, 0.0
  %v4640 = vmax.f32 %v4612, 0.0
  %v4641 = vmax.f32 %v4613, 0.0
  %v4642 = vmax.f32 %v4614, 0.0
  %v4643 = vmax.f32 %v4615, 0.0
  %v4644 = vmax.f32 %v4616, 0.0
  %v4645 = vmax.f32 %v4617, 0.0
  %v4646 = vmax.f32 %v4618, 0.0
  %v4647 = vmax.f32 %v4619, 0.0
  %v4648 = vmax.f32 %v4620, 0.0
  %v4649 = vmax.f32 %v4621, 0.0
  %v4650 = vmax.f32 %v4622, 0.0
  %v4651 = vmax.f32 %v4623, 0.0
  %v4652 = vmax.f32 %v4624, 0.0
  %v4653 = vmax.f32 %v4625, 0.0
  %v4654 = vmax.f32 %v4626, 0.0
  %v4655 = vmax.f32 %v4627, 0.0
  %v4656 = vmax.f32 %v4628, 0.0
  %v4657 = vmax.f32 %v4629, 0.0
  %v4658 = vadd.s32 %v1655, 56
  %v4659 = vadd.s32 %v1655, 64
  %v4660 = vadd.s32 %v1655, 72
  %v4661 = vadd.s32 %v1655, 80
  %v4662 = vadd.s32 %v1655, 88
  %v4663 = vadd.s32 %v1655, 96
  %v4664 = vadd.s32 %v1655, 104
  %v4665 = vadd.s32 %v1663, 128
  %v4666 = vmul.u32 %v4658, 2
  %v4667 = vmul.u32 %v4659, 2
  %v4668 = vmul.u32 %v4660, 2
  %v4669 = vmul.u32 %v4661, 2
  %v4670 = vmul.u32 %v4662, 2
  %v4671 = vmul.u32 %v4663, 2
  %v4672 = vmul.u32 %v4664, 2
  %vm4673 = vcmp.eq.s32.totalorder %v4665, %v1664
  %vm4674 = vcmp.eq.s32.totalorder %v4665, %v1665
  %vm4675 = vcmp.eq.s32.totalorder %v4665, %v1666
  %vm4676 = vcmp.eq.s32.totalorder %v4665, %v1667
  %vm4677 = vcmp.eq.s32.totalorder %v4665, %v1668
  %vm4678 = vcmp.eq.s32.totalorder %v4665, %v1669
  %vm4679 = vcmp.eq.s32.totalorder %v4665, %v1670
  %vm4680 = vcmp.eq.s32.totalorder %v1663, %v4666
  %vm4681 = vcmp.eq.s32.totalorder %v4665, %v4666
  %vm4682 = vcmp.eq.s32.totalorder %v1663, %v4667
  %vm4683 = vcmp.eq.s32.totalorder %v4665, %v4667
  %vm4684 = vcmp.eq.s32.totalorder %v1663, %v4668
  %vm4685 = vcmp.eq.s32.totalorder %v4665, %v4668
  %vm4686 = vcmp.eq.s32.totalorder %v1663, %v4669
  %vm4687 = vcmp.eq.s32.totalorder %v4665, %v4669
  %vm4688 = vcmp.eq.s32.totalorder %v1663, %v4670
  %vm4689 = vcmp.eq.s32.totalorder %v4665, %v4670
  %vm4690 = vcmp.eq.s32.totalorder %v1663, %v4671
  %vm4691 = vcmp.eq.s32.totalorder %v4665, %v4671
  %vm4692 = vcmp.eq.s32.totalorder %v1663, %v4672
  %vm4693 = vcmp.eq.s32.totalorder %v4665, %v4672
  %v4694 = vsel %vm4673, 1.0, 0.0
  %v4695 = vsel %vm4674, 1.0, 0.0
  %v4696 = vsel %vm4675, 1.0, 0.0
  %v4697 = vsel %vm4676, 1.0, 0.0
  %v4698 = vsel %vm4677, 1.0, 0.0
  %v4699 = vsel %vm4678, 1.0, 0.0
  %v4700 = vsel %vm4679, 1.0, 0.0
  %v4701 = vsel %vm4680, 1.0, 0.0
  %v4702 = vsel %vm4681, 1.0, 0.0
  %v4703 = vsel %vm4682, 1.0, 0.0
  %v4704 = vsel %vm4683, 1.0, 0.0
  %v4705 = vsel %vm4684, 1.0, 0.0
  %v4706 = vsel %vm4685, 1.0, 0.0
  %v4707 = vsel %vm4686, 1.0, 0.0
  %v4708 = vsel %vm4687, 1.0, 0.0
  %v4709 = vsel %vm4688, 1.0, 0.0
  %v4710 = vsel %vm4689, 1.0, 0.0
  %v4711 = vsel %vm4690, 1.0, 0.0
  %v4712 = vsel %vm4691, 1.0, 0.0
  %v4713 = vsel %vm4692, 1.0, 0.0
  %v4714 = vsel %vm4693, 1.0, 0.0
  %v4715 = vadd.s32 %v4666, 1
  %v4716 = vadd.s32 %v4667, 1
  %v4717 = vadd.s32 %v4668, 1
  %v4718 = vadd.s32 %v4669, 1
  %v4719 = vadd.s32 %v4670, 1
  %v4720 = vadd.s32 %v4671, 1
  %v4721 = vadd.s32 %v4672, 1
  %vm4722 = vcmp.eq.s32.totalorder %v4665, %v1685
  %vm4723 = vcmp.eq.s32.totalorder %v4665, %v1686
  %vm4724 = vcmp.eq.s32.totalorder %v4665, %v1687
  %vm4725 = vcmp.eq.s32.totalorder %v4665, %v1688
  %vm4726 = vcmp.eq.s32.totalorder %v4665, %v1689
  %vm4727 = vcmp.eq.s32.totalorder %v4665, %v1690
  %vm4728 = vcmp.eq.s32.totalorder %v4665, %v1691
  %vm4729 = vcmp.eq.s32.totalorder %v1663, %v4715
  %vm4730 = vcmp.eq.s32.totalorder %v4665, %v4715
  %vm4731 = vcmp.eq.s32.totalorder %v1663, %v4716
  %vm4732 = vcmp.eq.s32.totalorder %v4665, %v4716
  %vm4733 = vcmp.eq.s32.totalorder %v1663, %v4717
  %vm4734 = vcmp.eq.s32.totalorder %v4665, %v4717
  %vm4735 = vcmp.eq.s32.totalorder %v1663, %v4718
  %vm4736 = vcmp.eq.s32.totalorder %v4665, %v4718
  %vm4737 = vcmp.eq.s32.totalorder %v1663, %v4719
  %vm4738 = vcmp.eq.s32.totalorder %v4665, %v4719
  %vm4739 = vcmp.eq.s32.totalorder %v1663, %v4720
  %vm4740 = vcmp.eq.s32.totalorder %v4665, %v4720
  %vm4741 = vcmp.eq.s32.totalorder %v1663, %v4721
  %vm4742 = vcmp.eq.s32.totalorder %v4665, %v4721
  %v4743 = vsel %vm4722, 1.0, 0.0
  %v4744 = vsel %vm4723, 1.0, 0.0
  %v4745 = vsel %vm4724, 1.0, 0.0
  %v4746 = vsel %vm4725, 1.0, 0.0
  %v4747 = vsel %vm4726, 1.0, 0.0
  %v4748 = vsel %vm4727, 1.0, 0.0
  %v4749 = vsel %vm4728, 1.0, 0.0
  %v4750 = vsel %vm4729, 1.0, 0.0
  %v4751 = vsel %vm4730, 1.0, 0.0
  %v4752 = vsel %vm4731, 1.0, 0.0
  %v4753 = vsel %vm4732, 1.0, 0.0
  %v4754 = vsel %vm4733, 1.0, 0.0
  %v4755 = vsel %vm4734, 1.0, 0.0
  %v4756 = vsel %vm4735, 1.0, 0.0
  %v4757 = vsel %vm4736, 1.0, 0.0
  %v4758 = vsel %vm4737, 1.0, 0.0
  %v4759 = vsel %vm4738, 1.0, 0.0
  %v4760 = vsel %vm4739, 1.0, 0.0
  %v4761 = vsel %vm4740, 1.0, 0.0
  %v4762 = vsel %vm4741, 1.0, 0.0
  %v4763 = vsel %vm4742, 1.0, 0.0
  %vm4764 = vcmask 785408
  %v4766 = vsel %vm4764, %v4694, 0
  %v4769 = vsel %vm4764, %v4695, 0
  %v4772 = vsel %vm4764, %v4696, 0
  %v4775 = vsel %vm4764, %v4697, 0
  %v4778 = vsel %vm4764, %v4698, 0
  %v4781 = vsel %vm4764, %v4699, 0
  %v4784 = vsel %vm4764, %v4700, 0
  %v4787 = vsel %vm4764, %v4702, 0
  %v4790 = vsel %vm4764, %v4704, 0
  %v4793 = vsel %vm4764, %v4706, 0
  %v4796 = vsel %vm4764, %v4708, 0
  %v4799 = vsel %vm4764, %v4710, 0
  %v4802 = vsel %vm4764, %v4712, 0
  %v4805 = vsel %vm4764, %v4714, 0
  %4807 = vmatprep.subr.mxu0 0.0
  %4808 = vmatpush1.msra.mxu0 %v4630
  %4809 = vmatprep.subr.mxu0 0.0
  %4810 = vmatpush1.msra.mxu0 %v4631
  %4811 = vmatprep.subr.mxu0 0.0
  %4812 = vmatpush1.msra.mxu0 %v4632
  %4813 = vmatprep.subr.mxu0 0.0
  %4814 = vmatpush1.msra.mxu0 %v4633
  %4815 = vmatprep.subr.mxu0 0.0
  %4816 = vmatpush1.msra.mxu0 %v4634
  %4817 = vmatprep.subr.mxu0 0.0
  %4818 = vmatpush1.msra.mxu0 %v4635
  %4819 = vmatprep.subr.mxu0 0.0
  %4820 = vmatpush1.msra.mxu0 %v4636
  %4821 = vmatprep.subr.mxu0 0.0
  %4822 = vmatpush1.msra.mxu0 %v4637
  %4823 = vmatprep.subr.mxu0 0.0
  %4824 = vmatpush1.msra.mxu0 %v4638
  %4825 = vmatprep.subr.mxu0 0.0
  %4826 = vmatpush1.msra.mxu0 %v4639
  %4827 = vmatprep.subr.mxu0 0.0
  %4828 = vmatpush1.msra.mxu0 %v4640
  %4829 = vmatprep.subr.mxu0 0.0
  %4830 = vmatpush1.msra.mxu0 %v4641
  %4831 = vmatprep.subr.mxu0 0.0
  %4832 = vmatpush1.msra.mxu0 %v4642
  %4833 = vmatprep.subr.mxu0 0.0
  %4834 = vmatpush1.msra.mxu0 %v4643
  %4835 = vmatprep.subr.mxu0 0.0
  %4836 = vmatpush1.msra.mxu0 %v4644
  %4837 = vmatprep.subr.mxu0 0.0
  %4838 = vmatpush1.msra.mxu0 %v4645
  %4839 = vmatprep.subr.mxu0 0.0
  %4840 = vmatpush1.msra.mxu0 %v4646
  %4841 = vmatprep.subr.mxu0 0.0
  %4842 = vmatpush1.msra.mxu0 %v4647
  %4843 = vmatprep.subr.mxu0 0.0
  %4844 = vmatpush1.msra.mxu0 %v4648
  %4845 = vmatprep.subr.mxu0 0.0
  %4846 = vmatpush1.msra.mxu0 %v4649
  %4847 = vmatprep.subr.mxu0 0.0
  %4848 = vmatpush1.msra.mxu0 %v4650
  %4849 = vmatprep.subr.mxu0 0.0
  %4850 = vmatpush1.msra.mxu0 %v4651
  %4851 = vmatprep.subr.mxu0 0.0
  %4852 = vmatpush1.msra.mxu0 %v4652
  %4853 = vmatprep.subr.mxu0 0.0
  %4854 = vmatpush1.msra.mxu0 %v4653
  %4855 = vmatprep.subr.mxu0 0.0
  %4856 = vmatpush1.msra.mxu0 %v4654
  %4857 = vmatprep.subr.mxu0 0.0
  %4858 = vmatpush1.msra.mxu0 %v4655
  %4859 = vmatprep.subr.mxu0 0.0
  %4860 = vmatpush1.msra.mxu0 %v4656
  %4861 = vmatprep.subr.mxu0 0.0
  %4862 = vmatpush1.msra.mxu0 %v4657
  %4863 = vmatprep.subr.mxu0 0.0
  %4864 = vmatpush1.msra.mxu0 0.0
  %4865 = vmatprep.subr.mxu0 0.0
  %4866 = vmatpush1.msra.mxu0 0.0
  %4867 = vmatprep.subr.mxu0 0.0
  %4868 = vmatpush1.msra.mxu0 0.0
  %4869 = vmatprep.subr.mxu0 0.0
  %4870 = vmatpush1.msra.mxu0 0.0
  %4871 = vmatprep.mubr.f32.mxu0 %v4766
  %4872 = vmatmul.mubr.f32.gmra.mrb[0].mxu0 %v1678
  %v4873 = vpop.f32.mrb[0].mxu0
  %v4874 = vadd.f32 0.0, %v4873
  %v4875 = vpop.f32.mrb[0].mxu0
  %4876 = vmatprep.mubr.f32.mxu0 %v4769
  %4877 = vmatmul.mubr.f32.gmra.mrb[0].mxu0 %v1679
  %v4878 = vpop.f32.mrb[0].mxu0
  %v4879 = vadd.f32 0.0, %v4878
  %v4880 = vpop.f32.mrb[0].mxu0
  %4881 = vmatprep.mubr.f32.mxu0 %v4772
  %4882 = vmatmul.mubr.f32.gmra.mrb[0].mxu0 %v1680
  %v4883 = vpop.f32.mrb[0].mxu0
  %v4884 = vadd.f32 0.0, %v4883
  %v4885 = vpop.f32.mrb[0].mxu0
  %4886 = vmatprep.mubr.f32.mxu0 %v4775
  %4887 = vmatmul.mubr.f32.gmra.mrb[0].mxu0 %v1681
  %v4888 = vpop.f32.mrb[0].mxu0
  %v4889 = vadd.f32 0.0, %v4888
  %v4890 = vpop.f32.mrb[0].mxu0
  %4891 = vmatprep.mubr.f32.mxu0 %v4778
  %4892 = vmatmul.mubr.f32.gmra.mrb[0].mxu0 %v1682
  %v4893 = vpop.f32.mrb[0].mxu0
  %v4894 = vadd.f32 0.0, %v4893
  %v4895 = vpop.f32.mrb[0].mxu0
  %4896 = vmatprep.mubr.f32.mxu0 %v4781
  %4897 = vmatmul.mubr.f32.gmra.mrb[0].mxu0 %v1683
  %v4898 = vpop.f32.mrb[0].mxu0
  %v4899 = vadd.f32 0.0, %v4898
  %v4900 = vpop.f32.mrb[0].mxu0
  %4901 = vmatprep.mubr.f32.mxu0 %v4784
  %4902 = vmatmul.mubr.f32.gmra.mrb[0].mxu0 %v1684
  %v4903 = vpop.f32.mrb[0].mxu0
  %v4904 = vadd.f32 0.0, %v4903
  %v4905 = vpop.f32.mrb[0].mxu0
  %4906 = vmatprep.mubr.f32.mxu0 %v4787
  %4907 = vmatmul.mubr.f32.gmra.mrb[0].mxu0 %v4701
  %v4908 = vpop.f32.mrb[0].mxu0
  %v4909 = vadd.f32 0.0, %v4908
  %v4910 = vpop.f32.mrb[0].mxu0
  %4911 = vmatprep.mubr.f32.mxu0 %v4790
  %4912 = vmatmul.mubr.f32.gmra.mrb[0].mxu0 %v4703
  %v4913 = vpop.f32.mrb[0].mxu0
  %v4914 = vadd.f32 0.0, %v4913
  %v4915 = vpop.f32.mrb[0].mxu0
  %4916 = vmatprep.mubr.f32.mxu0 %v4793
  %4917 = vmatmul.mubr.f32.gmra.mrb[0].mxu0 %v4705
  %v4918 = vpop.f32.mrb[0].mxu0
  %v4919 = vadd.f32 0.0, %v4918
  %v4920 = vpop.f32.mrb[0].mxu0
  %4921 = vmatprep.mubr.f32.mxu0 %v4796
  %4922 = vmatmul.mubr.f32.gmra.mrb[0].mxu0 %v4707
  %v4923 = vpop.f32.mrb[0].mxu0
  %v4924 = vadd.f32 0.0, %v4923
  %v4925 = vpop.f32.mrb[0].mxu0
  %4926 = vmatprep.mubr.f32.mxu0 %v4799
  %4927 = vmatmul.mubr.f32.gmra.mrb[0].mxu0 %v4709
  %v4928 = vpop.f32.mrb[0].mxu0
  %v4929 = vadd.f32 0.0, %v4928
  %v4930 = vpop.f32.mrb[0].mxu0
  %4931 = vmatprep.mubr.f32.mxu0 %v4802
  %4932 = vmatmul.mubr.f32.gmra.mrb[0].mxu0 %v4711
  %v4933 = vpop.f32.mrb[0].mxu0
  %v4934 = vadd.f32 0.0, %v4933
  %v4935 = vpop.f32.mrb[0].mxu0
  %4936 = vmatprep.mubr.f32.mxu0 %v4805
  %4937 = vmatmul.mubr.f32.gmra.mrb[0].mxu0 %v4713
  %v4938 = vpop.f32.mrb[0].mxu0
  %v4939 = vadd.f32 0.0, %v4938
  %v4940 = vpop.f32.mrb[0].mxu0
  %4941 = vdwg.mxu0
  %v4943 = vsel %vm4764, %v4743, 0
  %v4946 = vsel %vm4764, %v4744, 0
  %v4949 = vsel %vm4764, %v4745, 0
  %v4952 = vsel %vm4764, %v4746, 0
  %v4955 = vsel %vm4764, %v4747, 0
  %v4958 = vsel %vm4764, %v4748, 0
  %v4961 = vsel %vm4764, %v4749, 0
  %v4964 = vsel %vm4764, %v4751, 0
  %v4967 = vsel %vm4764, %v4753, 0
  %v4970 = vsel %vm4764, %v4755, 0
  %v4973 = vsel %vm4764, %v4757, 0
  %v4976 = vsel %vm4764, %v4759, 0
  %v4979 = vsel %vm4764, %v4761, 0
  %v4982 = vsel %vm4764, %v4763, 0
  %4984 = vmatprep.subr.mxu0 0.0
  %4985 = vmatpush1.msra.mxu0 %v4630
  %4986 = vmatprep.subr.mxu0 0.0
  %4987 = vmatpush1.msra.mxu0 %v4631
  %4988 = vmatprep.subr.mxu0 0.0
  %4989 = vmatpush1.msra.mxu0 %v4632
  %4990 = vmatprep.subr.mxu0 0.0
  %4991 = vmatpush1.msra.mxu0 %v4633
  %4992 = vmatprep.subr.mxu0 0.0
  %4993 = vmatpush1.msra.mxu0 %v4634
  %4994 = vmatprep.subr.mxu0 0.0
  %4995 = vmatpush1.msra.mxu0 %v4635
  %4996 = vmatprep.subr.mxu0 0.0
  %4997 = vmatpush1.msra.mxu0 %v4636
  %4998 = vmatprep.subr.mxu0 0.0
  %4999 = vmatpush1.msra.mxu0 %v4637
  %5000 = vmatprep.subr.mxu0 0.0
  %5001 = vmatpush1.msra.mxu0 %v4638
  %5002 = vmatprep.subr.mxu0 0.0
  %5003 = vmatpush1.msra.mxu0 %v4639
  %5004 = vmatprep.subr.mxu0 0.0
  %5005 = vmatpush1.msra.mxu0 %v4640
  %5006 = vmatprep.subr.mxu0 0.0
  %5007 = vmatpush1.msra.mxu0 %v4641
  %5008 = vmatprep.subr.mxu0 0.0
  %5009 = vmatpush1.msra.mxu0 %v4642
  %5010 = vmatprep.subr.mxu0 0.0
  %5011 = vmatpush1.msra.mxu0 %v4643
  %5012 = vmatprep.subr.mxu0 0.0
  %5013 = vmatpush1.msra.mxu0 %v4644
  %5014 = vmatprep.subr.mxu0 0.0
  %5015 = vmatpush1.msra.mxu0 %v4645
  %5016 = vmatprep.subr.mxu0 0.0
  %5017 = vmatpush1.msra.mxu0 %v4646
  %5018 = vmatprep.subr.mxu0 0.0
  %5019 = vmatpush1.msra.mxu0 %v4647
  %5020 = vmatprep.subr.mxu0 0.0
  %5021 = vmatpush1.msra.mxu0 %v4648
  %5022 = vmatprep.subr.mxu0 0.0
  %5023 = vmatpush1.msra.mxu0 %v4649
  %5024 = vmatprep.subr.mxu0 0.0
  %5025 = vmatpush1.msra.mxu0 %v4650
  %5026 = vmatprep.subr.mxu0 0.0
  %5027 = vmatpush1.msra.mxu0 %v4651
  %5028 = vmatprep.subr.mxu0 0.0
  %5029 = vmatpush1.msra.mxu0 %v4652
  %5030 = vmatprep.subr.mxu0 0.0
  %5031 = vmatpush1.msra.mxu0 %v4653
  %5032 = vmatprep.subr.mxu0 0.0
  %5033 = vmatpush1.msra.mxu0 %v4654
  %5034 = vmatprep.subr.mxu0 0.0
  %5035 = vmatpush1.msra.mxu0 %v4655
  %5036 = vmatprep.subr.mxu0 0.0
  %5037 = vmatpush1.msra.mxu0 %v4656
  %5038 = vmatprep.subr.mxu0 0.0
  %5039 = vmatpush1.msra.mxu0 %v4657
  %5040 = vmatprep.subr.mxu0 0.0
  %5041 = vmatpush1.msra.mxu0 0.0
  %5042 = vmatprep.subr.mxu0 0.0
  %5043 = vmatpush1.msra.mxu0 0.0
  %5044 = vmatprep.subr.mxu0 0.0
  %5045 = vmatpush1.msra.mxu0 0.0
  %5046 = vmatprep.subr.mxu0 0.0
  %5047 = vmatpush1.msra.mxu0 0.0
  %5048 = vmatprep.mubr.f32.mxu0 %v4943
  %5049 = vmatmul.mubr.f32.gmra.mrb[0].mxu0 %v1699
  %v5050 = vpop.f32.mrb[0].mxu0
  %v5051 = vadd.f32 0.0, %v5050
  %v5052 = vpop.f32.mrb[0].mxu0
  %5053 = vmatprep.mubr.f32.mxu0 %v4946
  %5054 = vmatmul.mubr.f32.gmra.mrb[0].mxu0 %v1700
  %v5055 = vpop.f32.mrb[0].mxu0
  %v5056 = vadd.f32 0.0, %v5055
  %v5057 = vpop.f32.mrb[0].mxu0
  %5058 = vmatprep.mubr.f32.mxu0 %v4949
  %5059 = vmatmul.mubr.f32.gmra.mrb[0].mxu0 %v1701
  %v5060 = vpop.f32.mrb[0].mxu0
  %v5061 = vadd.f32 0.0, %v5060
  %v5062 = vpop.f32.mrb[0].mxu0
  %5063 = vmatprep.mubr.f32.mxu0 %v4952
  %5064 = vmatmul.mubr.f32.gmra.mrb[0].mxu0 %v1702
  %v5065 = vpop.f32.mrb[0].mxu0
  %v5066 = vadd.f32 0.0, %v5065
  %v5067 = vpop.f32.mrb[0].mxu0
  %5068 = vmatprep.mubr.f32.mxu0 %v4955
  %5069 = vmatmul.mubr.f32.gmra.mrb[0].mxu0 %v1703
  %v5070 = vpop.f32.mrb[0].mxu0
  %v5071 = vadd.f32 0.0, %v5070
  %v5072 = vpop.f32.mrb[0].mxu0
  %5073 = vmatprep.mubr.f32.mxu0 %v4958
  %5074 = vmatmul.mubr.f32.gmra.mrb[0].mxu0 %v1704
  %v5075 = vpop.f32.mrb[0].mxu0
  %v5076 = vadd.f32 0.0, %v5075
  %v5077 = vpop.f32.mrb[0].mxu0
  %5078 = vmatprep.mubr.f32.mxu0 %v4961
  %5079 = vmatmul.mubr.f32.gmra.mrb[0].mxu0 %v1705
  %v5080 = vpop.f32.mrb[0].mxu0
  %v5081 = vadd.f32 0.0, %v5080
  %v5082 = vpop.f32.mrb[0].mxu0
  %5083 = vmatprep.mubr.f32.mxu0 %v4964
  %5084 = vmatmul.mubr.f32.gmra.mrb[0].mxu0 %v4750
  %v5085 = vpop.f32.mrb[0].mxu0
  %v5086 = vadd.f32 0.0, %v5085
  %v5087 = vpop.f32.mrb[0].mxu0
  %5088 = vmatprep.mubr.f32.mxu0 %v4967
  %5089 = vmatmul.mubr.f32.gmra.mrb[0].mxu0 %v4752
  %v5090 = vpop.f32.mrb[0].mxu0
  %v5091 = vadd.f32 0.0, %v5090
  %v5092 = vpop.f32.mrb[0].mxu0
  %5093 = vmatprep.mubr.f32.mxu0 %v4970
  %5094 = vmatmul.mubr.f32.gmra.mrb[0].mxu0 %v4754
  %v5095 = vpop.f32.mrb[0].mxu0
  %v5096 = vadd.f32 0.0, %v5095
  %v5097 = vpop.f32.mrb[0].mxu0
  %5098 = vmatprep.mubr.f32.mxu0 %v4973
  %5099 = vmatmul.mubr.f32.gmra.mrb[0].mxu0 %v4756
  %v5100 = vpop.f32.mrb[0].mxu0
  %v5101 = vadd.f32 0.0, %v5100
  %v5102 = vpop.f32.mrb[0].mxu0
  %5103 = vmatprep.mubr.f32.mxu0 %v4976
  %5104 = vmatmul.mubr.f32.gmra.mrb[0].mxu0 %v4758
  %v5105 = vpop.f32.mrb[0].mxu0
  %v5106 = vadd.f32 0.0, %v5105
  %v5107 = vpop.f32.mrb[0].mxu0
  %5108 = vmatprep.mubr.f32.mxu0 %v4979
  %5109 = vmatmul.mubr.f32.gmra.mrb[0].mxu0 %v4760
  %v5110 = vpop.f32.mrb[0].mxu0
  %v5111 = vadd.f32 0.0, %v5110
  %v5112 = vpop.f32.mrb[0].mxu0
  %5113 = vmatprep.mubr.f32.mxu0 %v4982
  %5114 = vmatmul.mubr.f32.gmra.mrb[0].mxu0 %v4762
  %v5115 = vpop.f32.mrb[0].mxu0
  %v5116 = vadd.f32 0.0, %v5115
  %v5117 = vpop.f32.mrb[0].mxu0
  %5118 = vdwg.mxu0
  %v5119 = vmax.f32 %v4874, %v5051
  %v5120 = vmax.f32 %v4879, %v5056
  %v5121 = vmax.f32 %v4884, %v5061
  %v5122 = vmax.f32 %v4889, %v5066
  %v5123 = vmax.f32 %v4894, %v5071
  %v5124 = vmax.f32 %v4899, %v5076
  %v5125 = vmax.f32 %v4904, %v5081
  %v5126 = vmax.f32 %v4909, %v5086
  %v5127 = vmax.f32 %v4914, %v5091
  %v5128 = vmax.f32 %v4919, %v5096
  %v5129 = vmax.f32 %v4924, %v5101
  %v5130 = vmax.f32 %v4929, %v5106
  %v5131 = vmax.f32 %v4934, %v5111
  %v5132 = vmax.f32 %v4939, %v5116
  %v5134 = vsel %vm2210, %v5119, 0
  %v5137 = vsel %vm2210, %v5120, 0
  %v5140 = vsel %vm2210, %v5121, 0
  %v5143 = vsel %vm2210, %v5122, 0
  %v5146 = vsel %vm2210, %v5123, 0
  %v5149 = vsel %vm2210, %v5124, 0
  %v5152 = vsel %vm2210, %v5125, 0
  %v5155 = vsel %vm2210, %v5126, 0
  %v5158 = vsel %vm2210, %v5127, 0
  %v5161 = vsel %vm2210, %v5128, 0
  %v5164 = vsel %vm2210, %v5129, 0
  %v5167 = vsel %vm2210, %v5130, 0
  %v5170 = vsel %vm2210, %v5131, 0
  %v5173 = vsel %vm2210, %v5132, 0
  %v5176 = vsel %vm2232, %v1962, 0
  %5178 = vmatprep.subr.mxu0 0.0
  %5179 = vmatpush1.msra.mxu0 %v1961
  %5180 = vmatprep.subr.mxu0 0.0
  %5181 = vmatpush1.msra.mxu0 %v5176
  %5182 = vmatprep.subr.mxu0 0.0
  %5183 = vmatpush1.msra.mxu0 0.0
  %5184 = vmatprep.subr.mxu0 0.0
  %5185 = vmatpush1.msra.mxu0 0.0
  %5186 = vmatprep.subr.mxu0 0.0
  %5187 = vmatpush1.msra.mxu0 0.0
  %5188 = vmatprep.subr.mxu0 0.0
  %5189 = vmatpush1.msra.mxu0 0.0
  %5190 = vmatprep.subr.mxu0 0.0
  %5191 = vmatpush1.msra.mxu0 0.0
  %5192 = vmatprep.subr.mxu0 0.0
  %5193 = vmatpush1.msra.mxu0 0.0
  %5194 = vmatprep.subr.mxu0 0.0
  %5195 = vmatpush1.msra.mxu0 0.0
  %5196 = vmatprep.subr.mxu0 0.0
  %5197 = vmatpush1.msra.mxu0 0.0
  %5198 = vmatprep.subr.mxu0 0.0
  %5199 = vmatpush1.msra.mxu0 0.0
  %5200 = vmatprep.subr.mxu0 0.0
  %5201 = vmatpush1.msra.mxu0 0.0
  %5202 = vmatprep.subr.mxu0 0.0
  %5203 = vmatpush1.msra.mxu0 0.0
  %5204 = vmatprep.subr.mxu0 0.0
  %5205 = vmatpush1.msra.mxu0 0.0
  %5206 = vmatprep.subr.mxu0 0.0
  %5207 = vmatpush1.msra.mxu0 0.0
  %5208 = vmatprep.subr.mxu0 0.0
  %5209 = vmatpush1.msra.mxu0 0.0
  %5210 = vmatprep.subr.mxu0 0.0
  %5211 = vmatpush1.msra.mxu0 0.0
  %5212 = vmatprep.subr.mxu0 0.0
  %5213 = vmatpush1.msra.mxu0 0.0
  %5214 = vmatprep.subr.mxu0 0.0
  %5215 = vmatpush1.msra.mxu0 0.0
  %5216 = vmatprep.subr.mxu0 0.0
  %5217 = vmatpush1.msra.mxu0 0.0
  %5218 = vmatprep.subr.mxu0 0.0
  %5219 = vmatpush1.msra.mxu0 0.0
  %5220 = vmatprep.subr.mxu0 0.0
  %5221 = vmatpush1.msra.mxu0 0.0
  %5222 = vmatprep.subr.mxu0 0.0
  %5223 = vmatpush1.msra.mxu0 0.0
  %5224 = vmatprep.subr.mxu0 0.0
  %5225 = vmatpush1.msra.mxu0 0.0
  %5226 = vmatprep.subr.mxu0 0.0
  %5227 = vmatpush1.msra.mxu0 0.0
  %5228 = vmatprep.subr.mxu0 0.0
  %5229 = vmatpush1.msra.mxu0 0.0
  %5230 = vmatprep.subr.mxu0 0.0
  %5231 = vmatpush1.msra.mxu0 0.0
  %5232 = vmatprep.subr.mxu0 0.0
  %5233 = vmatpush1.msra.mxu0 0.0
  %5234 = vmatprep.subr.mxu0 0.0
  %5235 = vmatpush1.msra.mxu0 0.0
  %5236 = vmatprep.subr.mxu0 0.0
  %5237 = vmatpush1.msra.mxu0 0.0
  %5238 = vmatprep.subr.mxu0 0.0
  %5239 = vmatpush1.msra.mxu0 0.0
  %5240 = vmatprep.subr.mxu0 0.0
  %5241 = vmatpush1.msra.mxu0 0.0
  %5242 = vmatprep.mubr.f32.mxu0 0.0
  %5243 = vmatmul.mubr.f32.gmra.mrb[0].mxu0 %v5134
  %v5244 = vpop.f32.mrb[0].mxu0
  %v5245 = vadd.f32 0.0, %v5244
  %v5246 = vpop.f32.mrb[0].mxu0
  %5247 = vmatprep.mubr.f32.mxu0 0.0
  %5248 = vmatmul.mubr.f32.gmra.mrb[0].mxu0 %v5137
  %v5249 = vpop.f32.mrb[0].mxu0
  %v5250 = vadd.f32 0.0, %v5249
  %v5251 = vpop.f32.mrb[0].mxu0
  %5252 = vmatprep.mubr.f32.mxu0 0.0
  %5253 = vmatmul.mubr.f32.gmra.mrb[0].mxu0 %v5140
  %v5254 = vpop.f32.mrb[0].mxu0
  %v5255 = vadd.f32 0.0, %v5254
  %v5256 = vpop.f32.mrb[0].mxu0
  %5257 = vmatprep.mubr.f32.mxu0 0.0
  %5258 = vmatmul.mubr.f32.gmra.mrb[0].mxu0 %v5143
  %v5259 = vpop.f32.mrb[0].mxu0
  %v5260 = vadd.f32 0.0, %v5259
  %v5261 = vpop.f32.mrb[0].mxu0
  %5262 = vmatprep.mubr.f32.mxu0 0.0
  %5263 = vmatmul.mubr.f32.gmra.mrb[0].mxu0 %v5146
  %v5264 = vpop.f32.mrb[0].mxu0
  %v5265 = vadd.f32 0.0, %v5264
  %v5266 = vpop.f32.mrb[0].mxu0
  %5267 = vmatprep.mubr.f32.mxu0 0.0
  %5268 = vmatmul.mubr.f32.gmra.mrb[0].mxu0 %v5149
  %v5269 = vpop.f32.mrb[0].mxu0
  %v5270 = vadd.f32 0.0, %v5269
  %v5271 = vpop.f32.mrb[0].mxu0
  %5272 = vmatprep.mubr.f32.mxu0 0.0
  %5273 = vmatmul.mubr.f32.gmra.mrb[0].mxu0 %v5152
  %v5274 = vpop.f32.mrb[0].mxu0
  %v5275 = vadd.f32 0.0, %v5274
  %v5276 = vpop.f32.mrb[0].mxu0
  %5277 = vmatprep.mubr.f32.mxu0 0.0
  %5278 = vmatmul.mubr.f32.gmra.mrb[0].mxu0 %v5155
  %v5279 = vpop.f32.mrb[0].mxu0
  %v5280 = vadd.f32 0.0, %v5279
  %v5281 = vpop.f32.mrb[0].mxu0
  %5282 = vmatprep.mubr.f32.mxu0 0.0
  %5283 = vmatmul.mubr.f32.gmra.mrb[0].mxu0 %v5158
  %v5284 = vpop.f32.mrb[0].mxu0
  %v5285 = vadd.f32 0.0, %v5284
  %v5286 = vpop.f32.mrb[0].mxu0
  %5287 = vmatprep.mubr.f32.mxu0 0.0
  %5288 = vmatmul.mubr.f32.gmra.mrb[0].mxu0 %v5161
  %v5289 = vpop.f32.mrb[0].mxu0
  %v5290 = vadd.f32 0.0, %v5289
  %v5291 = vpop.f32.mrb[0].mxu0
  %5292 = vmatprep.mubr.f32.mxu0 0.0
  %5293 = vmatmul.mubr.f32.gmra.mrb[0].mxu0 %v5164
  %v5294 = vpop.f32.mrb[0].mxu0
  %v5295 = vadd.f32 0.0, %v5294
  %v5296 = vpop.f32.mrb[0].mxu0
  %5297 = vmatprep.mubr.f32.mxu0 0.0
  %5298 = vmatmul.mubr.f32.gmra.mrb[0].mxu0 %v5167
  %v5299 = vpop.f32.mrb[0].mxu0
  %v5300 = vadd.f32 0.0, %v5299
  %v5301 = vpop.f32.mrb[0].mxu0
  %5302 = vmatprep.mubr.f32.mxu0 0.0
  %5303 = vmatmul.mubr.f32.gmra.mrb[0].mxu0 %v5170
  %v5304 = vpop.f32.mrb[0].mxu0
  %v5305 = vadd.f32 0.0, %v5304
  %v5306 = vpop.f32.mrb[0].mxu0
  %5307 = vmatprep.mubr.f32.mxu0 0.0
  %5308 = vmatmul.mubr.f32.gmra.mrb[0].mxu0 %v5173
  %v5309 = vpop.f32.mrb[0].mxu0
  %v5310 = vadd.f32 0.0, %v5309
  %v5311 = vpop.f32.mrb[0].mxu0
  %5312 = vdwg.mxu0
  %v5314 = vsel %vm2232, %v1971, 0
  %5316 = vmatprep.subr.mxu0 0.0
  %5317 = vmatpush1.msra.mxu0 %v1970
  %5318 = vmatprep.subr.mxu0 0.0
  %5319 = vmatpush1.msra.mxu0 %v5314
  %5320 = vmatprep.subr.mxu0 0.0
  %5321 = vmatpush1.msra.mxu0 0.0
  %5322 = vmatprep.subr.mxu0 0.0
  %5323 = vmatpush1.msra.mxu0 0.0
  %5324 = vmatprep.subr.mxu0 0.0
  %5325 = vmatpush1.msra.mxu0 0.0
  %5326 = vmatprep.subr.mxu0 0.0
  %5327 = vmatpush1.msra.mxu0 0.0
  %5328 = vmatprep.subr.mxu0 0.0
  %5329 = vmatpush1.msra.mxu0 0.0
  %5330 = vmatprep.subr.mxu0 0.0
  %5331 = vmatpush1.msra.mxu0 0.0
  %5332 = vmatprep.subr.mxu0 0.0
  %5333 = vmatpush1.msra.mxu0 0.0
  %5334 = vmatprep.subr.mxu0 0.0
  %5335 = vmatpush1.msra.mxu0 0.0
  %5336 = vmatprep.subr.mxu0 0.0
  %5337 = vmatpush1.msra.mxu0 0.0
  %5338 = vmatprep.subr.mxu0 0.0
  %5339 = vmatpush1.msra.mxu0 0.0
  %5340 = vmatprep.subr.mxu0 0.0
  %5341 = vmatpush1.msra.mxu0 0.0
  %5342 = vmatprep.subr.mxu0 0.0
  %5343 = vmatpush1.msra.mxu0 0.0
  %5344 = vmatprep.subr.mxu0 0.0
  %5345 = vmatpush1.msra.mxu0 0.0
  %5346 = vmatprep.subr.mxu0 0.0
  %5347 = vmatpush1.msra.mxu0 0.0
  %5348 = vmatprep.subr.mxu0 0.0
  %5349 = vmatpush1.msra.mxu0 0.0
  %5350 = vmatprep.subr.mxu0 0.0
  %5351 = vmatpush1.msra.mxu0 0.0
  %5352 = vmatprep.subr.mxu0 0.0
  %5353 = vmatpush1.msra.mxu0 0.0
  %5354 = vmatprep.subr.mxu0 0.0
  %5355 = vmatpush1.msra.mxu0 0.0
  %5356 = vmatprep.subr.mxu0 0.0
  %5357 = vmatpush1.msra.mxu0 0.0
  %5358 = vmatprep.subr.mxu0 0.0
  %5359 = vmatpush1.msra.mxu0 0.0
  %5360 = vmatprep.subr.mxu0 0.0
  %5361 = vmatpush1.msra.mxu0 0.0
  %5362 = vmatprep.subr.mxu0 0.0
  %5363 = vmatpush1.msra.mxu0 0.0
  %5364 = vmatprep.subr.mxu0 0.0
  %5365 = vmatpush1.msra.mxu0 0.0
  %5366 = vmatprep.subr.mxu0 0.0
  %5367 = vmatpush1.msra.mxu0 0.0
  %5368 = vmatprep.subr.mxu0 0.0
  %5369 = vmatpush1.msra.mxu0 0.0
  %5370 = vmatprep.subr.mxu0 0.0
  %5371 = vmatpush1.msra.mxu0 0.0
  %5372 = vmatprep.subr.mxu0 0.0
  %5373 = vmatpush1.msra.mxu0 0.0
  %5374 = vmatprep.subr.mxu0 0.0
  %5375 = vmatpush1.msra.mxu0 0.0
  %5376 = vmatprep.subr.mxu0 0.0
  %5377 = vmatpush1.msra.mxu0 0.0
  %5378 = vmatprep.subr.mxu0 0.0
  %5379 = vmatpush1.msra.mxu0 0.0
  %5380 = vmatprep.mubr.f32.mxu0 0.0
  %5381 = vmatmul.mubr.f32.gmra.mrb[0].mxu0 %v5134
  %v5382 = vpop.f32.mrb[0].mxu0
  %v5383 = vadd.f32 0.0, %v5382
  %v5384 = vpop.f32.mrb[0].mxu0
  %5385 = vmatprep.mubr.f32.mxu0 0.0
  %5386 = vmatmul.mubr.f32.gmra.mrb[0].mxu0 %v5137
  %v5387 = vpop.f32.mrb[0].mxu0
  %v5388 = vadd.f32 0.0, %v5387
  %v5389 = vpop.f32.mrb[0].mxu0
  %5390 = vmatprep.mubr.f32.mxu0 0.0
  %5391 = vmatmul.mubr.f32.gmra.mrb[0].mxu0 %v5140
  %v5392 = vpop.f32.mrb[0].mxu0
  %v5393 = vadd.f32 0.0, %v5392
  %v5394 = vpop.f32.mrb[0].mxu0
  %5395 = vmatprep.mubr.f32.mxu0 0.0
  %5396 = vmatmul.mubr.f32.gmra.mrb[0].mxu0 %v5143
  %v5397 = vpop.f32.mrb[0].mxu0
  %v5398 = vadd.f32 0.0, %v5397
  %v5399 = vpop.f32.mrb[0].mxu0
  %5400 = vmatprep.mubr.f32.mxu0 0.0
  %5401 = vmatmul.mubr.f32.gmra.mrb[0].mxu0 %v5146
  %v5402 = vpop.f32.mrb[0].mxu0
  %v5403 = vadd.f32 0.0, %v5402
  %v5404 = vpop.f32.mrb[0].mxu0
  %5405 = vmatprep.mubr.f32.mxu0 0.0
  %5406 = vmatmul.mubr.f32.gmra.mrb[0].mxu0 %v5149
  %v5407 = vpop.f32.mrb[0].mxu0
  %v5408 = vadd.f32 0.0, %v5407
  %v5409 = vpop.f32.mrb[0].mxu0
  %5410 = vmatprep.mubr.f32.mxu0 0.0
  %5411 = vmatmul.mubr.f32.gmra.mrb[0].mxu0 %v5152
  %v5412 = vpop.f32.mrb[0].mxu0
  %v5413 = vadd.f32 0.0, %v5412
  %v5414 = vpop.f32.mrb[0].mxu0
  %5415 = vmatprep.mubr.f32.mxu0 0.0
  %5416 = vmatmul.mubr.f32.gmra.mrb[0].mxu0 %v5155
  %v5417 = vpop.f32.mrb[0].mxu0
  %v5418 = vadd.f32 0.0, %v5417
  %v5419 = vpop.f32.mrb[0].mxu0
  %5420 = vmatprep.mubr.f32.mxu0 0.0
  %5421 = vmatmul.mubr.f32.gmra.mrb[0].mxu0 %v5158
  %v5422 = vpop.f32.mrb[0].mxu0
  %v5423 = vadd.f32 0.0, %v5422
  %v5424 = vpop.f32.mrb[0].mxu0
  %5425 = vmatprep.mubr.f32.mxu0 0.0
  %5426 = vmatmul.mubr.f32.gmra.mrb[0].mxu0 %v5161
  %v5427 = vpop.f32.mrb[0].mxu0
  %v5428 = vadd.f32 0.0, %v5427
  %v5429 = vpop.f32.mrb[0].mxu0
  %5430 = vmatprep.mubr.f32.mxu0 0.0
  %5431 = vmatmul.mubr.f32.gmra.mrb[0].mxu0 %v5164
  %v5432 = vpop.f32.mrb[0].mxu0
  %v5433 = vadd.f32 0.0, %v5432
  %v5434 = vpop.f32.mrb[0].mxu0
  %5435 = vmatprep.mubr.f32.mxu0 0.0
  %5436 = vmatmul.mubr.f32.gmra.mrb[0].mxu0 %v5167
  %v5437 = vpop.f32.mrb[0].mxu0
  %v5438 = vadd.f32 0.0, %v5437
  %v5439 = vpop.f32.mrb[0].mxu0
  %5440 = vmatprep.mubr.f32.mxu0 0.0
  %5441 = vmatmul.mubr.f32.gmra.mrb[0].mxu0 %v5170
  %v5442 = vpop.f32.mrb[0].mxu0
  %v5443 = vadd.f32 0.0, %v5442
  %v5444 = vpop.f32.mrb[0].mxu0
  %5445 = vmatprep.mubr.f32.mxu0 0.0
  %5446 = vmatmul.mubr.f32.gmra.mrb[0].mxu0 %v5173
  %v5447 = vpop.f32.mrb[0].mxu0
  %v5448 = vadd.f32 0.0, %v5447
  %v5449 = vpop.f32.mrb[0].mxu0
  %5450 = vdwg.mxu0
  %v5451 = vmax.f32 %v5245, %v5383
  %v5452 = vmax.f32 %v5250, %v5388
  %v5453 = vmax.f32 %v5255, %v5393
  %v5454 = vmax.f32 %v5260, %v5398
  %v5455 = vmax.f32 %v5265, %v5403
  %v5456 = vmax.f32 %v5270, %v5408
  %v5457 = vmax.f32 %v5275, %v5413
  %v5458 = vmax.f32 %v5280, %v5418
  %v5459 = vmax.f32 %v5285, %v5423
  %v5460 = vmax.f32 %v5290, %v5428
  %v5461 = vmax.f32 %v5295, %v5433
  %v5462 = vmax.f32 %v5300, %v5438
  %v5463 = vmax.f32 %v5305, %v5443
  %v5464 = vmax.f32 %v5310, %v5448
  %v5465 = vld [vmem:[%s8] sm:$0xff]
  %v5466 = vld [vmem:[%s8 + $0x8] sm:$0xff]
  %v5467 = vld [vmem:[%s8 + $0x10] sm:$0xff]
  %v5468 = vld [vmem:[%s8 + $0x18] sm:$0xff]
  %v5469 = vld [vmem:[%s8 + $0x20] sm:$0xff]
  %v5470 = vld [vmem:[%s8 + $0x28] sm:$0xff]
  %v5471 = vld [vmem:[%s8 + $0x30] sm:$0xff]
  %v5472 = vld [vmem:[%s8 + $0x38] sm:$0xff]
  %v5473 = vld [vmem:[%s8 + $0x40] sm:$0xff]
  %v5474 = vld [vmem:[%s8 + $0x48] sm:$0xff]
  %v5475 = vld [vmem:[%s8 + $0x50] sm:$0xff]
  %v5476 = vld [vmem:[%s8 + $0x58] sm:$0xff]
  %v5477 = vld [vmem:[%s8 + $0x60] sm:$0xff]
  %v5478 = vld [vmem:[%s8 + $0x68] sm:$0xff]
  %v5479 = vld [vmem:[%s8 + $0x70] sm:$0xff]
  %v5480 = vld [vmem:[%s8 + $0x78] sm:$0xff]
  %v5481 = vld [vmem:[%s7] sm:$0xff]
  %v5482 = vld [vmem:[%s7 + $0x8] sm:$0xff]
  %v5483 = vld [vmem:[%s7 + $0x10] sm:$0xff]
  %v5484 = vld [vmem:[%s7 + $0x18] sm:$0xff]
  %v5485 = vld [vmem:[%s7 + $0x20] sm:$0xff]
  %v5486 = vld [vmem:[%s7 + $0x28] sm:$0xff]
  %v5487 = vld [vmem:[%s7 + $0x30] sm:$0xff]
  %v5488 = vld [vmem:[%s7 + $0x38] sm:$0xff]
  %v5489 = vld [vmem:[%s7 + $0x40] sm:$0xff]
  %v5490 = vld [vmem:[%s7 + $0x48] sm:$0xff]
  %v5491 = vld [vmem:[%s7 + $0x50] sm:$0xff]
  %v5492 = vld [vmem:[%s7 + $0x58] sm:$0xff]
  %v5493 = vld [vmem:[%s7 + $0x60] sm:$0xff]
  %v5494 = vld [vmem:[%s7 + $0x68] sm:$0xff]
  %v5495 = vld [vmem:[%s7 + $0x70] sm:$0xff]
  %v5496 = vld [vmem:[%s7 + $0x78] sm:$0xff]
  %v5498 = vsel %vm1706, %v5481, 0
  %v5501 = vsel %vm1706, %v5482, 0
  %v5504 = vsel %vm1706, %v5483, 0
  %v5507 = vsel %vm1706, %v5484, 0
  %v5510 = vsel %vm1706, %v5485, 0
  %v5513 = vsel %vm1706, %v5486, 0
  %v5516 = vsel %vm1706, %v5487, 0
  %v5519 = vsel %vm1706, %v5488, 0
  %v5522 = vsel %vm1706, %v5489, 0
  %v5525 = vsel %vm1706, %v5490, 0
  %v5528 = vsel %vm1706, %v5491, 0
  %v5531 = vsel %vm1706, %v5492, 0
  %v5534 = vsel %vm1706, %v5493, 0
  %v5537 = vsel %vm1706, %v5494, 0
  %v5540 = vsel %vm1706, %v5495, 0
  %v5543 = vsel %vm1706, %v5496, 0
  %5545 = vmatprep.subr.mxu0 0.0
  %5546 = vmatpush1.msra.mxu0 %v5451
  %5547 = vmatprep.subr.mxu0 0.0
  %5548 = vmatpush1.msra.mxu0 %v5452
  %5549 = vmatprep.subr.mxu0 0.0
  %5550 = vmatpush1.msra.mxu0 %v5453
  %5551 = vmatprep.subr.mxu0 0.0
  %5552 = vmatpush1.msra.mxu0 %v5454
  %5553 = vmatprep.subr.mxu0 0.0
  %5554 = vmatpush1.msra.mxu0 %v5455
  %5555 = vmatprep.subr.mxu0 0.0
  %5556 = vmatpush1.msra.mxu0 %v5456
  %5557 = vmatprep.subr.mxu0 0.0
  %5558 = vmatpush1.msra.mxu0 %v5457
  %5559 = vmatprep.subr.mxu0 0.0
  %5560 = vmatpush1.msra.mxu0 %v5458
  %5561 = vmatprep.subr.mxu0 0.0
  %5562 = vmatpush1.msra.mxu0 %v5459
  %5563 = vmatprep.subr.mxu0 0.0
  %5564 = vmatpush1.msra.mxu0 %v5460
  %5565 = vmatprep.subr.mxu0 0.0
  %5566 = vmatpush1.msra.mxu0 %v5461
  %5567 = vmatprep.subr.mxu0 0.0
  %5568 = vmatpush1.msra.mxu0 %v5462
  %5569 = vmatprep.subr.mxu0 0.0
  %5570 = vmatpush1.msra.mxu0 %v5463
  %5571 = vmatprep.subr.mxu0 0.0
  %5572 = vmatpush1.msra.mxu0 %v5464
  %5573 = vmatprep.subr.mxu0 0.0
  %5574 = vmatpush1.msra.mxu0 0.0
  %5575 = vmatprep.subr.mxu0 0.0
  %5576 = vmatpush1.msra.mxu0 0.0
  %5577 = vmatprep.subr.mxu0 0.0
  %5578 = vmatpush1.msra.mxu0 0.0
  %5579 = vmatprep.subr.mxu0 0.0
  %5580 = vmatpush1.msra.mxu0 0.0
  %5581 = vmatprep.subr.mxu0 0.0
  %5582 = vmatpush1.msra.mxu0 0.0
  %5583 = vmatprep.subr.mxu0 0.0
  %5584 = vmatpush1.msra.mxu0 0.0
  %5585 = vmatprep.subr.mxu0 0.0
  %5586 = vmatpush1.msra.mxu0 0.0
  %5587 = vmatprep.subr.mxu0 0.0
  %5588 = vmatpush1.msra.mxu0 0.0
  %5589 = vmatprep.subr.mxu0 0.0
  %5590 = vmatpush1.msra.mxu0 0.0
  %5591 = vmatprep.subr.mxu0 0.0
  %5592 = vmatpush1.msra.mxu0 0.0
  %5593 = vmatprep.subr.mxu0 0.0
  %5594 = vmatpush1.msra.mxu0 0.0
  %5595 = vmatprep.subr.mxu0 0.0
  %5596 = vmatpush1.msra.mxu0 0.0
  %5597 = vmatprep.subr.mxu0 0.0
  %5598 = vmatpush1.msra.mxu0 0.0
  %5599 = vmatprep.subr.mxu0 0.0
  %5600 = vmatpush1.msra.mxu0 0.0
  %5601 = vmatprep.subr.mxu0 0.0
  %5602 = vmatpush1.msra.mxu0 0.0
  %5603 = vmatprep.subr.mxu0 0.0
  %5604 = vmatpush1.msra.mxu0 0.0
  %5605 = vmatprep.subr.mxu0 0.0
  %5606 = vmatpush1.msra.mxu0 0.0
  %5607 = vmatprep.subr.mxu0 0.0
  %5608 = vmatpush1.msra.mxu0 0.0
  %5609 = vmatprep.mubr.f32.mxu0 0.0
  %5610 = vmatmul.mubr.f32.gmra.mrb[0].mxu0 %v5498
  %v5611 = vpop.f32.mrb[0].mxu0
  %v5612 = vadd.f32 0.0, %v5611
  %v5613 = vpop.f32.mrb[0].mxu0
  %5614 = vmatprep.mubr.f32.mxu0 0.0
  %5615 = vmatmul.mubr.f32.gmra.mrb[0].mxu0 %v5501
  %v5616 = vpop.f32.mrb[0].mxu0
  %v5617 = vadd.f32 0.0, %v5616
  %v5618 = vpop.f32.mrb[0].mxu0
  %5619 = vmatprep.mubr.f32.mxu0 0.0
  %5620 = vmatmul.mubr.f32.gmra.mrb[0].mxu0 %v5504
  %v5621 = vpop.f32.mrb[0].mxu0
  %v5622 = vadd.f32 0.0, %v5621
  %v5623 = vpop.f32.mrb[0].mxu0
  %5624 = vmatprep.mubr.f32.mxu0 0.0
  %5625 = vmatmul.mubr.f32.gmra.mrb[0].mxu0 %v5507
  %v5626 = vpop.f32.mrb[0].mxu0
  %v5627 = vadd.f32 0.0, %v5626
  %v5628 = vpop.f32.mrb[0].mxu0
  %5629 = vmatprep.mubr.f32.mxu0 0.0
  %5630 = vmatmul.mubr.f32.gmra.mrb[0].mxu0 %v5510
  %v5631 = vpop.f32.mrb[0].mxu0
  %v5632 = vadd.f32 0.0, %v5631
  %v5633 = vpop.f32.mrb[0].mxu0
  %5634 = vmatprep.mubr.f32.mxu0 0.0
  %5635 = vmatmul.mubr.f32.gmra.mrb[0].mxu0 %v5513
  %v5636 = vpop.f32.mrb[0].mxu0
  %v5637 = vadd.f32 0.0, %v5636
  %v5638 = vpop.f32.mrb[0].mxu0
  %5639 = vmatprep.mubr.f32.mxu0 0.0
  %5640 = vmatmul.mubr.f32.gmra.mrb[0].mxu0 %v5516
  %v5641 = vpop.f32.mrb[0].mxu0
  %v5642 = vadd.f32 0.0, %v5641
  %v5643 = vpop.f32.mrb[0].mxu0
  %5644 = vmatprep.mubr.f32.mxu0 0.0
  %5645 = vmatmul.mubr.f32.gmra.mrb[0].mxu0 %v5519
  %v5646 = vpop.f32.mrb[0].mxu0
  %v5647 = vadd.f32 0.0, %v5646
  %v5648 = vpop.f32.mrb[0].mxu0
  %5649 = vmatprep.mubr.f32.mxu0 0.0
  %5650 = vmatmul.mubr.f32.gmra.mrb[0].mxu0 %v5522
  %v5651 = vpop.f32.mrb[0].mxu0
  %v5652 = vadd.f32 0.0, %v5651
  %v5653 = vpop.f32.mrb[0].mxu0
  %5654 = vmatprep.mubr.f32.mxu0 0.0
  %5655 = vmatmul.mubr.f32.gmra.mrb[0].mxu0 %v5525
  %v5656 = vpop.f32.mrb[0].mxu0
  %v5657 = vadd.f32 0.0, %v5656
  %v5658 = vpop.f32.mrb[0].mxu0
  %5659 = vmatprep.mubr.f32.mxu0 0.0
  %5660 = vmatmul.mubr.f32.gmra.mrb[0].mxu0 %v5528
  %v5661 = vpop.f32.mrb[0].mxu0
  %v5662 = vadd.f32 0.0, %v5661
  %v5663 = vpop.f32.mrb[0].mxu0
  %5664 = vmatprep.mubr.f32.mxu0 0.0
  %5665 = vmatmul.mubr.f32.gmra.mrb[0].mxu0 %v5531
  %v5666 = vpop.f32.mrb[0].mxu0
  %v5667 = vadd.f32 0.0, %v5666
  %v5668 = vpop.f32.mrb[0].mxu0
  %5669 = vmatprep.mubr.f32.mxu0 0.0
  %5670 = vmatmul.mubr.f32.gmra.mrb[0].mxu0 %v5534
  %v5671 = vpop.f32.mrb[0].mxu0
  %v5672 = vadd.f32 0.0, %v5671
  %v5673 = vpop.f32.mrb[0].mxu0
  %5674 = vmatprep.mubr.f32.mxu0 0.0
  %5675 = vmatmul.mubr.f32.gmra.mrb[0].mxu0 %v5537
  %v5676 = vpop.f32.mrb[0].mxu0
  %v5677 = vadd.f32 0.0, %v5676
  %v5678 = vpop.f32.mrb[0].mxu0
  %5679 = vmatprep.mubr.f32.mxu0 0.0
  %5680 = vmatmul.mubr.f32.gmra.mrb[0].mxu0 %v5540
  %v5681 = vpop.f32.mrb[0].mxu0
  %v5682 = vadd.f32 0.0, %v5681
  %v5683 = vpop.f32.mrb[0].mxu0
  %5684 = vmatprep.mubr.f32.mxu0 0.0
  %5685 = vmatmul.mubr.f32.gmra.mrb[0].mxu0 %v5543
  %v5686 = vpop.f32.mrb[0].mxu0
  %v5687 = vadd.f32 0.0, %v5686
  %v5688 = vpop.f32.mrb[0].mxu0
  %5689 = vdwg.mxu0
  %v5690 = vadd.f32 %v5465, %v5612
  %v5691 = vadd.f32 %v5466, %v5617
  %v5692 = vadd.f32 %v5467, %v5622
  %v5693 = vadd.f32 %v5468, %v5627
  %v5694 = vadd.f32 %v5469, %v5632
  %v5695 = vadd.f32 %v5470, %v5637
  %v5696 = vadd.f32 %v5471, %v5642
  %v5697 = vadd.f32 %v5472, %v5647
  %v5698 = vadd.f32 %v5473, %v5652
  %v5699 = vadd.f32 %v5474, %v5657
  %v5700 = vadd.f32 %v5475, %v5662
  %v5701 = vadd.f32 %v5476, %v5667
  %v5702 = vadd.f32 %v5477, %v5672
  %v5703 = vadd.f32 %v5478, %v5677
  %v5704 = vadd.f32 %v5479, %v5682
  %v5705 = vadd.f32 %v5480, %v5687
  %s5706 = scalar_lea.vmem %s7, 128
  %v5707 = vld [vmem:[%s5706] sm:$0xff]
  %v5708 = vld [vmem:[%s5706 + $0x8] sm:$0xff]
  %v5709 = vld [vmem:[%s5706 + $0x10] sm:$0xff]
  %v5710 = vld [vmem:[%s5706 + $0x18] sm:$0xff]
  %v5711 = vld [vmem:[%s5706 + $0x20] sm:$0xff]
  %v5712 = vld [vmem:[%s5706 + $0x28] sm:$0xff]
  %v5713 = vld [vmem:[%s5706 + $0x30] sm:$0xff]
  %v5714 = vld [vmem:[%s5706 + $0x38] sm:$0xff]
  %v5715 = vld [vmem:[%s5706 + $0x40] sm:$0xff]
  %v5716 = vld [vmem:[%s5706 + $0x48] sm:$0xff]
  %v5717 = vld [vmem:[%s5706 + $0x50] sm:$0xff]
  %v5718 = vld [vmem:[%s5706 + $0x58] sm:$0xff]
  %v5719 = vld [vmem:[%s5706 + $0x60] sm:$0xff]
  %v5720 = vld [vmem:[%s5706 + $0x68] sm:$0xff]
  %v5721 = vld [vmem:[%s5706 + $0x70] sm:$0xff]
  %v5722 = vld [vmem:[%s5706 + $0x78] sm:$0xff]
  %5737 = vrot.lane.b32.xlu0 %v5451, 127
  %v5738 = vpop.permute.xlu0 %5737
  %5739 = vrot.lane.b32.xlu0 %v5452, 127
  %v5740 = vpop.permute.xlu0 %5739
  %5741 = vrot.lane.b32.xlu0 %v5453, 127
  %v5742 = vpop.permute.xlu0 %5741
  %5743 = vrot.lane.b32.xlu0 %v5454, 127
  %v5744 = vpop.permute.xlu0 %5743
  %5745 = vrot.lane.b32.xlu0 %v5455, 127
  %v5746 = vpop.permute.xlu0 %5745
  %5747 = vrot.lane.b32.xlu0 %v5456, 127
  %v5748 = vpop.permute.xlu0 %5747
  %5749 = vrot.lane.b32.xlu0 %v5457, 127
  %v5750 = vpop.permute.xlu0 %5749
  %5751 = vrot.lane.b32.xlu0 %v5458, 127
  %v5752 = vpop.permute.xlu0 %5751
  %5753 = vrot.lane.b32.xlu0 %v5459, 127
  %v5754 = vpop.permute.xlu0 %5753
  %5755 = vrot.lane.b32.xlu0 %v5460, 127
  %v5756 = vpop.permute.xlu0 %5755
  %5757 = vrot.lane.b32.xlu0 %v5461, 127
  %v5758 = vpop.permute.xlu0 %5757
  %5759 = vrot.lane.b32.xlu0 %v5462, 127
  %v5760 = vpop.permute.xlu0 %5759
  %5761 = vrot.lane.b32.xlu0 %v5463, 127
  %v5762 = vpop.permute.xlu0 %5761
  %5763 = vrot.lane.b32.xlu0 %v5464, 127
  %v5764 = vpop.permute.xlu0 %5763
  %v5780 = vsel %vm1706, %v5707, 0
  %v5783 = vsel %vm1706, %v5708, 0
  %v5786 = vsel %vm1706, %v5709, 0
  %v5789 = vsel %vm1706, %v5710, 0
  %v5792 = vsel %vm1706, %v5711, 0
  %v5795 = vsel %vm1706, %v5712, 0
  %v5798 = vsel %vm1706, %v5713, 0
  %v5801 = vsel %vm1706, %v5714, 0
  %v5804 = vsel %vm1706, %v5715, 0
  %v5807 = vsel %vm1706, %v5716, 0
  %v5810 = vsel %vm1706, %v5717, 0
  %v5813 = vsel %vm1706, %v5718, 0
  %v5816 = vsel %vm1706, %v5719, 0
  %v5819 = vsel %vm1706, %v5720, 0
  %v5822 = vsel %vm1706, %v5721, 0
  %v5825 = vsel %vm1706, %v5722, 0
  %5827 = vmatprep.subr.mxu0 0.0
  %5828 = vmatpush1.msra.mxu0 %v5738
  %5829 = vmatprep.subr.mxu0 0.0
  %5830 = vmatpush1.msra.mxu0 %v5740
  %5831 = vmatprep.subr.mxu0 0.0
  %5832 = vmatpush1.msra.mxu0 %v5742
  %5833 = vmatprep.subr.mxu0 0.0
  %5834 = vmatpush1.msra.mxu0 %v5744
  %5835 = vmatprep.subr.mxu0 0.0
  %5836 = vmatpush1.msra.mxu0 %v5746
  %5837 = vmatprep.subr.mxu0 0.0
  %5838 = vmatpush1.msra.mxu0 %v5748
  %5839 = vmatprep.subr.mxu0 0.0
  %5840 = vmatpush1.msra.mxu0 %v5750
  %5841 = vmatprep.subr.mxu0 0.0
  %5842 = vmatpush1.msra.mxu0 %v5752
  %5843 = vmatprep.subr.mxu0 0.0
  %5844 = vmatpush1.msra.mxu0 %v5754
  %5845 = vmatprep.subr.mxu0 0.0
  %5846 = vmatpush1.msra.mxu0 %v5756
  %5847 = vmatprep.subr.mxu0 0.0
  %5848 = vmatpush1.msra.mxu0 %v5758
  %5849 = vmatprep.subr.mxu0 0.0
  %5850 = vmatpush1.msra.mxu0 %v5760
  %5851 = vmatprep.subr.mxu0 0.0
  %5852 = vmatpush1.msra.mxu0 %v5762
  %5853 = vmatprep.subr.mxu0 0.0
  %5854 = vmatpush1.msra.mxu0 %v5764
  %5855 = vmatprep.subr.mxu0 0.0
  %5856 = vmatpush1.msra.mxu0 0.0
  %5857 = vmatprep.subr.mxu0 0.0
  %5858 = vmatpush1.msra.mxu0 0.0
  %5859 = vmatprep.subr.mxu0 0.0
  %5860 = vmatpush1.msra.mxu0 0.0
  %5861 = vmatprep.subr.mxu0 0.0
  %5862 = vmatpush1.msra.mxu0 0.0
  %5863 = vmatprep.subr.mxu0 0.0
  %5864 = vmatpush1.msra.mxu0 0.0
  %5865 = vmatprep.subr.mxu0 0.0
  %5866 = vmatpush1.msra.mxu0 0.0
  %5867 = vmatprep.subr.mxu0 0.0
  %5868 = vmatpush1.msra.mxu0 0.0
  %5869 = vmatprep.subr.mxu0 0.0
  %5870 = vmatpush1.msra.mxu0 0.0
  %5871 = vmatprep.subr.mxu0 0.0
  %5872 = vmatpush1.msra.mxu0 0.0
  %5873 = vmatprep.subr.mxu0 0.0
  %5874 = vmatpush1.msra.mxu0 0.0
  %5875 = vmatprep.subr.mxu0 0.0
  %5876 = vmatpush1.msra.mxu0 0.0
  %5877 = vmatprep.subr.mxu0 0.0
  %5878 = vmatpush1.msra.mxu0 0.0
  %5879 = vmatprep.subr.mxu0 0.0
  %5880 = vmatpush1.msra.mxu0 0.0
  %5881 = vmatprep.subr.mxu0 0.0
  %5882 = vmatpush1.msra.mxu0 0.0
  %5883 = vmatprep.subr.mxu0 0.0
  %5884 = vmatpush1.msra.mxu0 0.0
  %5885 = vmatprep.subr.mxu0 0.0
  %5886 = vmatpush1.msra.mxu0 0.0
  %5887 = vmatprep.subr.mxu0 0.0
  %5888 = vmatpush1.msra.mxu0 0.0
  %5889 = vmatprep.subr.mxu0 0.0
  %5890 = vmatpush1.msra.mxu0 0.0
  %5891 = vmatprep.mubr.f32.mxu0 0.0
  %5892 = vmatmul.mubr.f32.gmra.mrb[0].mxu0 %v5780
  %v5893 = vpop.f32.mrb[0].mxu0
  %v5894 = vadd.f32 0.0, %v5893
  %v5895 = vpop.f32.mrb[0].mxu0
  %5896 = vmatprep.mubr.f32.mxu0 0.0
  %5897 = vmatmul.mubr.f32.gmra.mrb[0].mxu0 %v5783
  %v5898 = vpop.f32.mrb[0].mxu0
  %v5899 = vadd.f32 0.0, %v5898
  %v5900 = vpop.f32.mrb[0].mxu0
  %5901 = vmatprep.mubr.f32.mxu0 0.0
  %5902 = vmatmul.mubr.f32.gmra.mrb[0].mxu0 %v5786
  %v5903 = vpop.f32.mrb[0].mxu0
  %v5904 = vadd.f32 0.0, %v5903
  %v5905 = vpop.f32.mrb[0].mxu0
  %5906 = vmatprep.mubr.f32.mxu0 0.0
  %5907 = vmatmul.mubr.f32.gmra.mrb[0].mxu0 %v5789
  %v5908 = vpop.f32.mrb[0].mxu0
  %v5909 = vadd.f32 0.0, %v5908
  %v5910 = vpop.f32.mrb[0].mxu0
  %5911 = vmatprep.mubr.f32.mxu0 0.0
  %5912 = vmatmul.mubr.f32.gmra.mrb[0].mxu0 %v5792
  %v5913 = vpop.f32.mrb[0].mxu0
  %v5914 = vadd.f32 0.0, %v5913
  %v5915 = vpop.f32.mrb[0].mxu0
  %5916 = vmatprep.mubr.f32.mxu0 0.0
  %5917 = vmatmul.mubr.f32.gmra.mrb[0].mxu0 %v5795
  %v5918 = vpop.f32.mrb[0].mxu0
  %v5919 = vadd.f32 0.0, %v5918
  %v5920 = vpop.f32.mrb[0].mxu0
  %5921 = vmatprep.mubr.f32.mxu0 0.0
  %5922 = vmatmul.mubr.f32.gmra.mrb[0].mxu0 %v5798
  %v5923 = vpop.f32.mrb[0].mxu0
  %v5924 = vadd.f32 0.0, %v5923
  %v5925 = vpop.f32.mrb[0].mxu0
  %5926 = vmatprep.mubr.f32.mxu0 0.0
  %5927 = vmatmul.mubr.f32.gmra.mrb[0].mxu0 %v5801
  %v5928 = vpop.f32.mrb[0].mxu0
  %v5929 = vadd.f32 0.0, %v5928
  %v5930 = vpop.f32.mrb[0].mxu0
  %5931 = vmatprep.mubr.f32.mxu0 0.0
  %5932 = vmatmul.mubr.f32.gmra.mrb[0].mxu0 %v5804
  %v5933 = vpop.f32.mrb[0].mxu0
  %v5934 = vadd.f32 0.0, %v5933
  %v5935 = vpop.f32.mrb[0].mxu0
  %5936 = vmatprep.mubr.f32.mxu0 0.0
  %5937 = vmatmul.mubr.f32.gmra.mrb[0].mxu0 %v5807
  %v5938 = vpop.f32.mrb[0].mxu0
  %v5939 = vadd.f32 0.0, %v5938
  %v5940 = vpop.f32.mrb[0].mxu0
  %5941 = vmatprep.mubr.f32.mxu0 0.0
  %5942 = vmatmul.mubr.f32.gmra.mrb[0].mxu0 %v5810
  %v5943 = vpop.f32.mrb[0].mxu0
  %v5944 = vadd.f32 0.0, %v5943
  %v5945 = vpop.f32.mrb[0].mxu0
  %5946 = vmatprep.mubr.f32.mxu0 0.0
  %5947 = vmatmul.mubr.f32.gmra.mrb[0].mxu0 %v5813
  %v5948 = vpop.f32.mrb[0].mxu0
  %v5949 = vadd.f32 0.0, %v5948
  %v5950 = vpop.f32.mrb[0].mxu0
  %5951 = vmatprep.mubr.f32.mxu0 0.0
  %5952 = vmatmul.mubr.f32.gmra.mrb[0].mxu0 %v5816
  %v5953 = vpop.f32.mrb[0].mxu0
  %v5954 = vadd.f32 0.0, %v5953
  %v5955 = vpop.f32.mrb[0].mxu0
  %5956 = vmatprep.mubr.f32.mxu0 0.0
  %5957 = vmatmul.mubr.f32.gmra.mrb[0].mxu0 %v5819
  %v5958 = vpop.f32.mrb[0].mxu0
  %v5959 = vadd.f32 0.0, %v5958
  %v5960 = vpop.f32.mrb[0].mxu0
  %5961 = vmatprep.mubr.f32.mxu0 0.0
  %5962 = vmatmul.mubr.f32.gmra.mrb[0].mxu0 %v5822
  %v5963 = vpop.f32.mrb[0].mxu0
  %v5964 = vadd.f32 0.0, %v5963
  %v5965 = vpop.f32.mrb[0].mxu0
  %5966 = vmatprep.mubr.f32.mxu0 0.0
  %5967 = vmatmul.mubr.f32.gmra.mrb[0].mxu0 %v5825
  %v5968 = vpop.f32.mrb[0].mxu0
  %v5969 = vadd.f32 0.0, %v5968
  %v5970 = vpop.f32.mrb[0].mxu0
  %5971 = vdwg.mxu0
  %v5972 = vadd.f32 %v5690, %v5894
  %v5973 = vadd.f32 %v5691, %v5899
  %v5974 = vadd.f32 %v5692, %v5904
  %v5975 = vadd.f32 %v5693, %v5909
  %v5976 = vadd.f32 %v5694, %v5914
  %v5977 = vadd.f32 %v5695, %v5919
  %v5978 = vadd.f32 %v5696, %v5924
  %v5979 = vadd.f32 %v5697, %v5929
  %v5980 = vadd.f32 %v5698, %v5934
  %v5981 = vadd.f32 %v5699, %v5939
  %v5982 = vadd.f32 %v5700, %v5944
  %v5983 = vadd.f32 %v5701, %v5949
  %v5984 = vadd.f32 %v5702, %v5954
  %v5985 = vadd.f32 %v5703, %v5959
  %v5986 = vadd.f32 %v5704, %v5964
  %v5987 = vadd.f32 %v5705, %v5969
  %s5988 = scalar_lea.vmem %s7, 256
  %v5989 = vld [vmem:[%s5988] sm:$0xff]
  %v5990 = vld [vmem:[%s5988 + $0x8] sm:$0xff]
  %v5991 = vld [vmem:[%s5988 + $0x10] sm:$0xff]
  %v5992 = vld [vmem:[%s5988 + $0x18] sm:$0xff]
  %v5993 = vld [vmem:[%s5988 + $0x20] sm:$0xff]
  %v5994 = vld [vmem:[%s5988 + $0x28] sm:$0xff]
  %v5995 = vld [vmem:[%s5988 + $0x30] sm:$0xff]
  %v5996 = vld [vmem:[%s5988 + $0x38] sm:$0xff]
  %v5997 = vld [vmem:[%s5988 + $0x40] sm:$0xff]
  %v5998 = vld [vmem:[%s5988 + $0x48] sm:$0xff]
  %v5999 = vld [vmem:[%s5988 + $0x50] sm:$0xff]
  %v6000 = vld [vmem:[%s5988 + $0x58] sm:$0xff]
  %v6001 = vld [vmem:[%s5988 + $0x60] sm:$0xff]
  %v6002 = vld [vmem:[%s5988 + $0x68] sm:$0xff]
  %v6003 = vld [vmem:[%s5988 + $0x70] sm:$0xff]
  %v6004 = vld [vmem:[%s5988 + $0x78] sm:$0xff]
  %6005 = vrot.lane.b32.xlu0 %v5451, 126
  %v6006 = vpop.permute.xlu0 %6005
  %6007 = vrot.lane.b32.xlu0 %v5452, 126
  %v6008 = vpop.permute.xlu0 %6007
  %6009 = vrot.lane.b32.xlu0 %v5453, 126
  %v6010 = vpop.permute.xlu0 %6009
  %6011 = vrot.lane.b32.xlu0 %v5454, 126
  %v6012 = vpop.permute.xlu0 %6011
  %6013 = vrot.lane.b32.xlu0 %v5455, 126
  %v6014 = vpop.permute.xlu0 %6013
  %6015 = vrot.lane.b32.xlu0 %v5456, 126
  %v6016 = vpop.permute.xlu0 %6015
  %6017 = vrot.lane.b32.xlu0 %v5457, 126
  %v6018 = vpop.permute.xlu0 %6017
  %6019 = vrot.lane.b32.xlu0 %v5458, 126
  %v6020 = vpop.permute.xlu0 %6019
  %6021 = vrot.lane.b32.xlu0 %v5459, 126
  %v6022 = vpop.permute.xlu0 %6021
  %6023 = vrot.lane.b32.xlu0 %v5460, 126
  %v6024 = vpop.permute.xlu0 %6023
  %6025 = vrot.lane.b32.xlu0 %v5461, 126
  %v6026 = vpop.permute.xlu0 %6025
  %6027 = vrot.lane.b32.xlu0 %v5462, 126
  %v6028 = vpop.permute.xlu0 %6027
  %6029 = vrot.lane.b32.xlu0 %v5463, 126
  %v6030 = vpop.permute.xlu0 %6029
  %6031 = vrot.lane.b32.xlu0 %v5464, 126
  %v6032 = vpop.permute.xlu0 %6031
  %v6048 = vsel %vm1706, %v5989, 0
  %v6051 = vsel %vm1706, %v5990, 0
  %v6054 = vsel %vm1706, %v5991, 0
  %v6057 = vsel %vm1706, %v5992, 0
  %v6060 = vsel %vm1706, %v5993, 0
  %v6063 = vsel %vm1706, %v5994, 0
  %v6066 = vsel %vm1706, %v5995, 0
  %v6069 = vsel %vm1706, %v5996, 0
  %v6072 = vsel %vm1706, %v5997, 0
  %v6075 = vsel %vm1706, %v5998, 0
  %v6078 = vsel %vm1706, %v5999, 0
  %v6081 = vsel %vm1706, %v6000, 0
  %v6084 = vsel %vm1706, %v6001, 0
  %v6087 = vsel %vm1706, %v6002, 0
  %v6090 = vsel %vm1706, %v6003, 0
  %v6093 = vsel %vm1706, %v6004, 0
  %6095 = vmatprep.subr.mxu0 0.0
  %6096 = vmatpush1.msra.mxu0 %v6006
  %6097 = vmatprep.subr.mxu0 0.0
  %6098 = vmatpush1.msra.mxu0 %v6008
  %6099 = vmatprep.subr.mxu0 0.0
  %6100 = vmatpush1.msra.mxu0 %v6010
  %6101 = vmatprep.subr.mxu0 0.0
  %6102 = vmatpush1.msra.mxu0 %v6012
  %6103 = vmatprep.subr.mxu0 0.0
  %6104 = vmatpush1.msra.mxu0 %v6014
  %6105 = vmatprep.subr.mxu0 0.0
  %6106 = vmatpush1.msra.mxu0 %v6016
  %6107 = vmatprep.subr.mxu0 0.0
  %6108 = vmatpush1.msra.mxu0 %v6018
  %6109 = vmatprep.subr.mxu0 0.0
  %6110 = vmatpush1.msra.mxu0 %v6020
  %6111 = vmatprep.subr.mxu0 0.0
  %6112 = vmatpush1.msra.mxu0 %v6022
  %6113 = vmatprep.subr.mxu0 0.0
  %6114 = vmatpush1.msra.mxu0 %v6024
  %6115 = vmatprep.subr.mxu0 0.0
  %6116 = vmatpush1.msra.mxu0 %v6026
  %6117 = vmatprep.subr.mxu0 0.0
  %6118 = vmatpush1.msra.mxu0 %v6028
  %6119 = vmatprep.subr.mxu0 0.0
  %6120 = vmatpush1.msra.mxu0 %v6030
  %6121 = vmatprep.subr.mxu0 0.0
  %6122 = vmatpush1.msra.mxu0 %v6032
  %6123 = vmatprep.subr.mxu0 0.0
  %6124 = vmatpush1.msra.mxu0 0.0
  %6125 = vmatprep.subr.mxu0 0.0
  %6126 = vmatpush1.msra.mxu0 0.0
  %6127 = vmatprep.subr.mxu0 0.0
  %6128 = vmatpush1.msra.mxu0 0.0
  %6129 = vmatprep.subr.mxu0 0.0
  %6130 = vmatpush1.msra.mxu0 0.0
  %6131 = vmatprep.subr.mxu0 0.0
  %6132 = vmatpush1.msra.mxu0 0.0
  %6133 = vmatprep.subr.mxu0 0.0
  %6134 = vmatpush1.msra.mxu0 0.0
  %6135 = vmatprep.subr.mxu0 0.0
  %6136 = vmatpush1.msra.mxu0 0.0
  %6137 = vmatprep.subr.mxu0 0.0
  %6138 = vmatpush1.msra.mxu0 0.0
  %6139 = vmatprep.subr.mxu0 0.0
  %6140 = vmatpush1.msra.mxu0 0.0
  %6141 = vmatprep.subr.mxu0 0.0
  %6142 = vmatpush1.msra.mxu0 0.0
  %6143 = vmatprep.subr.mxu0 0.0
  %6144 = vmatpush1.msra.mxu0 0.0
  %6145 = vmatprep.subr.mxu0 0.0
  %6146 = vmatpush1.msra.mxu0 0.0
  %6147 = vmatprep.subr.mxu0 0.0
  %6148 = vmatpush1.msra.mxu0 0.0
  %6149 = vmatprep.subr.mxu0 0.0
  %6150 = vmatpush1.msra.mxu0 0.0
  %6151 = vmatprep.subr.mxu0 0.0
  %6152 = vmatpush1.msra.mxu0 0.0
  %6153 = vmatprep.subr.mxu0 0.0
  %6154 = vmatpush1.msra.mxu0 0.0
  %6155 = vmatprep.subr.mxu0 0.0
  %6156 = vmatpush1.msra.mxu0 0.0
  %6157 = vmatprep.subr.mxu0 0.0
  %6158 = vmatpush1.msra.mxu0 0.0
  %6159 = vmatprep.mubr.f32.mxu0 0.0
  %6160 = vmatmul.mubr.f32.gmra.mrb[0].mxu0 %v6048
  %v6161 = vpop.f32.mrb[0].mxu0
  %v6162 = vadd.f32 0.0, %v6161
  %v6163 = vpop.f32.mrb[0].mxu0
  %6164 = vmatprep.mubr.f32.mxu0 0.0
  %6165 = vmatmul.mubr.f32.gmra.mrb[0].mxu0 %v6051
  %v6166 = vpop.f32.mrb[0].mxu0
  %v6167 = vadd.f32 0.0, %v6166
  %v6168 = vpop.f32.mrb[0].mxu0
  %6169 = vmatprep.mubr.f32.mxu0 0.0
  %6170 = vmatmul.mubr.f32.gmra.mrb[0].mxu0 %v6054
  %v6171 = vpop.f32.mrb[0].mxu0
  %v6172 = vadd.f32 0.0, %v6171
  %v6173 = vpop.f32.mrb[0].mxu0
  %6174 = vmatprep.mubr.f32.mxu0 0.0
  %6175 = vmatmul.mubr.f32.gmra.mrb[0].mxu0 %v6057
  %v6176 = vpop.f32.mrb[0].mxu0
  %v6177 = vadd.f32 0.0, %v6176
  %v6178 = vpop.f32.mrb[0].mxu0
  %6179 = vmatprep.mubr.f32.mxu0 0.0
  %6180 = vmatmul.mubr.f32.gmra.mrb[0].mxu0 %v6060
  %v6181 = vpop.f32.mrb[0].mxu0
  %v6182 = vadd.f32 0.0, %v6181
  %v6183 = vpop.f32.mrb[0].mxu0
  %6184 = vmatprep.mubr.f32.mxu0 0.0
  %6185 = vmatmul.mubr.f32.gmra.mrb[0].mxu0 %v6063
  %v6186 = vpop.f32.mrb[0].mxu0
  %v6187 = vadd.f32 0.0, %v6186
  %v6188 = vpop.f32.mrb[0].mxu0
  %6189 = vmatprep.mubr.f32.mxu0 0.0
  %6190 = vmatmul.mubr.f32.gmra.mrb[0].mxu0 %v6066
  %v6191 = vpop.f32.mrb[0].mxu0
  %v6192 = vadd.f32 0.0, %v6191
  %v6193 = vpop.f32.mrb[0].mxu0
  %6194 = vmatprep.mubr.f32.mxu0 0.0
  %6195 = vmatmul.mubr.f32.gmra.mrb[0].mxu0 %v6069
  %v6196 = vpop.f32.mrb[0].mxu0
  %v6197 = vadd.f32 0.0, %v6196
  %v6198 = vpop.f32.mrb[0].mxu0
  %6199 = vmatprep.mubr.f32.mxu0 0.0
  %6200 = vmatmul.mubr.f32.gmra.mrb[0].mxu0 %v6072
  %v6201 = vpop.f32.mrb[0].mxu0
  %v6202 = vadd.f32 0.0, %v6201
  %v6203 = vpop.f32.mrb[0].mxu0
  %6204 = vmatprep.mubr.f32.mxu0 0.0
  %6205 = vmatmul.mubr.f32.gmra.mrb[0].mxu0 %v6075
  %v6206 = vpop.f32.mrb[0].mxu0
  %v6207 = vadd.f32 0.0, %v6206
  %v6208 = vpop.f32.mrb[0].mxu0
  %6209 = vmatprep.mubr.f32.mxu0 0.0
  %6210 = vmatmul.mubr.f32.gmra.mrb[0].mxu0 %v6078
  %v6211 = vpop.f32.mrb[0].mxu0
  %v6212 = vadd.f32 0.0, %v6211
  %v6213 = vpop.f32.mrb[0].mxu0
  %6214 = vmatprep.mubr.f32.mxu0 0.0
  %6215 = vmatmul.mubr.f32.gmra.mrb[0].mxu0 %v6081
  %v6216 = vpop.f32.mrb[0].mxu0
  %v6217 = vadd.f32 0.0, %v6216
  %v6218 = vpop.f32.mrb[0].mxu0
  %6219 = vmatprep.mubr.f32.mxu0 0.0
  %6220 = vmatmul.mubr.f32.gmra.mrb[0].mxu0 %v6084
  %v6221 = vpop.f32.mrb[0].mxu0
  %v6222 = vadd.f32 0.0, %v6221
  %v6223 = vpop.f32.mrb[0].mxu0
  %6224 = vmatprep.mubr.f32.mxu0 0.0
  %6225 = vmatmul.mubr.f32.gmra.mrb[0].mxu0 %v6087
  %v6226 = vpop.f32.mrb[0].mxu0
  %v6227 = vadd.f32 0.0, %v6226
  %v6228 = vpop.f32.mrb[0].mxu0
  %6229 = vmatprep.mubr.f32.mxu0 0.0
  %6230 = vmatmul.mubr.f32.gmra.mrb[0].mxu0 %v6090
  %v6231 = vpop.f32.mrb[0].mxu0
  %v6232 = vadd.f32 0.0, %v6231
  %v6233 = vpop.f32.mrb[0].mxu0
  %6234 = vmatprep.mubr.f32.mxu0 0.0
  %6235 = vmatmul.mubr.f32.gmra.mrb[0].mxu0 %v6093
  %v6236 = vpop.f32.mrb[0].mxu0
  %v6237 = vadd.f32 0.0, %v6236
  %v6238 = vpop.f32.mrb[0].mxu0
  %6239 = vdwg.mxu0
  %v6240 = vadd.f32 %v5972, %v6162
  %v6241 = vadd.f32 %v5973, %v6167
  %v6242 = vadd.f32 %v5974, %v6172
  %v6243 = vadd.f32 %v5975, %v6177
  %v6244 = vadd.f32 %v5976, %v6182
  %v6245 = vadd.f32 %v5977, %v6187
  %v6246 = vadd.f32 %v5978, %v6192
  %v6247 = vadd.f32 %v5979, %v6197
  %v6248 = vadd.f32 %v5980, %v6202
  %v6249 = vadd.f32 %v5981, %v6207
  %v6250 = vadd.f32 %v5982, %v6212
  %v6251 = vadd.f32 %v5983, %v6217
  %v6252 = vadd.f32 %v5984, %v6222
  %v6253 = vadd.f32 %v5985, %v6227
  %v6254 = vadd.f32 %v5986, %v6232
  %v6255 = vadd.f32 %v5987, %v6237
  %s6256 = scalar_lea.vmem %s7, 384
  %v6257 = vld [vmem:[%s6256] sm:$0xff]
  %v6258 = vld [vmem:[%s6256 + $0x8] sm:$0xff]
  %v6259 = vld [vmem:[%s6256 + $0x10] sm:$0xff]
  %v6260 = vld [vmem:[%s6256 + $0x18] sm:$0xff]
  %v6261 = vld [vmem:[%s6256 + $0x20] sm:$0xff]
  %v6262 = vld [vmem:[%s6256 + $0x28] sm:$0xff]
  %v6263 = vld [vmem:[%s6256 + $0x30] sm:$0xff]
  %v6264 = vld [vmem:[%s6256 + $0x38] sm:$0xff]
  %v6265 = vld [vmem:[%s6256 + $0x40] sm:$0xff]
  %v6266 = vld [vmem:[%s6256 + $0x48] sm:$0xff]
  %v6267 = vld [vmem:[%s6256 + $0x50] sm:$0xff]
  %v6268 = vld [vmem:[%s6256 + $0x58] sm:$0xff]
  %v6269 = vld [vmem:[%s6256 + $0x60] sm:$0xff]
  %v6270 = vld [vmem:[%s6256 + $0x68] sm:$0xff]
  %v6271 = vld [vmem:[%s6256 + $0x70] sm:$0xff]
  %v6272 = vld [vmem:[%s6256 + $0x78] sm:$0xff]
  %6273 = vrot.lane.b32.xlu0 %v5451, 125
  %v6274 = vpop.permute.xlu0 %6273
  %6275 = vrot.lane.b32.xlu0 %v5452, 125
  %v6276 = vpop.permute.xlu0 %6275
  %6277 = vrot.lane.b32.xlu0 %v5453, 125
  %v6278 = vpop.permute.xlu0 %6277
  %6279 = vrot.lane.b32.xlu0 %v5454, 125
  %v6280 = vpop.permute.xlu0 %6279
  %6281 = vrot.lane.b32.xlu0 %v5455, 125
  %v6282 = vpop.permute.xlu0 %6281
  %6283 = vrot.lane.b32.xlu0 %v5456, 125
  %v6284 = vpop.permute.xlu0 %6283
  %6285 = vrot.lane.b32.xlu0 %v5457, 125
  %v6286 = vpop.permute.xlu0 %6285
  %6287 = vrot.lane.b32.xlu0 %v5458, 125
  %v6288 = vpop.permute.xlu0 %6287
  %6289 = vrot.lane.b32.xlu0 %v5459, 125
  %v6290 = vpop.permute.xlu0 %6289
  %6291 = vrot.lane.b32.xlu0 %v5460, 125
  %v6292 = vpop.permute.xlu0 %6291
  %6293 = vrot.lane.b32.xlu0 %v5461, 125
  %v6294 = vpop.permute.xlu0 %6293
  %6295 = vrot.lane.b32.xlu0 %v5462, 125
  %v6296 = vpop.permute.xlu0 %6295
  %6297 = vrot.lane.b32.xlu0 %v5463, 125
  %v6298 = vpop.permute.xlu0 %6297
  %6299 = vrot.lane.b32.xlu0 %v5464, 125
  %v6300 = vpop.permute.xlu0 %6299
  %v6316 = vsel %vm1706, %v6257, 0
  %v6319 = vsel %vm1706, %v6258, 0
  %v6322 = vsel %vm1706, %v6259, 0
  %v6325 = vsel %vm1706, %v6260, 0
  %v6328 = vsel %vm1706, %v6261, 0
  %v6331 = vsel %vm1706, %v6262, 0
  %v6334 = vsel %vm1706, %v6263, 0
  %v6337 = vsel %vm1706, %v6264, 0
  %v6340 = vsel %vm1706, %v6265, 0
  %v6343 = vsel %vm1706, %v6266, 0
  %v6346 = vsel %vm1706, %v6267, 0
  %v6349 = vsel %vm1706, %v6268, 0
  %v6352 = vsel %vm1706, %v6269, 0
  %v6355 = vsel %vm1706, %v6270, 0
  %v6358 = vsel %vm1706, %v6271, 0
  %v6361 = vsel %vm1706, %v6272, 0
  %6363 = vmatprep.subr.mxu0 0.0
  %6364 = vmatpush1.msra.mxu0 %v6274
  %6365 = vmatprep.subr.mxu0 0.0
  %6366 = vmatpush1.msra.mxu0 %v6276
  %6367 = vmatprep.subr.mxu0 0.0
  %6368 = vmatpush1.msra.mxu0 %v6278
  %6369 = vmatprep.subr.mxu0 0.0
  %6370 = vmatpush1.msra.mxu0 %v6280
  %6371 = vmatprep.subr.mxu0 0.0
  %6372 = vmatpush1.msra.mxu0 %v6282
  %6373 = vmatprep.subr.mxu0 0.0
  %6374 = vmatpush1.msra.mxu0 %v6284
  %6375 = vmatprep.subr.mxu0 0.0
  %6376 = vmatpush1.msra.mxu0 %v6286
  %6377 = vmatprep.subr.mxu0 0.0
  %6378 = vmatpush1.msra.mxu0 %v6288
  %6379 = vmatprep.subr.mxu0 0.0
  %6380 = vmatpush1.msra.mxu0 %v6290
  %6381 = vmatprep.subr.mxu0 0.0
  %6382 = vmatpush1.msra.mxu0 %v6292
  %6383 = vmatprep.subr.mxu0 0.0
  %6384 = vmatpush1.msra.mxu0 %v6294
  %6385 = vmatprep.subr.mxu0 0.0
  %6386 = vmatpush1.msra.mxu0 %v6296
  %6387 = vmatprep.subr.mxu0 0.0
  %6388 = vmatpush1.msra.mxu0 %v6298
  %6389 = vmatprep.subr.mxu0 0.0
  %6390 = vmatpush1.msra.mxu0 %v6300
  %6391 = vmatprep.subr.mxu0 0.0
  %6392 = vmatpush1.msra.mxu0 0.0
  %6393 = vmatprep.subr.mxu0 0.0
  %6394 = vmatpush1.msra.mxu0 0.0
  %6395 = vmatprep.subr.mxu0 0.0
  %6396 = vmatpush1.msra.mxu0 0.0
  %6397 = vmatprep.subr.mxu0 0.0
  %6398 = vmatpush1.msra.mxu0 0.0
  %6399 = vmatprep.subr.mxu0 0.0
  %6400 = vmatpush1.msra.mxu0 0.0
  %6401 = vmatprep.subr.mxu0 0.0
  %6402 = vmatpush1.msra.mxu0 0.0
  %6403 = vmatprep.subr.mxu0 0.0
  %6404 = vmatpush1.msra.mxu0 0.0
  %6405 = vmatprep.subr.mxu0 0.0
  %6406 = vmatpush1.msra.mxu0 0.0
  %6407 = vmatprep.subr.mxu0 0.0
  %6408 = vmatpush1.msra.mxu0 0.0
  %6409 = vmatprep.subr.mxu0 0.0
  %6410 = vmatpush1.msra.mxu0 0.0
  %6411 = vmatprep.subr.mxu0 0.0
  %6412 = vmatpush1.msra.mxu0 0.0
  %6413 = vmatprep.subr.mxu0 0.0
  %6414 = vmatpush1.msra.mxu0 0.0
  %6415 = vmatprep.subr.mxu0 0.0
  %6416 = vmatpush1.msra.mxu0 0.0
  %6417 = vmatprep.subr.mxu0 0.0
  %6418 = vmatpush1.msra.mxu0 0.0
  %6419 = vmatprep.subr.mxu0 0.0
  %6420 = vmatpush1.msra.mxu0 0.0
  %6421 = vmatprep.subr.mxu0 0.0
  %6422 = vmatpush1.msra.mxu0 0.0
  %6423 = vmatprep.subr.mxu0 0.0
  %6424 = vmatpush1.msra.mxu0 0.0
  %6425 = vmatprep.subr.mxu0 0.0
  %6426 = vmatpush1.msra.mxu0 0.0
  %6427 = vmatprep.mubr.f32.mxu0 0.0
  %6428 = vmatmul.mubr.f32.gmra.mrb[0].mxu0 %v6316
  %v6429 = vpop.f32.mrb[0].mxu0
  %v6430 = vadd.f32 0.0, %v6429
  %v6431 = vpop.f32.mrb[0].mxu0
  %6432 = vmatprep.mubr.f32.mxu0 0.0
  %6433 = vmatmul.mubr.f32.gmra.mrb[0].mxu0 %v6319
  %v6434 = vpop.f32.mrb[0].mxu0
  %v6435 = vadd.f32 0.0, %v6434
  %v6436 = vpop.f32.mrb[0].mxu0
  %6437 = vmatprep.mubr.f32.mxu0 0.0
  %6438 = vmatmul.mubr.f32.gmra.mrb[0].mxu0 %v6322
  %v6439 = vpop.f32.mrb[0].mxu0
  %v6440 = vadd.f32 0.0, %v6439
  %v6441 = vpop.f32.mrb[0].mxu0
  %6442 = vmatprep.mubr.f32.mxu0 0.0
  %6443 = vmatmul.mubr.f32.gmra.mrb[0].mxu0 %v6325
  %v6444 = vpop.f32.mrb[0].mxu0
  %v6445 = vadd.f32 0.0, %v6444
  %v6446 = vpop.f32.mrb[0].mxu0
  %6447 = vmatprep.mubr.f32.mxu0 0.0
  %6448 = vmatmul.mubr.f32.gmra.mrb[0].mxu0 %v6328
  %v6449 = vpop.f32.mrb[0].mxu0
  %v6450 = vadd.f32 0.0, %v6449
  %v6451 = vpop.f32.mrb[0].mxu0
  %6452 = vmatprep.mubr.f32.mxu0 0.0
  %6453 = vmatmul.mubr.f32.gmra.mrb[0].mxu0 %v6331
  %v6454 = vpop.f32.mrb[0].mxu0
  %v6455 = vadd.f32 0.0, %v6454
  %v6456 = vpop.f32.mrb[0].mxu0
  %6457 = vmatprep.mubr.f32.mxu0 0.0
  %6458 = vmatmul.mubr.f32.gmra.mrb[0].mxu0 %v6334
  %v6459 = vpop.f32.mrb[0].mxu0
  %v6460 = vadd.f32 0.0, %v6459
  %v6461 = vpop.f32.mrb[0].mxu0
  %6462 = vmatprep.mubr.f32.mxu0 0.0
  %6463 = vmatmul.mubr.f32.gmra.mrb[0].mxu0 %v6337
  %v6464 = vpop.f32.mrb[0].mxu0
  %v6465 = vadd.f32 0.0, %v6464
  %v6466 = vpop.f32.mrb[0].mxu0
  %6467 = vmatprep.mubr.f32.mxu0 0.0
  %6468 = vmatmul.mubr.f32.gmra.mrb[0].mxu0 %v6340
  %v6469 = vpop.f32.mrb[0].mxu0
  %v6470 = vadd.f32 0.0, %v6469
  %v6471 = vpop.f32.mrb[0].mxu0
  %6472 = vmatprep.mubr.f32.mxu0 0.0
  %6473 = vmatmul.mubr.f32.gmra.mrb[0].mxu0 %v6343
  %v6474 = vpop.f32.mrb[0].mxu0
  %v6475 = vadd.f32 0.0, %v6474
  %v6476 = vpop.f32.mrb[0].mxu0
  %6477 = vmatprep.mubr.f32.mxu0 0.0
  %6478 = vmatmul.mubr.f32.gmra.mrb[0].mxu0 %v6346
  %v6479 = vpop.f32.mrb[0].mxu0
  %v6480 = vadd.f32 0.0, %v6479
  %v6481 = vpop.f32.mrb[0].mxu0
  %6482 = vmatprep.mubr.f32.mxu0 0.0
  %6483 = vmatmul.mubr.f32.gmra.mrb[0].mxu0 %v6349
  %v6484 = vpop.f32.mrb[0].mxu0
  %v6485 = vadd.f32 0.0, %v6484
  %v6486 = vpop.f32.mrb[0].mxu0
  %6487 = vmatprep.mubr.f32.mxu0 0.0
  %6488 = vmatmul.mubr.f32.gmra.mrb[0].mxu0 %v6352
  %v6489 = vpop.f32.mrb[0].mxu0
  %v6490 = vadd.f32 0.0, %v6489
  %v6491 = vpop.f32.mrb[0].mxu0
  %6492 = vmatprep.mubr.f32.mxu0 0.0
  %6493 = vmatmul.mubr.f32.gmra.mrb[0].mxu0 %v6355
  %v6494 = vpop.f32.mrb[0].mxu0
  %v6495 = vadd.f32 0.0, %v6494
  %v6496 = vpop.f32.mrb[0].mxu0
  %6497 = vmatprep.mubr.f32.mxu0 0.0
  %6498 = vmatmul.mubr.f32.gmra.mrb[0].mxu0 %v6358
  %v6499 = vpop.f32.mrb[0].mxu0
  %v6500 = vadd.f32 0.0, %v6499
  %v6501 = vpop.f32.mrb[0].mxu0
  %6502 = vmatprep.mubr.f32.mxu0 0.0
  %6503 = vmatmul.mubr.f32.gmra.mrb[0].mxu0 %v6361
  %v6504 = vpop.f32.mrb[0].mxu0
  %v6505 = vadd.f32 0.0, %v6504
  %v6506 = vpop.f32.mrb[0].mxu0
  %6507 = vdwg.mxu0
  %v6508 = vadd.f32 %v6240, %v6430
  %v6509 = vadd.f32 %v6241, %v6435
  %v6510 = vadd.f32 %v6242, %v6440
  %v6511 = vadd.f32 %v6243, %v6445
  %v6512 = vadd.f32 %v6244, %v6450
  %v6513 = vadd.f32 %v6245, %v6455
  %v6514 = vadd.f32 %v6246, %v6460
  %v6515 = vadd.f32 %v6247, %v6465
  %v6516 = vadd.f32 %v6248, %v6470
  %v6517 = vadd.f32 %v6249, %v6475
  %v6518 = vadd.f32 %v6250, %v6480
  %v6519 = vadd.f32 %v6251, %v6485
  %v6520 = vadd.f32 %v6252, %v6490
  %v6521 = vadd.f32 %v6253, %v6495
  %v6522 = vadd.f32 %v6254, %v6500
  %v6523 = vadd.f32 %v6255, %v6505
  %s6524 = scalar_lea.vmem %s7, 512
  %v6525 = vld [vmem:[%s6524] sm:$0xff]
  %v6526 = vld [vmem:[%s6524 + $0x8] sm:$0xff]
  %v6527 = vld [vmem:[%s6524 + $0x10] sm:$0xff]
  %v6528 = vld [vmem:[%s6524 + $0x18] sm:$0xff]
  %v6529 = vld [vmem:[%s6524 + $0x20] sm:$0xff]
  %v6530 = vld [vmem:[%s6524 + $0x28] sm:$0xff]
  %v6531 = vld [vmem:[%s6524 + $0x30] sm:$0xff]
  %v6532 = vld [vmem:[%s6524 + $0x38] sm:$0xff]
  %v6533 = vld [vmem:[%s6524 + $0x40] sm:$0xff]
  %v6534 = vld [vmem:[%s6524 + $0x48] sm:$0xff]
  %v6535 = vld [vmem:[%s6524 + $0x50] sm:$0xff]
  %v6536 = vld [vmem:[%s6524 + $0x58] sm:$0xff]
  %v6537 = vld [vmem:[%s6524 + $0x60] sm:$0xff]
  %v6538 = vld [vmem:[%s6524 + $0x68] sm:$0xff]
  %v6539 = vld [vmem:[%s6524 + $0x70] sm:$0xff]
  %v6540 = vld [vmem:[%s6524 + $0x78] sm:$0xff]
  %6541 = vrot.lane.b32.xlu0 %v5451, 124
  %v6542 = vpop.permute.xlu0 %6541
  %6543 = vrot.lane.b32.xlu0 %v5452, 124
  %v6544 = vpop.permute.xlu0 %6543
  %6545 = vrot.lane.b32.xlu0 %v5453, 124
  %v6546 = vpop.permute.xlu0 %6545
  %6547 = vrot.lane.b32.xlu0 %v5454, 124
  %v6548 = vpop.permute.xlu0 %6547
  %6549 = vrot.lane.b32.xlu0 %v5455, 124
  %v6550 = vpop.permute.xlu0 %6549
  %6551 = vrot.lane.b32.xlu0 %v5456, 124
  %v6552 = vpop.permute.xlu0 %6551
  %6553 = vrot.lane.b32.xlu0 %v5457, 124
  %v6554 = vpop.permute.xlu0 %6553
  %6555 = vrot.lane.b32.xlu0 %v5458, 124
  %v6556 = vpop.permute.xlu0 %6555
  %6557 = vrot.lane.b32.xlu0 %v5459, 124
  %v6558 = vpop.permute.xlu0 %6557
  %6559 = vrot.lane.b32.xlu0 %v5460, 124
  %v6560 = vpop.permute.xlu0 %6559
  %6561 = vrot.lane.b32.xlu0 %v5461, 124
  %v6562 = vpop.permute.xlu0 %6561
  %6563 = vrot.lane.b32.xlu0 %v5462, 124
  %v6564 = vpop.permute.xlu0 %6563
  %6565 = vrot.lane.b32.xlu0 %v5463, 124
  %v6566 = vpop.permute.xlu0 %6565
  %6567 = vrot.lane.b32.xlu0 %v5464, 124
  %v6568 = vpop.permute.xlu0 %6567
  %v6584 = vsel %vm1706, %v6525, 0
  %v6587 = vsel %vm1706, %v6526, 0
  %v6590 = vsel %vm1706, %v6527, 0
  %v6593 = vsel %vm1706, %v6528, 0
  %v6596 = vsel %vm1706, %v6529, 0
  %v6599 = vsel %vm1706, %v6530, 0
  %v6602 = vsel %vm1706, %v6531, 0
  %v6605 = vsel %vm1706, %v6532, 0
  %v6608 = vsel %vm1706, %v6533, 0
  %v6611 = vsel %vm1706, %v6534, 0
  %v6614 = vsel %vm1706, %v6535, 0
  %v6617 = vsel %vm1706, %v6536, 0
  %v6620 = vsel %vm1706, %v6537, 0
  %v6623 = vsel %vm1706, %v6538, 0
  %v6626 = vsel %vm1706, %v6539, 0
  %v6629 = vsel %vm1706, %v6540, 0
  %6631 = vmatprep.subr.mxu0 0.0
  %6632 = vmatpush1.msra.mxu0 %v6542
  %6633 = vmatprep.subr.mxu0 0.0
  %6634 = vmatpush1.msra.mxu0 %v6544
  %6635 = vmatprep.subr.mxu0 0.0
  %6636 = vmatpush1.msra.mxu0 %v6546
  %6637 = vmatprep.subr.mxu0 0.0
  %6638 = vmatpush1.msra.mxu0 %v6548
  %6639 = vmatprep.subr.mxu0 0.0
  %6640 = vmatpush1.msra.mxu0 %v6550
  %6641 = vmatprep.subr.mxu0 0.0
  %6642 = vmatpush1.msra.mxu0 %v6552
  %6643 = vmatprep.subr.mxu0 0.0
  %6644 = vmatpush1.msra.mxu0 %v6554
  %6645 = vmatprep.subr.mxu0 0.0
  %6646 = vmatpush1.msra.mxu0 %v6556
  %6647 = vmatprep.subr.mxu0 0.0
  %6648 = vmatpush1.msra.mxu0 %v6558
  %6649 = vmatprep.subr.mxu0 0.0
  %6650 = vmatpush1.msra.mxu0 %v6560
  %6651 = vmatprep.subr.mxu0 0.0
  %6652 = vmatpush1.msra.mxu0 %v6562
  %6653 = vmatprep.subr.mxu0 0.0
  %6654 = vmatpush1.msra.mxu0 %v6564
  %6655 = vmatprep.subr.mxu0 0.0
  %6656 = vmatpush1.msra.mxu0 %v6566
  %6657 = vmatprep.subr.mxu0 0.0
  %6658 = vmatpush1.msra.mxu0 %v6568
  %6659 = vmatprep.subr.mxu0 0.0
  %6660 = vmatpush1.msra.mxu0 0.0
  %6661 = vmatprep.subr.mxu0 0.0
  %6662 = vmatpush1.msra.mxu0 0.0
  %6663 = vmatprep.subr.mxu0 0.0
  %6664 = vmatpush1.msra.mxu0 0.0
  %6665 = vmatprep.subr.mxu0 0.0
  %6666 = vmatpush1.msra.mxu0 0.0
  %6667 = vmatprep.subr.mxu0 0.0
  %6668 = vmatpush1.msra.mxu0 0.0
  %6669 = vmatprep.subr.mxu0 0.0
  %6670 = vmatpush1.msra.mxu0 0.0
  %6671 = vmatprep.subr.mxu0 0.0
  %6672 = vmatpush1.msra.mxu0 0.0
  %6673 = vmatprep.subr.mxu0 0.0
  %6674 = vmatpush1.msra.mxu0 0.0
  %6675 = vmatprep.subr.mxu0 0.0
  %6676 = vmatpush1.msra.mxu0 0.0
  %6677 = vmatprep.subr.mxu0 0.0
  %6678 = vmatpush1.msra.mxu0 0.0
  %6679 = vmatprep.subr.mxu0 0.0
  %6680 = vmatpush1.msra.mxu0 0.0
  %6681 = vmatprep.subr.mxu0 0.0
  %6682 = vmatpush1.msra.mxu0 0.0
  %6683 = vmatprep.subr.mxu0 0.0
  %6684 = vmatpush1.msra.mxu0 0.0
  %6685 = vmatprep.subr.mxu0 0.0
  %6686 = vmatpush1.msra.mxu0 0.0
  %6687 = vmatprep.subr.mxu0 0.0
  %6688 = vmatpush1.msra.mxu0 0.0
  %6689 = vmatprep.subr.mxu0 0.0
  %6690 = vmatpush1.msra.mxu0 0.0
  %6691 = vmatprep.subr.mxu0 0.0
  %6692 = vmatpush1.msra.mxu0 0.0
  %6693 = vmatprep.subr.mxu0 0.0
  %6694 = vmatpush1.msra.mxu0 0.0
  %6695 = vmatprep.mubr.f32.mxu0 0.0
  %6696 = vmatmul.mubr.f32.gmra.mrb[0].mxu0 %v6584
  %v6697 = vpop.f32.mrb[0].mxu0
  %v6698 = vadd.f32 0.0, %v6697
  %v6699 = vpop.f32.mrb[0].mxu0
  %6700 = vmatprep.mubr.f32.mxu0 0.0
  %6701 = vmatmul.mubr.f32.gmra.mrb[0].mxu0 %v6587
  %v6702 = vpop.f32.mrb[0].mxu0
  %v6703 = vadd.f32 0.0, %v6702
  %v6704 = vpop.f32.mrb[0].mxu0
  %6705 = vmatprep.mubr.f32.mxu0 0.0
  %6706 = vmatmul.mubr.f32.gmra.mrb[0].mxu0 %v6590
  %v6707 = vpop.f32.mrb[0].mxu0
  %v6708 = vadd.f32 0.0, %v6707
  %v6709 = vpop.f32.mrb[0].mxu0
  %6710 = vmatprep.mubr.f32.mxu0 0.0
  %6711 = vmatmul.mubr.f32.gmra.mrb[0].mxu0 %v6593
  %v6712 = vpop.f32.mrb[0].mxu0
  %v6713 = vadd.f32 0.0, %v6712
  %v6714 = vpop.f32.mrb[0].mxu0
  %6715 = vmatprep.mubr.f32.mxu0 0.0
  %6716 = vmatmul.mubr.f32.gmra.mrb[0].mxu0 %v6596
  %v6717 = vpop.f32.mrb[0].mxu0
  %v6718 = vadd.f32 0.0, %v6717
  %v6719 = vpop.f32.mrb[0].mxu0
  %6720 = vmatprep.mubr.f32.mxu0 0.0
  %6721 = vmatmul.mubr.f32.gmra.mrb[0].mxu0 %v6599
  %v6722 = vpop.f32.mrb[0].mxu0
  %v6723 = vadd.f32 0.0, %v6722
  %v6724 = vpop.f32.mrb[0].mxu0
  %6725 = vmatprep.mubr.f32.mxu0 0.0
  %6726 = vmatmul.mubr.f32.gmra.mrb[0].mxu0 %v6602
  %v6727 = vpop.f32.mrb[0].mxu0
  %v6728 = vadd.f32 0.0, %v6727
  %v6729 = vpop.f32.mrb[0].mxu0
  %6730 = vmatprep.mubr.f32.mxu0 0.0
  %6731 = vmatmul.mubr.f32.gmra.mrb[0].mxu0 %v6605
  %v6732 = vpop.f32.mrb[0].mxu0
  %v6733 = vadd.f32 0.0, %v6732
  %v6734 = vpop.f32.mrb[0].mxu0
  %6735 = vmatprep.mubr.f32.mxu0 0.0
  %6736 = vmatmul.mubr.f32.gmra.mrb[0].mxu0 %v6608
  %v6737 = vpop.f32.mrb[0].mxu0
  %v6738 = vadd.f32 0.0, %v6737
  %v6739 = vpop.f32.mrb[0].mxu0
  %6740 = vmatprep.mubr.f32.mxu0 0.0
  %6741 = vmatmul.mubr.f32.gmra.mrb[0].mxu0 %v6611
  %v6742 = vpop.f32.mrb[0].mxu0
  %v6743 = vadd.f32 0.0, %v6742
  %v6744 = vpop.f32.mrb[0].mxu0
  %6745 = vmatprep.mubr.f32.mxu0 0.0
  %6746 = vmatmul.mubr.f32.gmra.mrb[0].mxu0 %v6614
  %v6747 = vpop.f32.mrb[0].mxu0
  %v6748 = vadd.f32 0.0, %v6747
  %v6749 = vpop.f32.mrb[0].mxu0
  %6750 = vmatprep.mubr.f32.mxu0 0.0
  %6751 = vmatmul.mubr.f32.gmra.mrb[0].mxu0 %v6617
  %v6752 = vpop.f32.mrb[0].mxu0
  %v6753 = vadd.f32 0.0, %v6752
  %v6754 = vpop.f32.mrb[0].mxu0
  %6755 = vmatprep.mubr.f32.mxu0 0.0
  %6756 = vmatmul.mubr.f32.gmra.mrb[0].mxu0 %v6620
  %v6757 = vpop.f32.mrb[0].mxu0
  %v6758 = vadd.f32 0.0, %v6757
  %v6759 = vpop.f32.mrb[0].mxu0
  %6760 = vmatprep.mubr.f32.mxu0 0.0
  %6761 = vmatmul.mubr.f32.gmra.mrb[0].mxu0 %v6623
  %v6762 = vpop.f32.mrb[0].mxu0
  %v6763 = vadd.f32 0.0, %v6762
  %v6764 = vpop.f32.mrb[0].mxu0
  %6765 = vmatprep.mubr.f32.mxu0 0.0
  %6766 = vmatmul.mubr.f32.gmra.mrb[0].mxu0 %v6626
  %v6767 = vpop.f32.mrb[0].mxu0
  %v6768 = vadd.f32 0.0, %v6767
  %v6769 = vpop.f32.mrb[0].mxu0
  %6770 = vmatprep.mubr.f32.mxu0 0.0
  %6771 = vmatmul.mubr.f32.gmra.mrb[0].mxu0 %v6629
  %v6772 = vpop.f32.mrb[0].mxu0
  %v6773 = vadd.f32 0.0, %v6772
  %v6774 = vpop.f32.mrb[0].mxu0
  %6775 = vdwg.mxu0
  %v6776 = vadd.f32 %v6508, %v6698
  %v6777 = vadd.f32 %v6509, %v6703
  %v6778 = vadd.f32 %v6510, %v6708
  %v6779 = vadd.f32 %v6511, %v6713
  %v6780 = vadd.f32 %v6512, %v6718
  %v6781 = vadd.f32 %v6513, %v6723
  %v6782 = vadd.f32 %v6514, %v6728
  %v6783 = vadd.f32 %v6515, %v6733
  %v6784 = vadd.f32 %v6516, %v6738
  %v6785 = vadd.f32 %v6517, %v6743
  %v6786 = vadd.f32 %v6518, %v6748
  %v6787 = vadd.f32 %v6519, %v6753
  %v6788 = vadd.f32 %v6520, %v6758
  %v6789 = vadd.f32 %v6521, %v6763
  %v6790 = vadd.f32 %v6522, %v6768
  %v6791 = vadd.f32 %v6523, %v6773
  %s6792 = scalar_lea.vmem %s7, 640
  %v6793 = vld [vmem:[%s6792] sm:$0xff]
  %v6794 = vld [vmem:[%s6792 + $0x8] sm:$0xff]
  %v6795 = vld [vmem:[%s6792 + $0x10] sm:$0xff]
  %v6796 = vld [vmem:[%s6792 + $0x18] sm:$0xff]
  %v6797 = vld [vmem:[%s6792 + $0x20] sm:$0xff]
  %v6798 = vld [vmem:[%s6792 + $0x28] sm:$0xff]
  %v6799 = vld [vmem:[%s6792 + $0x30] sm:$0xff]
  %v6800 = vld [vmem:[%s6792 + $0x38] sm:$0xff]
  %v6801 = vld [vmem:[%s6792 + $0x40] sm:$0xff]
  %v6802 = vld [vmem:[%s6792 + $0x48] sm:$0xff]
  %v6803 = vld [vmem:[%s6792 + $0x50] sm:$0xff]
  %v6804 = vld [vmem:[%s6792 + $0x58] sm:$0xff]
  %v6805 = vld [vmem:[%s6792 + $0x60] sm:$0xff]
  %v6806 = vld [vmem:[%s6792 + $0x68] sm:$0xff]
  %v6807 = vld [vmem:[%s6792 + $0x70] sm:$0xff]
  %v6808 = vld [vmem:[%s6792 + $0x78] sm:$0xff]
  %6809 = vrot.lane.b32.xlu0 %v5451, 123
  %v6810 = vpop.permute.xlu0 %6809
  %6811 = vrot.lane.b32.xlu0 %v5452, 123
  %v6812 = vpop.permute.xlu0 %6811
  %6813 = vrot.lane.b32.xlu0 %v5453, 123
  %v6814 = vpop.permute.xlu0 %6813
  %6815 = vrot.lane.b32.xlu0 %v5454, 123
  %v6816 = vpop.permute.xlu0 %6815
  %6817 = vrot.lane.b32.xlu0 %v5455, 123
  %v6818 = vpop.permute.xlu0 %6817
  %6819 = vrot.lane.b32.xlu0 %v5456, 123
  %v6820 = vpop.permute.xlu0 %6819
  %6821 = vrot.lane.b32.xlu0 %v5457, 123
  %v6822 = vpop.permute.xlu0 %6821
  %6823 = vrot.lane.b32.xlu0 %v5458, 123
  %v6824 = vpop.permute.xlu0 %6823
  %6825 = vrot.lane.b32.xlu0 %v5459, 123
  %v6826 = vpop.permute.xlu0 %6825
  %6827 = vrot.lane.b32.xlu0 %v5460, 123
  %v6828 = vpop.permute.xlu0 %6827
  %6829 = vrot.lane.b32.xlu0 %v5461, 123
  %v6830 = vpop.permute.xlu0 %6829
  %6831 = vrot.lane.b32.xlu0 %v5462, 123
  %v6832 = vpop.permute.xlu0 %6831
  %6833 = vrot.lane.b32.xlu0 %v5463, 123
  %v6834 = vpop.permute.xlu0 %6833
  %6835 = vrot.lane.b32.xlu0 %v5464, 123
  %v6836 = vpop.permute.xlu0 %6835
  %v6852 = vsel %vm1706, %v6793, 0
  %v6855 = vsel %vm1706, %v6794, 0
  %v6858 = vsel %vm1706, %v6795, 0
  %v6861 = vsel %vm1706, %v6796, 0
  %v6864 = vsel %vm1706, %v6797, 0
  %v6867 = vsel %vm1706, %v6798, 0
  %v6870 = vsel %vm1706, %v6799, 0
  %v6873 = vsel %vm1706, %v6800, 0
  %v6876 = vsel %vm1706, %v6801, 0
  %v6879 = vsel %vm1706, %v6802, 0
  %v6882 = vsel %vm1706, %v6803, 0
  %v6885 = vsel %vm1706, %v6804, 0
  %v6888 = vsel %vm1706, %v6805, 0
  %v6891 = vsel %vm1706, %v6806, 0
  %v6894 = vsel %vm1706, %v6807, 0
  %v6897 = vsel %vm1706, %v6808, 0
  %6899 = vmatprep.subr.mxu0 0.0
  %6900 = vmatpush1.msra.mxu0 %v6810
  %6901 = vmatprep.subr.mxu0 0.0
  %6902 = vmatpush1.msra.mxu0 %v6812
  %6903 = vmatprep.subr.mxu0 0.0
  %6904 = vmatpush1.msra.mxu0 %v6814
  %6905 = vmatprep.subr.mxu0 0.0
  %6906 = vmatpush1.msra.mxu0 %v6816
  %6907 = vmatprep.subr.mxu0 0.0
  %6908 = vmatpush1.msra.mxu0 %v6818
  %6909 = vmatprep.subr.mxu0 0.0
  %6910 = vmatpush1.msra.mxu0 %v6820
  %6911 = vmatprep.subr.mxu0 0.0
  %6912 = vmatpush1.msra.mxu0 %v6822
  %6913 = vmatprep.subr.mxu0 0.0
  %6914 = vmatpush1.msra.mxu0 %v6824
  %6915 = vmatprep.subr.mxu0 0.0
  %6916 = vmatpush1.msra.mxu0 %v6826
  %6917 = vmatprep.subr.mxu0 0.0
  %6918 = vmatpush1.msra.mxu0 %v6828
  %6919 = vmatprep.subr.mxu0 0.0
  %6920 = vmatpush1.msra.mxu0 %v6830
  %6921 = vmatprep.subr.mxu0 0.0
  %6922 = vmatpush1.msra.mxu0 %v6832
  %6923 = vmatprep.subr.mxu0 0.0
  %6924 = vmatpush1.msra.mxu0 %v6834
  %6925 = vmatprep.subr.mxu0 0.0
  %6926 = vmatpush1.msra.mxu0 %v6836
  %6927 = vmatprep.subr.mxu0 0.0
  %6928 = vmatpush1.msra.mxu0 0.0
  %6929 = vmatprep.subr.mxu0 0.0
  %6930 = vmatpush1.msra.mxu0 0.0
  %6931 = vmatprep.subr.mxu0 0.0
  %6932 = vmatpush1.msra.mxu0 0.0
  %6933 = vmatprep.subr.mxu0 0.0
  %6934 = vmatpush1.msra.mxu0 0.0
  %6935 = vmatprep.subr.mxu0 0.0
  %6936 = vmatpush1.msra.mxu0 0.0
  %6937 = vmatprep.subr.mxu0 0.0
  %6938 = vmatpush1.msra.mxu0 0.0
  %6939 = vmatprep.subr.mxu0 0.0
  %6940 = vmatpush1.msra.mxu0 0.0
  %6941 = vmatprep.subr.mxu0 0.0
  %6942 = vmatpush1.msra.mxu0 0.0
  %6943 = vmatprep.subr.mxu0 0.0
  %6944 = vmatpush1.msra.mxu0 0.0
  %6945 = vmatprep.subr.mxu0 0.0
  %6946 = vmatpush1.msra.mxu0 0.0
  %6947 = vmatprep.subr.mxu0 0.0
  %6948 = vmatpush1.msra.mxu0 0.0
  %6949 = vmatprep.subr.mxu0 0.0
  %6950 = vmatpush1.msra.mxu0 0.0
  %6951 = vmatprep.subr.mxu0 0.0
  %6952 = vmatpush1.msra.mxu0 0.0
  %6953 = vmatprep.subr.mxu0 0.0
  %6954 = vmatpush1.msra.mxu0 0.0
  %6955 = vmatprep.subr.mxu0 0.0
  %6956 = vmatpush1.msra.mxu0 0.0
  %6957 = vmatprep.subr.mxu0 0.0
  %6958 = vmatpush1.msra.mxu0 0.0
  %6959 = vmatprep.subr.mxu0 0.0
  %6960 = vmatpush1.msra.mxu0 0.0
  %6961 = vmatprep.subr.mxu0 0.0
  %6962 = vmatpush1.msra.mxu0 0.0
  %6963 = vmatprep.mubr.f32.mxu0 0.0
  %6964 = vmatmul.mubr.f32.gmra.mrb[0].mxu0 %v6852
  %v6965 = vpop.f32.mrb[0].mxu0
  %v6966 = vadd.f32 0.0, %v6965
  %v6967 = vpop.f32.mrb[0].mxu0
  %6968 = vmatprep.mubr.f32.mxu0 0.0
  %6969 = vmatmul.mubr.f32.gmra.mrb[0].mxu0 %v6855
  %v6970 = vpop.f32.mrb[0].mxu0
  %v6971 = vadd.f32 0.0, %v6970
  %v6972 = vpop.f32.mrb[0].mxu0
  %6973 = vmatprep.mubr.f32.mxu0 0.0
  %6974 = vmatmul.mubr.f32.gmra.mrb[0].mxu0 %v6858
  %v6975 = vpop.f32.mrb[0].mxu0
  %v6976 = vadd.f32 0.0, %v6975
  %v6977 = vpop.f32.mrb[0].mxu0
  %6978 = vmatprep.mubr.f32.mxu0 0.0
  %6979 = vmatmul.mubr.f32.gmra.mrb[0].mxu0 %v6861
  %v6980 = vpop.f32.mrb[0].mxu0
  %v6981 = vadd.f32 0.0, %v6980
  %v6982 = vpop.f32.mrb[0].mxu0
  %6983 = vmatprep.mubr.f32.mxu0 0.0
  %6984 = vmatmul.mubr.f32.gmra.mrb[0].mxu0 %v6864
  %v6985 = vpop.f32.mrb[0].mxu0
  %v6986 = vadd.f32 0.0, %v6985
  %v6987 = vpop.f32.mrb[0].mxu0
  %6988 = vmatprep.mubr.f32.mxu0 0.0
  %6989 = vmatmul.mubr.f32.gmra.mrb[0].mxu0 %v6867
  %v6990 = vpop.f32.mrb[0].mxu0
  %v6991 = vadd.f32 0.0, %v6990
  %v6992 = vpop.f32.mrb[0].mxu0
  %6993 = vmatprep.mubr.f32.mxu0 0.0
  %6994 = vmatmul.mubr.f32.gmra.mrb[0].mxu0 %v6870
  %v6995 = vpop.f32.mrb[0].mxu0
  %v6996 = vadd.f32 0.0, %v6995
  %v6997 = vpop.f32.mrb[0].mxu0
  %6998 = vmatprep.mubr.f32.mxu0 0.0
  %6999 = vmatmul.mubr.f32.gmra.mrb[0].mxu0 %v6873
  %v7000 = vpop.f32.mrb[0].mxu0
  %v7001 = vadd.f32 0.0, %v7000
  %v7002 = vpop.f32.mrb[0].mxu0
  %7003 = vmatprep.mubr.f32.mxu0 0.0
  %7004 = vmatmul.mubr.f32.gmra.mrb[0].mxu0 %v6876
  %v7005 = vpop.f32.mrb[0].mxu0
  %v7006 = vadd.f32 0.0, %v7005
  %v7007 = vpop.f32.mrb[0].mxu0
  %7008 = vmatprep.mubr.f32.mxu0 0.0
  %7009 = vmatmul.mubr.f32.gmra.mrb[0].mxu0 %v6879
  %v7010 = vpop.f32.mrb[0].mxu0
  %v7011 = vadd.f32 0.0, %v7010
  %v7012 = vpop.f32.mrb[0].mxu0
  %7013 = vmatprep.mubr.f32.mxu0 0.0
  %7014 = vmatmul.mubr.f32.gmra.mrb[0].mxu0 %v6882
  %v7015 = vpop.f32.mrb[0].mxu0
  %v7016 = vadd.f32 0.0, %v7015
  %v7017 = vpop.f32.mrb[0].mxu0
  %7018 = vmatprep.mubr.f32.mxu0 0.0
  %7019 = vmatmul.mubr.f32.gmra.mrb[0].mxu0 %v6885
  %v7020 = vpop.f32.mrb[0].mxu0
  %v7021 = vadd.f32 0.0, %v7020
  %v7022 = vpop.f32.mrb[0].mxu0
  %7023 = vmatprep.mubr.f32.mxu0 0.0
  %7024 = vmatmul.mubr.f32.gmra.mrb[0].mxu0 %v6888
  %v7025 = vpop.f32.mrb[0].mxu0
  %v7026 = vadd.f32 0.0, %v7025
  %v7027 = vpop.f32.mrb[0].mxu0
  %7028 = vmatprep.mubr.f32.mxu0 0.0
  %7029 = vmatmul.mubr.f32.gmra.mrb[0].mxu0 %v6891
  %v7030 = vpop.f32.mrb[0].mxu0
  %v7031 = vadd.f32 0.0, %v7030
  %v7032 = vpop.f32.mrb[0].mxu0
  %7033 = vmatprep.mubr.f32.mxu0 0.0
  %7034 = vmatmul.mubr.f32.gmra.mrb[0].mxu0 %v6894
  %v7035 = vpop.f32.mrb[0].mxu0
  %v7036 = vadd.f32 0.0, %v7035
  %v7037 = vpop.f32.mrb[0].mxu0
  %7038 = vmatprep.mubr.f32.mxu0 0.0
  %7039 = vmatmul.mubr.f32.gmra.mrb[0].mxu0 %v6897
  %v7040 = vpop.f32.mrb[0].mxu0
  %v7041 = vadd.f32 0.0, %v7040
  %v7042 = vpop.f32.mrb[0].mxu0
  %7043 = vdwg.mxu0
  %v7044 = vadd.f32 %v6776, %v6966
  %v7045 = vadd.f32 %v6777, %v6971
  %v7046 = vadd.f32 %v6778, %v6976
  %v7047 = vadd.f32 %v6779, %v6981
  %v7048 = vadd.f32 %v6780, %v6986
  %v7049 = vadd.f32 %v6781, %v6991
  %v7050 = vadd.f32 %v6782, %v6996
  %v7051 = vadd.f32 %v6783, %v7001
  %v7052 = vadd.f32 %v6784, %v7006
  %v7053 = vadd.f32 %v6785, %v7011
  %v7054 = vadd.f32 %v6786, %v7016
  %v7055 = vadd.f32 %v6787, %v7021
  %v7056 = vadd.f32 %v6788, %v7026
  %v7057 = vadd.f32 %v6789, %v7031
  %v7058 = vadd.f32 %v6790, %v7036
  %v7059 = vadd.f32 %v6791, %v7041
  %s7060 = scalar_lea.vmem %s7, 768
  %v7061 = vld [vmem:[%s7060] sm:$0xff]
  %v7062 = vld [vmem:[%s7060 + $0x8] sm:$0xff]
  %v7063 = vld [vmem:[%s7060 + $0x10] sm:$0xff]
  %v7064 = vld [vmem:[%s7060 + $0x18] sm:$0xff]
  %v7065 = vld [vmem:[%s7060 + $0x20] sm:$0xff]
  %v7066 = vld [vmem:[%s7060 + $0x28] sm:$0xff]
  %v7067 = vld [vmem:[%s7060 + $0x30] sm:$0xff]
  %v7068 = vld [vmem:[%s7060 + $0x38] sm:$0xff]
  %v7069 = vld [vmem:[%s7060 + $0x40] sm:$0xff]
  %v7070 = vld [vmem:[%s7060 + $0x48] sm:$0xff]
  %v7071 = vld [vmem:[%s7060 + $0x50] sm:$0xff]
  %v7072 = vld [vmem:[%s7060 + $0x58] sm:$0xff]
  %v7073 = vld [vmem:[%s7060 + $0x60] sm:$0xff]
  %v7074 = vld [vmem:[%s7060 + $0x68] sm:$0xff]
  %v7075 = vld [vmem:[%s7060 + $0x70] sm:$0xff]
  %v7076 = vld [vmem:[%s7060 + $0x78] sm:$0xff]
  %7077 = vrot.lane.b32.xlu0 %v5451, 122
  %v7078 = vpop.permute.xlu0 %7077
  %7079 = vrot.lane.b32.xlu0 %v5452, 122
  %v7080 = vpop.permute.xlu0 %7079
  %7081 = vrot.lane.b32.xlu0 %v5453, 122
  %v7082 = vpop.permute.xlu0 %7081
  %7083 = vrot.lane.b32.xlu0 %v5454, 122
  %v7084 = vpop.permute.xlu0 %7083
  %7085 = vrot.lane.b32.xlu0 %v5455, 122
  %v7086 = vpop.permute.xlu0 %7085
  %7087 = vrot.lane.b32.xlu0 %v5456, 122
  %v7088 = vpop.permute.xlu0 %7087
  %7089 = vrot.lane.b32.xlu0 %v5457, 122
  %v7090 = vpop.permute.xlu0 %7089
  %7091 = vrot.lane.b32.xlu0 %v5458, 122
  %v7092 = vpop.permute.xlu0 %7091
  %7093 = vrot.lane.b32.xlu0 %v5459, 122
  %v7094 = vpop.permute.xlu0 %7093
  %7095 = vrot.lane.b32.xlu0 %v5460, 122
  %v7096 = vpop.permute.xlu0 %7095
  %7097 = vrot.lane.b32.xlu0 %v5461, 122
  %v7098 = vpop.permute.xlu0 %7097
  %7099 = vrot.lane.b32.xlu0 %v5462, 122
  %v7100 = vpop.permute.xlu0 %7099
  %7101 = vrot.lane.b32.xlu0 %v5463, 122
  %v7102 = vpop.permute.xlu0 %7101
  %7103 = vrot.lane.b32.xlu0 %v5464, 122
  %v7104 = vpop.permute.xlu0 %7103
  %v7120 = vsel %vm1706, %v7061, 0
  %v7123 = vsel %vm1706, %v7062, 0
  %v7126 = vsel %vm1706, %v7063, 0
  %v7129 = vsel %vm1706, %v7064, 0
  %v7132 = vsel %vm1706, %v7065, 0
  %v7135 = vsel %vm1706, %v7066, 0
  %v7138 = vsel %vm1706, %v7067, 0
  %v7141 = vsel %vm1706, %v7068, 0
  %v7144 = vsel %vm1706, %v7069, 0
  %v7147 = vsel %vm1706, %v7070, 0
  %v7150 = vsel %vm1706, %v7071, 0
  %v7153 = vsel %vm1706, %v7072, 0
  %v7156 = vsel %vm1706, %v7073, 0
  %v7159 = vsel %vm1706, %v7074, 0
  %v7162 = vsel %vm1706, %v7075, 0
  %v7165 = vsel %vm1706, %v7076, 0
  %7167 = vmatprep.subr.mxu0 0.0
  %7168 = vmatpush1.msra.mxu0 %v7078
  %7169 = vmatprep.subr.mxu0 0.0
  %7170 = vmatpush1.msra.mxu0 %v7080
  %7171 = vmatprep.subr.mxu0 0.0
  %7172 = vmatpush1.msra.mxu0 %v7082
  %7173 = vmatprep.subr.mxu0 0.0
  %7174 = vmatpush1.msra.mxu0 %v7084
  %7175 = vmatprep.subr.mxu0 0.0
  %7176 = vmatpush1.msra.mxu0 %v7086
  %7177 = vmatprep.subr.mxu0 0.0
  %7178 = vmatpush1.msra.mxu0 %v7088
  %7179 = vmatprep.subr.mxu0 0.0
  %7180 = vmatpush1.msra.mxu0 %v7090
  %7181 = vmatprep.subr.mxu0 0.0
  %7182 = vmatpush1.msra.mxu0 %v7092
  %7183 = vmatprep.subr.mxu0 0.0
  %7184 = vmatpush1.msra.mxu0 %v7094
  %7185 = vmatprep.subr.mxu0 0.0
  %7186 = vmatpush1.msra.mxu0 %v7096
  %7187 = vmatprep.subr.mxu0 0.0
  %7188 = vmatpush1.msra.mxu0 %v7098
  %7189 = vmatprep.subr.mxu0 0.0
  %7190 = vmatpush1.msra.mxu0 %v7100
  %7191 = vmatprep.subr.mxu0 0.0
  %7192 = vmatpush1.msra.mxu0 %v7102
  %7193 = vmatprep.subr.mxu0 0.0
  %7194 = vmatpush1.msra.mxu0 %v7104
  %7195 = vmatprep.subr.mxu0 0.0
  %7196 = vmatpush1.msra.mxu0 0.0
  %7197 = vmatprep.subr.mxu0 0.0
  %7198 = vmatpush1.msra.mxu0 0.0
  %7199 = vmatprep.subr.mxu0 0.0
  %7200 = vmatpush1.msra.mxu0 0.0
  %7201 = vmatprep.subr.mxu0 0.0
  %7202 = vmatpush1.msra.mxu0 0.0
  %7203 = vmatprep.subr.mxu0 0.0
  %7204 = vmatpush1.msra.mxu0 0.0
  %7205 = vmatprep.subr.mxu0 0.0
  %7206 = vmatpush1.msra.mxu0 0.0
  %7207 = vmatprep.subr.mxu0 0.0
  %7208 = vmatpush1.msra.mxu0 0.0
  %7209 = vmatprep.subr.mxu0 0.0
  %7210 = vmatpush1.msra.mxu0 0.0
  %7211 = vmatprep.subr.mxu0 0.0
  %7212 = vmatpush1.msra.mxu0 0.0
  %7213 = vmatprep.subr.mxu0 0.0
  %7214 = vmatpush1.msra.mxu0 0.0
  %7215 = vmatprep.subr.mxu0 0.0
  %7216 = vmatpush1.msra.mxu0 0.0
  %7217 = vmatprep.subr.mxu0 0.0
  %7218 = vmatpush1.msra.mxu0 0.0
  %7219 = vmatprep.subr.mxu0 0.0
  %7220 = vmatpush1.msra.mxu0 0.0
  %7221 = vmatprep.subr.mxu0 0.0
  %7222 = vmatpush1.msra.mxu0 0.0
  %7223 = vmatprep.subr.mxu0 0.0
  %7224 = vmatpush1.msra.mxu0 0.0
  %7225 = vmatprep.subr.mxu0 0.0
  %7226 = vmatpush1.msra.mxu0 0.0
  %7227 = vmatprep.subr.mxu0 0.0
  %7228 = vmatpush1.msra.mxu0 0.0
  %7229 = vmatprep.subr.mxu0 0.0
  %7230 = vmatpush1.msra.mxu0 0.0
  %7231 = vmatprep.mubr.f32.mxu0 0.0
  %7232 = vmatmul.mubr.f32.gmra.mrb[0].mxu0 %v7120
  %v7233 = vpop.f32.mrb[0].mxu0
  %v7234 = vadd.f32 0.0, %v7233
  %v7235 = vpop.f32.mrb[0].mxu0
  %7236 = vmatprep.mubr.f32.mxu0 0.0
  %7237 = vmatmul.mubr.f32.gmra.mrb[0].mxu0 %v7123
  %v7238 = vpop.f32.mrb[0].mxu0
  %v7239 = vadd.f32 0.0, %v7238
  %v7240 = vpop.f32.mrb[0].mxu0
  %7241 = vmatprep.mubr.f32.mxu0 0.0
  %7242 = vmatmul.mubr.f32.gmra.mrb[0].mxu0 %v7126
  %v7243 = vpop.f32.mrb[0].mxu0
  %v7244 = vadd.f32 0.0, %v7243
  %v7245 = vpop.f32.mrb[0].mxu0
  %7246 = vmatprep.mubr.f32.mxu0 0.0
  %7247 = vmatmul.mubr.f32.gmra.mrb[0].mxu0 %v7129
  %v7248 = vpop.f32.mrb[0].mxu0
  %v7249 = vadd.f32 0.0, %v7248
  %v7250 = vpop.f32.mrb[0].mxu0
  %7251 = vmatprep.mubr.f32.mxu0 0.0
  %7252 = vmatmul.mubr.f32.gmra.mrb[0].mxu0 %v7132
  %v7253 = vpop.f32.mrb[0].mxu0
  %v7254 = vadd.f32 0.0, %v7253
  %v7255 = vpop.f32.mrb[0].mxu0
  %7256 = vmatprep.mubr.f32.mxu0 0.0
  %7257 = vmatmul.mubr.f32.gmra.mrb[0].mxu0 %v7135
  %v7258 = vpop.f32.mrb[0].mxu0
  %v7259 = vadd.f32 0.0, %v7258
  %v7260 = vpop.f32.mrb[0].mxu0
  %7261 = vmatprep.mubr.f32.mxu0 0.0
  %7262 = vmatmul.mubr.f32.gmra.mrb[0].mxu0 %v7138
  %v7263 = vpop.f32.mrb[0].mxu0
  %v7264 = vadd.f32 0.0, %v7263
  %v7265 = vpop.f32.mrb[0].mxu0
  %7266 = vmatprep.mubr.f32.mxu0 0.0
  %7267 = vmatmul.mubr.f32.gmra.mrb[0].mxu0 %v7141
  %v7268 = vpop.f32.mrb[0].mxu0
  %v7269 = vadd.f32 0.0, %v7268
  %v7270 = vpop.f32.mrb[0].mxu0
  %7271 = vmatprep.mubr.f32.mxu0 0.0
  %7272 = vmatmul.mubr.f32.gmra.mrb[0].mxu0 %v7144
  %v7273 = vpop.f32.mrb[0].mxu0
  %v7274 = vadd.f32 0.0, %v7273
  %v7275 = vpop.f32.mrb[0].mxu0
  %7276 = vmatprep.mubr.f32.mxu0 0.0
  %7277 = vmatmul.mubr.f32.gmra.mrb[0].mxu0 %v7147
  %v7278 = vpop.f32.mrb[0].mxu0
  %v7279 = vadd.f32 0.0, %v7278
  %v7280 = vpop.f32.mrb[0].mxu0
  %7281 = vmatprep.mubr.f32.mxu0 0.0
  %7282 = vmatmul.mubr.f32.gmra.mrb[0].mxu0 %v7150
  %v7283 = vpop.f32.mrb[0].mxu0
  %v7284 = vadd.f32 0.0, %v7283
  %v7285 = vpop.f32.mrb[0].mxu0
  %7286 = vmatprep.mubr.f32.mxu0 0.0
  %7287 = vmatmul.mubr.f32.gmra.mrb[0].mxu0 %v7153
  %v7288 = vpop.f32.mrb[0].mxu0
  %v7289 = vadd.f32 0.0, %v7288
  %v7290 = vpop.f32.mrb[0].mxu0
  %7291 = vmatprep.mubr.f32.mxu0 0.0
  %7292 = vmatmul.mubr.f32.gmra.mrb[0].mxu0 %v7156
  %v7293 = vpop.f32.mrb[0].mxu0
  %v7294 = vadd.f32 0.0, %v7293
  %v7295 = vpop.f32.mrb[0].mxu0
  %7296 = vmatprep.mubr.f32.mxu0 0.0
  %7297 = vmatmul.mubr.f32.gmra.mrb[0].mxu0 %v7159
  %v7298 = vpop.f32.mrb[0].mxu0
  %v7299 = vadd.f32 0.0, %v7298
  %v7300 = vpop.f32.mrb[0].mxu0
  %7301 = vmatprep.mubr.f32.mxu0 0.0
  %7302 = vmatmul.mubr.f32.gmra.mrb[0].mxu0 %v7162
  %v7303 = vpop.f32.mrb[0].mxu0
  %v7304 = vadd.f32 0.0, %v7303
  %v7305 = vpop.f32.mrb[0].mxu0
  %7306 = vmatprep.mubr.f32.mxu0 0.0
  %7307 = vmatmul.mubr.f32.gmra.mrb[0].mxu0 %v7165
  %v7308 = vpop.f32.mrb[0].mxu0
  %v7309 = vadd.f32 0.0, %v7308
  %v7310 = vpop.f32.mrb[0].mxu0
  %7311 = vdwg.mxu0
  %v7312 = vadd.f32 %v7044, %v7234
  %v7313 = vadd.f32 %v7045, %v7239
  %v7314 = vadd.f32 %v7046, %v7244
  %v7315 = vadd.f32 %v7047, %v7249
  %v7316 = vadd.f32 %v7048, %v7254
  %v7317 = vadd.f32 %v7049, %v7259
  %v7318 = vadd.f32 %v7050, %v7264
  %v7319 = vadd.f32 %v7051, %v7269
  %v7320 = vadd.f32 %v7052, %v7274
  %v7321 = vadd.f32 %v7053, %v7279
  %v7322 = vadd.f32 %v7054, %v7284
  %v7323 = vadd.f32 %v7055, %v7289
  %v7324 = vadd.f32 %v7056, %v7294
  %v7325 = vadd.f32 %v7057, %v7299
  %v7326 = vadd.f32 %v7058, %v7304
  %v7327 = vadd.f32 %v7059, %v7309
  %v7328 = vmax.f32 %v7312, 0.0
  %v7329 = vmax.f32 %v7313, 0.0
  %v7330 = vmax.f32 %v7314, 0.0
  %v7331 = vmax.f32 %v7315, 0.0
  %v7332 = vmax.f32 %v7316, 0.0
  %v7333 = vmax.f32 %v7317, 0.0
  %v7334 = vmax.f32 %v7318, 0.0
  %v7335 = vmax.f32 %v7319, 0.0
  %v7336 = vmax.f32 %v7320, 0.0
  %v7337 = vmax.f32 %v7321, 0.0
  %v7338 = vmax.f32 %v7322, 0.0
  %v7339 = vmax.f32 %v7323, 0.0
  %v7340 = vmax.f32 %v7324, 0.0
  %v7341 = vmax.f32 %v7325, 0.0
  %v7342 = vmax.f32 %v7326, 0.0
  %v7343 = vmax.f32 %v7327, 0.0
  %v7344 = vld [vmem:[%s9] sm:$0xff]
  %v7345 = vld [vmem:[%s9 + $0x8] sm:$0xff]
  %v7346 = vld [vmem:[%s9 + $0x10] sm:$0xff]
  %v7347 = vld [vmem:[%s9 + $0x18] sm:$0xff]
  %v7348 = vld [vmem:[%s9 + $0x20] sm:$0xff]
  %v7349 = vld [vmem:[%s9 + $0x28] sm:$0xff]
  %v7350 = vld [vmem:[%s9 + $0x30] sm:$0xff]
  %v7351 = vld [vmem:[%s9 + $0x38] sm:$0xff]
  %v7352 = vld [vmem:[%s10] sm:$0xff]
  %v7353 = vld [vmem:[%s10 + $0x8] sm:$0xff]
  %v7354 = vld [vmem:[%s10 + $0x10] sm:$0xff]
  %v7355 = vld [vmem:[%s10 + $0x18] sm:$0xff]
  %v7356 = vld [vmem:[%s10 + $0x20] sm:$0xff]
  %v7357 = vld [vmem:[%s10 + $0x28] sm:$0xff]
  %v7358 = vld [vmem:[%s10 + $0x30] sm:$0xff]
  %v7359 = vld [vmem:[%s10 + $0x38] sm:$0xff]
  %7360 = vmatprep.subr.mxu0 0.0
  %7361 = vmatpush1.msra.mxu0 %v7328
  %7362 = vmatprep.subr.mxu0 0.0
  %7363 = vmatpush1.msra.mxu0 %v7329
  %7364 = vmatprep.subr.mxu0 0.0
  %7365 = vmatpush1.msra.mxu0 %v7330
  %7366 = vmatprep.subr.mxu0 0.0
  %7367 = vmatpush1.msra.mxu0 %v7331
  %7368 = vmatprep.subr.mxu0 0.0
  %7369 = vmatpush1.msra.mxu0 %v7332
  %7370 = vmatprep.subr.mxu0 0.0
  %7371 = vmatpush1.msra.mxu0 %v7333
  %7372 = vmatprep.subr.mxu0 0.0
  %7373 = vmatpush1.msra.mxu0 %v7334
  %7374 = vmatprep.subr.mxu0 0.0
  %7375 = vmatpush1.msra.mxu0 %v7335
  %7376 = vmatprep.subr.mxu0 0.0
  %7377 = vmatpush1.msra.mxu0 %v7336
  %7378 = vmatprep.subr.mxu0 0.0
  %7379 = vmatpush1.msra.mxu0 %v7337
  %7380 = vmatprep.subr.mxu0 0.0
  %7381 = vmatpush1.msra.mxu0 %v7338
  %7382 = vmatprep.subr.mxu0 0.0
  %7383 = vmatpush1.msra.mxu0 %v7339
  %7384 = vmatprep.subr.mxu0 0.0
  %7385 = vmatpush1.msra.mxu0 %v7340
  %7386 = vmatprep.subr.mxu0 0.0
  %7387 = vmatpush1.msra.mxu0 %v7341
  %7388 = vmatprep.subr.mxu0 0.0
  %7389 = vmatpush1.msra.mxu0 %v7342
  %7390 = vmatprep.subr.mxu0 0.0
  %7391 = vmatpush1.msra.mxu0 %v7343
  %7392 = vmatprep.subr.mxu0 0.0
  %7393 = vmatpush1.msra.mxu0 0.0
  %7394 = vmatprep.subr.mxu0 0.0
  %7395 = vmatpush1.msra.mxu0 0.0
  %7396 = vmatprep.subr.mxu0 0.0
  %7397 = vmatpush1.msra.mxu0 0.0
  %7398 = vmatprep.subr.mxu0 0.0
  %7399 = vmatpush1.msra.mxu0 0.0
  %7400 = vmatprep.subr.mxu0 0.0
  %7401 = vmatpush1.msra.mxu0 0.0
  %7402 = vmatprep.subr.mxu0 0.0
  %7403 = vmatpush1.msra.mxu0 0.0
  %7404 = vmatprep.subr.mxu0 0.0
  %7405 = vmatpush1.msra.mxu0 0.0
  %7406 = vmatprep.subr.mxu0 0.0
  %7407 = vmatpush1.msra.mxu0 0.0
  %7408 = vmatprep.subr.mxu0 0.0
  %7409 = vmatpush1.msra.mxu0 0.0
  %7410 = vmatprep.subr.mxu0 0.0
  %7411 = vmatpush1.msra.mxu0 0.0
  %7412 = vmatprep.subr.mxu0 0.0
  %7413 = vmatpush1.msra.mxu0 0.0
  %7414 = vmatprep.subr.mxu0 0.0
  %7415 = vmatpush1.msra.mxu0 0.0
  %7416 = vmatprep.subr.mxu0 0.0
  %7417 = vmatpush1.msra.mxu0 0.0
  %7418 = vmatprep.subr.mxu0 0.0
  %7419 = vmatpush1.msra.mxu0 0.0
  %7420 = vmatprep.subr.mxu0 0.0
  %7421 = vmatpush1.msra.mxu0 0.0
  %7422 = vmatprep.subr.mxu0 0.0
  %7423 = vmatpush1.msra.mxu0 0.0
  %7424 = vmatprep.mubr.f32.mxu0 0.0
  %7425 = vmatmul.mubr.f32.gmra.mrb[0].mxu0 %v7344
  %v7426 = vpop.f32.mrb[0].mxu0
  %v7427 = vadd.f32 %v7352, %v7426
  %v7428 = vpop.f32.mrb[0].mxu0
  %7429 = vmatprep.mubr.f32.mxu0 0.0
  %7430 = vmatmul.mubr.f32.gmra.mrb[0].mxu0 %v7345
  %v7431 = vpop.f32.mrb[0].mxu0
  %v7432 = vadd.f32 %v7353, %v7431
  %v7433 = vpop.f32.mrb[0].mxu0
  %7434 = vmatprep.mubr.f32.mxu0 0.0
  %7435 = vmatmul.mubr.f32.gmra.mrb[0].mxu0 %v7346
  %v7436 = vpop.f32.mrb[0].mxu0
  %v7437 = vadd.f32 %v7354, %v7436
  %v7438 = vpop.f32.mrb[0].mxu0
  %7439 = vmatprep.mubr.f32.mxu0 0.0
  %7440 = vmatmul.mubr.f32.gmra.mrb[0].mxu0 %v7347
  %v7441 = vpop.f32.mrb[0].mxu0
  %v7442 = vadd.f32 %v7355, %v7441
  %v7443 = vpop.f32.mrb[0].mxu0
  %7444 = vmatprep.mubr.f32.mxu0 0.0
  %7445 = vmatmul.mubr.f32.gmra.mrb[0].mxu0 %v7348
  %v7446 = vpop.f32.mrb[0].mxu0
  %v7447 = vadd.f32 %v7356, %v7446
  %v7448 = vpop.f32.mrb[0].mxu0
  %7449 = vmatprep.mubr.f32.mxu0 0.0
  %7450 = vmatmul.mubr.f32.gmra.mrb[0].mxu0 %v7349
  %v7451 = vpop.f32.mrb[0].mxu0
  %v7452 = vadd.f32 %v7357, %v7451
  %v7453 = vpop.f32.mrb[0].mxu0
  %7454 = vmatprep.mubr.f32.mxu0 0.0
  %7455 = vmatmul.mubr.f32.gmra.mrb[0].mxu0 %v7350
  %v7456 = vpop.f32.mrb[0].mxu0
  %v7457 = vadd.f32 %v7358, %v7456
  %v7458 = vpop.f32.mrb[0].mxu0
  %7459 = vmatprep.mubr.f32.mxu0 0.0
  %7460 = vmatmul.mubr.f32.gmra.mrb[0].mxu0 %v7351
  %v7461 = vpop.f32.mrb[0].mxu0
  %v7462 = vadd.f32 %v7359, %v7461
  %v7463 = vpop.f32.mrb[0].mxu0
  %7464 = vdwg.mxu0
  %v7465 = vmax.f32 %v7427, 0.0
  %v7466 = vmax.f32 %v7432, 0.0
  %v7467 = vmax.f32 %v7437, 0.0
  %v7468 = vmax.f32 %v7442, 0.0
  %v7469 = vmax.f32 %v7447, 0.0
  %v7470 = vmax.f32 %v7452, 0.0
  %v7471 = vmax.f32 %v7457, 0.0
  %v7472 = vmax.f32 %v7462, 0.0
  %v7473 = vld [vmem:[%s11] sm:$0xff]
  %v7474 = vld [vmem:[%s11 + $0x8] sm:$0x3]
  %v7475 = vld [vmem:[%s12] sm:$0xff]
  %v7476 = vld [vmem:[%s12 + $0x8] sm:$0x3]
  %vm7477 = vcmask 523264
  %v7479 = vsel %vm7477, %v7473, 0
  %v7482 = vsel %vm7477, %v7474, 0
  %7484 = vmatprep.subr.mxu0 0.0
  %7485 = vmatpush1.msra.mxu0 %v7465
  %7486 = vmatprep.subr.mxu0 0.0
  %7487 = vmatpush1.msra.mxu0 %v7466
  %7488 = vmatprep.subr.mxu0 0.0
  %7489 = vmatpush1.msra.mxu0 %v7467
  %7490 = vmatprep.subr.mxu0 0.0
  %7491 = vmatpush1.msra.mxu0 %v7468
  %7492 = vmatprep.subr.mxu0 0.0
  %7493 = vmatpush1.msra.mxu0 %v7469
  %7494 = vmatprep.subr.mxu0 0.0
  %7495 = vmatpush1.msra.mxu0 %v7470
  %7496 = vmatprep.subr.mxu0 0.0
  %7497 = vmatpush1.msra.mxu0 %v7471
  %7498 = vmatprep.subr.mxu0 0.0
  %7499 = vmatpush1.msra.mxu0 %v7472
  %7500 = vmatprep.subr.mxu0 0.0
  %7501 = vmatpush1.msra.mxu0 0.0
  %7502 = vmatprep.subr.mxu0 0.0
  %7503 = vmatpush1.msra.mxu0 0.0
  %7504 = vmatprep.subr.mxu0 0.0
  %7505 = vmatpush1.msra.mxu0 0.0
  %7506 = vmatprep.subr.mxu0 0.0
  %7507 = vmatpush1.msra.mxu0 0.0
  %7508 = vmatprep.subr.mxu0 0.0
  %7509 = vmatpush1.msra.mxu0 0.0
  %7510 = vmatprep.subr.mxu0 0.0
  %7511 = vmatpush1.msra.mxu0 0.0
  %7512 = vmatprep.subr.mxu0 0.0
  %7513 = vmatpush1.msra.mxu0 0.0
  %7514 = vmatprep.subr.mxu0 0.0
  %7515 = vmatpush1.msra.mxu0 0.0
  %7516 = vmatprep.subr.mxu0 0.0
  %7517 = vmatpush1.msra.mxu0 0.0
  %7518 = vmatprep.subr.mxu0 0.0
  %7519 = vmatpush1.msra.mxu0 0.0
  %7520 = vmatprep.subr.mxu0 0.0
  %7521 = vmatpush1.msra.mxu0 0.0
  %7522 = vmatprep.subr.mxu0 0.0
  %7523 = vmatpush1.msra.mxu0 0.0
  %7524 = vmatprep.subr.mxu0 0.0
  %7525 = vmatpush1.msra.mxu0 0.0
  %7526 = vmatprep.subr.mxu0 0.0
  %7527 = vmatpush1.msra.mxu0 0.0
  %7528 = vmatprep.subr.mxu0 0.0
  %7529 = vmatpush1.msra.mxu0 0.0
  %7530 = vmatprep.subr.mxu0 0.0
  %7531 = vmatpush1.msra.mxu0 0.0
  %7532 = vmatprep.subr.mxu0 0.0
  %7533 = vmatpush1.msra.mxu0 0.0
  %7534 = vmatprep.subr.mxu0 0.0
  %7535 = vmatpush1.msra.mxu0 0.0
  %7536 = vmatprep.subr.mxu0 0.0
  %7537 = vmatpush1.msra.mxu0 0.0
  %7538 = vmatprep.subr.mxu0 0.0
  %7539 = vmatpush1.msra.mxu0 0.0
  %7540 = vmatprep.subr.mxu0 0.0
  %7541 = vmatpush1.msra.mxu0 0.0
  %7542 = vmatprep.subr.mxu0 0.0
  %7543 = vmatpush1.msra.mxu0 0.0
  %7544 = vmatprep.subr.mxu0 0.0
  %7545 = vmatpush1.msra.mxu0 0.0
  %7546 = vmatprep.subr.mxu0 0.0
  %7547 = vmatpush1.msra.mxu0 0.0
  %7548 = vmatprep.mubr.f32.mxu0 0.0
  %7549 = vmatmul.mubr.f32.gmra.mrb[0].mxu0 %v7479
  %v7550 = vpop.f32.mrb[0].mxu0
  %v7551 = vadd.f32 %v7475, %v7550
  %v7552 = vpop.f32.mrb[0].mxu0
  %7553 = vmatprep.mubr.f32.mxu0 0.0
  %7554 = vmatmul.mubr.f32.gmra.mrb[0].mxu0 %v7482
  %v7555 = vpop.f32.mrb[0].mxu0
  %v7556 = vadd.f32 %v7476, %v7555
  %v7557 = vpop.f32.mrb[0].mxu0
  %7558 = vdwg.mxu0
  %v7559 = vsub.f32 0.0, %v7551
  %v7560 = vsub.f32 0.0, %v7556
  %v7561 = vmul.f32 %v7559, 1.442695
  %v7562 = vpow.pop %v7561
  %v7563 = vmul.f32 %v7560, 1.442695
  %v7564 = vpow.pop %v7563
  %v7565 = vadd.f32 %v7562, 1.0
  %v7566 = vadd.f32 %v7564, 1.0
  %v7567 = vrcp.pop %v7565
  %v7568 = vmul.f32 1.0, %v7567
  %v7569 = vrcp.pop %v7566
  %v7570 = vmul.f32 1.0, %v7569
  %vm7571 = vcmask 7168
  %7572 = vst.msk [vmem:[%s13] sm:$0xff] %vm7571, %v7568
  %vm7573 = vcmask 1024
  %7574 = vst.msk [vmem:[%s13 + $0x8] sm:$0x3] %vm7573, %v7570
  // Predicated region
  $region54: #{conv_single_chan_forward.1} parent=0 // pred_check
    _
  $region55: #{conv_single_chan_forward.1} parent=0 // pred_check_branch
    %7576 = sbr.rel (0) target = $region57
  $region56: #{conv_single_chan_forward.1} parent=0 // pred_region
    _
  $region57: #{conv_single_chan_forward.1} parent=0 // pred_fallthru
    _
  // Predicated region
  $region58: #{conv_single_chan_forward.1} parent=0 // pred_check
    _
  $region59: #{conv_single_chan_forward.1} parent=0 // pred_check_branch
    %7578 = sbr.rel (0) target = $region61
  $region60: #{conv_single_chan_forward.1} parent=0 // pred_region
    _
  $region61: #{conv_single_chan_forward.1} parent=0 // pred_fallthru
    _

</llo_original>
